<compile_context>
chip_gen: v5e
topology: v5e:2x2
jax: 0.10.0
libtpu: 0.0.40
codegen_flags: <defaults>
</compile_context>

<pallas_src>
import functools
from typing import NamedTuple

import jax
import jax.numpy as jnp
from jax import lax
from jax.experimental import pallas as pl
from jax.experimental.pallas import tpu as pltpu


# ----------------------------- configs -----------------------------

class EncoderConfig(NamedTuple):
    input_vocab_size: int
    output_vocab_size: int
    embed_dim: int
    num_heads: int
    mlp_ratio: int
    depth: int
    query_depth: int
    input_tokens: int
    output_tokens: int
    output_dim: int
    dropout: float


class GPTConfig(NamedTuple):
    block_size: int
    vocab_size: int
    n_layer: int
    n_head: int
    n_embd: int
    dropout: float
    bias: bool


class EncoderOutput(NamedTuple):
    z_q: jnp.ndarray
    dictionary_loss: jnp.ndarray
    commitment_loss: jnp.ndarray
    indices: jnp.ndarray


def _full_spec(shape):
    nd = len(shape)
    return pl.BlockSpec(shape, lambda b, _nd=nd: (0,) * _nd)


# ----------------------------- in-kernel helpers -----------------------------

def _ln(x, w, b):
    """LayerNorm in fp32. w, b are (1, E) (b may be None)."""
    mu = jnp.mean(x, axis=-1, keepdims=True)
    var = jnp.mean((x - mu) ** 2, axis=-1, keepdims=True)
    y = (x - mu) * lax.rsqrt(var + 1e-5)
    y = y * w
    if b is not None:
        y = y + b
    return y


def _erf_approx(x):
    # TODO(synk): lax.erf lowering inside Mosaic is not guaranteed; use the
    # Abramowitz & Stegun 7.1.26 rational approximation (|err| <= 1.5e-7) instead.
    a1, a2, a3, a4, a5 = 0.254829592, -0.284496736, 1.421413741, -1.453152027, 1.061405429
    pp = 0.3275911
    ax = jnp.abs(x)
    t = 1.0 / (1.0 + pp * ax)
    poly = ((((a5 * t + a4) * t + a3) * t + a2) * t + a1) * t
    y = 1.0 - poly * jnp.exp(-ax * ax)
    return jnp.where(x >= 0, y, -y)


def _gelu_exact(x):
    # exact (erf-based) GELU matching nn.GELU(), fp32 elementwise
    return 0.5 * x * (1.0 + _erf_approx(x * 0.7071067811865475))


def _causal_mask(T):
    qi = lax.broadcasted_iota(jnp.int32, (T, T), 0)
    ki = lax.broadcasted_iota(jnp.int32, (T, T), 1)
    return ki <= qi


def _block_fwd(x, l, ln_ref, wqkv_ref, wo_ref, wfc_ref, wmlp_ref, n_head, mask):
    """One nanoGPT Block (bias=False): x += attn(ln1(x)); x += mlp(ln2(x)).
    Weights are stacked over layers/heads on leading ref axes (static indices, no
    lane slices).  Matmuls bf16 x bf16 -> fp32; everything else fp32."""
    T, E = x.shape
    hd = E // n_head
    scale = 1.0 / (hd ** 0.5)

    # --- causal self-attention (head-major weights, out-proj folded per head) ---
    hln = _ln(x, ln_ref[2 * l:2 * l + 1, :], None).astype(jnp.bfloat16)
    base = 3 * l * n_head
    a = jnp.zeros((T, E), jnp.float32)
    for h in range(n_head):
        qh = jnp.dot(hln, wqkv_ref[base + h], preferred_element_type=jnp.float32)
        kh = jnp.dot(hln, wqkv_ref[base + n_head + h], preferred_element_type=jnp.float32)
        vh = jnp.dot(hln, wqkv_ref[base + 2 * n_head + h], preferred_element_type=jnp.float32)
        s = lax.dot_general(qh.astype(jnp.bfloat16), kh.astype(jnp.bfloat16),
                            (((1,), (1,)), ((), ())),
                            preferred_element_type=jnp.float32) * scale
        s = jnp.where(mask, s, jnp.float32(-1e30))
        m = jnp.max(s, axis=-1, keepdims=True)
        pr = jnp.exp(s - m)
        pr = pr * pl.reciprocal(jnp.sum(pr, axis=-1, keepdims=True), approx=True)
        oh = jnp.dot(pr.astype(jnp.bfloat16), vh.astype(jnp.bfloat16),
                     preferred_element_type=jnp.float32)
        a = a + jnp.dot(oh.astype(jnp.bfloat16), wo_ref[l * n_head + h],
                        preferred_element_type=jnp.float32)
    x = x + a

    # --- MLP ---
    hm = _ln(x, ln_ref[2 * l + 1:2 * l + 2, :], None)
    hm = jnp.dot(hm.astype(jnp.bfloat16), wfc_ref[l], preferred_element_type=jnp.float32)
    hm = _gelu_exact(hm)
    x = x + jnp.dot(hm.astype(jnp.bfloat16), wmlp_ref[l], preferred_element_type=jnp.float32)
    return x


def _cross_attn_fwd(z, c, ln_ref, wqkv_ref, bqkv_ref, wo_ref,
                    wfc_ref, bfc_ref, wproj_ref, n_head):
    """Pre-LN cross-attention (queries from z, keys/values from c) + MLP.
    TODO(synk): CrossAttentionBlock source not provided; this standard structure
    (with biases) is an assumption."""
    Tq, E = z.shape
    hd = E // n_head
    scale = 1.0 / (hd ** 0.5)

    hq = _ln(z, ln_ref[0:1, :], ln_ref[1:2, :]).astype(jnp.bfloat16)
    hc = _ln(c, ln_ref[2:3, :], ln_ref[3:4, :]).astype(jnp.bfloat16)
    a = jnp.zeros((Tq, E), jnp.float32)
    for h in range(n_head):
        qh = (jnp.dot(hq, wqkv_ref[h], preferred_element_type=jnp.float32)
              + bqkv_ref[h:h + 1, :])
        kh = (jnp.dot(hc, wqkv_ref[n_head + h], preferred_element_type=jnp.float32)
              + bqkv_ref[n_head + h:n_head + h + 1, :])
        vh = (jnp.dot(hc, wqkv_ref[2 * n_head + h], preferred_element_type=jnp.float32)
              + bqkv_ref[2 * n_head + h:2 * n_head + h + 1, :])
        s = lax.dot_general(qh.astype(jnp.bfloat16), kh.astype(jnp.bfloat16),
                            (((1,), (1,)), ((), ())),
                            preferred_element_type=jnp.float32) * scale
        m = jnp.max(s, axis=-1, keepdims=True)
        pr = jnp.exp(s - m)
        pr = pr * pl.reciprocal(jnp.sum(pr, axis=-1, keepdims=True), approx=True)
        oh = jnp.dot(pr.astype(jnp.bfloat16), vh.astype(jnp.bfloat16),
                     preferred_element_type=jnp.float32)
        a = a + jnp.dot(oh.astype(jnp.bfloat16), wo_ref[h],
                        preferred_element_type=jnp.float32)
    z = z + a + ln_ref[6:7, :]                               # out-proj bias

    h2 = _ln(z, ln_ref[4:5, :], ln_ref[5:6, :])
    h2 = jnp.dot(h2.astype(jnp.bfloat16), wfc_ref[...],
                 preferred_element_type=jnp.float32) + bfc_ref[...]
    h2 = _gelu_exact(h2)
    z = z + jnp.dot(h2.astype(jnp.bfloat16), wproj_ref[...],
                    preferred_element_type=jnp.float32) + ln_ref[7:8, :]   # mlp-proj bias
    return z


# ----------------------------- fused mega-kernels -----------------------------

def _encoder_kernel(x_ref, qtq_ref,
                    iln_ref, iwqkv_ref, iwo_ref, iwfc_ref, iwmlp_ref,
                    ca_ln_ref, ca_wqkv_ref, ca_bqkv_ref, ca_wo_ref,
                    ca_wfc_ref, ca_bfc_ref, ca_wproj_ref,
                    qln_ref, qwqkv_ref, qwo_ref, qwfc_ref, qwmlp_ref,
                    qpw_ref, qpb_ref, vqe_ref,
                    zq_ref, idx_ref, loss_ref,
                    *, n_head, depth, query_depth):
    """Whole Encoder: blocks -> cross-attn -> +query pos-enc -> query blocks
       -> query_proj -> VectorQuantizer, for one batch element (grid over B)."""
    x = x_ref[0].astype(jnp.float32)                          # (L, E)
    L = x.shape[0]
    mask_l = _causal_mask(L)
    for l in range(depth):
        x = _block_fwd(x, l, iln_ref, iwqkv_ref, iwo_ref, iwfc_ref, iwmlp_ref,
                       n_head, mask_l)

    z = qtq_ref[0].astype(jnp.float32)                        # query tokens (T_out, E)
    z = _cross_attn_fwd(z, x, ca_ln_ref, ca_wqkv_ref, ca_bqkv_ref, ca_wo_ref,
                        ca_wfc_ref, ca_bfc_ref, ca_wproj_ref, n_head)
    z = z + qtq_ref[1].astype(jnp.float32)                    # + query positional enc

    T_out = z.shape[0]
    mask_q = _causal_mask(T_out)
    for l in range(query_depth):
        z = _block_fwd(z, l, qln_ref, qwqkv_ref, qwo_ref, qwfc_ref, qwmlp_ref,
                       n_head, mask_q)

    # query_proj (fp32)
    zp = jnp.dot(z, qpw_ref[...], preferred_element_type=jnp.float32) + qpb_ref[...]

    # VectorQuantizer (fp32): distances, first argmin, codebook lookup, MSE partial sum
    e = vqe_ref[...]                                          # (D, K)
    N, D = zp.shape
    K = e.shape[1]
    d = (jnp.sum(zp * zp, axis=1, keepdims=True)
         - 2.0 * jnp.dot(zp, e, preferred_element_type=jnp.float32)
         + jnp.sum(e * e, axis=0, keepdims=True))             # (N, K)
    dmin = jnp.min(d, axis=1, keepdims=True)
    ids = lax.broadcasted_iota(jnp.int32, (N, K), 1)
    idx = jnp.min(jnp.where(d == dmin, ids, K), axis=1, keepdims=True)   # first argmin
    onehot = (ids == idx).astype(jnp.float32)
    qz = lax.dot_general(onehot, e, (((1,), (1,)), ((), ())),
                         preferred_element_type=jnp.float32)  # (N, D) = onehot @ e^T
    sq = (zp - qz) ** 2
    loss_ref[0] = jnp.sum(jnp.sum(sq, axis=1, keepdims=True), axis=0, keepdims=True)
    zq_ref[0] = qz.astype(zq_ref.dtype)
    idx_ref[0] = idx.astype(jnp.int32)


def _gpt_kernel(h_ref, tgt_ref,
                gln_ref, gwqkv_ref, gwo_ref, gwfc_ref, gwmlp_ref,
                lnf_ref, wte_ref,
                logits_ref, loss_ref, *, n_head, n_layer):
    """Whole GPT: n_layer blocks -> ln_f -> weight-tied lm_head -> CE partial sum."""
    x = h_ref[0].astype(jnp.float32)                          # (T, E)
    T = x.shape[0]
    mask = _causal_mask(T)
    for l in range(n_layer):
        x = _block_fwd(x, l, gln_ref, gwqkv_ref, gwo_ref, gwfc_ref, gwmlp_ref,
                       n_head, mask)

    hf = _ln(x, lnf_ref[...], None)
    # TODO(synk): at realistic vocab sizes the lm_head should be tiled over vocab with
    # an online logsumexp; at V=64 everything fits VMEM so one matmul is fine.
    logits = lax.dot_general(hf.astype(jnp.bfloat16),
                             wte_ref[...].astype(jnp.bfloat16),
                             (((1,), (1,)), ((), ())),
                             preferred_element_type=jnp.float32)          # (T, V)
    logits_ref[0] = logits.astype(logits_ref.dtype)

    t = tgt_ref[0]                                            # (T, 1) int32
    m = jnp.max(logits, axis=1, keepdims=True)
    lse = m + jnp.log(jnp.sum(jnp.exp(logits - m), axis=1, keepdims=True))
    ids = lax.broadcasted_iota(jnp.int32, logits.shape, 1)
    picked = jnp.sum(jnp.where(ids == t, logits, 0.0), axis=1, keepdims=True)
    loss_ref[0] = jnp.sum(lse - picked, axis=0, keepdims=True)


# ----------------------------- wrappers (1 pallas_call each) -----------------------------

def encoder_forward(p, x_tokens, cfg: EncoderConfig):
    B, L = x_tokens.shape
    E, T_out = cfg.embed_dim, cfg.output_tokens
    D, K = cfg.output_dim, cfg.output_vocab_size
    h0 = p["embedding"][x_tokens] + p["pos_enc"][:L][None]    # dropout p=0 -> identity

    blk, ca, qblk = p["blocks"], p["cross"], p["qblocks"]
    weights = (p["qtok_qpe"],
               blk["ln"], blk["wqkv"], blk["wo"], blk["wfc"], blk["wmlp"],
               ca["lnpack"], ca["wqkv"], ca["bqkv"], ca["wo"],
               ca["wfc"], ca["bfc"], ca["wproj"],
               qblk["ln"], qblk["wqkv"], qblk["wo"], qblk["wfc"], qblk["wmlp"],
               p["qp_w"], p["qp_b"], p["vq_e"])
    kern = functools.partial(_encoder_kernel, n_head=cfg.num_heads,
                             depth=cfg.depth, query_depth=cfg.query_depth)
    z_q, idx, loss_sum = pl.pallas_call(
        kern,
        grid=(B,),
        in_specs=[pl.BlockSpec((1, L, E), lambda b: (b, 0, 0))]
                 + [_full_spec(w.shape) for w in weights],
        out_specs=(pl.BlockSpec((1, T_out, D), lambda b: (b, 0, 0)),
                   pl.BlockSpec((1, T_out, 1), lambda b: (b, 0, 0)),
                   pl.BlockSpec((1, 1, 1), lambda b: (b, 0, 0))),
        out_shape=(jax.ShapeDtypeStruct((B, T_out, D), jnp.float32),
                   jax.ShapeDtypeStruct((B, T_out, 1), jnp.int32),
                   jax.ShapeDtypeStruct((B, 1, 1), jnp.float32)),
        compiler_params=pltpu.CompilerParams(dimension_semantics=("parallel",)),
    )(h0, *weights)

    loss = jnp.sum(loss_sum) / (B * T_out * D)
    # straight-through fwd value == quantized z; dictionary/commitment losses share fwd value
    # TODO(synk): stop-gradient / straight-through estimator not modelled (forward only).
    return EncoderOutput(z_q=z_q, dictionary_loss=loss, commitment_loss=loss,
                         indices=idx.reshape(B, T_out))


def gpt_forward(p, g: GPTConfig, idx_tokens, targets):
    B, T = idx_tokens.shape
    E, V = g.n_embd, g.vocab_size
    h0 = p["wte"][idx_tokens] + p["wpe"][:T][None]

    blk = p["blocks"]
    weights = (blk["ln"], blk["wqkv"], blk["wo"], blk["wfc"], blk["wmlp"],
               p["ln_f_w"], p["wte"])
    kern = functools.partial(_gpt_kernel, n_head=g.n_head, n_layer=g.n_layer)
    logits, loss_sum = pl.pallas_call(
        kern,
        grid=(B,),
        in_specs=[pl.BlockSpec((1, T, E), lambda b: (b, 0, 0)),
                  pl.BlockSpec((1, T, 1), lambda b: (b, 0, 0))]
                 + [_full_spec(w.shape) for w in weights],
        out_specs=(pl.BlockSpec((1, T, V), lambda b: (b, 0, 0)),
                   pl.BlockSpec((1, 1, 1), lambda b: (b, 0, 0))),
        out_shape=(jax.ShapeDtypeStruct((B, T, V), jnp.float32),
                   jax.ShapeDtypeStruct((B, 1, 1), jnp.float32)),
        compiler_params=pltpu.CompilerParams(dimension_semantics=("parallel",)),
    )(h0, targets.reshape(B, T, 1).astype(jnp.int32), *weights)

    loss = jnp.sum(loss_sum) / (B * T)
    return logits, loss


def encoder_decoder_forward(params, x, enc_cfg: EncoderConfig, gpt_cfg: GPTConfig):
    enc_output = encoder_forward(params["encoder"], x, enc_cfg)
    seq = jnp.concatenate([enc_output.indices, x], axis=1)
    inputs = seq[:, :-1]
    targets = seq[:, 1:]
    logits, loss = gpt_forward(params["gpt"], gpt_cfg, inputs, targets)
    return enc_output, logits, loss


# ----------------------------- parameter init -----------------------------

class KeyGen:
    def __init__(self, key):
        self.key = key

    def __call__(self):
        self.key, k = jax.random.split(self.key)
        return k


def _normal(kg, shape, std=0.02):
    return std * jax.random.normal(kg(), shape, jnp.float32)


def init_block_stack(kg, depth, E, n_head):
    """nanoGPT Blocks (bias=False), weights stacked over layers, attention head-major.
    Large matmul weights stored bf16 (halved DMA bytes), LN scales fp32."""
    hd = E // n_head
    return dict(
        ln=jnp.ones((2 * depth, E), jnp.float32),                           # [ln1, ln2] / layer
        wqkv=_normal(kg, (3 * depth * n_head, E, hd)).astype(jnp.bfloat16),  # layer-major [q|k|v] heads
        wo=_normal(kg, (depth * n_head, hd, E)).astype(jnp.bfloat16),
        wfc=_normal(kg, (depth, E, 4 * E)).astype(jnp.bfloat16),
        wmlp=_normal(kg, (depth, 4 * E, E)).astype(jnp.bfloat16),
    )


def init_cross_attn(kg, E, n_head, mlp_ratio):
    hd = E // n_head
    Hm = E * mlp_ratio
    lnpack = jnp.concatenate([
        jnp.ones((1, E), jnp.float32), jnp.zeros((1, E), jnp.float32),   # ln_q w, b
        jnp.ones((1, E), jnp.float32), jnp.zeros((1, E), jnp.float32),   # ln_kv w, b
        jnp.ones((1, E), jnp.float32), jnp.zeros((1, E), jnp.float32),   # ln2 w, b
        jnp.zeros((1, E), jnp.float32),                                  # out-proj bias
        jnp.zeros((1, E), jnp.float32),                                  # mlp-proj bias
    ], axis=0)                                                           # (8, E)
    return dict(
        lnpack=lnpack,
        wqkv=_normal(kg, (3 * n_head, E, hd)).astype(jnp.bfloat16),      # [q|k|v] heads
        bqkv=jnp.zeros((3 * n_head, hd), jnp.float32),
        wo=_normal(kg, (n_head, hd, E)).astype(jnp.bfloat16),
        wfc=_normal(kg, (E, Hm)).astype(jnp.bfloat16),
        bfc=jnp.zeros((1, Hm), jnp.float32),
        wproj=_normal(kg, (Hm, E)).astype(jnp.bfloat16),
    )


def init_encoder(kg, cfg: EncoderConfig):
    E = cfg.embed_dim
    limit = 3 ** 0.5
    return dict(
        embedding=_normal(kg, (cfg.input_vocab_size, E)),
        pos_enc=_normal(kg, (cfg.input_tokens, E)),
        blocks=init_block_stack(kg, cfg.depth, E, cfg.num_heads),
        # row 0: query tokens (zeros, as in torch), row 1: query positional encoding
        qtok_qpe=jnp.concatenate(
            [jnp.zeros((1, cfg.output_tokens, E), jnp.float32),
             _normal(kg, (1, cfg.output_tokens, E))], axis=0),
        cross=init_cross_attn(kg, E, cfg.num_heads, cfg.mlp_ratio),
        qblocks=init_block_stack(kg, cfg.query_depth, E, cfg.num_heads),
        qp_w=_normal(kg, (E, cfg.output_dim)),
        qp_b=jnp.zeros((1, cfg.output_dim), jnp.float32),
        vq_e=jax.random.uniform(kg(), (cfg.output_dim, cfg.output_vocab_size),
                                jnp.float32, -limit, limit),
    )


def init_gpt(kg, g: GPTConfig):
    E = g.n_embd
    return dict(
        wte=_normal(kg, (g.vocab_size, E)),   # fp32 master (embedding gather + tied lm_head)
        wpe=_normal(kg, (g.block_size, E)),
        blocks=init_block_stack(kg, g.n_layer, E, g.n_head),
        ln_f_w=jnp.ones((1, E), jnp.float32),
    )


# ----------------------------- main -----------------------------

if __name__ == "__main__":
    enc_cfg = EncoderConfig(
        input_vocab_size=64, output_vocab_size=32, embed_dim=32, num_heads=4,
        mlp_ratio=4, depth=1, query_depth=1, input_tokens=16, output_tokens=8,
        output_dim=16, dropout=0.0)
    gpt_cfg = GPTConfig(
        block_size=32, vocab_size=64, n_layer=1, n_head=4, n_embd=32,
        dropout=0.0, bias=False)

    kg = KeyGen(jax.random.PRNGKey(42))
    params = dict(encoder=init_encoder(kg, enc_cfg), gpt=init_gpt(kg, gpt_cfg))

    x = jax.random.randint(jax.random.PRNGKey(0), (2, enc_cfg.input_tokens),
                           0, enc_cfg.input_vocab_size, dtype=jnp.int32)

    fwd = jax.jit(lambda p, t: encoder_decoder_forward(p, t, enc_cfg, gpt_cfg))
    enc_out, logits, loss = fwd(params, x)
    jax.block_until_ready((enc_out, logits, loss))

    assert enc_out.z_q.shape == (2, enc_cfg.output_tokens, enc_cfg.output_dim)
    assert enc_out.indices.shape == (2, enc_cfg.output_tokens)
    assert logits.shape == (2, enc_cfg.output_tokens + enc_cfg.input_tokens - 1,
                            gpt_cfg.vocab_size)
    assert loss.shape == ()
    assert bool(jnp.isfinite(loss))
    print("KERNEL_OK")
</pallas_src>

<mosaic_0001>
module attributes {stable_mosaic.version = 11 : i64} {
  func.func @_encoder_kernel(%arg0: i32, %arg1: memref<1x16x32xf32, #tpu.memory_space<vmem>>, %arg2: memref<2x8x32xf32, #tpu.memory_space<vmem>>, %arg3: memref<2x32xf32, #tpu.memory_space<vmem>>, %arg4: memref<12x32x8xbf16, #tpu.memory_space<vmem>>, %arg5: memref<4x8x32xbf16, #tpu.memory_space<vmem>>, %arg6: memref<1x32x128xbf16, #tpu.memory_space<vmem>>, %arg7: memref<1x128x32xbf16, #tpu.memory_space<vmem>>, %arg8: memref<8x32xf32, #tpu.memory_space<vmem>>, %arg9: memref<12x32x8xbf16, #tpu.memory_space<vmem>>, %arg10: memref<12x8xf32, #tpu.memory_space<vmem>>, %arg11: memref<4x8x32xbf16, #tpu.memory_space<vmem>>, %arg12: memref<32x128xbf16, #tpu.memory_space<vmem>>, %arg13: memref<1x128xf32, #tpu.memory_space<vmem>>, %arg14: memref<128x32xbf16, #tpu.memory_space<vmem>>, %arg15: memref<2x32xf32, #tpu.memory_space<vmem>>, %arg16: memref<12x32x8xbf16, #tpu.memory_space<vmem>>, %arg17: memref<4x8x32xbf16, #tpu.memory_space<vmem>>, %arg18: memref<1x32x128xbf16, #tpu.memory_space<vmem>>, %arg19: memref<1x128x32xbf16, #tpu.memory_space<vmem>>, %arg20: memref<32x16xf32, #tpu.memory_space<vmem>>, %arg21: memref<1x16xf32, #tpu.memory_space<vmem>>, %arg22: memref<16x32xf32, #tpu.memory_space<vmem>>, %arg23: memref<1x8x16xf32, #tpu.memory_space<vmem>>, %arg24: memref<1x8x1xi32, #tpu.memory_space<vmem>>, %arg25: memref<1x1x1xf32, #tpu.memory_space<vmem>>) attributes {dimension_semantics = [#tpu.dimension_semantics<parallel>], iteration_bounds = array<i64: 2>, scalar_prefetch = 0 : i64, scratch_operands = 0 : i64, tpu.core_type = #tpu.core_type<tc>, window_params = [{transform_indices = @transform_0, window_bounds = array<i64: 1, 16, 32>}, {pipeline_mode = #tpu.pipeline_mode<synchronous>, transform_indices = @transform_1, window_bounds = array<i64: 2, 8, 32>}, {pipeline_mode = #tpu.pipeline_mode<synchronous>, transform_indices = @transform_2, window_bounds = array<i64: 2, 32>}, {pipeline_mode = #tpu.pipeline_mode<synchronous>, transform_indices = @transform_3, window_bounds = array<i64: 12, 32, 8>}, {pipeline_mode = #tpu.pipeline_mode<synchronous>, transform_indices = @transform_4, window_bounds = array<i64: 4, 8, 32>}, {pipeline_mode = #tpu.pipeline_mode<synchronous>, transform_indices = @transform_5, window_bounds = array<i64: 1, 32, 128>}, {pipeline_mode = #tpu.pipeline_mode<synchronous>, transform_indices = @transform_6, window_bounds = array<i64: 1, 128, 32>}, {pipeline_mode = #tpu.pipeline_mode<synchronous>, transform_indices = @transform_7, window_bounds = array<i64: 8, 32>}, {pipeline_mode = #tpu.pipeline_mode<synchronous>, transform_indices = @transform_8, window_bounds = array<i64: 12, 32, 8>}, {pipeline_mode = #tpu.pipeline_mode<synchronous>, transform_indices = @transform_9, window_bounds = array<i64: 12, 8>}, {pipeline_mode = #tpu.pipeline_mode<synchronous>, transform_indices = @transform_10, window_bounds = array<i64: 4, 8, 32>}, {pipeline_mode = #tpu.pipeline_mode<synchronous>, transform_indices = @transform_11, window_bounds = array<i64: 32, 128>}, {pipeline_mode = #tpu.pipeline_mode<synchronous>, transform_indices = @transform_12, window_bounds = array<i64: 1, 128>}, {pipeline_mode = #tpu.pipeline_mode<synchronous>, transform_indices = @transform_13, window_bounds = array<i64: 128, 32>}, {pipeline_mode = #tpu.pipeline_mode<synchronous>, transform_indices = @transform_14, window_bounds = array<i64: 2, 32>}, {pipeline_mode = #tpu.pipeline_mode<synchronous>, transform_indices = @transform_15, window_bounds = array<i64: 12, 32, 8>}, {pipeline_mode = #tpu.pipeline_mode<synchronous>, transform_indices = @transform_16, window_bounds = array<i64: 4, 8, 32>}, {pipeline_mode = #tpu.pipeline_mode<synchronous>, transform_indices = @transform_17, window_bounds = array<i64: 1, 32, 128>}, {pipeline_mode = #tpu.pipeline_mode<synchronous>, transform_indices = @transform_18, window_bounds = array<i64: 1, 128, 32>}, {pipeline_mode = #tpu.pipeline_mode<synchronous>, transform_indices = @transform_19, window_bounds = array<i64: 32, 16>}, {pipeline_mode = #tpu.pipeline_mode<synchronous>, transform_indices = @transform_20, window_bounds = array<i64: 1, 16>}, {pipeline_mode = #tpu.pipeline_mode<synchronous>, transform_indices = @transform_21, window_bounds = array<i64: 16, 32>}, {transform_indices = @transform_22, window_bounds = array<i64: 1, 8, 16>}, {transform_indices = @transform_23, window_bounds = array<i64: 1, 8, 1>}, {transform_indices = @transform_24, window_bounds = array<i64: 1, 1, 1>}]} {
    %c0 = arith.constant 0 : index
    %c0_0 = arith.constant 0 : index
    %c0_1 = arith.constant 0 : index
    %0 = vector.load %arg1[%c0, %c0_0, %c0_1] : memref<1x16x32xf32, #tpu.memory_space<vmem>>, vector<1x16x32xf32>
    %1 = vector.shape_cast %0 : vector<1x16x32xf32> to vector<16x32xf32>
    %2 = tpu.iota {dimensions = array<i32: 0>} : vector<16x16xi32>
    %3 = tpu.iota {dimensions = array<i32: 1>} : vector<16x16xi32>
    %4 = arith.cmpi sle, %3, %2 : vector<16x16xi32>
    %c0_2 = arith.constant 0 : index
    %c0_3 = arith.constant 0 : index
    %5 = vector.load %arg3[%c0_2, %c0_3] : memref<2x32xf32, #tpu.memory_space<vmem>>, vector<1x32xf32>
    %cst = arith.constant dense<0.000000e+00> : vector<16xf32>
    %6 = vector.multi_reduction <add>, %1, %cst [1] : vector<16x32xf32> to vector<16xf32>
    %7 = vector.shape_cast %6 : vector<16xf32> to vector<16x1xf32>
    %cst_4 = arith.constant 3.200000e+01 : f32
    %8 = vector.broadcast %cst_4 : f32 to vector<16x1xf32>
    %9 = arith.divf %7, %8 : vector<16x1xf32>
    %10 = vector.broadcast %9 : vector<16x1xf32> to vector<16x32xf32>
    %11 = arith.subf %1, %10 : vector<16x32xf32>
    %12 = arith.mulf %11, %11 : vector<16x32xf32>
    %cst_5 = arith.constant dense<0.000000e+00> : vector<16xf32>
    %13 = vector.multi_reduction <add>, %12, %cst_5 [1] : vector<16x32xf32> to vector<16xf32>
    %14 = vector.shape_cast %13 : vector<16xf32> to vector<16x1xf32>
    %cst_6 = arith.constant 3.200000e+01 : f32
    %15 = vector.broadcast %cst_6 : f32 to vector<16x1xf32>
    %16 = arith.divf %14, %15 : vector<16x1xf32>
    %17 = vector.broadcast %9 : vector<16x1xf32> to vector<16x32xf32>
    %18 = arith.subf %1, %17 : vector<16x32xf32>
    %cst_7 = arith.constant 9.99999974E-6 : f32
    %19 = vector.broadcast %cst_7 : f32 to vector<16x1xf32>
    %20 = arith.addf %16, %19 : vector<16x1xf32>
    %21 = math.rsqrt %20 : vector<16x1xf32>
    %22 = vector.broadcast %21 : vector<16x1xf32> to vector<16x32xf32>
    %23 = arith.mulf %18, %22 : vector<16x32xf32>
    %24 = vector.broadcast %5 : vector<1x32xf32> to vector<16x32xf32>
    %25 = arith.mulf %23, %24 : vector<16x32xf32>
    %26 = arith.truncf %25 : vector<16x32xf32> to vector<16x32xbf16>
    %cst_8 = arith.constant 0.000000e+00 : f32
    %27 = vector.broadcast %cst_8 : f32 to vector<16x32xf32>
    %c0_9 = arith.constant 0 : index
    %c0_10 = arith.constant 0 : index
    %c0_11 = arith.constant 0 : index
    %28 = vector.load %arg4[%c0_9, %c0_10, %c0_11] : memref<12x32x8xbf16, #tpu.memory_space<vmem>>, vector<1x32x8xbf16>
    %29 = vector.shape_cast %28 : vector<1x32x8xbf16> to vector<32x8xbf16>
    %cst_12 = arith.constant dense<0.000000e+00> : vector<16x8xf32>
    %30 = tpu.matmul %26, %29, %cst_12 {dimension_numbers = #tpu.dot_dimension_numbers<[1], [0], [0], [1], [0, 0, 1, 1], [], []>} : vector<16x32xbf16>, vector<32x8xbf16>, vector<16x8xf32> -> vector<16x8xf32>
    %c4 = arith.constant 4 : index
    %c0_13 = arith.constant 0 : index
    %c0_14 = arith.constant 0 : index
    %31 = vector.load %arg4[%c4, %c0_13, %c0_14] : memref<12x32x8xbf16, #tpu.memory_space<vmem>>, vector<1x32x8xbf16>
    %32 = vector.shape_cast %31 : vector<1x32x8xbf16> to vector<32x8xbf16>
    %cst_15 = arith.constant dense<0.000000e+00> : vector<16x8xf32>
    %33 = tpu.matmul %26, %32, %cst_15 {dimension_numbers = #tpu.dot_dimension_numbers<[1], [0], [0], [1], [0, 0, 1, 1], [], []>} : vector<16x32xbf16>, vector<32x8xbf16>, vector<16x8xf32> -> vector<16x8xf32>
    %c8 = arith.constant 8 : index
    %c0_16 = arith.constant 0 : index
    %c0_17 = arith.constant 0 : index
    %34 = vector.load %arg4[%c8, %c0_16, %c0_17] : memref<12x32x8xbf16, #tpu.memory_space<vmem>>, vector<1x32x8xbf16>
    %35 = vector.shape_cast %34 : vector<1x32x8xbf16> to vector<32x8xbf16>
    %cst_18 = arith.constant dense<0.000000e+00> : vector<16x8xf32>
    %36 = tpu.matmul %26, %35, %cst_18 {dimension_numbers = #tpu.dot_dimension_numbers<[1], [0], [0], [1], [0, 0, 1, 1], [], []>} : vector<16x32xbf16>, vector<32x8xbf16>, vector<16x8xf32> -> vector<16x8xf32>
    %37 = arith.truncf %30 : vector<16x8xf32> to vector<16x8xbf16>
    %38 = arith.truncf %33 : vector<16x8xf32> to vector<16x8xbf16>
    %cst_19 = arith.constant dense<0.000000e+00> : vector<16x16xf32>
    %39 = tpu.matmul %37, %38, %cst_19 {dimension_numbers = #tpu.dot_dimension_numbers<[1], [1], [0], [0], [0, 0, 1, 0], [], []>} : vector<16x8xbf16>, vector<16x8xbf16>, vector<16x16xf32> -> vector<16x16xf32>
    %cst_20 = arith.constant 0.353553385 : f32
    %40 = vector.broadcast %cst_20 : f32 to vector<16x16xf32>
    %41 = arith.mulf %39, %40 : vector<16x16xf32>
    %cst_21 = arith.constant -1.000000e+30 : f32
    %42 = vector.broadcast %cst_21 : f32 to vector<16x16xf32>
    %43 = arith.select %4, %41, %42 : vector<16x16xi1>, vector<16x16xf32>
    %cst_22 = arith.constant dense<0xFF800000> : vector<16xf32>
    %44 = vector.multi_reduction <maximumf>, %43, %cst_22 [1] : vector<16x16xf32> to vector<16xf32>
    %45 = vector.shape_cast %44 : vector<16xf32> to vector<16x1xf32>
    %46 = vector.broadcast %45 : vector<16x1xf32> to vector<16x16xf32>
    %47 = arith.subf %43, %46 : vector<16x16xf32>
    %48 = math.exp %47 : vector<16x16xf32>
    %cst_23 = arith.constant dense<0.000000e+00> : vector<16xf32>
    %49 = vector.multi_reduction <add>, %48, %cst_23 [1] : vector<16x16xf32> to vector<16xf32>
    %50 = vector.shape_cast %49 : vector<16xf32> to vector<16x1xf32>
    %51 = tpu.reciprocal %50 {approx = true} : vector<16x1xf32> -> vector<16x1xf32>
    %52 = vector.broadcast %51 : vector<16x1xf32> to vector<16x16xf32>
    %53 = arith.mulf %48, %52 : vector<16x16xf32>
    %54 = arith.truncf %53 : vector<16x16xf32> to vector<16x16xbf16>
    %55 = arith.truncf %36 : vector<16x8xf32> to vector<16x8xbf16>
    %cst_24 = arith.constant dense<0.000000e+00> : vector<16x8xf32>
    %56 = tpu.matmul %54, %55, %cst_24 {dimension_numbers = #tpu.dot_dimension_numbers<[1], [0], [0], [1], [0, 0, 1, 1], [], []>} : vector<16x16xbf16>, vector<16x8xbf16>, vector<16x8xf32> -> vector<16x8xf32>
    %57 = arith.truncf %56 : vector<16x8xf32> to vector<16x8xbf16>
    %c0_25 = arith.constant 0 : index
    %c0_26 = arith.constant 0 : index
    %c0_27 = arith.constant 0 : index
    %58 = vector.load %arg5[%c0_25, %c0_26, %c0_27] : memref<4x8x32xbf16, #tpu.memory_space<vmem>>, vector<1x8x32xbf16>
    %59 = vector.shape_cast %58 : vector<1x8x32xbf16> to vector<8x32xbf16>
    %cst_28 = arith.constant dense<0.000000e+00> : vector<16x32xf32>
    %60 = tpu.matmul %57, %59, %cst_28 {dimension_numbers = #tpu.dot_dimension_numbers<[1], [0], [0], [1], [0, 0, 1, 1], [], []>} : vector<16x8xbf16>, vector<8x32xbf16>, vector<16x32xf32> -> vector<16x32xf32>
    %61 = arith.addf %27, %60 : vector<16x32xf32>
    %c1 = arith.constant 1 : index
    %c0_29 = arith.constant 0 : index
    %c0_30 = arith.constant 0 : index
    %62 = vector.load %arg4[%c1, %c0_29, %c0_30] : memref<12x32x8xbf16, #tpu.memory_space<vmem>>, vector<1x32x8xbf16>
    %63 = vector.shape_cast %62 : vector<1x32x8xbf16> to vector<32x8xbf16>
    %cst_31 = arith.constant dense<0.000000e+00> : vector<16x8xf32>
    %64 = tpu.matmul %26, %63, %cst_31 {dimension_numbers = #tpu.dot_dimension_numbers<[1], [0], [0], [1], [0, 0, 1, 1], [], []>} : vector<16x32xbf16>, vector<32x8xbf16>, vector<16x8xf32> -> vector<16x8xf32>
    %c5 = arith.constant 5 : index
    %c0_32 = arith.constant 0 : index
    %c0_33 = arith.constant 0 : index
    %65 = vector.load %arg4[%c5, %c0_32, %c0_33] : memref<12x32x8xbf16, #tpu.memory_space<vmem>>, vector<1x32x8xbf16>
    %66 = vector.shape_cast %65 : vector<1x32x8xbf16> to vector<32x8xbf16>
    %cst_34 = arith.constant dense<0.000000e+00> : vector<16x8xf32>
    %67 = tpu.matmul %26, %66, %cst_34 {dimension_numbers = #tpu.dot_dimension_numbers<[1], [0], [0], [1], [0, 0, 1, 1], [], []>} : vector<16x32xbf16>, vector<32x8xbf16>, vector<16x8xf32> -> vector<16x8xf32>
    %c9 = arith.constant 9 : index
    %c0_35 = arith.constant 0 : index
    %c0_36 = arith.constant 0 : index
    %68 = vector.load %arg4[%c9, %c0_35, %c0_36] : memref<12x32x8xbf16, #tpu.memory_space<vmem>>, vector<1x32x8xbf16>
    %69 = vector.shape_cast %68 : vector<1x32x8xbf16> to vector<32x8xbf16>
    %cst_37 = arith.constant dense<0.000000e+00> : vector<16x8xf32>
    %70 = tpu.matmul %26, %69, %cst_37 {dimension_numbers = #tpu.dot_dimension_numbers<[1], [0], [0], [1], [0, 0, 1, 1], [], []>} : vector<16x32xbf16>, vector<32x8xbf16>, vector<16x8xf32> -> vector<16x8xf32>
    %71 = arith.truncf %64 : vector<16x8xf32> to vector<16x8xbf16>
    %72 = arith.truncf %67 : vector<16x8xf32> to vector<16x8xbf16>
    %cst_38 = arith.constant dense<0.000000e+00> : vector<16x16xf32>
    %73 = tpu.matmul %71, %72, %cst_38 {dimension_numbers = #tpu.dot_dimension_numbers<[1], [1], [0], [0], [0, 0, 1, 0], [], []>} : vector<16x8xbf16>, vector<16x8xbf16>, vector<16x16xf32> -> vector<16x16xf32>
    %cst_39 = arith.constant 0.353553385 : f32
    %74 = vector.broadcast %cst_39 : f32 to vector<16x16xf32>
    %75 = arith.mulf %73, %74 : vector<16x16xf32>
    %cst_40 = arith.constant -1.000000e+30 : f32
    %76 = vector.broadcast %cst_40 : f32 to vector<16x16xf32>
    %77 = arith.select %4, %75, %76 : vector<16x16xi1>, vector<16x16xf32>
    %cst_41 = arith.constant dense<0xFF800000> : vector<16xf32>
    %78 = vector.multi_reduction <maximumf>, %77, %cst_41 [1] : vector<16x16xf32> to vector<16xf32>
    %79 = vector.shape_cast %78 : vector<16xf32> to vector<16x1xf32>
    %80 = vector.broadcast %79 : vector<16x1xf32> to vector<16x16xf32>
    %81 = arith.subf %77, %80 : vector<16x16xf32>
    %82 = math.exp %81 : vector<16x16xf32>
    %cst_42 = arith.constant dense<0.000000e+00> : vector<16xf32>
    %83 = vector.multi_reduction <add>, %82, %cst_42 [1] : vector<16x16xf32> to vector<16xf32>
    %84 = vector.shape_cast %83 : vector<16xf32> to vector<16x1xf32>
    %85 = tpu.reciprocal %84 {approx = true} : vector<16x1xf32> -> vector<16x1xf32>
    %86 = vector.broadcast %85 : vector<16x1xf32> to vector<16x16xf32>
    %87 = arith.mulf %82, %86 : vector<16x16xf32>
    %88 = arith.truncf %87 : vector<16x16xf32> to vector<16x16xbf16>
    %89 = arith.truncf %70 : vector<16x8xf32> to vector<16x8xbf16>
    %cst_43 = arith.constant dense<0.000000e+00> : vector<16x8xf32>
    %90 = tpu.matmul %88, %89, %cst_43 {dimension_numbers = #tpu.dot_dimension_numbers<[1], [0], [0], [1], [0, 0, 1, 1], [], []>} : vector<16x16xbf16>, vector<16x8xbf16>, vector<16x8xf32> -> vector<16x8xf32>
    %91 = arith.truncf %90 : vector<16x8xf32> to vector<16x8xbf16>
    %c1_44 = arith.constant 1 : index
    %c0_45 = arith.constant 0 : index
    %c0_46 = arith.constant 0 : index
    %92 = vector.load %arg5[%c1_44, %c0_45, %c0_46] : memref<4x8x32xbf16, #tpu.memory_space<vmem>>, vector<1x8x32xbf16>
    %93 = vector.shape_cast %92 : vector<1x8x32xbf16> to vector<8x32xbf16>
    %cst_47 = arith.constant dense<0.000000e+00> : vector<16x32xf32>
    %94 = tpu.matmul %91, %93, %cst_47 {dimension_numbers = #tpu.dot_dimension_numbers<[1], [0], [0], [1], [0, 0, 1, 1], [], []>} : vector<16x8xbf16>, vector<8x32xbf16>, vector<16x32xf32> -> vector<16x32xf32>
    %95 = arith.addf %61, %94 : vector<16x32xf32>
    %c2 = arith.constant 2 : index
    %c0_48 = arith.constant 0 : index
    %c0_49 = arith.constant 0 : index
    %96 = vector.load %arg4[%c2, %c0_48, %c0_49] : memref<12x32x8xbf16, #tpu.memory_space<vmem>>, vector<1x32x8xbf16>
    %97 = vector.shape_cast %96 : vector<1x32x8xbf16> to vector<32x8xbf16>
    %cst_50 = arith.constant dense<0.000000e+00> : vector<16x8xf32>
    %98 = tpu.matmul %26, %97, %cst_50 {dimension_numbers = #tpu.dot_dimension_numbers<[1], [0], [0], [1], [0, 0, 1, 1], [], []>} : vector<16x32xbf16>, vector<32x8xbf16>, vector<16x8xf32> -> vector<16x8xf32>
    %c6 = arith.constant 6 : index
    %c0_51 = arith.constant 0 : index
    %c0_52 = arith.constant 0 : index
    %99 = vector.load %arg4[%c6, %c0_51, %c0_52] : memref<12x32x8xbf16, #tpu.memory_space<vmem>>, vector<1x32x8xbf16>
    %100 = vector.shape_cast %99 : vector<1x32x8xbf16> to vector<32x8xbf16>
    %cst_53 = arith.constant dense<0.000000e+00> : vector<16x8xf32>
    %101 = tpu.matmul %26, %100, %cst_53 {dimension_numbers = #tpu.dot_dimension_numbers<[1], [0], [0], [1], [0, 0, 1, 1], [], []>} : vector<16x32xbf16>, vector<32x8xbf16>, vector<16x8xf32> -> vector<16x8xf32>
    %c10 = arith.constant 10 : index
    %c0_54 = arith.constant 0 : index
    %c0_55 = arith.constant 0 : index
    %102 = vector.load %arg4[%c10, %c0_54, %c0_55] : memref<12x32x8xbf16, #tpu.memory_space<vmem>>, vector<1x32x8xbf16>
    %103 = vector.shape_cast %102 : vector<1x32x8xbf16> to vector<32x8xbf16>
    %cst_56 = arith.constant dense<0.000000e+00> : vector<16x8xf32>
    %104 = tpu.matmul %26, %103, %cst_56 {dimension_numbers = #tpu.dot_dimension_numbers<[1], [0], [0], [1], [0, 0, 1, 1], [], []>} : vector<16x32xbf16>, vector<32x8xbf16>, vector<16x8xf32> -> vector<16x8xf32>
    %105 = arith.truncf %98 : vector<16x8xf32> to vector<16x8xbf16>
    %106 = arith.truncf %101 : vector<16x8xf32> to vector<16x8xbf16>
    %cst_57 = arith.constant dense<0.000000e+00> : vector<16x16xf32>
    %107 = tpu.matmul %105, %106, %cst_57 {dimension_numbers = #tpu.dot_dimension_numbers<[1], [1], [0], [0], [0, 0, 1, 0], [], []>} : vector<16x8xbf16>, vector<16x8xbf16>, vector<16x16xf32> -> vector<16x16xf32>
    %cst_58 = arith.constant 0.353553385 : f32
    %108 = vector.broadcast %cst_58 : f32 to vector<16x16xf32>
    %109 = arith.mulf %107, %108 : vector<16x16xf32>
    %cst_59 = arith.constant -1.000000e+30 : f32
    %110 = vector.broadcast %cst_59 : f32 to vector<16x16xf32>
    %111 = arith.select %4, %109, %110 : vector<16x16xi1>, vector<16x16xf32>
    %cst_60 = arith.constant dense<0xFF800000> : vector<16xf32>
    %112 = vector.multi_reduction <maximumf>, %111, %cst_60 [1] : vector<16x16xf32> to vector<16xf32>
    %113 = vector.shape_cast %112 : vector<16xf32> to vector<16x1xf32>
    %114 = vector.broadcast %113 : vector<16x1xf32> to vector<16x16xf32>
    %115 = arith.subf %111, %114 : vector<16x16xf32>
    %116 = math.exp %115 : vector<16x16xf32>
    %cst_61 = arith.constant dense<0.000000e+00> : vector<16xf32>
    %117 = vector.multi_reduction <add>, %116, %cst_61 [1] : vector<16x16xf32> to vector<16xf32>
    %118 = vector.shape_cast %117 : vector<16xf32> to vector<16x1xf32>
    %119 = tpu.reciprocal %118 {approx = true} : vector<16x1xf32> -> vector<16x1xf32>
    %120 = vector.broadcast %119 : vector<16x1xf32> to vector<16x16xf32>
    %121 = arith.mulf %116, %120 : vector<16x16xf32>
    %122 = arith.truncf %121 : vector<16x16xf32> to vector<16x16xbf16>
    %123 = arith.truncf %104 : vector<16x8xf32> to vector<16x8xbf16>
    %cst_62 = arith.constant dense<0.000000e+00> : vector<16x8xf32>
    %124 = tpu.matmul %122, %123, %cst_62 {dimension_numbers = #tpu.dot_dimension_numbers<[1], [0], [0], [1], [0, 0, 1, 1], [], []>} : vector<16x16xbf16>, vector<16x8xbf16>, vector<16x8xf32> -> vector<16x8xf32>
    %125 = arith.truncf %124 : vector<16x8xf32> to vector<16x8xbf16>
    %c2_63 = arith.constant 2 : index
    %c0_64 = arith.constant 0 : index
    %c0_65 = arith.constant 0 : index
    %126 = vector.load %arg5[%c2_63, %c0_64, %c0_65] : memref<4x8x32xbf16, #tpu.memory_space<vmem>>, vector<1x8x32xbf16>
    %127 = vector.shape_cast %126 : vector<1x8x32xbf16> to vector<8x32xbf16>
    %cst_66 = arith.constant dense<0.000000e+00> : vector<16x32xf32>
    %128 = tpu.matmul %125, %127, %cst_66 {dimension_numbers = #tpu.dot_dimension_numbers<[1], [0], [0], [1], [0, 0, 1, 1], [], []>} : vector<16x8xbf16>, vector<8x32xbf16>, vector<16x32xf32> -> vector<16x32xf32>
    %129 = arith.addf %95, %128 : vector<16x32xf32>
    %c3 = arith.constant 3 : index
    %c0_67 = arith.constant 0 : index
    %c0_68 = arith.constant 0 : index
    %130 = vector.load %arg4[%c3, %c0_67, %c0_68] : memref<12x32x8xbf16, #tpu.memory_space<vmem>>, vector<1x32x8xbf16>
    %131 = vector.shape_cast %130 : vector<1x32x8xbf16> to vector<32x8xbf16>
    %cst_69 = arith.constant dense<0.000000e+00> : vector<16x8xf32>
    %132 = tpu.matmul %26, %131, %cst_69 {dimension_numbers = #tpu.dot_dimension_numbers<[1], [0], [0], [1], [0, 0, 1, 1], [], []>} : vector<16x32xbf16>, vector<32x8xbf16>, vector<16x8xf32> -> vector<16x8xf32>
    %c7 = arith.constant 7 : index
    %c0_70 = arith.constant 0 : index
    %c0_71 = arith.constant 0 : index
    %133 = vector.load %arg4[%c7, %c0_70, %c0_71] : memref<12x32x8xbf16, #tpu.memory_space<vmem>>, vector<1x32x8xbf16>
    %134 = vector.shape_cast %133 : vector<1x32x8xbf16> to vector<32x8xbf16>
    %cst_72 = arith.constant dense<0.000000e+00> : vector<16x8xf32>
    %135 = tpu.matmul %26, %134, %cst_72 {dimension_numbers = #tpu.dot_dimension_numbers<[1], [0], [0], [1], [0, 0, 1, 1], [], []>} : vector<16x32xbf16>, vector<32x8xbf16>, vector<16x8xf32> -> vector<16x8xf32>
    %c11 = arith.constant 11 : index
    %c0_73 = arith.constant 0 : index
    %c0_74 = arith.constant 0 : index
    %136 = vector.load %arg4[%c11, %c0_73, %c0_74] : memref<12x32x8xbf16, #tpu.memory_space<vmem>>, vector<1x32x8xbf16>
    %137 = vector.shape_cast %136 : vector<1x32x8xbf16> to vector<32x8xbf16>
    %cst_75 = arith.constant dense<0.000000e+00> : vector<16x8xf32>
    %138 = tpu.matmul %26, %137, %cst_75 {dimension_numbers = #tpu.dot_dimension_numbers<[1], [0], [0], [1], [0, 0, 1, 1], [], []>} : vector<16x32xbf16>, vector<32x8xbf16>, vector<16x8xf32> -> vector<16x8xf32>
    %139 = arith.truncf %132 : vector<16x8xf32> to vector<16x8xbf16>
    %140 = arith.truncf %135 : vector<16x8xf32> to vector<16x8xbf16>
    %cst_76 = arith.constant dense<0.000000e+00> : vector<16x16xf32>
    %141 = tpu.matmul %139, %140, %cst_76 {dimension_numbers = #tpu.dot_dimension_numbers<[1], [1], [0], [0], [0, 0, 1, 0], [], []>} : vector<16x8xbf16>, vector<16x8xbf16>, vector<16x16xf32> -> vector<16x16xf32>
    %cst_77 = arith.constant 0.353553385 : f32
    %142 = vector.broadcast %cst_77 : f32 to vector<16x16xf32>
    %143 = arith.mulf %141, %142 : vector<16x16xf32>
    %cst_78 = arith.constant -1.000000e+30 : f32
    %144 = vector.broadcast %cst_78 : f32 to vector<16x16xf32>
    %145 = arith.select %4, %143, %144 : vector<16x16xi1>, vector<16x16xf32>
    %cst_79 = arith.constant dense<0xFF800000> : vector<16xf32>
    %146 = vector.multi_reduction <maximumf>, %145, %cst_79 [1] : vector<16x16xf32> to vector<16xf32>
    %147 = vector.shape_cast %146 : vector<16xf32> to vector<16x1xf32>
    %148 = vector.broadcast %147 : vector<16x1xf32> to vector<16x16xf32>
    %149 = arith.subf %145, %148 : vector<16x16xf32>
    %150 = math.exp %149 : vector<16x16xf32>
    %cst_80 = arith.constant dense<0.000000e+00> : vector<16xf32>
    %151 = vector.multi_reduction <add>, %150, %cst_80 [1] : vector<16x16xf32> to vector<16xf32>
    %152 = vector.shape_cast %151 : vector<16xf32> to vector<16x1xf32>
    %153 = tpu.reciprocal %152 {approx = true} : vector<16x1xf32> -> vector<16x1xf32>
    %154 = vector.broadcast %153 : vector<16x1xf32> to vector<16x16xf32>
    %155 = arith.mulf %150, %154 : vector<16x16xf32>
    %156 = arith.truncf %155 : vector<16x16xf32> to vector<16x16xbf16>
    %157 = arith.truncf %138 : vector<16x8xf32> to vector<16x8xbf16>
    %cst_81 = arith.constant dense<0.000000e+00> : vector<16x8xf32>
    %158 = tpu.matmul %156, %157, %cst_81 {dimension_numbers = #tpu.dot_dimension_numbers<[1], [0], [0], [1], [0, 0, 1, 1], [], []>} : vector<16x16xbf16>, vector<16x8xbf16>, vector<16x8xf32> -> vector<16x8xf32>
    %159 = arith.truncf %158 : vector<16x8xf32> to vector<16x8xbf16>
    %c3_82 = arith.constant 3 : index
    %c0_83 = arith.constant 0 : index
    %c0_84 = arith.constant 0 : index
    %160 = vector.load %arg5[%c3_82, %c0_83, %c0_84] : memref<4x8x32xbf16, #tpu.memory_space<vmem>>, vector<1x8x32xbf16>
    %161 = vector.shape_cast %160 : vector<1x8x32xbf16> to vector<8x32xbf16>
    %cst_85 = arith.constant dense<0.000000e+00> : vector<16x32xf32>
    %162 = tpu.matmul %159, %161, %cst_85 {dimension_numbers = #tpu.dot_dimension_numbers<[1], [0], [0], [1], [0, 0, 1, 1], [], []>} : vector<16x8xbf16>, vector<8x32xbf16>, vector<16x32xf32> -> vector<16x32xf32>
    %163 = arith.addf %129, %162 : vector<16x32xf32>
    %164 = arith.addf %1, %163 : vector<16x32xf32>
    %c1_86 = arith.constant 1 : index
    %c0_87 = arith.constant 0 : index
    %165 = vector.load %arg3[%c1_86, %c0_87] : memref<2x32xf32, #tpu.memory_space<vmem>>, vector<1x32xf32>
    %cst_88 = arith.constant dense<0.000000e+00> : vector<16xf32>
    %166 = vector.multi_reduction <add>, %164, %cst_88 [1] : vector<16x32xf32> to vector<16xf32>
    %167 = vector.shape_cast %166 : vector<16xf32> to vector<16x1xf32>
    %cst_89 = arith.constant 3.200000e+01 : f32
    %168 = vector.broadcast %cst_89 : f32 to vector<16x1xf32>
    %169 = arith.divf %167, %168 : vector<16x1xf32>
    %170 = vector.broadcast %169 : vector<16x1xf32> to vector<16x32xf32>
    %171 = arith.subf %164, %170 : vector<16x32xf32>
    %172 = arith.mulf %171, %171 : vector<16x32xf32>
    %cst_90 = arith.constant dense<0.000000e+00> : vector<16xf32>
    %173 = vector.multi_reduction <add>, %172, %cst_90 [1] : vector<16x32xf32> to vector<16xf32>
    %174 = vector.shape_cast %173 : vector<16xf32> to vector<16x1xf32>
    %cst_91 = arith.constant 3.200000e+01 : f32
    %175 = vector.broadcast %cst_91 : f32 to vector<16x1xf32>
    %176 = arith.divf %174, %175 : vector<16x1xf32>
    %177 = vector.broadcast %169 : vector<16x1xf32> to vector<16x32xf32>
    %178 = arith.subf %164, %177 : vector<16x32xf32>
    %cst_92 = arith.constant 9.99999974E-6 : f32
    %179 = vector.broadcast %cst_92 : f32 to vector<16x1xf32>
    %180 = arith.addf %176, %179 : vector<16x1xf32>
    %181 = math.rsqrt %180 : vector<16x1xf32>
    %182 = vector.broadcast %181 : vector<16x1xf32> to vector<16x32xf32>
    %183 = arith.mulf %178, %182 : vector<16x32xf32>
    %184 = vector.broadcast %165 : vector<1x32xf32> to vector<16x32xf32>
    %185 = arith.mulf %183, %184 : vector<16x32xf32>
    %186 = arith.truncf %185 : vector<16x32xf32> to vector<16x32xbf16>
    %c0_93 = arith.constant 0 : index
    %c0_94 = arith.constant 0 : index
    %c0_95 = arith.constant 0 : index
    %187 = vector.load %arg6[%c0_93, %c0_94, %c0_95] : memref<1x32x128xbf16, #tpu.memory_space<vmem>>, vector<1x32x128xbf16>
    %188 = vector.shape_cast %187 : vector<1x32x128xbf16> to vector<32x128xbf16>
    %cst_96 = arith.constant dense<0.000000e+00> : vector<16x128xf32>
    %189 = tpu.matmul %186, %188, %cst_96 {dimension_numbers = #tpu.dot_dimension_numbers<[1], [0], [0], [1], [0, 0, 1, 1], [], []>} : vector<16x32xbf16>, vector<32x128xbf16>, vector<16x128xf32> -> vector<16x128xf32>
    %cst_97 = arith.constant 5.000000e-01 : f32
    %190 = vector.broadcast %cst_97 : f32 to vector<16x128xf32>
    %191 = arith.mulf %190, %189 : vector<16x128xf32>
    %cst_98 = arith.constant 0.707106769 : f32
    %192 = vector.broadcast %cst_98 : f32 to vector<16x128xf32>
    %193 = arith.mulf %189, %192 : vector<16x128xf32>
    %194 = math.absf %193 : vector<16x128xf32>
    %cst_99 = arith.constant 0.327591091 : f32
    %195 = vector.broadcast %cst_99 : f32 to vector<16x128xf32>
    %196 = arith.mulf %195, %194 : vector<16x128xf32>
    %cst_100 = arith.constant 1.000000e+00 : f32
    %197 = vector.broadcast %cst_100 : f32 to vector<16x128xf32>
    %198 = arith.addf %197, %196 : vector<16x128xf32>
    %cst_101 = arith.constant 1.000000e+00 : f32
    %199 = vector.broadcast %cst_101 : f32 to vector<16x128xf32>
    %200 = arith.divf %199, %198 : vector<16x128xf32>
    %cst_102 = arith.constant 1.06140542 : f32
    %201 = vector.broadcast %cst_102 : f32 to vector<16x128xf32>
    %202 = arith.mulf %201, %200 : vector<16x128xf32>
    %cst_103 = arith.constant -1.45315206 : f32
    %203 = vector.broadcast %cst_103 : f32 to vector<16x128xf32>
    %204 = arith.addf %202, %203 : vector<16x128xf32>
    %205 = arith.mulf %204, %200 : vector<16x128xf32>
    %cst_104 = arith.constant 1.42141378 : f32
    %206 = vector.broadcast %cst_104 : f32 to vector<16x128xf32>
    %207 = arith.addf %205, %206 : vector<16x128xf32>
    %208 = arith.mulf %207, %200 : vector<16x128xf32>
    %cst_105 = arith.constant -0.284496725 : f32
    %209 = vector.broadcast %cst_105 : f32 to vector<16x128xf32>
    %210 = arith.addf %208, %209 : vector<16x128xf32>
    %211 = arith.mulf %210, %200 : vector<16x128xf32>
    %cst_106 = arith.constant 0.254829586 : f32
    %212 = vector.broadcast %cst_106 : f32 to vector<16x128xf32>
    %213 = arith.addf %211, %212 : vector<16x128xf32>
    %214 = arith.mulf %213, %200 : vector<16x128xf32>
    %cst_107 = arith.constant 0.000000e+00 : f32
    %215 = vector.broadcast %cst_107 : f32 to vector<16x128xf32>
    %216 = arith.subf %215, %194 : vector<16x128xf32>
    %217 = arith.mulf %216, %194 : vector<16x128xf32>
    %218 = math.exp %217 : vector<16x128xf32>
    %219 = arith.mulf %214, %218 : vector<16x128xf32>
    %cst_108 = arith.constant 1.000000e+00 : f32
    %220 = vector.broadcast %cst_108 : f32 to vector<16x128xf32>
    %221 = arith.subf %220, %219 : vector<16x128xf32>
    %cst_109 = arith.constant 0.000000e+00 : f32
    %222 = vector.broadcast %cst_109 : f32 to vector<16x128xf32>
    %223 = arith.cmpf oge, %193, %222 : vector<16x128xf32>
    %cst_110 = arith.constant 0.000000e+00 : f32
    %224 = vector.broadcast %cst_110 : f32 to vector<16x128xf32>
    %225 = arith.subf %224, %221 : vector<16x128xf32>
    %226 = arith.select %223, %221, %225 : vector<16x128xi1>, vector<16x128xf32>
    %cst_111 = arith.constant 1.000000e+00 : f32
    %227 = vector.broadcast %cst_111 : f32 to vector<16x128xf32>
    %228 = arith.addf %227, %226 : vector<16x128xf32>
    %229 = arith.mulf %191, %228 : vector<16x128xf32>
    %230 = arith.truncf %229 : vector<16x128xf32> to vector<16x128xbf16>
    %c0_112 = arith.constant 0 : index
    %c0_113 = arith.constant 0 : index
    %c0_114 = arith.constant 0 : index
    %231 = vector.load %arg7[%c0_112, %c0_113, %c0_114] : memref<1x128x32xbf16, #tpu.memory_space<vmem>>, vector<1x128x32xbf16>
    %232 = vector.shape_cast %231 : vector<1x128x32xbf16> to vector<128x32xbf16>
    %cst_115 = arith.constant dense<0.000000e+00> : vector<16x32xf32>
    %233 = tpu.matmul %230, %232, %cst_115 {dimension_numbers = #tpu.dot_dimension_numbers<[1], [0], [0], [1], [0, 0, 1, 1], [], []>} : vector<16x128xbf16>, vector<128x32xbf16>, vector<16x32xf32> -> vector<16x32xf32>
    %234 = arith.addf %164, %233 : vector<16x32xf32>
    %c0_116 = arith.constant 0 : index
    %c0_117 = arith.constant 0 : index
    %c0_118 = arith.constant 0 : index
    %235 = vector.load %arg2[%c0_116, %c0_117, %c0_118] : memref<2x8x32xf32, #tpu.memory_space<vmem>>, vector<1x8x32xf32>
    %236 = vector.shape_cast %235 : vector<1x8x32xf32> to vector<8x32xf32>
    %c0_119 = arith.constant 0 : index
    %c0_120 = arith.constant 0 : index
    %237 = vector.load %arg8[%c0_119, %c0_120] : memref<8x32xf32, #tpu.memory_space<vmem>>, vector<1x32xf32>
    %c1_121 = arith.constant 1 : index
    %c0_122 = arith.constant 0 : index
    %238 = vector.load %arg8[%c1_121, %c0_122] : memref<8x32xf32, #tpu.memory_space<vmem>>, vector<1x32xf32>
    %cst_123 = arith.constant dense<0.000000e+00> : vector<8xf32>
    %239 = vector.multi_reduction <add>, %236, %cst_123 [1] : vector<8x32xf32> to vector<8xf32>
    %240 = vector.shape_cast %239 : vector<8xf32> to vector<8x1xf32>
    %cst_124 = arith.constant 3.200000e+01 : f32
    %241 = vector.broadcast %cst_124 : f32 to vector<8x1xf32>
    %242 = arith.divf %240, %241 : vector<8x1xf32>
    %243 = vector.broadcast %242 : vector<8x1xf32> to vector<8x32xf32>
    %244 = arith.subf %236, %243 : vector<8x32xf32>
    %245 = arith.mulf %244, %244 : vector<8x32xf32>
    %cst_125 = arith.constant dense<0.000000e+00> : vector<8xf32>
    %246 = vector.multi_reduction <add>, %245, %cst_125 [1] : vector<8x32xf32> to vector<8xf32>
    %247 = vector.shape_cast %246 : vector<8xf32> to vector<8x1xf32>
    %cst_126 = arith.constant 3.200000e+01 : f32
    %248 = vector.broadcast %cst_126 : f32 to vector<8x1xf32>
    %249 = arith.divf %247, %248 : vector<8x1xf32>
    %250 = vector.broadcast %242 : vector<8x1xf32> to vector<8x32xf32>
    %251 = arith.subf %236, %250 : vector<8x32xf32>
    %cst_127 = arith.constant 9.99999974E-6 : f32
    %252 = vector.broadcast %cst_127 : f32 to vector<8x1xf32>
    %253 = arith.addf %249, %252 : vector<8x1xf32>
    %254 = math.rsqrt %253 : vector<8x1xf32>
    %255 = vector.broadcast %254 : vector<8x1xf32> to vector<8x32xf32>
    %256 = arith.mulf %251, %255 : vector<8x32xf32>
    %257 = vector.broadcast %237 : vector<1x32xf32> to vector<8x32xf32>
    %258 = arith.mulf %256, %257 : vector<8x32xf32>
    %259 = vector.broadcast %238 : vector<1x32xf32> to vector<8x32xf32>
    %260 = arith.addf %258, %259 : vector<8x32xf32>
    %261 = arith.truncf %260 : vector<8x32xf32> to vector<8x32xbf16>
    %c2_128 = arith.constant 2 : index
    %c0_129 = arith.constant 0 : index
    %262 = vector.load %arg8[%c2_128, %c0_129] : memref<8x32xf32, #tpu.memory_space<vmem>>, vector<1x32xf32>
    %c3_130 = arith.constant 3 : index
    %c0_131 = arith.constant 0 : index
    %263 = vector.load %arg8[%c3_130, %c0_131] : memref<8x32xf32, #tpu.memory_space<vmem>>, vector<1x32xf32>
    %cst_132 = arith.constant dense<0.000000e+00> : vector<16xf32>
    %264 = vector.multi_reduction <add>, %234, %cst_132 [1] : vector<16x32xf32> to vector<16xf32>
    %265 = vector.shape_cast %264 : vector<16xf32> to vector<16x1xf32>
    %cst_133 = arith.constant 3.200000e+01 : f32
    %266 = vector.broadcast %cst_133 : f32 to vector<16x1xf32>
    %267 = arith.divf %265, %266 : vector<16x1xf32>
    %268 = vector.broadcast %267 : vector<16x1xf32> to vector<16x32xf32>
    %269 = arith.subf %234, %268 : vector<16x32xf32>
    %270 = arith.mulf %269, %269 : vector<16x32xf32>
    %cst_134 = arith.constant dense<0.000000e+00> : vector<16xf32>
    %271 = vector.multi_reduction <add>, %270, %cst_134 [1] : vector<16x32xf32> to vector<16xf32>
    %272 = vector.shape_cast %271 : vector<16xf32> to vector<16x1xf32>
    %cst_135 = arith.constant 3.200000e+01 : f32
    %273 = vector.broadcast %cst_135 : f32 to vector<16x1xf32>
    %274 = arith.divf %272, %273 : vector<16x1xf32>
    %275 = vector.broadcast %267 : vector<16x1xf32> to vector<16x32xf32>
    %276 = arith.subf %234, %275 : vector<16x32xf32>
    %cst_136 = arith.constant 9.99999974E-6 : f32
    %277 = vector.broadcast %cst_136 : f32 to vector<16x1xf32>
    %278 = arith.addf %274, %277 : vector<16x1xf32>
    %279 = math.rsqrt %278 : vector<16x1xf32>
    %280 = vector.broadcast %279 : vector<16x1xf32> to vector<16x32xf32>
    %281 = arith.mulf %276, %280 : vector<16x32xf32>
    %282 = vector.broadcast %262 : vector<1x32xf32> to vector<16x32xf32>
    %283 = arith.mulf %281, %282 : vector<16x32xf32>
    %284 = vector.broadcast %263 : vector<1x32xf32> to vector<16x32xf32>
    %285 = arith.addf %283, %284 : vector<16x32xf32>
    %286 = arith.truncf %285 : vector<16x32xf32> to vector<16x32xbf16>
    %cst_137 = arith.constant 0.000000e+00 : f32
    %287 = vector.broadcast %cst_137 : f32 to vector<8x32xf32>
    %c0_138 = arith.constant 0 : index
    %c0_139 = arith.constant 0 : index
    %c0_140 = arith.constant 0 : index
    %288 = vector.load %arg9[%c0_138, %c0_139, %c0_140] : memref<12x32x8xbf16, #tpu.memory_space<vmem>>, vector<1x32x8xbf16>
    %289 = vector.shape_cast %288 : vector<1x32x8xbf16> to vector<32x8xbf16>
    %cst_141 = arith.constant dense<0.000000e+00> : vector<8x8xf32>
    %290 = tpu.matmul %261, %289, %cst_141 {dimension_numbers = #tpu.dot_dimension_numbers<[1], [0], [0], [1], [0, 0, 1, 1], [], []>} : vector<8x32xbf16>, vector<32x8xbf16>, vector<8x8xf32> -> vector<8x8xf32>
    %c0_142 = arith.constant 0 : index
    %c0_143 = arith.constant 0 : index
    %291 = vector.load %arg10[%c0_142, %c0_143] : memref<12x8xf32, #tpu.memory_space<vmem>>, vector<1x8xf32>
    %292 = vector.broadcast %291 : vector<1x8xf32> to vector<8x8xf32>
    %293 = arith.addf %290, %292 : vector<8x8xf32>
    %c4_144 = arith.constant 4 : index
    %c0_145 = arith.constant 0 : index
    %c0_146 = arith.constant 0 : index
    %294 = vector.load %arg9[%c4_144, %c0_145, %c0_146] : memref<12x32x8xbf16, #tpu.memory_space<vmem>>, vector<1x32x8xbf16>
    %295 = vector.shape_cast %294 : vector<1x32x8xbf16> to vector<32x8xbf16>
    %cst_147 = arith.constant dense<0.000000e+00> : vector<16x8xf32>
    %296 = tpu.matmul %286, %295, %cst_147 {dimension_numbers = #tpu.dot_dimension_numbers<[1], [0], [0], [1], [0, 0, 1, 1], [], []>} : vector<16x32xbf16>, vector<32x8xbf16>, vector<16x8xf32> -> vector<16x8xf32>
    %c4_148 = arith.constant 4 : index
    %c0_149 = arith.constant 0 : index
    %297 = vector.load %arg10[%c4_148, %c0_149] : memref<12x8xf32, #tpu.memory_space<vmem>>, vector<1x8xf32>
    %298 = vector.broadcast %297 : vector<1x8xf32> to vector<16x8xf32>
    %299 = arith.addf %296, %298 : vector<16x8xf32>
    %c8_150 = arith.constant 8 : index
    %c0_151 = arith.constant 0 : index
    %c0_152 = arith.constant 0 : index
    %300 = vector.load %arg9[%c8_150, %c0_151, %c0_152] : memref<12x32x8xbf16, #tpu.memory_space<vmem>>, vector<1x32x8xbf16>
    %301 = vector.shape_cast %300 : vector<1x32x8xbf16> to vector<32x8xbf16>
    %cst_153 = arith.constant dense<0.000000e+00> : vector<16x8xf32>
    %302 = tpu.matmul %286, %301, %cst_153 {dimension_numbers = #tpu.dot_dimension_numbers<[1], [0], [0], [1], [0, 0, 1, 1], [], []>} : vector<16x32xbf16>, vector<32x8xbf16>, vector<16x8xf32> -> vector<16x8xf32>
    %c8_154 = arith.constant 8 : index
    %c0_155 = arith.constant 0 : index
    %303 = vector.load %arg10[%c8_154, %c0_155] : memref<12x8xf32, #tpu.memory_space<vmem>>, vector<1x8xf32>
    %304 = vector.broadcast %303 : vector<1x8xf32> to vector<16x8xf32>
    %305 = arith.addf %302, %304 : vector<16x8xf32>
    %306 = arith.truncf %293 : vector<8x8xf32> to vector<8x8xbf16>
    %307 = arith.truncf %299 : vector<16x8xf32> to vector<16x8xbf16>
    %cst_156 = arith.constant dense<0.000000e+00> : vector<8x16xf32>
    %308 = tpu.matmul %306, %307, %cst_156 {dimension_numbers = #tpu.dot_dimension_numbers<[1], [1], [0], [0], [0, 0, 1, 0], [], []>} : vector<8x8xbf16>, vector<16x8xbf16>, vector<8x16xf32> -> vector<8x16xf32>
    %cst_157 = arith.constant 0.353553385 : f32
    %309 = vector.broadcast %cst_157 : f32 to vector<8x16xf32>
    %310 = arith.mulf %308, %309 : vector<8x16xf32>
    %cst_158 = arith.constant dense<0xFF800000> : vector<8xf32>
    %311 = vector.multi_reduction <maximumf>, %310, %cst_158 [1] : vector<8x16xf32> to vector<8xf32>
    %312 = vector.shape_cast %311 : vector<8xf32> to vector<8x1xf32>
    %313 = vector.broadcast %312 : vector<8x1xf32> to vector<8x16xf32>
    %314 = arith.subf %310, %313 : vector<8x16xf32>
    %315 = math.exp %314 : vector<8x16xf32>
    %cst_159 = arith.constant dense<0.000000e+00> : vector<8xf32>
    %316 = vector.multi_reduction <add>, %315, %cst_159 [1] : vector<8x16xf32> to vector<8xf32>
    %317 = vector.shape_cast %316 : vector<8xf32> to vector<8x1xf32>
    %318 = tpu.reciprocal %317 {approx = true} : vector<8x1xf32> -> vector<8x1xf32>
    %319 = vector.broadcast %318 : vector<8x1xf32> to vector<8x16xf32>
    %320 = arith.mulf %315, %319 : vector<8x16xf32>
    %321 = arith.truncf %320 : vector<8x16xf32> to vector<8x16xbf16>
    %322 = arith.truncf %305 : vector<16x8xf32> to vector<16x8xbf16>
    %cst_160 = arith.constant dense<0.000000e+00> : vector<8x8xf32>
    %323 = tpu.matmul %321, %322, %cst_160 {dimension_numbers = #tpu.dot_dimension_numbers<[1], [0], [0], [1], [0, 0, 1, 1], [], []>} : vector<8x16xbf16>, vector<16x8xbf16>, vector<8x8xf32> -> vector<8x8xf32>
    %324 = arith.truncf %323 : vector<8x8xf32> to vector<8x8xbf16>
    %c0_161 = arith.constant 0 : index
    %c0_162 = arith.constant 0 : index
    %c0_163 = arith.constant 0 : index
    %325 = vector.load %arg11[%c0_161, %c0_162, %c0_163] : memref<4x8x32xbf16, #tpu.memory_space<vmem>>, vector<1x8x32xbf16>
    %326 = vector.shape_cast %325 : vector<1x8x32xbf16> to vector<8x32xbf16>
    %cst_164 = arith.constant dense<0.000000e+00> : vector<8x32xf32>
    %327 = tpu.matmul %324, %326, %cst_164 {dimension_numbers = #tpu.dot_dimension_numbers<[1], [0], [0], [1], [0, 0, 1, 1], [], []>} : vector<8x8xbf16>, vector<8x32xbf16>, vector<8x32xf32> -> vector<8x32xf32>
    %328 = arith.addf %287, %327 : vector<8x32xf32>
    %c1_165 = arith.constant 1 : index
    %c0_166 = arith.constant 0 : index
    %c0_167 = arith.constant 0 : index
    %329 = vector.load %arg9[%c1_165, %c0_166, %c0_167] : memref<12x32x8xbf16, #tpu.memory_space<vmem>>, vector<1x32x8xbf16>
    %330 = vector.shape_cast %329 : vector<1x32x8xbf16> to vector<32x8xbf16>
    %cst_168 = arith.constant dense<0.000000e+00> : vector<8x8xf32>
    %331 = tpu.matmul %261, %330, %cst_168 {dimension_numbers = #tpu.dot_dimension_numbers<[1], [0], [0], [1], [0, 0, 1, 1], [], []>} : vector<8x32xbf16>, vector<32x8xbf16>, vector<8x8xf32> -> vector<8x8xf32>
    %c1_169 = arith.constant 1 : index
    %c0_170 = arith.constant 0 : index
    %332 = vector.load %arg10[%c1_169, %c0_170] : memref<12x8xf32, #tpu.memory_space<vmem>>, vector<1x8xf32>
    %333 = vector.broadcast %332 : vector<1x8xf32> to vector<8x8xf32>
    %334 = arith.addf %331, %333 : vector<8x8xf32>
    %c5_171 = arith.constant 5 : index
    %c0_172 = arith.constant 0 : index
    %c0_173 = arith.constant 0 : index
    %335 = vector.load %arg9[%c5_171, %c0_172, %c0_173] : memref<12x32x8xbf16, #tpu.memory_space<vmem>>, vector<1x32x8xbf16>
    %336 = vector.shape_cast %335 : vector<1x32x8xbf16> to vector<32x8xbf16>
    %cst_174 = arith.constant dense<0.000000e+00> : vector<16x8xf32>
    %337 = tpu.matmul %286, %336, %cst_174 {dimension_numbers = #tpu.dot_dimension_numbers<[1], [0], [0], [1], [0, 0, 1, 1], [], []>} : vector<16x32xbf16>, vector<32x8xbf16>, vector<16x8xf32> -> vector<16x8xf32>
    %c5_175 = arith.constant 5 : index
    %c0_176 = arith.constant 0 : index
    %338 = vector.load %arg10[%c5_175, %c0_176] : memref<12x8xf32, #tpu.memory_space<vmem>>, vector<1x8xf32>
    %339 = vector.broadcast %338 : vector<1x8xf32> to vector<16x8xf32>
    %340 = arith.addf %337, %339 : vector<16x8xf32>
    %c9_177 = arith.constant 9 : index
    %c0_178 = arith.constant 0 : index
    %c0_179 = arith.constant 0 : index
    %341 = vector.load %arg9[%c9_177, %c0_178, %c0_179] : memref<12x32x8xbf16, #tpu.memory_space<vmem>>, vector<1x32x8xbf16>
    %342 = vector.shape_cast %341 : vector<1x32x8xbf16> to vector<32x8xbf16>
    %cst_180 = arith.constant dense<0.000000e+00> : vector<16x8xf32>
    %343 = tpu.matmul %286, %342, %cst_180 {dimension_numbers = #tpu.dot_dimension_numbers<[1], [0], [0], [1], [0, 0, 1, 1], [], []>} : vector<16x32xbf16>, vector<32x8xbf16>, vector<16x8xf32> -> vector<16x8xf32>
    %c9_181 = arith.constant 9 : index
    %c0_182 = arith.constant 0 : index
    %344 = vector.load %arg10[%c9_181, %c0_182] : memref<12x8xf32, #tpu.memory_space<vmem>>, vector<1x8xf32>
    %345 = vector.broadcast %344 : vector<1x8xf32> to vector<16x8xf32>
    %346 = arith.addf %343, %345 : vector<16x8xf32>
    %347 = arith.truncf %334 : vector<8x8xf32> to vector<8x8xbf16>
    %348 = arith.truncf %340 : vector<16x8xf32> to vector<16x8xbf16>
    %cst_183 = arith.constant dense<0.000000e+00> : vector<8x16xf32>
    %349 = tpu.matmul %347, %348, %cst_183 {dimension_numbers = #tpu.dot_dimension_numbers<[1], [1], [0], [0], [0, 0, 1, 0], [], []>} : vector<8x8xbf16>, vector<16x8xbf16>, vector<8x16xf32> -> vector<8x16xf32>
    %cst_184 = arith.constant 0.353553385 : f32
    %350 = vector.broadcast %cst_184 : f32 to vector<8x16xf32>
    %351 = arith.mulf %349, %350 : vector<8x16xf32>
    %cst_185 = arith.constant dense<0xFF800000> : vector<8xf32>
    %352 = vector.multi_reduction <maximumf>, %351, %cst_185 [1] : vector<8x16xf32> to vector<8xf32>
    %353 = vector.shape_cast %352 : vector<8xf32> to vector<8x1xf32>
    %354 = vector.broadcast %353 : vector<8x1xf32> to vector<8x16xf32>
    %355 = arith.subf %351, %354 : vector<8x16xf32>
    %356 = math.exp %355 : vector<8x16xf32>
    %cst_186 = arith.constant dense<0.000000e+00> : vector<8xf32>
    %357 = vector.multi_reduction <add>, %356, %cst_186 [1] : vector<8x16xf32> to vector<8xf32>
    %358 = vector.shape_cast %357 : vector<8xf32> to vector<8x1xf32>
    %359 = tpu.reciprocal %358 {approx = true} : vector<8x1xf32> -> vector<8x1xf32>
    %360 = vector.broadcast %359 : vector<8x1xf32> to vector<8x16xf32>
    %361 = arith.mulf %356, %360 : vector<8x16xf32>
    %362 = arith.truncf %361 : vector<8x16xf32> to vector<8x16xbf16>
    %363 = arith.truncf %346 : vector<16x8xf32> to vector<16x8xbf16>
    %cst_187 = arith.constant dense<0.000000e+00> : vector<8x8xf32>
    %364 = tpu.matmul %362, %363, %cst_187 {dimension_numbers = #tpu.dot_dimension_numbers<[1], [0], [0], [1], [0, 0, 1, 1], [], []>} : vector<8x16xbf16>, vector<16x8xbf16>, vector<8x8xf32> -> vector<8x8xf32>
    %365 = arith.truncf %364 : vector<8x8xf32> to vector<8x8xbf16>
    %c1_188 = arith.constant 1 : index
    %c0_189 = arith.constant 0 : index
    %c0_190 = arith.constant 0 : index
    %366 = vector.load %arg11[%c1_188, %c0_189, %c0_190] : memref<4x8x32xbf16, #tpu.memory_space<vmem>>, vector<1x8x32xbf16>
    %367 = vector.shape_cast %366 : vector<1x8x32xbf16> to vector<8x32xbf16>
    %cst_191 = arith.constant dense<0.000000e+00> : vector<8x32xf32>
    %368 = tpu.matmul %365, %367, %cst_191 {dimension_numbers = #tpu.dot_dimension_numbers<[1], [0], [0], [1], [0, 0, 1, 1], [], []>} : vector<8x8xbf16>, vector<8x32xbf16>, vector<8x32xf32> -> vector<8x32xf32>
    %369 = arith.addf %328, %368 : vector<8x32xf32>
    %c2_192 = arith.constant 2 : index
    %c0_193 = arith.constant 0 : index
    %c0_194 = arith.constant 0 : index
    %370 = vector.load %arg9[%c2_192, %c0_193, %c0_194] : memref<12x32x8xbf16, #tpu.memory_space<vmem>>, vector<1x32x8xbf16>
    %371 = vector.shape_cast %370 : vector<1x32x8xbf16> to vector<32x8xbf16>
    %cst_195 = arith.constant dense<0.000000e+00> : vector<8x8xf32>
    %372 = tpu.matmul %261, %371, %cst_195 {dimension_numbers = #tpu.dot_dimension_numbers<[1], [0], [0], [1], [0, 0, 1, 1], [], []>} : vector<8x32xbf16>, vector<32x8xbf16>, vector<8x8xf32> -> vector<8x8xf32>
    %c2_196 = arith.constant 2 : index
    %c0_197 = arith.constant 0 : index
    %373 = vector.load %arg10[%c2_196, %c0_197] : memref<12x8xf32, #tpu.memory_space<vmem>>, vector<1x8xf32>
    %374 = vector.broadcast %373 : vector<1x8xf32> to vector<8x8xf32>
    %375 = arith.addf %372, %374 : vector<8x8xf32>
    %c6_198 = arith.constant 6 : index
    %c0_199 = arith.constant 0 : index
    %c0_200 = arith.constant 0 : index
    %376 = vector.load %arg9[%c6_198, %c0_199, %c0_200] : memref<12x32x8xbf16, #tpu.memory_space<vmem>>, vector<1x32x8xbf16>
    %377 = vector.shape_cast %376 : vector<1x32x8xbf16> to vector<32x8xbf16>
    %cst_201 = arith.constant dense<0.000000e+00> : vector<16x8xf32>
    %378 = tpu.matmul %286, %377, %cst_201 {dimension_numbers = #tpu.dot_dimension_numbers<[1], [0], [0], [1], [0, 0, 1, 1], [], []>} : vector<16x32xbf16>, vector<32x8xbf16>, vector<16x8xf32> -> vector<16x8xf32>
    %c6_202 = arith.constant 6 : index
    %c0_203 = arith.constant 0 : index
    %379 = vector.load %arg10[%c6_202, %c0_203] : memref<12x8xf32, #tpu.memory_space<vmem>>, vector<1x8xf32>
    %380 = vector.broadcast %379 : vector<1x8xf32> to vector<16x8xf32>
    %381 = arith.addf %378, %380 : vector<16x8xf32>
    %c10_204 = arith.constant 10 : index
    %c0_205 = arith.constant 0 : index
    %c0_206 = arith.constant 0 : index
    %382 = vector.load %arg9[%c10_204, %c0_205, %c0_206] : memref<12x32x8xbf16, #tpu.memory_space<vmem>>, vector<1x32x8xbf16>
    %383 = vector.shape_cast %382 : vector<1x32x8xbf16> to vector<32x8xbf16>
    %cst_207 = arith.constant dense<0.000000e+00> : vector<16x8xf32>
    %384 = tpu.matmul %286, %383, %cst_207 {dimension_numbers = #tpu.dot_dimension_numbers<[1], [0], [0], [1], [0, 0, 1, 1], [], []>} : vector<16x32xbf16>, vector<32x8xbf16>, vector<16x8xf32> -> vector<16x8xf32>
    %c10_208 = arith.constant 10 : index
    %c0_209 = arith.constant 0 : index
    %385 = vector.load %arg10[%c10_208, %c0_209] : memref<12x8xf32, #tpu.memory_space<vmem>>, vector<1x8xf32>
    %386 = vector.broadcast %385 : vector<1x8xf32> to vector<16x8xf32>
    %387 = arith.addf %384, %386 : vector<16x8xf32>
    %388 = arith.truncf %375 : vector<8x8xf32> to vector<8x8xbf16>
    %389 = arith.truncf %381 : vector<16x8xf32> to vector<16x8xbf16>
    %cst_210 = arith.constant dense<0.000000e+00> : vector<8x16xf32>
    %390 = tpu.matmul %388, %389, %cst_210 {dimension_numbers = #tpu.dot_dimension_numbers<[1], [1], [0], [0], [0, 0, 1, 0], [], []>} : vector<8x8xbf16>, vector<16x8xbf16>, vector<8x16xf32> -> vector<8x16xf32>
    %cst_211 = arith.constant 0.353553385 : f32
    %391 = vector.broadcast %cst_211 : f32 to vector<8x16xf32>
    %392 = arith.mulf %390, %391 : vector<8x16xf32>
    %cst_212 = arith.constant dense<0xFF800000> : vector<8xf32>
    %393 = vector.multi_reduction <maximumf>, %392, %cst_212 [1] : vector<8x16xf32> to vector<8xf32>
    %394 = vector.shape_cast %393 : vector<8xf32> to vector<8x1xf32>
    %395 = vector.broadcast %394 : vector<8x1xf32> to vector<8x16xf32>
    %396 = arith.subf %392, %395 : vector<8x16xf32>
    %397 = math.exp %396 : vector<8x16xf32>
    %cst_213 = arith.constant dense<0.000000e+00> : vector<8xf32>
    %398 = vector.multi_reduction <add>, %397, %cst_213 [1] : vector<8x16xf32> to vector<8xf32>
    %399 = vector.shape_cast %398 : vector<8xf32> to vector<8x1xf32>
    %400 = tpu.reciprocal %399 {approx = true} : vector<8x1xf32> -> vector<8x1xf32>
    %401 = vector.broadcast %400 : vector<8x1xf32> to vector<8x16xf32>
    %402 = arith.mulf %397, %401 : vector<8x16xf32>
    %403 = arith.truncf %402 : vector<8x16xf32> to vector<8x16xbf16>
    %404 = arith.truncf %387 : vector<16x8xf32> to vector<16x8xbf16>
    %cst_214 = arith.constant dense<0.000000e+00> : vector<8x8xf32>
    %405 = tpu.matmul %403, %404, %cst_214 {dimension_numbers = #tpu.dot_dimension_numbers<[1], [0], [0], [1], [0, 0, 1, 1], [], []>} : vector<8x16xbf16>, vector<16x8xbf16>, vector<8x8xf32> -> vector<8x8xf32>
    %406 = arith.truncf %405 : vector<8x8xf32> to vector<8x8xbf16>
    %c2_215 = arith.constant 2 : index
    %c0_216 = arith.constant 0 : index
    %c0_217 = arith.constant 0 : index
    %407 = vector.load %arg11[%c2_215, %c0_216, %c0_217] : memref<4x8x32xbf16, #tpu.memory_space<vmem>>, vector<1x8x32xbf16>
    %408 = vector.shape_cast %407 : vector<1x8x32xbf16> to vector<8x32xbf16>
    %cst_218 = arith.constant dense<0.000000e+00> : vector<8x32xf32>
    %409 = tpu.matmul %406, %408, %cst_218 {dimension_numbers = #tpu.dot_dimension_numbers<[1], [0], [0], [1], [0, 0, 1, 1], [], []>} : vector<8x8xbf16>, vector<8x32xbf16>, vector<8x32xf32> -> vector<8x32xf32>
    %410 = arith.addf %369, %409 : vector<8x32xf32>
    %c3_219 = arith.constant 3 : index
    %c0_220 = arith.constant 0 : index
    %c0_221 = arith.constant 0 : index
    %411 = vector.load %arg9[%c3_219, %c0_220, %c0_221] : memref<12x32x8xbf16, #tpu.memory_space<vmem>>, vector<1x32x8xbf16>
    %412 = vector.shape_cast %411 : vector<1x32x8xbf16> to vector<32x8xbf16>
    %cst_222 = arith.constant dense<0.000000e+00> : vector<8x8xf32>
    %413 = tpu.matmul %261, %412, %cst_222 {dimension_numbers = #tpu.dot_dimension_numbers<[1], [0], [0], [1], [0, 0, 1, 1], [], []>} : vector<8x32xbf16>, vector<32x8xbf16>, vector<8x8xf32> -> vector<8x8xf32>
    %c3_223 = arith.constant 3 : index
    %c0_224 = arith.constant 0 : index
    %414 = vector.load %arg10[%c3_223, %c0_224] : memref<12x8xf32, #tpu.memory_space<vmem>>, vector<1x8xf32>
    %415 = vector.broadcast %414 : vector<1x8xf32> to vector<8x8xf32>
    %416 = arith.addf %413, %415 : vector<8x8xf32>
    %c7_225 = arith.constant 7 : index
    %c0_226 = arith.constant 0 : index
    %c0_227 = arith.constant 0 : index
    %417 = vector.load %arg9[%c7_225, %c0_226, %c0_227] : memref<12x32x8xbf16, #tpu.memory_space<vmem>>, vector<1x32x8xbf16>
    %418 = vector.shape_cast %417 : vector<1x32x8xbf16> to vector<32x8xbf16>
    %cst_228 = arith.constant dense<0.000000e+00> : vector<16x8xf32>
    %419 = tpu.matmul %286, %418, %cst_228 {dimension_numbers = #tpu.dot_dimension_numbers<[1], [0], [0], [1], [0, 0, 1, 1], [], []>} : vector<16x32xbf16>, vector<32x8xbf16>, vector<16x8xf32> -> vector<16x8xf32>
    %c7_229 = arith.constant 7 : index
    %c0_230 = arith.constant 0 : index
    %420 = vector.load %arg10[%c7_229, %c0_230] : memref<12x8xf32, #tpu.memory_space<vmem>>, vector<1x8xf32>
    %421 = vector.broadcast %420 : vector<1x8xf32> to vector<16x8xf32>
    %422 = arith.addf %419, %421 : vector<16x8xf32>
    %c11_231 = arith.constant 11 : index
    %c0_232 = arith.constant 0 : index
    %c0_233 = arith.constant 0 : index
    %423 = vector.load %arg9[%c11_231, %c0_232, %c0_233] : memref<12x32x8xbf16, #tpu.memory_space<vmem>>, vector<1x32x8xbf16>
    %424 = vector.shape_cast %423 : vector<1x32x8xbf16> to vector<32x8xbf16>
    %cst_234 = arith.constant dense<0.000000e+00> : vector<16x8xf32>
    %425 = tpu.matmul %286, %424, %cst_234 {dimension_numbers = #tpu.dot_dimension_numbers<[1], [0], [0], [1], [0, 0, 1, 1], [], []>} : vector<16x32xbf16>, vector<32x8xbf16>, vector<16x8xf32> -> vector<16x8xf32>
    %c11_235 = arith.constant 11 : index
    %c0_236 = arith.constant 0 : index
    %426 = vector.load %arg10[%c11_235, %c0_236] : memref<12x8xf32, #tpu.memory_space<vmem>>, vector<1x8xf32>
    %427 = vector.broadcast %426 : vector<1x8xf32> to vector<16x8xf32>
    %428 = arith.addf %425, %427 : vector<16x8xf32>
    %429 = arith.truncf %416 : vector<8x8xf32> to vector<8x8xbf16>
    %430 = arith.truncf %422 : vector<16x8xf32> to vector<16x8xbf16>
    %cst_237 = arith.constant dense<0.000000e+00> : vector<8x16xf32>
    %431 = tpu.matmul %429, %430, %cst_237 {dimension_numbers = #tpu.dot_dimension_numbers<[1], [1], [0], [0], [0, 0, 1, 0], [], []>} : vector<8x8xbf16>, vector<16x8xbf16>, vector<8x16xf32> -> vector<8x16xf32>
    %cst_238 = arith.constant 0.353553385 : f32
    %432 = vector.broadcast %cst_238 : f32 to vector<8x16xf32>
    %433 = arith.mulf %431, %432 : vector<8x16xf32>
    %cst_239 = arith.constant dense<0xFF800000> : vector<8xf32>
    %434 = vector.multi_reduction <maximumf>, %433, %cst_239 [1] : vector<8x16xf32> to vector<8xf32>
    %435 = vector.shape_cast %434 : vector<8xf32> to vector<8x1xf32>
    %436 = vector.broadcast %435 : vector<8x1xf32> to vector<8x16xf32>
    %437 = arith.subf %433, %436 : vector<8x16xf32>
    %438 = math.exp %437 : vector<8x16xf32>
    %cst_240 = arith.constant dense<0.000000e+00> : vector<8xf32>
    %439 = vector.multi_reduction <add>, %438, %cst_240 [1] : vector<8x16xf32> to vector<8xf32>
    %440 = vector.shape_cast %439 : vector<8xf32> to vector<8x1xf32>
    %441 = tpu.reciprocal %440 {approx = true} : vector<8x1xf32> -> vector<8x1xf32>
    %442 = vector.broadcast %441 : vector<8x1xf32> to vector<8x16xf32>
    %443 = arith.mulf %438, %442 : vector<8x16xf32>
    %444 = arith.truncf %443 : vector<8x16xf32> to vector<8x16xbf16>
    %445 = arith.truncf %428 : vector<16x8xf32> to vector<16x8xbf16>
    %cst_241 = arith.constant dense<0.000000e+00> : vector<8x8xf32>
    %446 = tpu.matmul %444, %445, %cst_241 {dimension_numbers = #tpu.dot_dimension_numbers<[1], [0], [0], [1], [0, 0, 1, 1], [], []>} : vector<8x16xbf16>, vector<16x8xbf16>, vector<8x8xf32> -> vector<8x8xf32>
    %447 = arith.truncf %446 : vector<8x8xf32> to vector<8x8xbf16>
    %c3_242 = arith.constant 3 : index
    %c0_243 = arith.constant 0 : index
    %c0_244 = arith.constant 0 : index
    %448 = vector.load %arg11[%c3_242, %c0_243, %c0_244] : memref<4x8x32xbf16, #tpu.memory_space<vmem>>, vector<1x8x32xbf16>
    %449 = vector.shape_cast %448 : vector<1x8x32xbf16> to vector<8x32xbf16>
    %cst_245 = arith.constant dense<0.000000e+00> : vector<8x32xf32>
    %450 = tpu.matmul %447, %449, %cst_245 {dimension_numbers = #tpu.dot_dimension_numbers<[1], [0], [0], [1], [0, 0, 1, 1], [], []>} : vector<8x8xbf16>, vector<8x32xbf16>, vector<8x32xf32> -> vector<8x32xf32>
    %451 = arith.addf %410, %450 : vector<8x32xf32>
    %452 = arith.addf %236, %451 : vector<8x32xf32>
    %c6_246 = arith.constant 6 : index
    %c0_247 = arith.constant 0 : index
    %453 = vector.load %arg8[%c6_246, %c0_247] : memref<8x32xf32, #tpu.memory_space<vmem>>, vector<1x32xf32>
    %454 = vector.broadcast %453 : vector<1x32xf32> to vector<8x32xf32>
    %455 = arith.addf %452, %454 : vector<8x32xf32>
    %c4_248 = arith.constant 4 : index
    %c0_249 = arith.constant 0 : index
    %456 = vector.load %arg8[%c4_248, %c0_249] : memref<8x32xf32, #tpu.memory_space<vmem>>, vector<1x32xf32>
    %c5_250 = arith.constant 5 : index
    %c0_251 = arith.constant 0 : index
    %457 = vector.load %arg8[%c5_250, %c0_251] : memref<8x32xf32, #tpu.memory_space<vmem>>, vector<1x32xf32>
    %cst_252 = arith.constant dense<0.000000e+00> : vector<8xf32>
    %458 = vector.multi_reduction <add>, %455, %cst_252 [1] : vector<8x32xf32> to vector<8xf32>
    %459 = vector.shape_cast %458 : vector<8xf32> to vector<8x1xf32>
    %cst_253 = arith.constant 3.200000e+01 : f32
    %460 = vector.broadcast %cst_253 : f32 to vector<8x1xf32>
    %461 = arith.divf %459, %460 : vector<8x1xf32>
    %462 = vector.broadcast %461 : vector<8x1xf32> to vector<8x32xf32>
    %463 = arith.subf %455, %462 : vector<8x32xf32>
    %464 = arith.mulf %463, %463 : vector<8x32xf32>
    %cst_254 = arith.constant dense<0.000000e+00> : vector<8xf32>
    %465 = vector.multi_reduction <add>, %464, %cst_254 [1] : vector<8x32xf32> to vector<8xf32>
    %466 = vector.shape_cast %465 : vector<8xf32> to vector<8x1xf32>
    %cst_255 = arith.constant 3.200000e+01 : f32
    %467 = vector.broadcast %cst_255 : f32 to vector<8x1xf32>
    %468 = arith.divf %466, %467 : vector<8x1xf32>
    %469 = vector.broadcast %461 : vector<8x1xf32> to vector<8x32xf32>
    %470 = arith.subf %455, %469 : vector<8x32xf32>
    %cst_256 = arith.constant 9.99999974E-6 : f32
    %471 = vector.broadcast %cst_256 : f32 to vector<8x1xf32>
    %472 = arith.addf %468, %471 : vector<8x1xf32>
    %473 = math.rsqrt %472 : vector<8x1xf32>
    %474 = vector.broadcast %473 : vector<8x1xf32> to vector<8x32xf32>
    %475 = arith.mulf %470, %474 : vector<8x32xf32>
    %476 = vector.broadcast %456 : vector<1x32xf32> to vector<8x32xf32>
    %477 = arith.mulf %475, %476 : vector<8x32xf32>
    %478 = vector.broadcast %457 : vector<1x32xf32> to vector<8x32xf32>
    %479 = arith.addf %477, %478 : vector<8x32xf32>
    %480 = arith.truncf %479 : vector<8x32xf32> to vector<8x32xbf16>
    %c0_257 = arith.constant 0 : index
    %c0_258 = arith.constant 0 : index
    %481 = vector.load %arg12[%c0_257, %c0_258] : memref<32x128xbf16, #tpu.memory_space<vmem>>, vector<32x128xbf16>
    %cst_259 = arith.constant dense<0.000000e+00> : vector<8x128xf32>
    %482 = tpu.matmul %480, %481, %cst_259 {dimension_numbers = #tpu.dot_dimension_numbers<[1], [0], [0], [1], [0, 0, 1, 1], [], []>} : vector<8x32xbf16>, vector<32x128xbf16>, vector<8x128xf32> -> vector<8x128xf32>
    %c0_260 = arith.constant 0 : index
    %c0_261 = arith.constant 0 : index
    %483 = vector.load %arg13[%c0_260, %c0_261] : memref<1x128xf32, #tpu.memory_space<vmem>>, vector<1x128xf32>
    %484 = vector.broadcast %483 : vector<1x128xf32> to vector<8x128xf32>
    %485 = arith.addf %482, %484 : vector<8x128xf32>
    %cst_262 = arith.constant 5.000000e-01 : f32
    %486 = vector.broadcast %cst_262 : f32 to vector<8x128xf32>
    %487 = arith.mulf %486, %485 : vector<8x128xf32>
    %cst_263 = arith.constant 0.707106769 : f32
    %488 = vector.broadcast %cst_263 : f32 to vector<8x128xf32>
    %489 = arith.mulf %485, %488 : vector<8x128xf32>
    %490 = math.absf %489 : vector<8x128xf32>
    %cst_264 = arith.constant 0.327591091 : f32
    %491 = vector.broadcast %cst_264 : f32 to vector<8x128xf32>
    %492 = arith.mulf %491, %490 : vector<8x128xf32>
    %cst_265 = arith.constant 1.000000e+00 : f32
    %493 = vector.broadcast %cst_265 : f32 to vector<8x128xf32>
    %494 = arith.addf %493, %492 : vector<8x128xf32>
    %cst_266 = arith.constant 1.000000e+00 : f32
    %495 = vector.broadcast %cst_266 : f32 to vector<8x128xf32>
    %496 = arith.divf %495, %494 : vector<8x128xf32>
    %cst_267 = arith.constant 1.06140542 : f32
    %497 = vector.broadcast %cst_267 : f32 to vector<8x128xf32>
    %498 = arith.mulf %497, %496 : vector<8x128xf32>
    %cst_268 = arith.constant -1.45315206 : f32
    %499 = vector.broadcast %cst_268 : f32 to vector<8x128xf32>
    %500 = arith.addf %498, %499 : vector<8x128xf32>
    %501 = arith.mulf %500, %496 : vector<8x128xf32>
    %cst_269 = arith.constant 1.42141378 : f32
    %502 = vector.broadcast %cst_269 : f32 to vector<8x128xf32>
    %503 = arith.addf %501, %502 : vector<8x128xf32>
    %504 = arith.mulf %503, %496 : vector<8x128xf32>
    %cst_270 = arith.constant -0.284496725 : f32
    %505 = vector.broadcast %cst_270 : f32 to vector<8x128xf32>
    %506 = arith.addf %504, %505 : vector<8x128xf32>
    %507 = arith.mulf %506, %496 : vector<8x128xf32>
    %cst_271 = arith.constant 0.254829586 : f32
    %508 = vector.broadcast %cst_271 : f32 to vector<8x128xf32>
    %509 = arith.addf %507, %508 : vector<8x128xf32>
    %510 = arith.mulf %509, %496 : vector<8x128xf32>
    %cst_272 = arith.constant 0.000000e+00 : f32
    %511 = vector.broadcast %cst_272 : f32 to vector<8x128xf32>
    %512 = arith.subf %511, %490 : vector<8x128xf32>
    %513 = arith.mulf %512, %490 : vector<8x128xf32>
    %514 = math.exp %513 : vector<8x128xf32>
    %515 = arith.mulf %510, %514 : vector<8x128xf32>
    %cst_273 = arith.constant 1.000000e+00 : f32
    %516 = vector.broadcast %cst_273 : f32 to vector<8x128xf32>
    %517 = arith.subf %516, %515 : vector<8x128xf32>
    %cst_274 = arith.constant 0.000000e+00 : f32
    %518 = vector.broadcast %cst_274 : f32 to vector<8x128xf32>
    %519 = arith.cmpf oge, %489, %518 : vector<8x128xf32>
    %cst_275 = arith.constant 0.000000e+00 : f32
    %520 = vector.broadcast %cst_275 : f32 to vector<8x128xf32>
    %521 = arith.subf %520, %517 : vector<8x128xf32>
    %522 = arith.select %519, %517, %521 : vector<8x128xi1>, vector<8x128xf32>
    %cst_276 = arith.constant 1.000000e+00 : f32
    %523 = vector.broadcast %cst_276 : f32 to vector<8x128xf32>
    %524 = arith.addf %523, %522 : vector<8x128xf32>
    %525 = arith.mulf %487, %524 : vector<8x128xf32>
    %526 = arith.truncf %525 : vector<8x128xf32> to vector<8x128xbf16>
    %c0_277 = arith.constant 0 : index
    %c0_278 = arith.constant 0 : index
    %527 = vector.load %arg14[%c0_277, %c0_278] : memref<128x32xbf16, #tpu.memory_space<vmem>>, vector<128x32xbf16>
    %cst_279 = arith.constant dense<0.000000e+00> : vector<8x32xf32>
    %528 = tpu.matmul %526, %527, %cst_279 {dimension_numbers = #tpu.dot_dimension_numbers<[1], [0], [0], [1], [0, 0, 1, 1], [], []>} : vector<8x128xbf16>, vector<128x32xbf16>, vector<8x32xf32> -> vector<8x32xf32>
    %529 = arith.addf %455, %528 : vector<8x32xf32>
    %c7_280 = arith.constant 7 : index
    %c0_281 = arith.constant 0 : index
    %530 = vector.load %arg8[%c7_280, %c0_281] : memref<8x32xf32, #tpu.memory_space<vmem>>, vector<1x32xf32>
    %531 = vector.broadcast %530 : vector<1x32xf32> to vector<8x32xf32>
    %532 = arith.addf %529, %531 : vector<8x32xf32>
    %c1_282 = arith.constant 1 : index
    %c0_283 = arith.constant 0 : index
    %c0_284 = arith.constant 0 : index
    %533 = vector.load %arg2[%c1_282, %c0_283, %c0_284] : memref<2x8x32xf32, #tpu.memory_space<vmem>>, vector<1x8x32xf32>
    %534 = vector.shape_cast %533 : vector<1x8x32xf32> to vector<8x32xf32>
    %535 = arith.addf %532, %534 : vector<8x32xf32>
    %536 = tpu.iota {dimensions = array<i32: 0>} : vector<8x8xi32>
    %537 = tpu.iota {dimensions = array<i32: 1>} : vector<8x8xi32>
    %538 = arith.cmpi sle, %537, %536 : vector<8x8xi32>
    %c0_285 = arith.constant 0 : index
    %c0_286 = arith.constant 0 : index
    %539 = vector.load %arg15[%c0_285, %c0_286] : memref<2x32xf32, #tpu.memory_space<vmem>>, vector<1x32xf32>
    %cst_287 = arith.constant dense<0.000000e+00> : vector<8xf32>
    %540 = vector.multi_reduction <add>, %535, %cst_287 [1] : vector<8x32xf32> to vector<8xf32>
    %541 = vector.shape_cast %540 : vector<8xf32> to vector<8x1xf32>
    %cst_288 = arith.constant 3.200000e+01 : f32
    %542 = vector.broadcast %cst_288 : f32 to vector<8x1xf32>
    %543 = arith.divf %541, %542 : vector<8x1xf32>
    %544 = vector.broadcast %543 : vector<8x1xf32> to vector<8x32xf32>
    %545 = arith.subf %535, %544 : vector<8x32xf32>
    %546 = arith.mulf %545, %545 : vector<8x32xf32>
    %cst_289 = arith.constant dense<0.000000e+00> : vector<8xf32>
    %547 = vector.multi_reduction <add>, %546, %cst_289 [1] : vector<8x32xf32> to vector<8xf32>
    %548 = vector.shape_cast %547 : vector<8xf32> to vector<8x1xf32>
    %cst_290 = arith.constant 3.200000e+01 : f32
    %549 = vector.broadcast %cst_290 : f32 to vector<8x1xf32>
    %550 = arith.divf %548, %549 : vector<8x1xf32>
    %551 = vector.broadcast %543 : vector<8x1xf32> to vector<8x32xf32>
    %552 = arith.subf %535, %551 : vector<8x32xf32>
    %cst_291 = arith.constant 9.99999974E-6 : f32
    %553 = vector.broadcast %cst_291 : f32 to vector<8x1xf32>
    %554 = arith.addf %550, %553 : vector<8x1xf32>
    %555 = math.rsqrt %554 : vector<8x1xf32>
    %556 = vector.broadcast %555 : vector<8x1xf32> to vector<8x32xf32>
    %557 = arith.mulf %552, %556 : vector<8x32xf32>
    %558 = vector.broadcast %539 : vector<1x32xf32> to vector<8x32xf32>
    %559 = arith.mulf %557, %558 : vector<8x32xf32>
    %560 = arith.truncf %559 : vector<8x32xf32> to vector<8x32xbf16>
    %cst_292 = arith.constant 0.000000e+00 : f32
    %561 = vector.broadcast %cst_292 : f32 to vector<8x32xf32>
    %c0_293 = arith.constant 0 : index
    %c0_294 = arith.constant 0 : index
    %c0_295 = arith.constant 0 : index
    %562 = vector.load %arg16[%c0_293, %c0_294, %c0_295] : memref<12x32x8xbf16, #tpu.memory_space<vmem>>, vector<1x32x8xbf16>
    %563 = vector.shape_cast %562 : vector<1x32x8xbf16> to vector<32x8xbf16>
    %cst_296 = arith.constant dense<0.000000e+00> : vector<8x8xf32>
    %564 = tpu.matmul %560, %563, %cst_296 {dimension_numbers = #tpu.dot_dimension_numbers<[1], [0], [0], [1], [0, 0, 1, 1], [], []>} : vector<8x32xbf16>, vector<32x8xbf16>, vector<8x8xf32> -> vector<8x8xf32>
    %c4_297 = arith.constant 4 : index
    %c0_298 = arith.constant 0 : index
    %c0_299 = arith.constant 0 : index
    %565 = vector.load %arg16[%c4_297, %c0_298, %c0_299] : memref<12x32x8xbf16, #tpu.memory_space<vmem>>, vector<1x32x8xbf16>
    %566 = vector.shape_cast %565 : vector<1x32x8xbf16> to vector<32x8xbf16>
    %cst_300 = arith.constant dense<0.000000e+00> : vector<8x8xf32>
    %567 = tpu.matmul %560, %566, %cst_300 {dimension_numbers = #tpu.dot_dimension_numbers<[1], [0], [0], [1], [0, 0, 1, 1], [], []>} : vector<8x32xbf16>, vector<32x8xbf16>, vector<8x8xf32> -> vector<8x8xf32>
    %c8_301 = arith.constant 8 : index
    %c0_302 = arith.constant 0 : index
    %c0_303 = arith.constant 0 : index
    %568 = vector.load %arg16[%c8_301, %c0_302, %c0_303] : memref<12x32x8xbf16, #tpu.memory_space<vmem>>, vector<1x32x8xbf16>
    %569 = vector.shape_cast %568 : vector<1x32x8xbf16> to vector<32x8xbf16>
    %cst_304 = arith.constant dense<0.000000e+00> : vector<8x8xf32>
    %570 = tpu.matmul %560, %569, %cst_304 {dimension_numbers = #tpu.dot_dimension_numbers<[1], [0], [0], [1], [0, 0, 1, 1], [], []>} : vector<8x32xbf16>, vector<32x8xbf16>, vector<8x8xf32> -> vector<8x8xf32>
    %571 = arith.truncf %564 : vector<8x8xf32> to vector<8x8xbf16>
    %572 = arith.truncf %567 : vector<8x8xf32> to vector<8x8xbf16>
    %cst_305 = arith.constant dense<0.000000e+00> : vector<8x8xf32>
    %573 = tpu.matmul %571, %572, %cst_305 {dimension_numbers = #tpu.dot_dimension_numbers<[1], [1], [0], [0], [0, 0, 1, 0], [], []>} : vector<8x8xbf16>, vector<8x8xbf16>, vector<8x8xf32> -> vector<8x8xf32>
    %cst_306 = arith.constant 0.353553385 : f32
    %574 = vector.broadcast %cst_306 : f32 to vector<8x8xf32>
    %575 = arith.mulf %573, %574 : vector<8x8xf32>
    %cst_307 = arith.constant -1.000000e+30 : f32
    %576 = vector.broadcast %cst_307 : f32 to vector<8x8xf32>
    %577 = arith.select %538, %575, %576 : vector<8x8xi1>, vector<8x8xf32>
    %cst_308 = arith.constant dense<0xFF800000> : vector<8xf32>
    %578 = vector.multi_reduction <maximumf>, %577, %cst_308 [1] : vector<8x8xf32> to vector<8xf32>
    %579 = vector.shape_cast %578 : vector<8xf32> to vector<8x1xf32>
    %580 = vector.broadcast %579 : vector<8x1xf32> to vector<8x8xf32>
    %581 = arith.subf %577, %580 : vector<8x8xf32>
    %582 = math.exp %581 : vector<8x8xf32>
    %cst_309 = arith.constant dense<0.000000e+00> : vector<8xf32>
    %583 = vector.multi_reduction <add>, %582, %cst_309 [1] : vector<8x8xf32> to vector<8xf32>
    %584 = vector.shape_cast %583 : vector<8xf32> to vector<8x1xf32>
    %585 = tpu.reciprocal %584 {approx = true} : vector<8x1xf32> -> vector<8x1xf32>
    %586 = vector.broadcast %585 : vector<8x1xf32> to vector<8x8xf32>
    %587 = arith.mulf %582, %586 : vector<8x8xf32>
    %588 = arith.truncf %587 : vector<8x8xf32> to vector<8x8xbf16>
    %589 = arith.truncf %570 : vector<8x8xf32> to vector<8x8xbf16>
    %cst_310 = arith.constant dense<0.000000e+00> : vector<8x8xf32>
    %590 = tpu.matmul %588, %589, %cst_310 {dimension_numbers = #tpu.dot_dimension_numbers<[1], [0], [0], [1], [0, 0, 1, 1], [], []>} : vector<8x8xbf16>, vector<8x8xbf16>, vector<8x8xf32> -> vector<8x8xf32>
    %591 = arith.truncf %590 : vector<8x8xf32> to vector<8x8xbf16>
    %c0_311 = arith.constant 0 : index
    %c0_312 = arith.constant 0 : index
    %c0_313 = arith.constant 0 : index
    %592 = vector.load %arg17[%c0_311, %c0_312, %c0_313] : memref<4x8x32xbf16, #tpu.memory_space<vmem>>, vector<1x8x32xbf16>
    %593 = vector.shape_cast %592 : vector<1x8x32xbf16> to vector<8x32xbf16>
    %cst_314 = arith.constant dense<0.000000e+00> : vector<8x32xf32>
    %594 = tpu.matmul %591, %593, %cst_314 {dimension_numbers = #tpu.dot_dimension_numbers<[1], [0], [0], [1], [0, 0, 1, 1], [], []>} : vector<8x8xbf16>, vector<8x32xbf16>, vector<8x32xf32> -> vector<8x32xf32>
    %595 = arith.addf %561, %594 : vector<8x32xf32>
    %c1_315 = arith.constant 1 : index
    %c0_316 = arith.constant 0 : index
    %c0_317 = arith.constant 0 : index
    %596 = vector.load %arg16[%c1_315, %c0_316, %c0_317] : memref<12x32x8xbf16, #tpu.memory_space<vmem>>, vector<1x32x8xbf16>
    %597 = vector.shape_cast %596 : vector<1x32x8xbf16> to vector<32x8xbf16>
    %cst_318 = arith.constant dense<0.000000e+00> : vector<8x8xf32>
    %598 = tpu.matmul %560, %597, %cst_318 {dimension_numbers = #tpu.dot_dimension_numbers<[1], [0], [0], [1], [0, 0, 1, 1], [], []>} : vector<8x32xbf16>, vector<32x8xbf16>, vector<8x8xf32> -> vector<8x8xf32>
    %c5_319 = arith.constant 5 : index
    %c0_320 = arith.constant 0 : index
    %c0_321 = arith.constant 0 : index
    %599 = vector.load %arg16[%c5_319, %c0_320, %c0_321] : memref<12x32x8xbf16, #tpu.memory_space<vmem>>, vector<1x32x8xbf16>
    %600 = vector.shape_cast %599 : vector<1x32x8xbf16> to vector<32x8xbf16>
    %cst_322 = arith.constant dense<0.000000e+00> : vector<8x8xf32>
    %601 = tpu.matmul %560, %600, %cst_322 {dimension_numbers = #tpu.dot_dimension_numbers<[1], [0], [0], [1], [0, 0, 1, 1], [], []>} : vector<8x32xbf16>, vector<32x8xbf16>, vector<8x8xf32> -> vector<8x8xf32>
    %c9_323 = arith.constant 9 : index
    %c0_324 = arith.constant 0 : index
    %c0_325 = arith.constant 0 : index
    %602 = vector.load %arg16[%c9_323, %c0_324, %c0_325] : memref<12x32x8xbf16, #tpu.memory_space<vmem>>, vector<1x32x8xbf16>
    %603 = vector.shape_cast %602 : vector<1x32x8xbf16> to vector<32x8xbf16>
    %cst_326 = arith.constant dense<0.000000e+00> : vector<8x8xf32>
    %604 = tpu.matmul %560, %603, %cst_326 {dimension_numbers = #tpu.dot_dimension_numbers<[1], [0], [0], [1], [0, 0, 1, 1], [], []>} : vector<8x32xbf16>, vector<32x8xbf16>, vector<8x8xf32> -> vector<8x8xf32>
    %605 = arith.truncf %598 : vector<8x8xf32> to vector<8x8xbf16>
    %606 = arith.truncf %601 : vector<8x8xf32> to vector<8x8xbf16>
    %cst_327 = arith.constant dense<0.000000e+00> : vector<8x8xf32>
    %607 = tpu.matmul %605, %606, %cst_327 {dimension_numbers = #tpu.dot_dimension_numbers<[1], [1], [0], [0], [0, 0, 1, 0], [], []>} : vector<8x8xbf16>, vector<8x8xbf16>, vector<8x8xf32> -> vector<8x8xf32>
    %cst_328 = arith.constant 0.353553385 : f32
    %608 = vector.broadcast %cst_328 : f32 to vector<8x8xf32>
    %609 = arith.mulf %607, %608 : vector<8x8xf32>
    %cst_329 = arith.constant -1.000000e+30 : f32
    %610 = vector.broadcast %cst_329 : f32 to vector<8x8xf32>
    %611 = arith.select %538, %609, %610 : vector<8x8xi1>, vector<8x8xf32>
    %cst_330 = arith.constant dense<0xFF800000> : vector<8xf32>
    %612 = vector.multi_reduction <maximumf>, %611, %cst_330 [1] : vector<8x8xf32> to vector<8xf32>
    %613 = vector.shape_cast %612 : vector<8xf32> to vector<8x1xf32>
    %614 = vector.broadcast %613 : vector<8x1xf32> to vector<8x8xf32>
    %615 = arith.subf %611, %614 : vector<8x8xf32>
    %616 = math.exp %615 : vector<8x8xf32>
    %cst_331 = arith.constant dense<0.000000e+00> : vector<8xf32>
    %617 = vector.multi_reduction <add>, %616, %cst_331 [1] : vector<8x8xf32> to vector<8xf32>
    %618 = vector.shape_cast %617 : vector<8xf32> to vector<8x1xf32>
    %619 = tpu.reciprocal %618 {approx = true} : vector<8x1xf32> -> vector<8x1xf32>
    %620 = vector.broadcast %619 : vector<8x1xf32> to vector<8x8xf32>
    %621 = arith.mulf %616, %620 : vector<8x8xf32>
    %622 = arith.truncf %621 : vector<8x8xf32> to vector<8x8xbf16>
    %623 = arith.truncf %604 : vector<8x8xf32> to vector<8x8xbf16>
    %cst_332 = arith.constant dense<0.000000e+00> : vector<8x8xf32>
    %624 = tpu.matmul %622, %623, %cst_332 {dimension_numbers = #tpu.dot_dimension_numbers<[1], [0], [0], [1], [0, 0, 1, 1], [], []>} : vector<8x8xbf16>, vector<8x8xbf16>, vector<8x8xf32> -> vector<8x8xf32>
    %625 = arith.truncf %624 : vector<8x8xf32> to vector<8x8xbf16>
    %c1_333 = arith.constant 1 : index
    %c0_334 = arith.constant 0 : index
    %c0_335 = arith.constant 0 : index
    %626 = vector.load %arg17[%c1_333, %c0_334, %c0_335] : memref<4x8x32xbf16, #tpu.memory_space<vmem>>, vector<1x8x32xbf16>
    %627 = vector.shape_cast %626 : vector<1x8x32xbf16> to vector<8x32xbf16>
    %cst_336 = arith.constant dense<0.000000e+00> : vector<8x32xf32>
    %628 = tpu.matmul %625, %627, %cst_336 {dimension_numbers = #tpu.dot_dimension_numbers<[1], [0], [0], [1], [0, 0, 1, 1], [], []>} : vector<8x8xbf16>, vector<8x32xbf16>, vector<8x32xf32> -> vector<8x32xf32>
    %629 = arith.addf %595, %628 : vector<8x32xf32>
    %c2_337 = arith.constant 2 : index
    %c0_338 = arith.constant 0 : index
    %c0_339 = arith.constant 0 : index
    %630 = vector.load %arg16[%c2_337, %c0_338, %c0_339] : memref<12x32x8xbf16, #tpu.memory_space<vmem>>, vector<1x32x8xbf16>
    %631 = vector.shape_cast %630 : vector<1x32x8xbf16> to vector<32x8xbf16>
    %cst_340 = arith.constant dense<0.000000e+00> : vector<8x8xf32>
    %632 = tpu.matmul %560, %631, %cst_340 {dimension_numbers = #tpu.dot_dimension_numbers<[1], [0], [0], [1], [0, 0, 1, 1], [], []>} : vector<8x32xbf16>, vector<32x8xbf16>, vector<8x8xf32> -> vector<8x8xf32>
    %c6_341 = arith.constant 6 : index
    %c0_342 = arith.constant 0 : index
    %c0_343 = arith.constant 0 : index
    %633 = vector.load %arg16[%c6_341, %c0_342, %c0_343] : memref<12x32x8xbf16, #tpu.memory_space<vmem>>, vector<1x32x8xbf16>
    %634 = vector.shape_cast %633 : vector<1x32x8xbf16> to vector<32x8xbf16>
    %cst_344 = arith.constant dense<0.000000e+00> : vector<8x8xf32>
    %635 = tpu.matmul %560, %634, %cst_344 {dimension_numbers = #tpu.dot_dimension_numbers<[1], [0], [0], [1], [0, 0, 1, 1], [], []>} : vector<8x32xbf16>, vector<32x8xbf16>, vector<8x8xf32> -> vector<8x8xf32>
    %c10_345 = arith.constant 10 : index
    %c0_346 = arith.constant 0 : index
    %c0_347 = arith.constant 0 : index
    %636 = vector.load %arg16[%c10_345, %c0_346, %c0_347] : memref<12x32x8xbf16, #tpu.memory_space<vmem>>, vector<1x32x8xbf16>
    %637 = vector.shape_cast %636 : vector<1x32x8xbf16> to vector<32x8xbf16>
    %cst_348 = arith.constant dense<0.000000e+00> : vector<8x8xf32>
    %638 = tpu.matmul %560, %637, %cst_348 {dimension_numbers = #tpu.dot_dimension_numbers<[1], [0], [0], [1], [0, 0, 1, 1], [], []>} : vector<8x32xbf16>, vector<32x8xbf16>, vector<8x8xf32> -> vector<8x8xf32>
    %639 = arith.truncf %632 : vector<8x8xf32> to vector<8x8xbf16>
    %640 = arith.truncf %635 : vector<8x8xf32> to vector<8x8xbf16>
    %cst_349 = arith.constant dense<0.000000e+00> : vector<8x8xf32>
    %641 = tpu.matmul %639, %640, %cst_349 {dimension_numbers = #tpu.dot_dimension_numbers<[1], [1], [0], [0], [0, 0, 1, 0], [], []>} : vector<8x8xbf16>, vector<8x8xbf16>, vector<8x8xf32> -> vector<8x8xf32>
    %cst_350 = arith.constant 0.353553385 : f32
    %642 = vector.broadcast %cst_350 : f32 to vector<8x8xf32>
    %643 = arith.mulf %641, %642 : vector<8x8xf32>
    %cst_351 = arith.constant -1.000000e+30 : f32
    %644 = vector.broadcast %cst_351 : f32 to vector<8x8xf32>
    %645 = arith.select %538, %643, %644 : vector<8x8xi1>, vector<8x8xf32>
    %cst_352 = arith.constant dense<0xFF800000> : vector<8xf32>
    %646 = vector.multi_reduction <maximumf>, %645, %cst_352 [1] : vector<8x8xf32> to vector<8xf32>
    %647 = vector.shape_cast %646 : vector<8xf32> to vector<8x1xf32>
    %648 = vector.broadcast %647 : vector<8x1xf32> to vector<8x8xf32>
    %649 = arith.subf %645, %648 : vector<8x8xf32>
    %650 = math.exp %649 : vector<8x8xf32>
    %cst_353 = arith.constant dense<0.000000e+00> : vector<8xf32>
    %651 = vector.multi_reduction <add>, %650, %cst_353 [1] : vector<8x8xf32> to vector<8xf32>
    %652 = vector.shape_cast %651 : vector<8xf32> to vector<8x1xf32>
    %653 = tpu.reciprocal %652 {approx = true} : vector<8x1xf32> -> vector<8x1xf32>
    %654 = vector.broadcast %653 : vector<8x1xf32> to vector<8x8xf32>
    %655 = arith.mulf %650, %654 : vector<8x8xf32>
    %656 = arith.truncf %655 : vector<8x8xf32> to vector<8x8xbf16>
    %657 = arith.truncf %638 : vector<8x8xf32> to vector<8x8xbf16>
    %cst_354 = arith.constant dense<0.000000e+00> : vector<8x8xf32>
    %658 = tpu.matmul %656, %657, %cst_354 {dimension_numbers = #tpu.dot_dimension_numbers<[1], [0], [0], [1], [0, 0, 1, 1], [], []>} : vector<8x8xbf16>, vector<8x8xbf16>, vector<8x8xf32> -> vector<8x8xf32>
    %659 = arith.truncf %658 : vector<8x8xf32> to vector<8x8xbf16>
    %c2_355 = arith.constant 2 : index
    %c0_356 = arith.constant 0 : index
    %c0_357 = arith.constant 0 : index
    %660 = vector.load %arg17[%c2_355, %c0_356, %c0_357] : memref<4x8x32xbf16, #tpu.memory_space<vmem>>, vector<1x8x32xbf16>
    %661 = vector.shape_cast %660 : vector<1x8x32xbf16> to vector<8x32xbf16>
    %cst_358 = arith.constant dense<0.000000e+00> : vector<8x32xf32>
    %662 = tpu.matmul %659, %661, %cst_358 {dimension_numbers = #tpu.dot_dimension_numbers<[1], [0], [0], [1], [0, 0, 1, 1], [], []>} : vector<8x8xbf16>, vector<8x32xbf16>, vector<8x32xf32> -> vector<8x32xf32>
    %663 = arith.addf %629, %662 : vector<8x32xf32>
    %c3_359 = arith.constant 3 : index
    %c0_360 = arith.constant 0 : index
    %c0_361 = arith.constant 0 : index
    %664 = vector.load %arg16[%c3_359, %c0_360, %c0_361] : memref<12x32x8xbf16, #tpu.memory_space<vmem>>, vector<1x32x8xbf16>
    %665 = vector.shape_cast %664 : vector<1x32x8xbf16> to vector<32x8xbf16>
    %cst_362 = arith.constant dense<0.000000e+00> : vector<8x8xf32>
    %666 = tpu.matmul %560, %665, %cst_362 {dimension_numbers = #tpu.dot_dimension_numbers<[1], [0], [0], [1], [0, 0, 1, 1], [], []>} : vector<8x32xbf16>, vector<32x8xbf16>, vector<8x8xf32> -> vector<8x8xf32>
    %c7_363 = arith.constant 7 : index
    %c0_364 = arith.constant 0 : index
    %c0_365 = arith.constant 0 : index
    %667 = vector.load %arg16[%c7_363, %c0_364, %c0_365] : memref<12x32x8xbf16, #tpu.memory_space<vmem>>, vector<1x32x8xbf16>
    %668 = vector.shape_cast %667 : vector<1x32x8xbf16> to vector<32x8xbf16>
    %cst_366 = arith.constant dense<0.000000e+00> : vector<8x8xf32>
    %669 = tpu.matmul %560, %668, %cst_366 {dimension_numbers = #tpu.dot_dimension_numbers<[1], [0], [0], [1], [0, 0, 1, 1], [], []>} : vector<8x32xbf16>, vector<32x8xbf16>, vector<8x8xf32> -> vector<8x8xf32>
    %c11_367 = arith.constant 11 : index
    %c0_368 = arith.constant 0 : index
    %c0_369 = arith.constant 0 : index
    %670 = vector.load %arg16[%c11_367, %c0_368, %c0_369] : memref<12x32x8xbf16, #tpu.memory_space<vmem>>, vector<1x32x8xbf16>
    %671 = vector.shape_cast %670 : vector<1x32x8xbf16> to vector<32x8xbf16>
    %cst_370 = arith.constant dense<0.000000e+00> : vector<8x8xf32>
    %672 = tpu.matmul %560, %671, %cst_370 {dimension_numbers = #tpu.dot_dimension_numbers<[1], [0], [0], [1], [0, 0, 1, 1], [], []>} : vector<8x32xbf16>, vector<32x8xbf16>, vector<8x8xf32> -> vector<8x8xf32>
    %673 = arith.truncf %666 : vector<8x8xf32> to vector<8x8xbf16>
    %674 = arith.truncf %669 : vector<8x8xf32> to vector<8x8xbf16>
    %cst_371 = arith.constant dense<0.000000e+00> : vector<8x8xf32>
    %675 = tpu.matmul %673, %674, %cst_371 {dimension_numbers = #tpu.dot_dimension_numbers<[1], [1], [0], [0], [0, 0, 1, 0], [], []>} : vector<8x8xbf16>, vector<8x8xbf16>, vector<8x8xf32> -> vector<8x8xf32>
    %cst_372 = arith.constant 0.353553385 : f32
    %676 = vector.broadcast %cst_372 : f32 to vector<8x8xf32>
    %677 = arith.mulf %675, %676 : vector<8x8xf32>
    %cst_373 = arith.constant -1.000000e+30 : f32
    %678 = vector.broadcast %cst_373 : f32 to vector<8x8xf32>
    %679 = arith.select %538, %677, %678 : vector<8x8xi1>, vector<8x8xf32>
    %cst_374 = arith.constant dense<0xFF800000> : vector<8xf32>
    %680 = vector.multi_reduction <maximumf>, %679, %cst_374 [1] : vector<8x8xf32> to vector<8xf32>
    %681 = vector.shape_cast %680 : vector<8xf32> to vector<8x1xf32>
    %682 = vector.broadcast %681 : vector<8x1xf32> to vector<8x8xf32>
    %683 = arith.subf %679, %682 : vector<8x8xf32>
    %684 = math.exp %683 : vector<8x8xf32>
    %cst_375 = arith.constant dense<0.000000e+00> : vector<8xf32>
    %685 = vector.multi_reduction <add>, %684, %cst_375 [1] : vector<8x8xf32> to vector<8xf32>
    %686 = vector.shape_cast %685 : vector<8xf32> to vector<8x1xf32>
    %687 = tpu.reciprocal %686 {approx = true} : vector<8x1xf32> -> vector<8x1xf32>
    %688 = vector.broadcast %687 : vector<8x1xf32> to vector<8x8xf32>
    %689 = arith.mulf %684, %688 : vector<8x8xf32>
    %690 = arith.truncf %689 : vector<8x8xf32> to vector<8x8xbf16>
    %691 = arith.truncf %672 : vector<8x8xf32> to vector<8x8xbf16>
    %cst_376 = arith.constant dense<0.000000e+00> : vector<8x8xf32>
    %692 = tpu.matmul %690, %691, %cst_376 {dimension_numbers = #tpu.dot_dimension_numbers<[1], [0], [0], [1], [0, 0, 1, 1], [], []>} : vector<8x8xbf16>, vector<8x8xbf16>, vector<8x8xf32> -> vector<8x8xf32>
    %693 = arith.truncf %692 : vector<8x8xf32> to vector<8x8xbf16>
    %c3_377 = arith.constant 3 : index
    %c0_378 = arith.constant 0 : index
    %c0_379 = arith.constant 0 : index
    %694 = vector.load %arg17[%c3_377, %c0_378, %c0_379] : memref<4x8x32xbf16, #tpu.memory_space<vmem>>, vector<1x8x32xbf16>
    %695 = vector.shape_cast %694 : vector<1x8x32xbf16> to vector<8x32xbf16>
    %cst_380 = arith.constant dense<0.000000e+00> : vector<8x32xf32>
    %696 = tpu.matmul %693, %695, %cst_380 {dimension_numbers = #tpu.dot_dimension_numbers<[1], [0], [0], [1], [0, 0, 1, 1], [], []>} : vector<8x8xbf16>, vector<8x32xbf16>, vector<8x32xf32> -> vector<8x32xf32>
    %697 = arith.addf %663, %696 : vector<8x32xf32>
    %698 = arith.addf %535, %697 : vector<8x32xf32>
    %c1_381 = arith.constant 1 : index
    %c0_382 = arith.constant 0 : index
    %699 = vector.load %arg15[%c1_381, %c0_382] : memref<2x32xf32, #tpu.memory_space<vmem>>, vector<1x32xf32>
    %cst_383 = arith.constant dense<0.000000e+00> : vector<8xf32>
    %700 = vector.multi_reduction <add>, %698, %cst_383 [1] : vector<8x32xf32> to vector<8xf32>
    %701 = vector.shape_cast %700 : vector<8xf32> to vector<8x1xf32>
    %cst_384 = arith.constant 3.200000e+01 : f32
    %702 = vector.broadcast %cst_384 : f32 to vector<8x1xf32>
    %703 = arith.divf %701, %702 : vector<8x1xf32>
    %704 = vector.broadcast %703 : vector<8x1xf32> to vector<8x32xf32>
    %705 = arith.subf %698, %704 : vector<8x32xf32>
    %706 = arith.mulf %705, %705 : vector<8x32xf32>
    %cst_385 = arith.constant dense<0.000000e+00> : vector<8xf32>
    %707 = vector.multi_reduction <add>, %706, %cst_385 [1] : vector<8x32xf32> to vector<8xf32>
    %708 = vector.shape_cast %707 : vector<8xf32> to vector<8x1xf32>
    %cst_386 = arith.constant 3.200000e+01 : f32
    %709 = vector.broadcast %cst_386 : f32 to vector<8x1xf32>
    %710 = arith.divf %708, %709 : vector<8x1xf32>
    %711 = vector.broadcast %703 : vector<8x1xf32> to vector<8x32xf32>
    %712 = arith.subf %698, %711 : vector<8x32xf32>
    %cst_387 = arith.constant 9.99999974E-6 : f32
    %713 = vector.broadcast %cst_387 : f32 to vector<8x1xf32>
    %714 = arith.addf %710, %713 : vector<8x1xf32>
    %715 = math.rsqrt %714 : vector<8x1xf32>
    %716 = vector.broadcast %715 : vector<8x1xf32> to vector<8x32xf32>
    %717 = arith.mulf %712, %716 : vector<8x32xf32>
    %718 = vector.broadcast %699 : vector<1x32xf32> to vector<8x32xf32>
    %719 = arith.mulf %717, %718 : vector<8x32xf32>
    %720 = arith.truncf %719 : vector<8x32xf32> to vector<8x32xbf16>
    %c0_388 = arith.constant 0 : index
    %c0_389 = arith.constant 0 : index
    %c0_390 = arith.constant 0 : index
    %721 = vector.load %arg18[%c0_388, %c0_389, %c0_390] : memref<1x32x128xbf16, #tpu.memory_space<vmem>>, vector<1x32x128xbf16>
    %722 = vector.shape_cast %721 : vector<1x32x128xbf16> to vector<32x128xbf16>
    %cst_391 = arith.constant dense<0.000000e+00> : vector<8x128xf32>
    %723 = tpu.matmul %720, %722, %cst_391 {dimension_numbers = #tpu.dot_dimension_numbers<[1], [0], [0], [1], [0, 0, 1, 1], [], []>} : vector<8x32xbf16>, vector<32x128xbf16>, vector<8x128xf32> -> vector<8x128xf32>
    %cst_392 = arith.constant 5.000000e-01 : f32
    %724 = vector.broadcast %cst_392 : f32 to vector<8x128xf32>
    %725 = arith.mulf %724, %723 : vector<8x128xf32>
    %cst_393 = arith.constant 0.707106769 : f32
    %726 = vector.broadcast %cst_393 : f32 to vector<8x128xf32>
    %727 = arith.mulf %723, %726 : vector<8x128xf32>
    %728 = math.absf %727 : vector<8x128xf32>
    %cst_394 = arith.constant 0.327591091 : f32
    %729 = vector.broadcast %cst_394 : f32 to vector<8x128xf32>
    %730 = arith.mulf %729, %728 : vector<8x128xf32>
    %cst_395 = arith.constant 1.000000e+00 : f32
    %731 = vector.broadcast %cst_395 : f32 to vector<8x128xf32>
    %732 = arith.addf %731, %730 : vector<8x128xf32>
    %cst_396 = arith.constant 1.000000e+00 : f32
    %733 = vector.broadcast %cst_396 : f32 to vector<8x128xf32>
    %734 = arith.divf %733, %732 : vector<8x128xf32>
    %cst_397 = arith.constant 1.06140542 : f32
    %735 = vector.broadcast %cst_397 : f32 to vector<8x128xf32>
    %736 = arith.mulf %735, %734 : vector<8x128xf32>
    %cst_398 = arith.constant -1.45315206 : f32
    %737 = vector.broadcast %cst_398 : f32 to vector<8x128xf32>
    %738 = arith.addf %736, %737 : vector<8x128xf32>
    %739 = arith.mulf %738, %734 : vector<8x128xf32>
    %cst_399 = arith.constant 1.42141378 : f32
    %740 = vector.broadcast %cst_399 : f32 to vector<8x128xf32>
    %741 = arith.addf %739, %740 : vector<8x128xf32>
    %742 = arith.mulf %741, %734 : vector<8x128xf32>
    %cst_400 = arith.constant -0.284496725 : f32
    %743 = vector.broadcast %cst_400 : f32 to vector<8x128xf32>
    %744 = arith.addf %742, %743 : vector<8x128xf32>
    %745 = arith.mulf %744, %734 : vector<8x128xf32>
    %cst_401 = arith.constant 0.254829586 : f32
    %746 = vector.broadcast %cst_401 : f32 to vector<8x128xf32>
    %747 = arith.addf %745, %746 : vector<8x128xf32>
    %748 = arith.mulf %747, %734 : vector<8x128xf32>
    %cst_402 = arith.constant 0.000000e+00 : f32
    %749 = vector.broadcast %cst_402 : f32 to vector<8x128xf32>
    %750 = arith.subf %749, %728 : vector<8x128xf32>
    %751 = arith.mulf %750, %728 : vector<8x128xf32>
    %752 = math.exp %751 : vector<8x128xf32>
    %753 = arith.mulf %748, %752 : vector<8x128xf32>
    %cst_403 = arith.constant 1.000000e+00 : f32
    %754 = vector.broadcast %cst_403 : f32 to vector<8x128xf32>
    %755 = arith.subf %754, %753 : vector<8x128xf32>
    %cst_404 = arith.constant 0.000000e+00 : f32
    %756 = vector.broadcast %cst_404 : f32 to vector<8x128xf32>
    %757 = arith.cmpf oge, %727, %756 : vector<8x128xf32>
    %cst_405 = arith.constant 0.000000e+00 : f32
    %758 = vector.broadcast %cst_405 : f32 to vector<8x128xf32>
    %759 = arith.subf %758, %755 : vector<8x128xf32>
    %760 = arith.select %757, %755, %759 : vector<8x128xi1>, vector<8x128xf32>
    %cst_406 = arith.constant 1.000000e+00 : f32
    %761 = vector.broadcast %cst_406 : f32 to vector<8x128xf32>
    %762 = arith.addf %761, %760 : vector<8x128xf32>
    %763 = arith.mulf %725, %762 : vector<8x128xf32>
    %764 = arith.truncf %763 : vector<8x128xf32> to vector<8x128xbf16>
    %c0_407 = arith.constant 0 : index
    %c0_408 = arith.constant 0 : index
    %c0_409 = arith.constant 0 : index
    %765 = vector.load %arg19[%c0_407, %c0_408, %c0_409] : memref<1x128x32xbf16, #tpu.memory_space<vmem>>, vector<1x128x32xbf16>
    %766 = vector.shape_cast %765 : vector<1x128x32xbf16> to vector<128x32xbf16>
    %cst_410 = arith.constant dense<0.000000e+00> : vector<8x32xf32>
    %767 = tpu.matmul %764, %766, %cst_410 {dimension_numbers = #tpu.dot_dimension_numbers<[1], [0], [0], [1], [0, 0, 1, 1], [], []>} : vector<8x128xbf16>, vector<128x32xbf16>, vector<8x32xf32> -> vector<8x32xf32>
    %768 = arith.addf %698, %767 : vector<8x32xf32>
    %c0_411 = arith.constant 0 : index
    %c0_412 = arith.constant 0 : index
    %769 = vector.load %arg20[%c0_411, %c0_412] : memref<32x16xf32, #tpu.memory_space<vmem>>, vector<32x16xf32>
    %cst_413 = arith.constant dense<0.000000e+00> : vector<8x16xf32>
    %770 = tpu.matmul %768, %769, %cst_413 {dimension_numbers = #tpu.dot_dimension_numbers<[1], [0], [0], [1], [0, 0, 1, 1], [], []>} : vector<8x32xf32>, vector<32x16xf32>, vector<8x16xf32> -> vector<8x16xf32>
    %c0_414 = arith.constant 0 : index
    %c0_415 = arith.constant 0 : index
    %771 = vector.load %arg21[%c0_414, %c0_415] : memref<1x16xf32, #tpu.memory_space<vmem>>, vector<1x16xf32>
    %772 = vector.broadcast %771 : vector<1x16xf32> to vector<8x16xf32>
    %773 = arith.addf %770, %772 : vector<8x16xf32>
    %c0_416 = arith.constant 0 : index
    %c0_417 = arith.constant 0 : index
    %774 = vector.load %arg22[%c0_416, %c0_417] : memref<16x32xf32, #tpu.memory_space<vmem>>, vector<16x32xf32>
    %775 = arith.mulf %773, %773 : vector<8x16xf32>
    %cst_418 = arith.constant dense<0.000000e+00> : vector<8xf32>
    %776 = vector.multi_reduction <add>, %775, %cst_418 [1] : vector<8x16xf32> to vector<8xf32>
    %777 = vector.shape_cast %776 : vector<8xf32> to vector<8x1xf32>
    %cst_419 = arith.constant dense<0.000000e+00> : vector<8x32xf32>
    %778 = tpu.matmul %773, %774, %cst_419 {dimension_numbers = #tpu.dot_dimension_numbers<[1], [0], [0], [1], [0, 0, 1, 1], [], []>} : vector<8x16xf32>, vector<16x32xf32>, vector<8x32xf32> -> vector<8x32xf32>
    %cst_420 = arith.constant 2.000000e+00 : f32
    %779 = vector.broadcast %cst_420 : f32 to vector<8x32xf32>
    %780 = arith.mulf %779, %778 : vector<8x32xf32>
    %781 = vector.broadcast %777 : vector<8x1xf32> to vector<8x32xf32>
    %782 = arith.subf %781, %780 : vector<8x32xf32>
    %783 = arith.mulf %774, %774 : vector<16x32xf32>
    %cst_421 = arith.constant dense<0.000000e+00> : vector<32xf32>
    %784 = vector.multi_reduction <add>, %783, %cst_421 [0] : vector<16x32xf32> to vector<32xf32>
    %785 = vector.shape_cast %784 : vector<32xf32> to vector<1x32xf32>
    %786 = vector.broadcast %785 : vector<1x32xf32> to vector<8x32xf32>
    %787 = arith.addf %782, %786 : vector<8x32xf32>
    %cst_422 = arith.constant dense<0x7F800000> : vector<8xf32>
    %788 = vector.multi_reduction <minimumf>, %787, %cst_422 [1] : vector<8x32xf32> to vector<8xf32>
    %789 = vector.shape_cast %788 : vector<8xf32> to vector<8x1xf32>
    %790 = tpu.iota {dimensions = array<i32: 1>} : vector<8x32xi32>
    %791 = vector.broadcast %789 : vector<8x1xf32> to vector<8x32xf32>
    %792 = arith.cmpf oeq, %787, %791 : vector<8x32xf32>
    %c32_i32 = arith.constant 32 : i32
    %793 = vector.broadcast %c32_i32 : i32 to vector<8x32xi32>
    %794 = arith.select %792, %790, %793 : vector<8x32xi1>, vector<8x32xi32>
    %cst_423 = arith.constant dense<2147483647> : vector<8xi32>
    %795 = vector.multi_reduction <minsi>, %794, %cst_423 [1] : vector<8x32xi32> to vector<8xi32>
    %796 = vector.shape_cast %795 : vector<8xi32> to vector<8x1xi32>
    %797 = vector.broadcast %796 : vector<8x1xi32> to vector<8x32xi32>
    %798 = arith.cmpi eq, %790, %797 : vector<8x32xi32>
    %799 = arith.extui %798 : vector<8x32xi1> to vector<8x32xi32>
    %800 = arith.sitofp %799 : vector<8x32xi32> to vector<8x32xf32>
    %cst_424 = arith.constant dense<0.000000e+00> : vector<8x16xf32>
    %801 = tpu.matmul %800, %774, %cst_424 {dimension_numbers = #tpu.dot_dimension_numbers<[1], [1], [0], [0], [0, 0, 1, 0], [], []>} : vector<8x32xf32>, vector<16x32xf32>, vector<8x16xf32> -> vector<8x16xf32>
    %802 = arith.subf %773, %801 : vector<8x16xf32>
    %803 = arith.mulf %802, %802 : vector<8x16xf32>
    %cst_425 = arith.constant dense<0.000000e+00> : vector<8xf32>
    %804 = vector.multi_reduction <add>, %803, %cst_425 [1] : vector<8x16xf32> to vector<8xf32>
    %805 = vector.shape_cast %804 : vector<8xf32> to vector<8x1xf32>
    %cst_426 = arith.constant dense<0.000000e+00> : vector<1xf32>
    %806 = vector.multi_reduction <add>, %805, %cst_426 [0] : vector<8x1xf32> to vector<1xf32>
    %807 = vector.shape_cast %806 : vector<1xf32> to vector<1x1xf32>
    %c0_427 = arith.constant 0 : index
    %c0_428 = arith.constant 0 : index
    %c0_429 = arith.constant 0 : index
    %808 = vector.load %arg25[%c0_427, %c0_428, %c0_429] : memref<1x1x1xf32, #tpu.memory_space<vmem>>, vector<1x1x1xf32>
    %809 = vector.shape_cast %808 : vector<1x1x1xf32> to vector<1x1xf32>
    %810 = vector.shape_cast %807 : vector<1x1xf32> to vector<1x1x1xf32>
    tpu.vector_store %arg25[%c0_427, %c0_428, %c0_429], %810 {strides = array<i32>} : memref<1x1x1xf32, #tpu.memory_space<vmem>>, vector<1x1x1xf32>,
    %c0_430 = arith.constant 0 : index
    %c0_431 = arith.constant 0 : index
    %c0_432 = arith.constant 0 : index
    %811 = vector.load %arg23[%c0_430, %c0_431, %c0_432] : memref<1x8x16xf32, #tpu.memory_space<vmem>>, vector<1x8x16xf32>
    %812 = vector.shape_cast %811 : vector<1x8x16xf32> to vector<8x16xf32>
    %813 = vector.shape_cast %801 : vector<8x16xf32> to vector<1x8x16xf32>
    tpu.vector_store %arg23[%c0_430, %c0_431, %c0_432], %813 {strides = array<i32>} : memref<1x8x16xf32, #tpu.memory_space<vmem>>, vector<1x8x16xf32>,
    %c0_433 = arith.constant 0 : index
    %c0_434 = arith.constant 0 : index
    %c0_435 = arith.constant 0 : index
    %814 = vector.load %arg24[%c0_433, %c0_434, %c0_435] : memref<1x8x1xi32, #tpu.memory_space<vmem>>, vector<1x8x1xi32>
    %815 = vector.shape_cast %814 : vector<1x8x1xi32> to vector<8x1xi32>
    %816 = vector.shape_cast %796 : vector<8x1xi32> to vector<1x8x1xi32>
    tpu.vector_store %arg24[%c0_433, %c0_434, %c0_435], %816 {strides = array<i32>} : memref<1x8x1xi32, #tpu.memory_space<vmem>>, vector<1x8x1xi32>,
    return
  }
  func.func @transform_0(%arg0: i32) -> (i32, i32, i32) {
    %c0_i32 = arith.constant 0 : i32
    %c0_i32_0 = arith.constant 0 : i32
    %c0_i32_1 = arith.constant 0 : i32
    return %arg0, %c0_i32, %c0_i32_0 : i32, i32, i32
  }
  func.func @transform_1(%arg0: i32) -> (i32, i32, i32) {
    %c0_i32 = arith.constant 0 : i32
    %c0_i32_0 = arith.constant 0 : i32
    %c0_i32_1 = arith.constant 0 : i32
    %c0_i32_2 = arith.constant 0 : i32
    return %c0_i32, %c0_i32_0, %c0_i32_1 : i32, i32, i32
  }
  func.func @transform_2(%arg0: i32) -> (i32, i32) {
    %c0_i32 = arith.constant 0 : i32
    %c0_i32_0 = arith.constant 0 : i32
    %c0_i32_1 = arith.constant 0 : i32
    return %c0_i32, %c0_i32_0 : i32, i32
  }
  func.func @transform_3(%arg0: i32) -> (i32, i32, i32) {
    %c0_i32 = arith.constant 0 : i32
    %c0_i32_0 = arith.constant 0 : i32
    %c0_i32_1 = arith.constant 0 : i32
    %c0_i32_2 = arith.constant 0 : i32
    return %c0_i32, %c0_i32_0, %c0_i32_1 : i32, i32, i32
  }
  func.func @transform_4(%arg0: i32) -> (i32, i32, i32) {
    %c0_i32 = arith.constant 0 : i32
    %c0_i32_0 = arith.constant 0 : i32
    %c0_i32_1 = arith.constant 0 : i32
    %c0_i32_2 = arith.constant 0 : i32
    return %c0_i32, %c0_i32_0, %c0_i32_1 : i32, i32, i32
  }
  func.func @transform_5(%arg0: i32) -> (i32, i32, i32) {
    %c0_i32 = arith.constant 0 : i32
    %c0_i32_0 = arith.constant 0 : i32
    %c0_i32_1 = arith.constant 0 : i32
    %c0_i32_2 = arith.constant 0 : i32
    return %c0_i32, %c0_i32_0, %c0_i32_1 : i32, i32, i32
  }
  func.func @transform_6(%arg0: i32) -> (i32, i32, i32) {
    %c0_i32 = arith.constant 0 : i32
    %c0_i32_0 = arith.constant 0 : i32
    %c0_i32_1 = arith.constant 0 : i32
    %c0_i32_2 = arith.constant 0 : i32
    return %c0_i32, %c0_i32_0, %c0_i32_1 : i32, i32, i32
  }
  func.func @transform_7(%arg0: i32) -> (i32, i32) {
    %c0_i32 = arith.constant 0 : i32
    %c0_i32_0 = arith.constant 0 : i32
    %c0_i32_1 = arith.constant 0 : i32
    return %c0_i32, %c0_i32_0 : i32, i32
  }
  func.func @transform_8(%arg0: i32) -> (i32, i32, i32) {
    %c0_i32 = arith.constant 0 : i32
    %c0_i32_0 = arith.constant 0 : i32
    %c0_i32_1 = arith.constant 0 : i32
    %c0_i32_2 = arith.constant 0 : i32
    return %c0_i32, %c0_i32_0, %c0_i32_1 : i32, i32, i32
  }
  func.func @transform_9(%arg0: i32) -> (i32, i32) {
    %c0_i32 = arith.constant 0 : i32
    %c0_i32_0 = arith.constant 0 : i32
    %c0_i32_1 = arith.constant 0 : i32
    return %c0_i32, %c0_i32_0 : i32, i32
  }
  func.func @transform_10(%arg0: i32) -> (i32, i32, i32) {
    %c0_i32 = arith.constant 0 : i32
    %c0_i32_0 = arith.constant 0 : i32
    %c0_i32_1 = arith.constant 0 : i32
    %c0_i32_2 = arith.constant 0 : i32
    return %c0_i32, %c0_i32_0, %c0_i32_1 : i32, i32, i32
  }
  func.func @transform_11(%arg0: i32) -> (i32, i32) {
    %c0_i32 = arith.constant 0 : i32
    %c0_i32_0 = arith.constant 0 : i32
    %c0_i32_1 = arith.constant 0 : i32
    return %c0_i32, %c0_i32_0 : i32, i32
  }
  func.func @transform_12(%arg0: i32) -> (i32, i32) {
    %c0_i32 = arith.constant 0 : i32
    %c0_i32_0 = arith.constant 0 : i32
    %c0_i32_1 = arith.constant 0 : i32
    return %c0_i32, %c0_i32_0 : i32, i32
  }
  func.func @transform_13(%arg0: i32) -> (i32, i32) {
    %c0_i32 = arith.constant 0 : i32
    %c0_i32_0 = arith.constant 0 : i32
    %c0_i32_1 = arith.constant 0 : i32
    return %c0_i32, %c0_i32_0 : i32, i32
  }
  func.func @transform_14(%arg0: i32) -> (i32, i32) {
    %c0_i32 = arith.constant 0 : i32
    %c0_i32_0 = arith.constant 0 : i32
    %c0_i32_1 = arith.constant 0 : i32
    return %c0_i32, %c0_i32_0 : i32, i32
  }
  func.func @transform_15(%arg0: i32) -> (i32, i32, i32) {
    %c0_i32 = arith.constant 0 : i32
    %c0_i32_0 = arith.constant 0 : i32
    %c0_i32_1 = arith.constant 0 : i32
    %c0_i32_2 = arith.constant 0 : i32
    return %c0_i32, %c0_i32_0, %c0_i32_1 : i32, i32, i32
  }
  func.func @transform_16(%arg0: i32) -> (i32, i32, i32) {
    %c0_i32 = arith.constant 0 : i32
    %c0_i32_0 = arith.constant 0 : i32
    %c0_i32_1 = arith.constant 0 : i32
    %c0_i32_2 = arith.constant 0 : i32
    return %c0_i32, %c0_i32_0, %c0_i32_1 : i32, i32, i32
  }
  func.func @transform_17(%arg0: i32) -> (i32, i32, i32) {
    %c0_i32 = arith.constant 0 : i32
    %c0_i32_0 = arith.constant 0 : i32
    %c0_i32_1 = arith.constant 0 : i32
    %c0_i32_2 = arith.constant 0 : i32
    return %c0_i32, %c0_i32_0, %c0_i32_1 : i32, i32, i32
  }
  func.func @transform_18(%arg0: i32) -> (i32, i32, i32) {
    %c0_i32 = arith.constant 0 : i32
    %c0_i32_0 = arith.constant 0 : i32
    %c0_i32_1 = arith.constant 0 : i32
    %c0_i32_2 = arith.constant 0 : i32
    return %c0_i32, %c0_i32_0, %c0_i32_1 : i32, i32, i32
  }
  func.func @transform_19(%arg0: i32) -> (i32, i32) {
    %c0_i32 = arith.constant 0 : i32
    %c0_i32_0 = arith.constant 0 : i32
    %c0_i32_1 = arith.constant 0 : i32
    return %c0_i32, %c0_i32_0 : i32, i32
  }
  func.func @transform_20(%arg0: i32) -> (i32, i32) {
    %c0_i32 = arith.constant 0 : i32
    %c0_i32_0 = arith.constant 0 : i32
    %c0_i32_1 = arith.constant 0 : i32
    return %c0_i32, %c0_i32_0 : i32, i32
  }
  func.func @transform_21(%arg0: i32) -> (i32, i32) {
    %c0_i32 = arith.constant 0 : i32
    %c0_i32_0 = arith.constant 0 : i32
    %c0_i32_1 = arith.constant 0 : i32
    return %c0_i32, %c0_i32_0 : i32, i32
  }
  func.func @transform_22(%arg0: i32) -> (i32, i32, i32) {
    %c0_i32 = arith.constant 0 : i32
    %c0_i32_0 = arith.constant 0 : i32
    %c0_i32_1 = arith.constant 0 : i32
    return %arg0, %c0_i32, %c0_i32_0 : i32, i32, i32
  }
  func.func @transform_23(%arg0: i32) -> (i32, i32, i32) {
    %c0_i32 = arith.constant 0 : i32
    %c0_i32_0 = arith.constant 0 : i32
    %c0_i32_1 = arith.constant 0 : i32
    return %arg0, %c0_i32, %c0_i32_0 : i32, i32, i32
  }
  func.func @transform_24(%arg0: i32) -> (i32, i32, i32) {
    %c0_i32 = arith.constant 0 : i32
    %c0_i32_0 = arith.constant 0 : i32
    %c0_i32_1 = arith.constant 0 : i32
    return %arg0, %c0_i32, %c0_i32_0 : i32, i32, i32
  }
}

module attributes {stable_mosaic.version = 11 : i64} {
  func.func @_gpt_kernel(%arg0: i32, %arg1: memref<1x23x32xf32, #tpu.memory_space<vmem>>, %arg2: memref<1x23x1xi32, #tpu.memory_space<vmem>>, %arg3: memref<2x32xf32, #tpu.memory_space<vmem>>, %arg4: memref<12x32x8xbf16, #tpu.memory_space<vmem>>, %arg5: memref<4x8x32xbf16, #tpu.memory_space<vmem>>, %arg6: memref<1x32x128xbf16, #tpu.memory_space<vmem>>, %arg7: memref<1x128x32xbf16, #tpu.memory_space<vmem>>, %arg8: memref<1x32xf32, #tpu.memory_space<vmem>>, %arg9: memref<64x32xf32, #tpu.memory_space<vmem>>, %arg10: memref<1x23x64xf32, #tpu.memory_space<vmem>>, %arg11: memref<1x1x1xf32, #tpu.memory_space<vmem>>) attributes {dimension_semantics = [#tpu.dimension_semantics<parallel>], iteration_bounds = array<i64: 2>, scalar_prefetch = 0 : i64, scratch_operands = 0 : i64, tpu.core_type = #tpu.core_type<tc>, window_params = [{transform_indices = @transform_0, window_bounds = array<i64: 1, 23, 32>}, {transform_indices = @transform_1, window_bounds = array<i64: 1, 23, 1>}, {pipeline_mode = #tpu.pipeline_mode<synchronous>, transform_indices = @transform_2, window_bounds = array<i64: 2, 32>}, {pipeline_mode = #tpu.pipeline_mode<synchronous>, transform_indices = @transform_3, window_bounds = array<i64: 12, 32, 8>}, {pipeline_mode = #tpu.pipeline_mode<synchronous>, transform_indices = @transform_4, window_bounds = array<i64: 4, 8, 32>}, {pipeline_mode = #tpu.pipeline_mode<synchronous>, transform_indices = @transform_5, window_bounds = array<i64: 1, 32, 128>}, {pipeline_mode = #tpu.pipeline_mode<synchronous>, transform_indices = @transform_6, window_bounds = array<i64: 1, 128, 32>}, {pipeline_mode = #tpu.pipeline_mode<synchronous>, transform_indices = @transform_7, window_bounds = array<i64: 1, 32>}, {pipeline_mode = #tpu.pipeline_mode<synchronous>, transform_indices = @transform_8, window_bounds = array<i64: 64, 32>}, {transform_indices = @transform_9, window_bounds = array<i64: 1, 23, 64>}, {transform_indices = @transform_10, window_bounds = array<i64: 1, 1, 1>}]} {
    %c0 = arith.constant 0 : index
    %c0_0 = arith.constant 0 : index
    %c0_1 = arith.constant 0 : index
    %0 = vector.load %arg1[%c0, %c0_0, %c0_1] : memref<1x23x32xf32, #tpu.memory_space<vmem>>, vector<1x23x32xf32>
    %1 = vector.shape_cast %0 : vector<1x23x32xf32> to vector<23x32xf32>
    %2 = tpu.iota {dimensions = array<i32: 0>} : vector<23x23xi32>
    %3 = tpu.iota {dimensions = array<i32: 1>} : vector<23x23xi32>
    %4 = arith.cmpi sle, %3, %2 : vector<23x23xi32>
    %c0_2 = arith.constant 0 : index
    %c0_3 = arith.constant 0 : index
    %5 = vector.load %arg3[%c0_2, %c0_3] : memref<2x32xf32, #tpu.memory_space<vmem>>, vector<1x32xf32>
    %cst = arith.constant dense<0.000000e+00> : vector<23xf32>
    %6 = vector.multi_reduction <add>, %1, %cst [1] : vector<23x32xf32> to vector<23xf32>
    %7 = vector.shape_cast %6 : vector<23xf32> to vector<23x1xf32>
    %cst_4 = arith.constant 3.200000e+01 : f32
    %8 = vector.broadcast %cst_4 : f32 to vector<23x1xf32>
    %9 = arith.divf %7, %8 : vector<23x1xf32>
    %10 = vector.broadcast %9 : vector<23x1xf32> to vector<23x32xf32>
    %11 = arith.subf %1, %10 : vector<23x32xf32>
    %12 = arith.mulf %11, %11 : vector<23x32xf32>
    %cst_5 = arith.constant dense<0.000000e+00> : vector<23xf32>
    %13 = vector.multi_reduction <add>, %12, %cst_5 [1] : vector<23x32xf32> to vector<23xf32>
    %14 = vector.shape_cast %13 : vector<23xf32> to vector<23x1xf32>
    %cst_6 = arith.constant 3.200000e+01 : f32
    %15 = vector.broadcast %cst_6 : f32 to vector<23x1xf32>
    %16 = arith.divf %14, %15 : vector<23x1xf32>
    %17 = vector.broadcast %9 : vector<23x1xf32> to vector<23x32xf32>
    %18 = arith.subf %1, %17 : vector<23x32xf32>
    %cst_7 = arith.constant 9.99999974E-6 : f32
    %19 = vector.broadcast %cst_7 : f32 to vector<23x1xf32>
    %20 = arith.addf %16, %19 : vector<23x1xf32>
    %21 = math.rsqrt %20 : vector<23x1xf32>
    %22 = vector.broadcast %21 : vector<23x1xf32> to vector<23x32xf32>
    %23 = arith.mulf %18, %22 : vector<23x32xf32>
    %24 = vector.broadcast %5 : vector<1x32xf32> to vector<23x32xf32>
    %25 = arith.mulf %23, %24 : vector<23x32xf32>
    %26 = arith.truncf %25 : vector<23x32xf32> to vector<23x32xbf16>
    %cst_8 = arith.constant 0.000000e+00 : f32
    %27 = vector.broadcast %cst_8 : f32 to vector<23x32xf32>
    %c0_9 = arith.constant 0 : index
    %c0_10 = arith.constant 0 : index
    %c0_11 = arith.constant 0 : index
    %28 = vector.load %arg4[%c0_9, %c0_10, %c0_11] : memref<12x32x8xbf16, #tpu.memory_space<vmem>>, vector<1x32x8xbf16>
    %29 = vector.shape_cast %28 : vector<1x32x8xbf16> to vector<32x8xbf16>
    %cst_12 = arith.constant dense<0.000000e+00> : vector<23x8xf32>
    %30 = tpu.matmul %26, %29, %cst_12 {dimension_numbers = #tpu.dot_dimension_numbers<[1], [0], [0], [1], [0, 0, 1, 1], [], []>} : vector<23x32xbf16>, vector<32x8xbf16>, vector<23x8xf32> -> vector<23x8xf32>
    %c4 = arith.constant 4 : index
    %c0_13 = arith.constant 0 : index
    %c0_14 = arith.constant 0 : index
    %31 = vector.load %arg4[%c4, %c0_13, %c0_14] : memref<12x32x8xbf16, #tpu.memory_space<vmem>>, vector<1x32x8xbf16>
    %32 = vector.shape_cast %31 : vector<1x32x8xbf16> to vector<32x8xbf16>
    %cst_15 = arith.constant dense<0.000000e+00> : vector<23x8xf32>
    %33 = tpu.matmul %26, %32, %cst_15 {dimension_numbers = #tpu.dot_dimension_numbers<[1], [0], [0], [1], [0, 0, 1, 1], [], []>} : vector<23x32xbf16>, vector<32x8xbf16>, vector<23x8xf32> -> vector<23x8xf32>
    %c8 = arith.constant 8 : index
    %c0_16 = arith.constant 0 : index
    %c0_17 = arith.constant 0 : index
    %34 = vector.load %arg4[%c8, %c0_16, %c0_17] : memref<12x32x8xbf16, #tpu.memory_space<vmem>>, vector<1x32x8xbf16>
    %35 = vector.shape_cast %34 : vector<1x32x8xbf16> to vector<32x8xbf16>
    %cst_18 = arith.constant dense<0.000000e+00> : vector<23x8xf32>
    %36 = tpu.matmul %26, %35, %cst_18 {dimension_numbers = #tpu.dot_dimension_numbers<[1], [0], [0], [1], [0, 0, 1, 1], [], []>} : vector<23x32xbf16>, vector<32x8xbf16>, vector<23x8xf32> -> vector<23x8xf32>
    %37 = arith.truncf %30 : vector<23x8xf32> to vector<23x8xbf16>
    %38 = arith.truncf %33 : vector<23x8xf32> to vector<23x8xbf16>
    %cst_19 = arith.constant dense<0.000000e+00> : vector<23x23xf32>
    %39 = tpu.matmul %37, %38, %cst_19 {dimension_numbers = #tpu.dot_dimension_numbers<[1], [1], [0], [0], [0, 0, 1, 0], [], []>} : vector<23x8xbf16>, vector<23x8xbf16>, vector<23x23xf32> -> vector<23x23xf32>
    %cst_20 = arith.constant 0.353553385 : f32
    %40 = vector.broadcast %cst_20 : f32 to vector<23x23xf32>
    %41 = arith.mulf %39, %40 : vector<23x23xf32>
    %cst_21 = arith.constant -1.000000e+30 : f32
    %42 = vector.broadcast %cst_21 : f32 to vector<23x23xf32>
    %43 = arith.select %4, %41, %42 : vector<23x23xi1>, vector<23x23xf32>
    %cst_22 = arith.constant dense<0xFF800000> : vector<23xf32>
    %44 = vector.multi_reduction <maximumf>, %43, %cst_22 [1] : vector<23x23xf32> to vector<23xf32>
    %45 = vector.shape_cast %44 : vector<23xf32> to vector<23x1xf32>
    %46 = vector.broadcast %45 : vector<23x1xf32> to vector<23x23xf32>
    %47 = arith.subf %43, %46 : vector<23x23xf32>
    %48 = math.exp %47 : vector<23x23xf32>
    %cst_23 = arith.constant dense<0.000000e+00> : vector<23xf32>
    %49 = vector.multi_reduction <add>, %48, %cst_23 [1] : vector<23x23xf32> to vector<23xf32>
    %50 = vector.shape_cast %49 : vector<23xf32> to vector<23x1xf32>
    %51 = tpu.reciprocal %50 {approx = true} : vector<23x1xf32> -> vector<23x1xf32>
    %52 = vector.broadcast %51 : vector<23x1xf32> to vector<23x23xf32>
    %53 = arith.mulf %48, %52 : vector<23x23xf32>
    %54 = arith.truncf %53 : vector<23x23xf32> to vector<23x23xbf16>
    %55 = arith.truncf %36 : vector<23x8xf32> to vector<23x8xbf16>
    %cst_24 = arith.constant dense<0.000000e+00> : vector<23x8xf32>
    %56 = tpu.matmul %54, %55, %cst_24 {dimension_numbers = #tpu.dot_dimension_numbers<[1], [0], [0], [1], [0, 0, 1, 1], [], []>} : vector<23x23xbf16>, vector<23x8xbf16>, vector<23x8xf32> -> vector<23x8xf32>
    %57 = arith.truncf %56 : vector<23x8xf32> to vector<23x8xbf16>
    %c0_25 = arith.constant 0 : index
    %c0_26 = arith.constant 0 : index
    %c0_27 = arith.constant 0 : index
    %58 = vector.load %arg5[%c0_25, %c0_26, %c0_27] : memref<4x8x32xbf16, #tpu.memory_space<vmem>>, vector<1x8x32xbf16>
    %59 = vector.shape_cast %58 : vector<1x8x32xbf16> to vector<8x32xbf16>
    %cst_28 = arith.constant dense<0.000000e+00> : vector<23x32xf32>
    %60 = tpu.matmul %57, %59, %cst_28 {dimension_numbers = #tpu.dot_dimension_numbers<[1], [0], [0], [1], [0, 0, 1, 1], [], []>} : vector<23x8xbf16>, vector<8x32xbf16>, vector<23x32xf32> -> vector<23x32xf32>
    %61 = arith.addf %27, %60 : vector<23x32xf32>
    %c1 = arith.constant 1 : index
    %c0_29 = arith.constant 0 : index
    %c0_30 = arith.constant 0 : index
    %62 = vector.load %arg4[%c1, %c0_29, %c0_30] : memref<12x32x8xbf16, #tpu.memory_space<vmem>>, vector<1x32x8xbf16>
    %63 = vector.shape_cast %62 : vector<1x32x8xbf16> to vector<32x8xbf16>
    %cst_31 = arith.constant dense<0.000000e+00> : vector<23x8xf32>
    %64 = tpu.matmul %26, %63, %cst_31 {dimension_numbers = #tpu.dot_dimension_numbers<[1], [0], [0], [1], [0, 0, 1, 1], [], []>} : vector<23x32xbf16>, vector<32x8xbf16>, vector<23x8xf32> -> vector<23x8xf32>
    %c5 = arith.constant 5 : index
    %c0_32 = arith.constant 0 : index
    %c0_33 = arith.constant 0 : index
    %65 = vector.load %arg4[%c5, %c0_32, %c0_33] : memref<12x32x8xbf16, #tpu.memory_space<vmem>>, vector<1x32x8xbf16>
    %66 = vector.shape_cast %65 : vector<1x32x8xbf16> to vector<32x8xbf16>
    %cst_34 = arith.constant dense<0.000000e+00> : vector<23x8xf32>
    %67 = tpu.matmul %26, %66, %cst_34 {dimension_numbers = #tpu.dot_dimension_numbers<[1], [0], [0], [1], [0, 0, 1, 1], [], []>} : vector<23x32xbf16>, vector<32x8xbf16>, vector<23x8xf32> -> vector<23x8xf32>
    %c9 = arith.constant 9 : index
    %c0_35 = arith.constant 0 : index
    %c0_36 = arith.constant 0 : index
    %68 = vector.load %arg4[%c9, %c0_35, %c0_36] : memref<12x32x8xbf16, #tpu.memory_space<vmem>>, vector<1x32x8xbf16>
    %69 = vector.shape_cast %68 : vector<1x32x8xbf16> to vector<32x8xbf16>
    %cst_37 = arith.constant dense<0.000000e+00> : vector<23x8xf32>
    %70 = tpu.matmul %26, %69, %cst_37 {dimension_numbers = #tpu.dot_dimension_numbers<[1], [0], [0], [1], [0, 0, 1, 1], [], []>} : vector<23x32xbf16>, vector<32x8xbf16>, vector<23x8xf32> -> vector<23x8xf32>
    %71 = arith.truncf %64 : vector<23x8xf32> to vector<23x8xbf16>
    %72 = arith.truncf %67 : vector<23x8xf32> to vector<23x8xbf16>
    %cst_38 = arith.constant dense<0.000000e+00> : vector<23x23xf32>
    %73 = tpu.matmul %71, %72, %cst_38 {dimension_numbers = #tpu.dot_dimension_numbers<[1], [1], [0], [0], [0, 0, 1, 0], [], []>} : vector<23x8xbf16>, vector<23x8xbf16>, vector<23x23xf32> -> vector<23x23xf32>
    %cst_39 = arith.constant 0.353553385 : f32
    %74 = vector.broadcast %cst_39 : f32 to vector<23x23xf32>
    %75 = arith.mulf %73, %74 : vector<23x23xf32>
    %cst_40 = arith.constant -1.000000e+30 : f32
    %76 = vector.broadcast %cst_40 : f32 to vector<23x23xf32>
    %77 = arith.select %4, %75, %76 : vector<23x23xi1>, vector<23x23xf32>
    %cst_41 = arith.constant dense<0xFF800000> : vector<23xf32>
    %78 = vector.multi_reduction <maximumf>, %77, %cst_41 [1] : vector<23x23xf32> to vector<23xf32>
    %79 = vector.shape_cast %78 : vector<23xf32> to vector<23x1xf32>
    %80 = vector.broadcast %79 : vector<23x1xf32> to vector<23x23xf32>
    %81 = arith.subf %77, %80 : vector<23x23xf32>
    %82 = math.exp %81 : vector<23x23xf32>
    %cst_42 = arith.constant dense<0.000000e+00> : vector<23xf32>
    %83 = vector.multi_reduction <add>, %82, %cst_42 [1] : vector<23x23xf32> to vector<23xf32>
    %84 = vector.shape_cast %83 : vector<23xf32> to vector<23x1xf32>
    %85 = tpu.reciprocal %84 {approx = true} : vector<23x1xf32> -> vector<23x1xf32>
    %86 = vector.broadcast %85 : vector<23x1xf32> to vector<23x23xf32>
    %87 = arith.mulf %82, %86 : vector<23x23xf32>
    %88 = arith.truncf %87 : vector<23x23xf32> to vector<23x23xbf16>
    %89 = arith.truncf %70 : vector<23x8xf32> to vector<23x8xbf16>
    %cst_43 = arith.constant dense<0.000000e+00> : vector<23x8xf32>
    %90 = tpu.matmul %88, %89, %cst_43 {dimension_numbers = #tpu.dot_dimension_numbers<[1], [0], [0], [1], [0, 0, 1, 1], [], []>} : vector<23x23xbf16>, vector<23x8xbf16>, vector<23x8xf32> -> vector<23x8xf32>
    %91 = arith.truncf %90 : vector<23x8xf32> to vector<23x8xbf16>
    %c1_44 = arith.constant 1 : index
    %c0_45 = arith.constant 0 : index
    %c0_46 = arith.constant 0 : index
    %92 = vector.load %arg5[%c1_44, %c0_45, %c0_46] : memref<4x8x32xbf16, #tpu.memory_space<vmem>>, vector<1x8x32xbf16>
    %93 = vector.shape_cast %92 : vector<1x8x32xbf16> to vector<8x32xbf16>
    %cst_47 = arith.constant dense<0.000000e+00> : vector<23x32xf32>
    %94 = tpu.matmul %91, %93, %cst_47 {dimension_numbers = #tpu.dot_dimension_numbers<[1], [0], [0], [1], [0, 0, 1, 1], [], []>} : vector<23x8xbf16>, vector<8x32xbf16>, vector<23x32xf32> -> vector<23x32xf32>
    %95 = arith.addf %61, %94 : vector<23x32xf32>
    %c2 = arith.constant 2 : index
    %c0_48 = arith.constant 0 : index
    %c0_49 = arith.constant 0 : index
    %96 = vector.load %arg4[%c2, %c0_48, %c0_49] : memref<12x32x8xbf16, #tpu.memory_space<vmem>>, vector<1x32x8xbf16>
    %97 = vector.shape_cast %96 : vector<1x32x8xbf16> to vector<32x8xbf16>
    %cst_50 = arith.constant dense<0.000000e+00> : vector<23x8xf32>
    %98 = tpu.matmul %26, %97, %cst_50 {dimension_numbers = #tpu.dot_dimension_numbers<[1], [0], [0], [1], [0, 0, 1, 1], [], []>} : vector<23x32xbf16>, vector<32x8xbf16>, vector<23x8xf32> -> vector<23x8xf32>
    %c6 = arith.constant 6 : index
    %c0_51 = arith.constant 0 : index
    %c0_52 = arith.constant 0 : index
    %99 = vector.load %arg4[%c6, %c0_51, %c0_52] : memref<12x32x8xbf16, #tpu.memory_space<vmem>>, vector<1x32x8xbf16>
    %100 = vector.shape_cast %99 : vector<1x32x8xbf16> to vector<32x8xbf16>
    %cst_53 = arith.constant dense<0.000000e+00> : vector<23x8xf32>
    %101 = tpu.matmul %26, %100, %cst_53 {dimension_numbers = #tpu.dot_dimension_numbers<[1], [0], [0], [1], [0, 0, 1, 1], [], []>} : vector<23x32xbf16>, vector<32x8xbf16>, vector<23x8xf32> -> vector<23x8xf32>
    %c10 = arith.constant 10 : index
    %c0_54 = arith.constant 0 : index
    %c0_55 = arith.constant 0 : index
    %102 = vector.load %arg4[%c10, %c0_54, %c0_55] : memref<12x32x8xbf16, #tpu.memory_space<vmem>>, vector<1x32x8xbf16>
    %103 = vector.shape_cast %102 : vector<1x32x8xbf16> to vector<32x8xbf16>
    %cst_56 = arith.constant dense<0.000000e+00> : vector<23x8xf32>
    %104 = tpu.matmul %26, %103, %cst_56 {dimension_numbers = #tpu.dot_dimension_numbers<[1], [0], [0], [1], [0, 0, 1, 1], [], []>} : vector<23x32xbf16>, vector<32x8xbf16>, vector<23x8xf32> -> vector<23x8xf32>
    %105 = arith.truncf %98 : vector<23x8xf32> to vector<23x8xbf16>
    %106 = arith.truncf %101 : vector<23x8xf32> to vector<23x8xbf16>
    %cst_57 = arith.constant dense<0.000000e+00> : vector<23x23xf32>
    %107 = tpu.matmul %105, %106, %cst_57 {dimension_numbers = #tpu.dot_dimension_numbers<[1], [1], [0], [0], [0, 0, 1, 0], [], []>} : vector<23x8xbf16>, vector<23x8xbf16>, vector<23x23xf32> -> vector<23x23xf32>
    %cst_58 = arith.constant 0.353553385 : f32
    %108 = vector.broadcast %cst_58 : f32 to vector<23x23xf32>
    %109 = arith.mulf %107, %108 : vector<23x23xf32>
    %cst_59 = arith.constant -1.000000e+30 : f32
    %110 = vector.broadcast %cst_59 : f32 to vector<23x23xf32>
    %111 = arith.select %4, %109, %110 : vector<23x23xi1>, vector<23x23xf32>
    %cst_60 = arith.constant dense<0xFF800000> : vector<23xf32>
    %112 = vector.multi_reduction <maximumf>, %111, %cst_60 [1] : vector<23x23xf32> to vector<23xf32>
    %113 = vector.shape_cast %112 : vector<23xf32> to vector<23x1xf32>
    %114 = vector.broadcast %113 : vector<23x1xf32> to vector<23x23xf32>
    %115 = arith.subf %111, %114 : vector<23x23xf32>
    %116 = math.exp %115 : vector<23x23xf32>
    %cst_61 = arith.constant dense<0.000000e+00> : vector<23xf32>
    %117 = vector.multi_reduction <add>, %116, %cst_61 [1] : vector<23x23xf32> to vector<23xf32>
    %118 = vector.shape_cast %117 : vector<23xf32> to vector<23x1xf32>
    %119 = tpu.reciprocal %118 {approx = true} : vector<23x1xf32> -> vector<23x1xf32>
    %120 = vector.broadcast %119 : vector<23x1xf32> to vector<23x23xf32>
    %121 = arith.mulf %116, %120 : vector<23x23xf32>
    %122 = arith.truncf %121 : vector<23x23xf32> to vector<23x23xbf16>
    %123 = arith.truncf %104 : vector<23x8xf32> to vector<23x8xbf16>
    %cst_62 = arith.constant dense<0.000000e+00> : vector<23x8xf32>
    %124 = tpu.matmul %122, %123, %cst_62 {dimension_numbers = #tpu.dot_dimension_numbers<[1], [0], [0], [1], [0, 0, 1, 1], [], []>} : vector<23x23xbf16>, vector<23x8xbf16>, vector<23x8xf32> -> vector<23x8xf32>
    %125 = arith.truncf %124 : vector<23x8xf32> to vector<23x8xbf16>
    %c2_63 = arith.constant 2 : index
    %c0_64 = arith.constant 0 : index
    %c0_65 = arith.constant 0 : index
    %126 = vector.load %arg5[%c2_63, %c0_64, %c0_65] : memref<4x8x32xbf16, #tpu.memory_space<vmem>>, vector<1x8x32xbf16>
    %127 = vector.shape_cast %126 : vector<1x8x32xbf16> to vector<8x32xbf16>
    %cst_66 = arith.constant dense<0.000000e+00> : vector<23x32xf32>
    %128 = tpu.matmul %125, %127, %cst_66 {dimension_numbers = #tpu.dot_dimension_numbers<[1], [0], [0], [1], [0, 0, 1, 1], [], []>} : vector<23x8xbf16>, vector<8x32xbf16>, vector<23x32xf32> -> vector<23x32xf32>
    %129 = arith.addf %95, %128 : vector<23x32xf32>
    %c3 = arith.constant 3 : index
    %c0_67 = arith.constant 0 : index
    %c0_68 = arith.constant 0 : index
    %130 = vector.load %arg4[%c3, %c0_67, %c0_68] : memref<12x32x8xbf16, #tpu.memory_space<vmem>>, vector<1x32x8xbf16>
    %131 = vector.shape_cast %130 : vector<1x32x8xbf16> to vector<32x8xbf16>
    %cst_69 = arith.constant dense<0.000000e+00> : vector<23x8xf32>
    %132 = tpu.matmul %26, %131, %cst_69 {dimension_numbers = #tpu.dot_dimension_numbers<[1], [0], [0], [1], [0, 0, 1, 1], [], []>} : vector<23x32xbf16>, vector<32x8xbf16>, vector<23x8xf32> -> vector<23x8xf32>
    %c7 = arith.constant 7 : index
    %c0_70 = arith.constant 0 : index
    %c0_71 = arith.constant 0 : index
    %133 = vector.load %arg4[%c7, %c0_70, %c0_71] : memref<12x32x8xbf16, #tpu.memory_space<vmem>>, vector<1x32x8xbf16>
    %134 = vector.shape_cast %133 : vector<1x32x8xbf16> to vector<32x8xbf16>
    %cst_72 = arith.constant dense<0.000000e+00> : vector<23x8xf32>
    %135 = tpu.matmul %26, %134, %cst_72 {dimension_numbers = #tpu.dot_dimension_numbers<[1], [0], [0], [1], [0, 0, 1, 1], [], []>} : vector<23x32xbf16>, vector<32x8xbf16>, vector<23x8xf32> -> vector<23x8xf32>
    %c11 = arith.constant 11 : index
    %c0_73 = arith.constant 0 : index
    %c0_74 = arith.constant 0 : index
    %136 = vector.load %arg4[%c11, %c0_73, %c0_74] : memref<12x32x8xbf16, #tpu.memory_space<vmem>>, vector<1x32x8xbf16>
    %137 = vector.shape_cast %136 : vector<1x32x8xbf16> to vector<32x8xbf16>
    %cst_75 = arith.constant dense<0.000000e+00> : vector<23x8xf32>
    %138 = tpu.matmul %26, %137, %cst_75 {dimension_numbers = #tpu.dot_dimension_numbers<[1], [0], [0], [1], [0, 0, 1, 1], [], []>} : vector<23x32xbf16>, vector<32x8xbf16>, vector<23x8xf32> -> vector<23x8xf32>
    %139 = arith.truncf %132 : vector<23x8xf32> to vector<23x8xbf16>
    %140 = arith.truncf %135 : vector<23x8xf32> to vector<23x8xbf16>
    %cst_76 = arith.constant dense<0.000000e+00> : vector<23x23xf32>
    %141 = tpu.matmul %139, %140, %cst_76 {dimension_numbers = #tpu.dot_dimension_numbers<[1], [1], [0], [0], [0, 0, 1, 0], [], []>} : vector<23x8xbf16>, vector<23x8xbf16>, vector<23x23xf32> -> vector<23x23xf32>
    %cst_77 = arith.constant 0.353553385 : f32
    %142 = vector.broadcast %cst_77 : f32 to vector<23x23xf32>
    %143 = arith.mulf %141, %142 : vector<23x23xf32>
    %cst_78 = arith.constant -1.000000e+30 : f32
    %144 = vector.broadcast %cst_78 : f32 to vector<23x23xf32>
    %145 = arith.select %4, %143, %144 : vector<23x23xi1>, vector<23x23xf32>
    %cst_79 = arith.constant dense<0xFF800000> : vector<23xf32>
    %146 = vector.multi_reduction <maximumf>, %145, %cst_79 [1] : vector<23x23xf32> to vector<23xf32>
    %147 = vector.shape_cast %146 : vector<23xf32> to vector<23x1xf32>
    %148 = vector.broadcast %147 : vector<23x1xf32> to vector<23x23xf32>
    %149 = arith.subf %145, %148 : vector<23x23xf32>
    %150 = math.exp %149 : vector<23x23xf32>
    %cst_80 = arith.constant dense<0.000000e+00> : vector<23xf32>
    %151 = vector.multi_reduction <add>, %150, %cst_80 [1] : vector<23x23xf32> to vector<23xf32>
    %152 = vector.shape_cast %151 : vector<23xf32> to vector<23x1xf32>
    %153 = tpu.reciprocal %152 {approx = true} : vector<23x1xf32> -> vector<23x1xf32>
    %154 = vector.broadcast %153 : vector<23x1xf32> to vector<23x23xf32>
    %155 = arith.mulf %150, %154 : vector<23x23xf32>
    %156 = arith.truncf %155 : vector<23x23xf32> to vector<23x23xbf16>
    %157 = arith.truncf %138 : vector<23x8xf32> to vector<23x8xbf16>
    %cst_81 = arith.constant dense<0.000000e+00> : vector<23x8xf32>
    %158 = tpu.matmul %156, %157, %cst_81 {dimension_numbers = #tpu.dot_dimension_numbers<[1], [0], [0], [1], [0, 0, 1, 1], [], []>} : vector<23x23xbf16>, vector<23x8xbf16>, vector<23x8xf32> -> vector<23x8xf32>
    %159 = arith.truncf %158 : vector<23x8xf32> to vector<23x8xbf16>
    %c3_82 = arith.constant 3 : index
    %c0_83 = arith.constant 0 : index
    %c0_84 = arith.constant 0 : index
    %160 = vector.load %arg5[%c3_82, %c0_83, %c0_84] : memref<4x8x32xbf16, #tpu.memory_space<vmem>>, vector<1x8x32xbf16>
    %161 = vector.shape_cast %160 : vector<1x8x32xbf16> to vector<8x32xbf16>
    %cst_85 = arith.constant dense<0.000000e+00> : vector<23x32xf32>
    %162 = tpu.matmul %159, %161, %cst_85 {dimension_numbers = #tpu.dot_dimension_numbers<[1], [0], [0], [1], [0, 0, 1, 1], [], []>} : vector<23x8xbf16>, vector<8x32xbf16>, vector<23x32xf32> -> vector<23x32xf32>
    %163 = arith.addf %129, %162 : vector<23x32xf32>
    %164 = arith.addf %1, %163 : vector<23x32xf32>
    %c1_86 = arith.constant 1 : index
    %c0_87 = arith.constant 0 : index
    %165 = vector.load %arg3[%c1_86, %c0_87] : memref<2x32xf32, #tpu.memory_space<vmem>>, vector<1x32xf32>
    %cst_88 = arith.constant dense<0.000000e+00> : vector<23xf32>
    %166 = vector.multi_reduction <add>, %164, %cst_88 [1] : vector<23x32xf32> to vector<23xf32>
    %167 = vector.shape_cast %166 : vector<23xf32> to vector<23x1xf32>
    %cst_89 = arith.constant 3.200000e+01 : f32
    %168 = vector.broadcast %cst_89 : f32 to vector<23x1xf32>
    %169 = arith.divf %167, %168 : vector<23x1xf32>
    %170 = vector.broadcast %169 : vector<23x1xf32> to vector<23x32xf32>
    %171 = arith.subf %164, %170 : vector<23x32xf32>
    %172 = arith.mulf %171, %171 : vector<23x32xf32>
    %cst_90 = arith.constant dense<0.000000e+00> : vector<23xf32>
    %173 = vector.multi_reduction <add>, %172, %cst_90 [1] : vector<23x32xf32> to vector<23xf32>
    %174 = vector.shape_cast %173 : vector<23xf32> to vector<23x1xf32>
    %cst_91 = arith.constant 3.200000e+01 : f32
    %175 = vector.broadcast %cst_91 : f32 to vector<23x1xf32>
    %176 = arith.divf %174, %175 : vector<23x1xf32>
    %177 = vector.broadcast %169 : vector<23x1xf32> to vector<23x32xf32>
    %178 = arith.subf %164, %177 : vector<23x32xf32>
    %cst_92 = arith.constant 9.99999974E-6 : f32
    %179 = vector.broadcast %cst_92 : f32 to vector<23x1xf32>
    %180 = arith.addf %176, %179 : vector<23x1xf32>
    %181 = math.rsqrt %180 : vector<23x1xf32>
    %182 = vector.broadcast %181 : vector<23x1xf32> to vector<23x32xf32>
    %183 = arith.mulf %178, %182 : vector<23x32xf32>
    %184 = vector.broadcast %165 : vector<1x32xf32> to vector<23x32xf32>
    %185 = arith.mulf %183, %184 : vector<23x32xf32>
    %186 = arith.truncf %185 : vector<23x32xf32> to vector<23x32xbf16>
    %c0_93 = arith.constant 0 : index
    %c0_94 = arith.constant 0 : index
    %c0_95 = arith.constant 0 : index
    %187 = vector.load %arg6[%c0_93, %c0_94, %c0_95] : memref<1x32x128xbf16, #tpu.memory_space<vmem>>, vector<1x32x128xbf16>
    %188 = vector.shape_cast %187 : vector<1x32x128xbf16> to vector<32x128xbf16>
    %cst_96 = arith.constant dense<0.000000e+00> : vector<23x128xf32>
    %189 = tpu.matmul %186, %188, %cst_96 {dimension_numbers = #tpu.dot_dimension_numbers<[1], [0], [0], [1], [0, 0, 1, 1], [], []>} : vector<23x32xbf16>, vector<32x128xbf16>, vector<23x128xf32> -> vector<23x128xf32>
    %cst_97 = arith.constant 5.000000e-01 : f32
    %190 = vector.broadcast %cst_97 : f32 to vector<23x128xf32>
    %191 = arith.mulf %190, %189 : vector<23x128xf32>
    %cst_98 = arith.constant 0.707106769 : f32
    %192 = vector.broadcast %cst_98 : f32 to vector<23x128xf32>
    %193 = arith.mulf %189, %192 : vector<23x128xf32>
    %194 = math.absf %193 : vector<23x128xf32>
    %cst_99 = arith.constant 0.327591091 : f32
    %195 = vector.broadcast %cst_99 : f32 to vector<23x128xf32>
    %196 = arith.mulf %195, %194 : vector<23x128xf32>
    %cst_100 = arith.constant 1.000000e+00 : f32
    %197 = vector.broadcast %cst_100 : f32 to vector<23x128xf32>
    %198 = arith.addf %197, %196 : vector<23x128xf32>
    %cst_101 = arith.constant 1.000000e+00 : f32
    %199 = vector.broadcast %cst_101 : f32 to vector<23x128xf32>
    %200 = arith.divf %199, %198 : vector<23x128xf32>
    %cst_102 = arith.constant 1.06140542 : f32
    %201 = vector.broadcast %cst_102 : f32 to vector<23x128xf32>
    %202 = arith.mulf %201, %200 : vector<23x128xf32>
    %cst_103 = arith.constant -1.45315206 : f32
    %203 = vector.broadcast %cst_103 : f32 to vector<23x128xf32>
    %204 = arith.addf %202, %203 : vector<23x128xf32>
    %205 = arith.mulf %204, %200 : vector<23x128xf32>
    %cst_104 = arith.constant 1.42141378 : f32
    %206 = vector.broadcast %cst_104 : f32 to vector<23x128xf32>
    %207 = arith.addf %205, %206 : vector<23x128xf32>
    %208 = arith.mulf %207, %200 : vector<23x128xf32>
    %cst_105 = arith.constant -0.284496725 : f32
    %209 = vector.broadcast %cst_105 : f32 to vector<23x128xf32>
    %210 = arith.addf %208, %209 : vector<23x128xf32>
    %211 = arith.mulf %210, %200 : vector<23x128xf32>
    %cst_106 = arith.constant 0.254829586 : f32
    %212 = vector.broadcast %cst_106 : f32 to vector<23x128xf32>
    %213 = arith.addf %211, %212 : vector<23x128xf32>
    %214 = arith.mulf %213, %200 : vector<23x128xf32>
    %cst_107 = arith.constant 0.000000e+00 : f32
    %215 = vector.broadcast %cst_107 : f32 to vector<23x128xf32>
    %216 = arith.subf %215, %194 : vector<23x128xf32>
    %217 = arith.mulf %216, %194 : vector<23x128xf32>
    %218 = math.exp %217 : vector<23x128xf32>
    %219 = arith.mulf %214, %218 : vector<23x128xf32>
    %cst_108 = arith.constant 1.000000e+00 : f32
    %220 = vector.broadcast %cst_108 : f32 to vector<23x128xf32>
    %221 = arith.subf %220, %219 : vector<23x128xf32>
    %cst_109 = arith.constant 0.000000e+00 : f32
    %222 = vector.broadcast %cst_109 : f32 to vector<23x128xf32>
    %223 = arith.cmpf oge, %193, %222 : vector<23x128xf32>
    %cst_110 = arith.constant 0.000000e+00 : f32
    %224 = vector.broadcast %cst_110 : f32 to vector<23x128xf32>
    %225 = arith.subf %224, %221 : vector<23x128xf32>
    %226 = arith.select %223, %221, %225 : vector<23x128xi1>, vector<23x128xf32>
    %cst_111 = arith.constant 1.000000e+00 : f32
    %227 = vector.broadcast %cst_111 : f32 to vector<23x128xf32>
    %228 = arith.addf %227, %226 : vector<23x128xf32>
    %229 = arith.mulf %191, %228 : vector<23x128xf32>
    %230 = arith.truncf %229 : vector<23x128xf32> to vector<23x128xbf16>
    %c0_112 = arith.constant 0 : index
    %c0_113 = arith.constant 0 : index
    %c0_114 = arith.constant 0 : index
    %231 = vector.load %arg7[%c0_112, %c0_113, %c0_114] : memref<1x128x32xbf16, #tpu.memory_space<vmem>>, vector<1x128x32xbf16>
    %232 = vector.shape_cast %231 : vector<1x128x32xbf16> to vector<128x32xbf16>
    %cst_115 = arith.constant dense<0.000000e+00> : vector<23x32xf32>
    %233 = tpu.matmul %230, %232, %cst_115 {dimension_numbers = #tpu.dot_dimension_numbers<[1], [0], [0], [1], [0, 0, 1, 1], [], []>} : vector<23x128xbf16>, vector<128x32xbf16>, vector<23x32xf32> -> vector<23x32xf32>
    %234 = arith.addf %164, %233 : vector<23x32xf32>
    %c0_116 = arith.constant 0 : index
    %c0_117 = arith.constant 0 : index
    %235 = vector.load %arg8[%c0_116, %c0_117] : memref<1x32xf32, #tpu.memory_space<vmem>>, vector<1x32xf32>
    %cst_118 = arith.constant dense<0.000000e+00> : vector<23xf32>
    %236 = vector.multi_reduction <add>, %234, %cst_118 [1] : vector<23x32xf32> to vector<23xf32>
    %237 = vector.shape_cast %236 : vector<23xf32> to vector<23x1xf32>
    %cst_119 = arith.constant 3.200000e+01 : f32
    %238 = vector.broadcast %cst_119 : f32 to vector<23x1xf32>
    %239 = arith.divf %237, %238 : vector<23x1xf32>
    %240 = vector.broadcast %239 : vector<23x1xf32> to vector<23x32xf32>
    %241 = arith.subf %234, %240 : vector<23x32xf32>
    %242 = arith.mulf %241, %241 : vector<23x32xf32>
    %cst_120 = arith.constant dense<0.000000e+00> : vector<23xf32>
    %243 = vector.multi_reduction <add>, %242, %cst_120 [1] : vector<23x32xf32> to vector<23xf32>
    %244 = vector.shape_cast %243 : vector<23xf32> to vector<23x1xf32>
    %cst_121 = arith.constant 3.200000e+01 : f32
    %245 = vector.broadcast %cst_121 : f32 to vector<23x1xf32>
    %246 = arith.divf %244, %245 : vector<23x1xf32>
    %247 = vector.broadcast %239 : vector<23x1xf32> to vector<23x32xf32>
    %248 = arith.subf %234, %247 : vector<23x32xf32>
    %cst_122 = arith.constant 9.99999974E-6 : f32
    %249 = vector.broadcast %cst_122 : f32 to vector<23x1xf32>
    %250 = arith.addf %246, %249 : vector<23x1xf32>
    %251 = math.rsqrt %250 : vector<23x1xf32>
    %252 = vector.broadcast %251 : vector<23x1xf32> to vector<23x32xf32>
    %253 = arith.mulf %248, %252 : vector<23x32xf32>
    %254 = vector.broadcast %235 : vector<1x32xf32> to vector<23x32xf32>
    %255 = arith.mulf %253, %254 : vector<23x32xf32>
    %256 = arith.truncf %255 : vector<23x32xf32> to vector<23x32xbf16>
    %c0_123 = arith.constant 0 : index
    %c0_124 = arith.constant 0 : index
    %257 = vector.load %arg9[%c0_123, %c0_124] : memref<64x32xf32, #tpu.memory_space<vmem>>, vector<64x32xf32>
    %258 = arith.truncf %257 : vector<64x32xf32> to vector<64x32xbf16>
    %cst_125 = arith.constant dense<0.000000e+00> : vector<23x64xf32>
    %259 = tpu.matmul %256, %258, %cst_125 {dimension_numbers = #tpu.dot_dimension_numbers<[1], [1], [0], [0], [0, 0, 1, 0], [], []>} : vector<23x32xbf16>, vector<64x32xbf16>, vector<23x64xf32> -> vector<23x64xf32>
    %c0_126 = arith.constant 0 : index
    %c0_127 = arith.constant 0 : index
    %c0_128 = arith.constant 0 : index
    %260 = vector.load %arg10[%c0_126, %c0_127, %c0_128] : memref<1x23x64xf32, #tpu.memory_space<vmem>>, vector<1x23x64xf32>
    %261 = vector.shape_cast %260 : vector<1x23x64xf32> to vector<23x64xf32>
    %262 = vector.shape_cast %259 : vector<23x64xf32> to vector<1x23x64xf32>
    tpu.vector_store %arg10[%c0_126, %c0_127, %c0_128], %262 {strides = array<i32>} : memref<1x23x64xf32, #tpu.memory_space<vmem>>, vector<1x23x64xf32>,
    %c0_129 = arith.constant 0 : index
    %c0_130 = arith.constant 0 : index
    %c0_131 = arith.constant 0 : index
    %263 = vector.load %arg2[%c0_129, %c0_130, %c0_131] : memref<1x23x1xi32, #tpu.memory_space<vmem>>, vector<1x23x1xi32>
    %264 = vector.shape_cast %263 : vector<1x23x1xi32> to vector<23x1xi32>
    %cst_132 = arith.constant dense<0xFF800000> : vector<23xf32>
    %265 = vector.multi_reduction <maximumf>, %259, %cst_132 [1] : vector<23x64xf32> to vector<23xf32>
    %266 = vector.shape_cast %265 : vector<23xf32> to vector<23x1xf32>
    %267 = vector.broadcast %266 : vector<23x1xf32> to vector<23x64xf32>
    %268 = arith.subf %259, %267 : vector<23x64xf32>
    %269 = math.exp %268 : vector<23x64xf32>
    %cst_133 = arith.constant dense<0.000000e+00> : vector<23xf32>
    %270 = vector.multi_reduction <add>, %269, %cst_133 [1] : vector<23x64xf32> to vector<23xf32>
    %271 = vector.shape_cast %270 : vector<23xf32> to vector<23x1xf32>
    %272 = math.log %271 : vector<23x1xf32>
    %273 = arith.addf %266, %272 : vector<23x1xf32>
    %274 = tpu.iota {dimensions = array<i32: 1>} : vector<23x64xi32>
    %275 = vector.broadcast %264 : vector<23x1xi32> to vector<23x64xi32>
    %276 = arith.cmpi eq, %274, %275 : vector<23x64xi32>
    %cst_134 = arith.constant 0.000000e+00 : f32
    %277 = vector.broadcast %cst_134 : f32 to vector<23x64xf32>
    %278 = arith.select %276, %259, %277 : vector<23x64xi1>, vector<23x64xf32>
    %cst_135 = arith.constant dense<0.000000e+00> : vector<23xf32>
    %279 = vector.multi_reduction <add>, %278, %cst_135 [1] : vector<23x64xf32> to vector<23xf32>
    %280 = vector.shape_cast %279 : vector<23xf32> to vector<23x1xf32>
    %281 = arith.subf %273, %280 : vector<23x1xf32>
    %cst_136 = arith.constant dense<0.000000e+00> : vector<1xf32>
    %282 = vector.multi_reduction <add>, %281, %cst_136 [0] : vector<23x1xf32> to vector<1xf32>
    %283 = vector.shape_cast %282 : vector<1xf32> to vector<1x1xf32>
    %c0_137 = arith.constant 0 : index
    %c0_138 = arith.constant 0 : index
    %c0_139 = arith.constant 0 : index
    %284 = vector.load %arg11[%c0_137, %c0_138, %c0_139] : memref<1x1x1xf32, #tpu.memory_space<vmem>>, vector<1x1x1xf32>
    %285 = vector.shape_cast %284 : vector<1x1x1xf32> to vector<1x1xf32>
    %286 = vector.shape_cast %283 : vector<1x1xf32> to vector<1x1x1xf32>
    tpu.vector_store %arg11[%c0_137, %c0_138, %c0_139], %286 {strides = array<i32>} : memref<1x1x1xf32, #tpu.memory_space<vmem>>, vector<1x1x1xf32>,
    return
  }
  func.func @transform_0(%arg0: i32) -> (i32, i32, i32) {
    %c0_i32 = arith.constant 0 : i32
    %c0_i32_0 = arith.constant 0 : i32
    %c0_i32_1 = arith.constant 0 : i32
    return %arg0, %c0_i32, %c0_i32_0 : i32, i32, i32
  }
  func.func @transform_1(%arg0: i32) -> (i32, i32, i32) {
    %c0_i32 = arith.constant 0 : i32
    %c0_i32_0 = arith.constant 0 : i32
    %c0_i32_1 = arith.constant 0 : i32
    return %arg0, %c0_i32, %c0_i32_0 : i32, i32, i32
  }
  func.func @transform_2(%arg0: i32) -> (i32, i32) {
    %c0_i32 = arith.constant 0 : i32
    %c0_i32_0 = arith.constant 0 : i32
    %c0_i32_1 = arith.constant 0 : i32
    return %c0_i32, %c0_i32_0 : i32, i32
  }
  func.func @transform_3(%arg0: i32) -> (i32, i32, i32) {
    %c0_i32 = arith.constant 0 : i32
    %c0_i32_0 = arith.constant 0 : i32
    %c0_i32_1 = arith.constant 0 : i32
    %c0_i32_2 = arith.constant 0 : i32
    return %c0_i32, %c0_i32_0, %c0_i32_1 : i32, i32, i32
  }
  func.func @transform_4(%arg0: i32) -> (i32, i32, i32) {
    %c0_i32 = arith.constant 0 : i32
    %c0_i32_0 = arith.constant 0 : i32
    %c0_i32_1 = arith.constant 0 : i32
    %c0_i32_2 = arith.constant 0 : i32
    return %c0_i32, %c0_i32_0, %c0_i32_1 : i32, i32, i32
  }
  func.func @transform_5(%arg0: i32) -> (i32, i32, i32) {
    %c0_i32 = arith.constant 0 : i32
    %c0_i32_0 = arith.constant 0 : i32
    %c0_i32_1 = arith.constant 0 : i32
    %c0_i32_2 = arith.constant 0 : i32
    return %c0_i32, %c0_i32_0, %c0_i32_1 : i32, i32, i32
  }
  func.func @transform_6(%arg0: i32) -> (i32, i32, i32) {
    %c0_i32 = arith.constant 0 : i32
    %c0_i32_0 = arith.constant 0 : i32
    %c0_i32_1 = arith.constant 0 : i32
    %c0_i32_2 = arith.constant 0 : i32
    return %c0_i32, %c0_i32_0, %c0_i32_1 : i32, i32, i32
  }
  func.func @transform_7(%arg0: i32) -> (i32, i32) {
    %c0_i32 = arith.constant 0 : i32
    %c0_i32_0 = arith.constant 0 : i32
    %c0_i32_1 = arith.constant 0 : i32
    return %c0_i32, %c0_i32_0 : i32, i32
  }
  func.func @transform_8(%arg0: i32) -> (i32, i32) {
    %c0_i32 = arith.constant 0 : i32
    %c0_i32_0 = arith.constant 0 : i32
    %c0_i32_1 = arith.constant 0 : i32
    return %c0_i32, %c0_i32_0 : i32, i32
  }
  func.func @transform_9(%arg0: i32) -> (i32, i32, i32) {
    %c0_i32 = arith.constant 0 : i32
    %c0_i32_0 = arith.constant 0 : i32
    %c0_i32_1 = arith.constant 0 : i32
    return %arg0, %c0_i32, %c0_i32_0 : i32, i32, i32
  }
  func.func @transform_10(%arg0: i32) -> (i32, i32, i32) {
    %c0_i32 = arith.constant 0 : i32
    %c0_i32_0 = arith.constant 0 : i32
    %c0_i32_1 = arith.constant 0 : i32
    return %arg0, %c0_i32, %c0_i32_0 : i32, i32, i32
  }
}

</mosaic_0001>

<llo_original>
// kernel: _lambda_.3
$region0: #{_lambda_.3}
  #allocation0 [shape = 'u32[]', space=smem, size = 0x4, offset = 0x4, fixed_abs, tag = 'smem constant byte address 0x4 - core index']
  #allocation1 [shape = 'u32[72,128]{1,0:T(1,128)}', space=vmem, size = 0x9000, scoped, tag = 'internal scratch']
  %s0 = inlined_call_operand.vmem [shape: f32[2,23,32], index: 0, kind: input, shape index: {}]
  %s1 = inlined_call_operand.vmem [shape: s32[2,23,1], index: 1, kind: input, shape index: {}]
  %s2 = inlined_call_operand.vmem [shape: f32[2,32], index: 2, kind: input, shape index: {}]
  %s3 = inlined_call_operand.vmem [shape: bf16[12,32,8], index: 3, kind: input, shape index: {}]
  %s4 = inlined_call_operand.vmem [shape: bf16[4,8,32], index: 4, kind: input, shape index: {}]
  %s5 = inlined_call_operand.vmem [shape: bf16[1,32,128], index: 5, kind: input, shape index: {}]
  %s6 = inlined_call_operand.vmem [shape: bf16[1,128,32], index: 6, kind: input, shape index: {}]
  %s7 = inlined_call_operand.vmem [shape: f32[1,32], index: 7, kind: input, shape index: {}]
  %s8 = inlined_call_operand.vmem [shape: f32[64,32], index: 8, kind: input, shape index: {}]
  %s9 = inlined_call_operand.vmem [shape: f32[2,23,64], index: 9, kind: output, shape index: {0}]
  %s10 = inlined_call_operand.vmem [shape: f32[2,1,1], index: 10, kind: output, shape index: {1}]
  %11 = xla_tuple %s9, %s10
  %s12 = sld [smem:[#allocation0]]
  $region77: #{_lambda_.3} parent=0
    _
  %s14 = ssub.s32 1, %s12
  %s15 = scalar_select 0, %s14, %s12
  loop: start=0, step=1, limit=4
  $region2: #{_lambda_.3} parent=0 // loop_pre_header
    _
  $region3: #{_lambda_.3} parent=0 // loop_header
    %s17 = sphi 0, %s21
    %p18 = scmp.ge.s32.totalorder %s17, 4
    %s27 = sphi 0, %s29
    %s30 = sphi 0, %s27
    %s31 = sphi 0, %s30
    %s47 = sphi 0, %s31
    %s53 = sphi 0, %s55
    %s56 = sphi 0, %s53
    %s57 = sphi 0, %s56
    %s73 = sphi 0, %s57
    %s77 = sphi 0, %s77
    %s79 = sphi 0, %s77
    %s80 = sphi 0, %s79
    %s94 = sphi 0, %s80
    %s98 = sphi 0, %s98
    %s100 = sphi 0, %s98
    %s101 = sphi 0, %s100
    %s115 = sphi 0, %s101
    %s119 = sphi 0, %s119
    %s121 = sphi 0, %s119
    %s122 = sphi 0, %s121
    %s136 = sphi 0, %s122
    %s140 = sphi 0, %s140
    %s142 = sphi 0, %s140
    %s143 = sphi 0, %s142
    %s157 = sphi 0, %s143
    %s161 = sphi 0, %s161
    %s163 = sphi 0, %s161
    %s164 = sphi 0, %s163
    %s178 = sphi 0, %s164
    %s182 = sphi 0, %s182
    %s184 = sphi 0, %s182
    %s185 = sphi 0, %s184
    %s199 = sphi 0, %s185
    %s203 = sphi 0, %s203
    %s205 = sphi 0, %s203
    %s206 = sphi 0, %s205
    %s220 = sphi 0, %s206
    %s226 = sphi 0, %s228
    %s229 = sphi 0, %s226
    %s230 = sphi 0, %s229
    %s246 = sphi 0, %s230
    %s252 = sphi 0, %s254
    %s255 = sphi 0, %s252
    %s256 = sphi 0, %s255
    %s272 = sphi 0, %s256
  $region4: #{_lambda_.3} parent=0 // loop_header_branch
    %20 = sbr.rel (%p18) target = $region8
  $region5: #{_lambda_.3} parent=0 // loop_body
    %s22 = ssub.s32 %s17, 1
    %s23 = ssub.s32 %s17, 2
    %s24 = sadd.s32 %s17, 1
    %s25 = ssub.s32 %s17, %s24
    %p26 = scmp.eq.s32.totalorder %s25, 0
    %s28 = sadd.s32 %s27, 1
    %s29 = scalar_select %p26, %s27, %s28
    %p32 = pneg %p26
    %p33 = scmp.eq.s32.totalorder %s17, 1
    %p34 = por %p32, %p33
    %p35 = scmp.ne.s32.totalorder %s27, %s30
    %p36 = scmp.eq.s32.totalorder %s17, 0
    %p37 = por %p35, %p36
    %p38 = scmp.ne.s32.totalorder %s27, %s30
    %p39 = scmp.eq.s32.totalorder %s22, 1
    %p40 = por %p38, %p39
    %p41 = scmp.ne.s32.totalorder %s30, %s31
    %p42 = scmp.eq.s32.totalorder %s22, 0
    %p43 = por %p41, %p42
    %p44 = scmp.ne.s32.totalorder %s30, %s31
    %p45 = scmp.eq.s32.totalorder %s23, 1
    %p46 = por %p44, %p45
    %p48 = scmp.ne.s32.totalorder %s31, %s47
    %p49 = scmp.eq.s32.totalorder %s23, 0
    %p50 = por %p48, %p49
    %s51 = ssub.s32 %s17, %s24
    %p52 = scmp.eq.s32.totalorder %s51, 0
    %s54 = sadd.s32 %s53, 1
    %s55 = scalar_select %p52, %s53, %s54
    %p58 = pneg %p52
    %p59 = scmp.eq.s32.totalorder %s17, 1
    %p60 = por %p58, %p59
    %p61 = scmp.ne.s32.totalorder %s53, %s56
    %p62 = scmp.eq.s32.totalorder %s17, 0
    %p63 = por %p61, %p62
    %p64 = scmp.ne.s32.totalorder %s53, %s56
    %p65 = scmp.eq.s32.totalorder %s22, 1
    %p66 = por %p64, %p65
    %p67 = scmp.ne.s32.totalorder %s56, %s57
    %p68 = scmp.eq.s32.totalorder %s22, 0
    %p69 = por %p67, %p68
    %p70 = scmp.ne.s32.totalorder %s56, %s57
    %p71 = scmp.eq.s32.totalorder %s23, 1
    %p72 = por %p70, %p71
    %p74 = scmp.ne.s32.totalorder %s57, %s73
    %p75 = scmp.eq.s32.totalorder %s23, 0
    %p76 = por %p74, %p75
    %s78 = sadd.s32 %s77, 1
    %p81 = scmp.eq.s32.totalorder %s17, 1
    %p82 = scmp.ne.s32.totalorder %s77, %s79
    %p83 = scmp.eq.s32.totalorder %s17, 0
    %p84 = por %p82, %p83
    %p85 = scmp.ne.s32.totalorder %s77, %s79
    %p86 = scmp.eq.s32.totalorder %s22, 1
    %p87 = por %p85, %p86
    %p88 = scmp.ne.s32.totalorder %s79, %s80
    %p89 = scmp.eq.s32.totalorder %s22, 0
    %p90 = por %p88, %p89
    %p91 = scmp.ne.s32.totalorder %s79, %s80
    %p92 = scmp.eq.s32.totalorder %s23, 1
    %p93 = por %p91, %p92
    %p95 = scmp.ne.s32.totalorder %s80, %s94
    %p96 = scmp.eq.s32.totalorder %s23, 0
    %p97 = por %p95, %p96
    %s99 = sadd.s32 %s98, 1
    %p102 = scmp.eq.s32.totalorder %s17, 1
    %p103 = scmp.ne.s32.totalorder %s98, %s100
    %p104 = scmp.eq.s32.totalorder %s17, 0
    %p105 = por %p103, %p104
    %p106 = scmp.ne.s32.totalorder %s98, %s100
    %p107 = scmp.eq.s32.totalorder %s22, 1
    %p108 = por %p106, %p107
    %p109 = scmp.ne.s32.totalorder %s100, %s101
    %p110 = scmp.eq.s32.totalorder %s22, 0
    %p111 = por %p109, %p110
    %p112 = scmp.ne.s32.totalorder %s100, %s101
    %p113 = scmp.eq.s32.totalorder %s23, 1
    %p114 = por %p112, %p113
    %p116 = scmp.ne.s32.totalorder %s101, %s115
    %p117 = scmp.eq.s32.totalorder %s23, 0
    %p118 = por %p116, %p117
    %s120 = sadd.s32 %s119, 1
    %p123 = scmp.eq.s32.totalorder %s17, 1
    %p124 = scmp.ne.s32.totalorder %s119, %s121
    %p125 = scmp.eq.s32.totalorder %s17, 0
    %p126 = por %p124, %p125
    %p127 = scmp.ne.s32.totalorder %s119, %s121
    %p128 = scmp.eq.s32.totalorder %s22, 1
    %p129 = por %p127, %p128
    %p130 = scmp.ne.s32.totalorder %s121, %s122
    %p131 = scmp.eq.s32.totalorder %s22, 0
    %p132 = por %p130, %p131
    %p133 = scmp.ne.s32.totalorder %s121, %s122
    %p134 = scmp.eq.s32.totalorder %s23, 1
    %p135 = por %p133, %p134
    %p137 = scmp.ne.s32.totalorder %s122, %s136
    %p138 = scmp.eq.s32.totalorder %s23, 0
    %p139 = por %p137, %p138
    %s141 = sadd.s32 %s140, 1
    %p144 = scmp.eq.s32.totalorder %s17, 1
    %p145 = scmp.ne.s32.totalorder %s140, %s142
    %p146 = scmp.eq.s32.totalorder %s17, 0
    %p147 = por %p145, %p146
    %p148 = scmp.ne.s32.totalorder %s140, %s142
    %p149 = scmp.eq.s32.totalorder %s22, 1
    %p150 = por %p148, %p149
    %p151 = scmp.ne.s32.totalorder %s142, %s143
    %p152 = scmp.eq.s32.totalorder %s22, 0
    %p153 = por %p151, %p152
    %p154 = scmp.ne.s32.totalorder %s142, %s143
    %p155 = scmp.eq.s32.totalorder %s23, 1
    %p156 = por %p154, %p155
    %p158 = scmp.ne.s32.totalorder %s143, %s157
    %p159 = scmp.eq.s32.totalorder %s23, 0
    %p160 = por %p158, %p159
    %s162 = sadd.s32 %s161, 1
    %p165 = scmp.eq.s32.totalorder %s17, 1
    %p166 = scmp.ne.s32.totalorder %s161, %s163
    %p167 = scmp.eq.s32.totalorder %s17, 0
    %p168 = por %p166, %p167
    %p169 = scmp.ne.s32.totalorder %s161, %s163
    %p170 = scmp.eq.s32.totalorder %s22, 1
    %p171 = por %p169, %p170
    %p172 = scmp.ne.s32.totalorder %s163, %s164
    %p173 = scmp.eq.s32.totalorder %s22, 0
    %p174 = por %p172, %p173
    %p175 = scmp.ne.s32.totalorder %s163, %s164
    %p176 = scmp.eq.s32.totalorder %s23, 1
    %p177 = por %p175, %p176
    %p179 = scmp.ne.s32.totalorder %s164, %s178
    %p180 = scmp.eq.s32.totalorder %s23, 0
    %p181 = por %p179, %p180
    %s183 = sadd.s32 %s182, 1
    %p186 = scmp.eq.s32.totalorder %s17, 1
    %p187 = scmp.ne.s32.totalorder %s182, %s184
    %p188 = scmp.eq.s32.totalorder %s17, 0
    %p189 = por %p187, %p188
    %p190 = scmp.ne.s32.totalorder %s182, %s184
    %p191 = scmp.eq.s32.totalorder %s22, 1
    %p192 = por %p190, %p191
    %p193 = scmp.ne.s32.totalorder %s184, %s185
    %p194 = scmp.eq.s32.totalorder %s22, 0
    %p195 = por %p193, %p194
    %p196 = scmp.ne.s32.totalorder %s184, %s185
    %p197 = scmp.eq.s32.totalorder %s23, 1
    %p198 = por %p196, %p197
    %p200 = scmp.ne.s32.totalorder %s185, %s199
    %p201 = scmp.eq.s32.totalorder %s23, 0
    %p202 = por %p200, %p201
    %s204 = sadd.s32 %s203, 1
    %p207 = scmp.eq.s32.totalorder %s17, 1
    %p208 = scmp.ne.s32.totalorder %s203, %s205
    %p209 = scmp.eq.s32.totalorder %s17, 0
    %p210 = por %p208, %p209
    %p211 = scmp.ne.s32.totalorder %s203, %s205
    %p212 = scmp.eq.s32.totalorder %s22, 1
    %p213 = por %p211, %p212
    %p214 = scmp.ne.s32.totalorder %s205, %s206
    %p215 = scmp.eq.s32.totalorder %s22, 0
    %p216 = por %p214, %p215
    %p217 = scmp.ne.s32.totalorder %s205, %s206
    %p218 = scmp.eq.s32.totalorder %s23, 1
    %p219 = por %p217, %p218
    %p221 = scmp.ne.s32.totalorder %s206, %s220
    %p222 = scmp.eq.s32.totalorder %s23, 0
    %p223 = por %p221, %p222
    %s224 = ssub.s32 %s17, %s24
    %p225 = scmp.eq.s32.totalorder %s224, 0
    %s227 = sadd.s32 %s226, 1
    %s228 = scalar_select %p225, %s226, %s227
    %p231 = pneg %p225
    %p232 = scmp.eq.s32.totalorder %s17, 1
    %p233 = por %p231, %p232
    %p234 = scmp.ne.s32.totalorder %s226, %s229
    %p235 = scmp.eq.s32.totalorder %s17, 0
    %p236 = por %p234, %p235
    %p237 = scmp.ne.s32.totalorder %s226, %s229
    %p238 = scmp.eq.s32.totalorder %s22, 1
    %p239 = por %p237, %p238
    %p240 = scmp.ne.s32.totalorder %s229, %s230
    %p241 = scmp.eq.s32.totalorder %s22, 0
    %p242 = por %p240, %p241
    %p243 = scmp.ne.s32.totalorder %s229, %s230
    %p244 = scmp.eq.s32.totalorder %s23, 1
    %p245 = por %p243, %p244
    %p247 = scmp.ne.s32.totalorder %s230, %s246
    %p248 = scmp.eq.s32.totalorder %s23, 0
    %p249 = por %p247, %p248
    %s250 = ssub.s32 %s17, %s24
    %p251 = scmp.eq.s32.totalorder %s250, 0
    %s253 = sadd.s32 %s252, 1
    %s254 = scalar_select %p251, %s252, %s253
    %p257 = pneg %p251
    %p258 = scmp.eq.s32.totalorder %s17, 1
    %p259 = por %p257, %p258
    %p260 = scmp.ne.s32.totalorder %s252, %s255
    %p261 = scmp.eq.s32.totalorder %s17, 0
    %p262 = por %p260, %p261
    %p263 = scmp.ne.s32.totalorder %s252, %s255
    %p264 = scmp.eq.s32.totalorder %s22, 1
    %p265 = por %p263, %p264
    %p266 = scmp.ne.s32.totalorder %s255, %s256
    %p267 = scmp.eq.s32.totalorder %s22, 0
    %p268 = por %p266, %p267
    %p269 = scmp.ne.s32.totalorder %s255, %s256
    %p270 = scmp.eq.s32.totalorder %s23, 1
    %p271 = por %p269, %p270
    %p273 = scmp.ne.s32.totalorder %s256, %s272
    %p274 = scmp.eq.s32.totalorder %s23, 0
    %p275 = por %p273, %p274
    %p276 = scmp.le.s32.totalorder 1, %s17
    %p277 = scmp.lt.s32.totalorder %s17, 3
    %p278 = pnand %p276, %p277
    %p279 = pneg %p278
    // Predicated region
    $region9: #{_lambda_.3} parent=5 // pred_check
      _
    $region10: #{_lambda_.3} parent=5 // pred_check_branch
      %281 = sbr.rel (%p278) target = $region12
    $region11: #{_lambda_.3} parent=5 // pred_region
      %s282 = ssub.s32 %s17, 1
      // Predicated region
      $region13: #{_lambda_.3} parent=11 // pred_check
        %p283 = pneg %p90
      $region14: #{_lambda_.3} parent=11 // pred_check_branch
        %285 = sbr.rel (%p283) target = $region16
      $region15: #{_lambda_.3} parent=11 // pred_region
        _
      $region16: #{_lambda_.3} parent=11 // pred_fallthru
        _
      // Predicated region
      $region17: #{_lambda_.3} parent=11 // pred_check
        %p286 = pneg %p111
      $region18: #{_lambda_.3} parent=11 // pred_check_branch
        %288 = sbr.rel (%p286) target = $region20
      $region19: #{_lambda_.3} parent=11 // pred_region
        _
      $region20: #{_lambda_.3} parent=11 // pred_fallthru
        _
      // Predicated region
      $region21: #{_lambda_.3} parent=11 // pred_check
        %p289 = pneg %p132
      $region22: #{_lambda_.3} parent=11 // pred_check_branch
        %291 = sbr.rel (%p289) target = $region24
      $region23: #{_lambda_.3} parent=11 // pred_region
        _
      $region24: #{_lambda_.3} parent=11 // pred_fallthru
        _
      // Predicated region
      $region25: #{_lambda_.3} parent=11 // pred_check
        %p292 = pneg %p153
      $region26: #{_lambda_.3} parent=11 // pred_check_branch
        %294 = sbr.rel (%p292) target = $region28
      $region27: #{_lambda_.3} parent=11 // pred_region
        _
      $region28: #{_lambda_.3} parent=11 // pred_fallthru
        _
      // Predicated region
      $region29: #{_lambda_.3} parent=11 // pred_check
        %p295 = pneg %p174
      $region30: #{_lambda_.3} parent=11 // pred_check_branch
        %297 = sbr.rel (%p295) target = $region32
      $region31: #{_lambda_.3} parent=11 // pred_region
        _
      $region32: #{_lambda_.3} parent=11 // pred_fallthru
        _
      // Predicated region
      $region33: #{_lambda_.3} parent=11 // pred_check
        %p298 = pneg %p195
      $region34: #{_lambda_.3} parent=11 // pred_check_branch
        %300 = sbr.rel (%p298) target = $region36
      $region35: #{_lambda_.3} parent=11 // pred_region
        _
      $region36: #{_lambda_.3} parent=11 // pred_fallthru
        _
      // Predicated region
      $region37: #{_lambda_.3} parent=11 // pred_check
        %p301 = pneg %p216
      $region38: #{_lambda_.3} parent=11 // pred_check_branch
        %303 = sbr.rel (%p301) target = $region40
      $region39: #{_lambda_.3} parent=11 // pred_region
        _
      $region40: #{_lambda_.3} parent=11 // pred_fallthru
        _
    $region12: #{_lambda_.3} parent=5 // pred_fallthru
      _
    %p304 = scmp.lt.s32.totalorder %s17, 2
    // Predicated region
    $region41: #{_lambda_.3} parent=5 // pred_check
      %p305 = pneg %p304
    $region42: #{_lambda_.3} parent=5 // pred_check_branch
      %307 = sbr.rel (%p305) target = $region44
    $region43: #{_lambda_.3} parent=5 // pred_region
      // Predicated region
      $region45: #{_lambda_.3} parent=43 // pred_check
        %p308 = pneg %p37
      $region46: #{_lambda_.3} parent=43 // pred_check_branch
        %310 = sbr.rel (%p308) target = $region48
      $region47: #{_lambda_.3} parent=43 // pred_region
        %p311 = scmp.lt.s32.totalorder %s17, 1
        %s312 = scalar_select %p311, %s17, 1
        %s313 = smul.addr %s312, 3
        %s314 = smul.addr %s313, 8
        %s315 = scalar_lea.vmem %s0, %s314
      $region48: #{_lambda_.3} parent=43 // pred_fallthru
        _
      // Predicated region
      $region49: #{_lambda_.3} parent=43 // pred_check
        %p316 = pneg %p63
      $region50: #{_lambda_.3} parent=43 // pred_check_branch
        %318 = sbr.rel (%p316) target = $region52
      $region51: #{_lambda_.3} parent=43 // pred_region
        %p319 = scmp.lt.s32.totalorder %s17, 1
        %s320 = scalar_select %p319, %s17, 1
        %s321 = smul.addr %s320, 3
        %s322 = smul.addr %s321, 8
        %s323 = scalar_lea.vmem %s1, %s322
      $region52: #{_lambda_.3} parent=43 // pred_fallthru
        _
    $region44: #{_lambda_.3} parent=5 // pred_fallthru
      _
    %p324 = scmp.le.s32.totalorder 1, %s17
    %p325 = scmp.lt.s32.totalorder %s17, 3
    %p326 = pnand %p324, %p325
    %p327 = pneg %p326
    // Predicated region
    $region53: #{_lambda_.3} parent=5 // pred_check
      _
    $region54: #{_lambda_.3} parent=5 // pred_check_branch
      %329 = sbr.rel (%p326) target = $region56
    $region55: #{_lambda_.3} parent=5 // pred_region
      %s330 = ssub.s32 %s17, 1
      %p331 = scmp.lt.s32.totalorder %s22, 1
      %s332 = scalar_select %p331, %s22, 1
      %s333 = smul.addr %s332, 3
      %s334 = smul.addr %s333, 8
      %s335 = scalar_lea.vmem %s0, %s334
      %p336 = pneg %p43
      %p337 = pneg %p40
      %p338 = scmp.lt.s32.totalorder %s22, 1
      %s339 = scalar_select %p338, %s22, 1
      %s340 = smul.addr %s339, 3
      %s341 = smul.addr %s340, 8
      %s342 = scalar_lea.vmem %s1, %s341
      %p343 = pneg %p69
      %p344 = pneg %p66
      %p345 = pneg %p90
      %p346 = pneg %p87
      %p347 = pneg %p111
      %p348 = pneg %p108
      %p349 = pneg %p132
      %p350 = pneg %p129
      %p351 = pneg %p153
      %p352 = pneg %p150
      %p353 = pneg %p174
      %p354 = pneg %p171
      %p355 = pneg %p195
      %p356 = pneg %p192
      %p357 = pneg %p216
      %p358 = pneg %p213
      %p359 = pneg %p242
      %p360 = pneg %p239
      %p361 = scmp.lt.s32.totalorder %s22, 1
      %s362 = scalar_select %p361, %s22, 1
      %s363 = smul.addr %s362, 3
      %s364 = smul.addr %s363, 8
      %s365 = scalar_lea.vmem %s9, %s364
      %p366 = pneg %p268
      %p367 = pneg %p265
      %p368 = scmp.lt.s32.totalorder %s22, 1
      %s369 = scalar_select %p368, %s22, 1
      %s370 = scalar_lea.vmem %s10, %s369
      %p371 = scmp.lt.s32.totalorder %s22, 1
      %s372 = scalar_select %p371, %s22, 1
      %s373 = smul.addr %s372, 3
      %s374 = smul.addr %s373, 8
      %s375 = scalar_lea.vmem %s0, %s374
      %p376 = scmp.lt.s32.totalorder %s22, 1
      %s377 = scalar_select %p376, %s22, 1
      %s378 = smul.addr %s377, 3
      %s379 = smul.addr %s378, 8
      %s380 = scalar_lea.vmem %s1, %s379
      %p381 = scmp.lt.s32.totalorder %s22, 1
      %s382 = scalar_select %p381, %s22, 1
      %s383 = smul.addr %s382, 3
      %s384 = smul.addr %s383, 8
      %s385 = scalar_lea.vmem %s9, %s384
      %p386 = scmp.lt.s32.totalorder %s22, 1
      %s387 = scalar_select %p386, %s22, 1
      %s388 = scalar_lea.vmem %s10, %s387
      %v390 = vld [vmem:[%s375] sm:$0xff]
      %v391 = vld [vmem:[%s375 + $0x8] sm:$0xff]
      %v392 = vld [vmem:[%s375 + $0x10] sm:$0x7f]
      %v393 = vlaneseq
      %v394 = vshrl.u32 %v393, 7
      %v395 = vadd.s32 %v394, 8
      %v396 = vadd.s32 %v394, 16
      %v397 = vlaneseq
      %v398 = vand.u32 %v397, 127
      %vm399 = vcmp.le.s32.totalorder %v398, %v394
      %vm400 = vcmp.le.s32.totalorder %v398, %v395
      %vm401 = vcmp.le.s32.totalorder %v398, %v396
      %v402 = vld [vmem:[%s2] sm:$0x1]
      %vm403 = vcmask 261120
      %v404 = vsel %vm403, %v390, 0.0
      %405 = vadd.xlane.f32.xlu0 %v404
      %v406 = vpop.xlane.xlu0 %405
      %v407 = vsel %vm403, %v391, 0.0
      %408 = vadd.xlane.f32.xlu0 %v407
      %v409 = vpop.xlane.xlu0 %408
      %vm410 = vcmask 260096
      %v411 = vsel %vm410, %v392, 0.0
      %412 = vadd.xlane.f32.xlu0 %v411
      %v413 = vpop.xlane.xlu0 %412
      %v414 = vrcp.pop 32.0
      %v415 = vmul.f32 32.0, %v414
      %v416 = vsub.f32 1.0, %v415
      %v417 = vmul.f32 %v414, %v416
      %v418 = vadd.f32 %v414, %v417
      %vm419 = vweird.f32 %v414
      %v420 = vsel %vm419, %v414, %v418
      %v421 = vmul.f32 %v406, %v420
      %v422 = vmul.f32 %v409, %v420
      %v423 = vmul.f32 %v413, %v420
      %v424 = vsub.f32 %v390, %v421
      %v425 = vsub.f32 %v391, %v422
      %v426 = vsub.f32 %v392, %v423
      %v427 = vmul.f32 %v424, %v424
      %v428 = vmul.f32 %v425, %v425
      %v429 = vmul.f32 %v426, %v426
      %v430 = vsel %vm403, %v427, 0.0
      %431 = vadd.xlane.f32.xlu0 %v430
      %v432 = vpop.xlane.xlu0 %431
      %v433 = vsel %vm403, %v428, 0.0
      %434 = vadd.xlane.f32.xlu0 %v433
      %v435 = vpop.xlane.xlu0 %434
      %v436 = vsel %vm410, %v429, 0.0
      %437 = vadd.xlane.f32.xlu0 %v436
      %v438 = vpop.xlane.xlu0 %437
      %v439 = vmul.f32 %v432, %v420
      %v440 = vmul.f32 %v435, %v420
      %v441 = vmul.f32 %v438, %v420
      %v442 = vadd.f32 %v439, 1e-05
      %v443 = vadd.f32 %v440, 1e-05
      %v444 = vadd.f32 %v441, 1e-05
      %v445 = vrsqrt.pop %v442
      %v446 = vmul.f32 %v445, %v442
      %v447 = vmul.f32 %v446, %v445
      %v448 = vmul.f32 0.5, %v447
      %v449 = vsub.f32 1.5, %v448
      %v450 = vmul.f32 %v445, %v449
      %vm451 = vweird.f32 %v442
      %vm452 = vweird.f32 %v445
      %vm453 = vmor %vm451, %vm452
      %v454 = vsel %vm453, %v445, %v450
      %v455 = vrsqrt.pop %v443
      %v456 = vmul.f32 %v455, %v443
      %v457 = vmul.f32 %v456, %v455
      %v458 = vmul.f32 0.5, %v457
      %v459 = vsub.f32 1.5, %v458
      %v460 = vmul.f32 %v455, %v459
      %vm461 = vweird.f32 %v443
      %vm462 = vweird.f32 %v455
      %vm463 = vmor %vm461, %vm462
      %v464 = vsel %vm463, %v455, %v460
      %v465 = vrsqrt.pop %v444
      %v466 = vmul.f32 %v465, %v444
      %v467 = vmul.f32 %v466, %v465
      %v468 = vmul.f32 0.5, %v467
      %v469 = vsub.f32 1.5, %v468
      %v470 = vmul.f32 %v465, %v469
      %vm471 = vweird.f32 %v444
      %vm472 = vweird.f32 %v465
      %vm473 = vmor %vm471, %vm472
      %v474 = vsel %vm473, %v465, %v470
      %v475 = vmul.f32 %v424, %v454
      %v476 = vmul.f32 %v425, %v464
      %v477 = vmul.f32 %v426, %v474
      %v478 = vperm.slane %v402, 0
      %v479 = vmul.f32 %v475, %v478
      %v480 = vmul.f32 %v476, %v478
      %v481 = vmul.f32 %v477, %v478
      %v482 = vpack.c.bf16 %v480, %v479
      %v483 = vpack.c.bf16 %v481, %v481
      %v484 = vld [vmem:[%s3] sm:$0xf]
      %v485 = vld [vmem:[%s3 + $0x4] sm:$0xf]
      %v486 = vld [vmem:[%s3 + $0x8] sm:$0xf]
      %v487 = vld [vmem:[%s3 + $0xc] sm:$0xf]
      %v492 = vunpack.c.l.b16 %v484
      %v493 = vunpack.c.l.b16 %v485
      %v494 = vunpack.c.l.b16 %v486
      %v495 = vunpack.c.l.b16 %v487
      %v496 = vpack.c.b16 %v493, %v492
      %v497 = vpack.c.b16 %v495, %v494
      %v501 = vsel %vm403, %v482, 0
      %v504 = vsel %vm403, %v483, 0
      %506 = vmatpush.bf16.msra.mxu0 0
      %507 = vmatpush.bf16.msra.mxu0 0
      %508 = vmatpush.bf16.msra.mxu0 0
      %509 = vmatpush.bf16.msra.mxu0 0
      %510 = vmatpush.bf16.msra.mxu0 0
      %511 = vmatpush.bf16.msra.mxu0 0
      %512 = vmatpush.bf16.msra.mxu0 %v497
      %513 = vmatpush.bf16.msra.mxu0 %v496
      %514 = vmatmul.bf16.gmra.mxu0 %v501
      %v515 = vpop.f32.mrf.mxu0
      %v516 = vadd.f32 0.0, %v515
      %v517 = vpop.f32.mrf.mxu0
      %v518 = vadd.f32 0.0, %v517
      %519 = vmatmul.bf16.gmra.mxu0 %v504
      %v520 = vpop.f32.mrf.mxu0
      %v521 = vadd.f32 0.0, %v520
      %v522 = vpop.f32.mrf.mxu0
      %523 = vdwg.mxu0
      %s524 = scalar_lea.vmem %s3, 64
      %v525 = vld [vmem:[%s524] sm:$0xf]
      %v526 = vld [vmem:[%s524 + $0x4] sm:$0xf]
      %v527 = vld [vmem:[%s524 + $0x8] sm:$0xf]
      %v528 = vld [vmem:[%s524 + $0xc] sm:$0xf]
      %v533 = vunpack.c.l.b16 %v525
      %v534 = vunpack.c.l.b16 %v526
      %v535 = vunpack.c.l.b16 %v527
      %v536 = vunpack.c.l.b16 %v528
      %v537 = vpack.c.b16 %v534, %v533
      %v538 = vpack.c.b16 %v536, %v535
      %541 = vmatpush.bf16.msra.mxu0 0
      %542 = vmatpush.bf16.msra.mxu0 0
      %543 = vmatpush.bf16.msra.mxu0 0
      %544 = vmatpush.bf16.msra.mxu0 0
      %545 = vmatpush.bf16.msra.mxu0 0
      %546 = vmatpush.bf16.msra.mxu0 0
      %547 = vmatpush.bf16.msra.mxu0 %v538
      %548 = vmatpush.bf16.msra.mxu0 %v537
      %549 = vmatmul.bf16.gmra.mxu0 %v501
      %v550 = vpop.f32.mrf.mxu0
      %v551 = vadd.f32 0.0, %v550
      %v552 = vpop.f32.mrf.mxu0
      %v553 = vadd.f32 0.0, %v552
      %554 = vmatmul.bf16.gmra.mxu0 %v504
      %v555 = vpop.f32.mrf.mxu0
      %v556 = vadd.f32 0.0, %v555
      %v557 = vpop.f32.mrf.mxu0
      %558 = vdwg.mxu0
      %s559 = scalar_lea.vmem %s3, 128
      %v560 = vld [vmem:[%s559] sm:$0xf]
      %v561 = vld [vmem:[%s559 + $0x4] sm:$0xf]
      %v562 = vld [vmem:[%s559 + $0x8] sm:$0xf]
      %v563 = vld [vmem:[%s559 + $0xc] sm:$0xf]
      %v568 = vunpack.c.l.b16 %v560
      %v569 = vunpack.c.l.b16 %v561
      %v570 = vunpack.c.l.b16 %v562
      %v571 = vunpack.c.l.b16 %v563
      %v572 = vpack.c.b16 %v569, %v568
      %v573 = vpack.c.b16 %v571, %v570
      %576 = vmatpush.bf16.msra.mxu0 0
      %577 = vmatpush.bf16.msra.mxu0 0
      %578 = vmatpush.bf16.msra.mxu0 0
      %579 = vmatpush.bf16.msra.mxu0 0
      %580 = vmatpush.bf16.msra.mxu0 0
      %581 = vmatpush.bf16.msra.mxu0 0
      %582 = vmatpush.bf16.msra.mxu0 %v573
      %583 = vmatpush.bf16.msra.mxu0 %v572
      %584 = vmatmul.bf16.gmra.mxu0 %v501
      %v585 = vpop.f32.mrf.mxu0
      %v586 = vadd.f32 0.0, %v585
      %v587 = vpop.f32.mrf.mxu0
      %v588 = vadd.f32 0.0, %v587
      %589 = vmatmul.bf16.gmra.mxu0 %v504
      %v590 = vpop.f32.mrf.mxu0
      %v591 = vadd.f32 0.0, %v590
      %v592 = vpop.f32.mrf.mxu0
      %593 = vdwg.mxu0
      %v594 = vpack.c.bf16 %v518, %v516
      %v595 = vpack.c.bf16 %v521, %v521
      %v596 = vpack.c.bf16 %v553, %v551
      %v597 = vpack.c.bf16 %v556, %v556
      %vm598 = vcmask 64512
      %v600 = vsel %vm598, %v594, 0
      %v603 = vsel %vm598, %v595, 0
      %v606 = vsel %vm598, %v596, 0
      %v609 = vsel %vm598, %v597, 0
      %611 = vmatpush.bf16.xpose.msra.mxu0 0
      %612 = vmatpush.bf16.xpose.msra.mxu0 0
      %613 = vmatpush.bf16.xpose.msra.mxu0 0
      %614 = vmatpush.bf16.xpose.msra.mxu0 0
      %615 = vmatpush.bf16.xpose.msra.mxu0 0
      %616 = vmatpush.bf16.xpose.msra.mxu0 0
      %617 = vmatpush.bf16.xpose.msra.mxu0 %v609
      %618 = vmatpush.bf16.xpose.msra.mxu0 %v606
      %619 = vmatmul.bf16.gmra.mxu0 %v600
      %v620 = vpop.f32.mrf.mxu0
      %v621 = vadd.f32 0.0, %v620
      %v622 = vpop.f32.mrf.mxu0
      %v623 = vadd.f32 0.0, %v622
      %624 = vmatmul.bf16.gmra.mxu0 %v603
      %v625 = vpop.f32.mrf.mxu0
      %v626 = vadd.f32 0.0, %v625
      %v627 = vpop.f32.mrf.mxu0
      %628 = vdwg.mxu0
      %v629 = vmul.f32 %v621, 0.35355338
      %v630 = vmul.f32 %v623, 0.35355338
      %v631 = vmul.f32 %v626, 0.35355338
      %v632 = vsel %vm399, %v629, -1e+30
      %v633 = vsel %vm400, %v630, -1e+30
      %v634 = vsel %vm401, %v631, -1e+30
      %vm635 = vcmask 187392
      %v636 = vsel %vm635, %v632, -inf
      %637 = vmax.xlane.f32.xlu0 %v636
      %v638 = vpop.xlane.xlu0 %637
      %v639 = vsel %vm635, %v633, -inf
      %640 = vmax.xlane.f32.xlu0 %v639
      %v641 = vpop.xlane.xlu0 %640
      %vm642 = vcmask 186368
      %v643 = vsel %vm642, %v634, -inf
      %644 = vmax.xlane.f32.xlu0 %v643
      %v645 = vpop.xlane.xlu0 %644
      %v646 = vsub.f32 %v632, %v638
      %v647 = vsub.f32 %v633, %v641
      %v648 = vsub.f32 %v634, %v645
      %v649 = vmul.f32 %v646, 1.442695
      %v650 = vpow.pop %v649
      %v651 = vmul.f32 %v647, 1.442695
      %v652 = vpow.pop %v651
      %v653 = vmul.f32 %v648, 1.442695
      %v654 = vpow.pop %v653
      %v655 = vsel %vm635, %v650, 0.0
      %656 = vadd.xlane.f32.xlu0 %v655
      %v657 = vpop.xlane.xlu0 %656
      %v658 = vsel %vm635, %v652, 0.0
      %659 = vadd.xlane.f32.xlu0 %v658
      %v660 = vpop.xlane.xlu0 %659
      %v661 = vsel %vm642, %v654, 0.0
      %662 = vadd.xlane.f32.xlu0 %v661
      %v663 = vpop.xlane.xlu0 %662
      %v664 = vrcp.pop %v657
      %v665 = vrcp.pop %v660
      %v666 = vrcp.pop %v663
      %v667 = vmul.f32 %v650, %v664
      %v668 = vmul.f32 %v652, %v665
      %v669 = vmul.f32 %v654, %v666
      %v670 = vpack.c.bf16 %v668, %v667
      %v671 = vpack.c.bf16 %v669, %v669
      %v672 = vpack.c.bf16 %v588, %v586
      %v673 = vpack.c.bf16 %v591, %v591
      %v675 = vsel %vm635, %v670, 0
      %v678 = vsel %vm635, %v671, 0
      %vm680 = vcmask 1042432
      %vm681 = vcmask 1043456
      %v682 = vsel %vm680, 4294967295, 65535
      %v683 = vsel %vm681, %v682, 0
      %v685 = vand.u32 %v673, %v683
      %687 = vmatpush.bf16.msra.mxu0 0
      %688 = vmatpush.bf16.msra.mxu0 0
      %689 = vmatpush.bf16.msra.mxu0 0
      %690 = vmatpush.bf16.msra.mxu0 0
      %691 = vmatpush.bf16.msra.mxu0 0
      %692 = vmatpush.bf16.msra.mxu0 0
      %693 = vmatpush.bf16.msra.mxu0 %v685
      %694 = vmatpush.bf16.msra.mxu0 %v672
      %695 = vmatmul.bf16.gmra.mxu0 %v675
      %v696 = vpop.f32.mrf.mxu0
      %v697 = vadd.f32 0.0, %v696
      %v698 = vpop.f32.mrf.mxu0
      %v699 = vadd.f32 0.0, %v698
      %700 = vmatmul.bf16.gmra.mxu0 %v678
      %v701 = vpop.f32.mrf.mxu0
      %v702 = vadd.f32 0.0, %v701
      %v703 = vpop.f32.mrf.mxu0
      %704 = vdwg.mxu0
      %v705 = vpack.c.bf16 %v699, %v697
      %v706 = vpack.c.bf16 %v702, %v702
      %v707 = vld [vmem:[%s4] sm:$0xf]
      %s708 = scalar_lea.vmem %s3, 16
      %v709 = vld [vmem:[%s708] sm:$0xf]
      %v710 = vld [vmem:[%s708 + $0x4] sm:$0xf]
      %v711 = vld [vmem:[%s708 + $0x8] sm:$0xf]
      %v712 = vld [vmem:[%s708 + $0xc] sm:$0xf]
      %v717 = vunpack.c.l.b16 %v709
      %v718 = vunpack.c.l.b16 %v710
      %v719 = vunpack.c.l.b16 %v711
      %v720 = vunpack.c.l.b16 %v712
      %v721 = vpack.c.b16 %v718, %v717
      %v722 = vpack.c.b16 %v720, %v719
      %725 = vmatpush.bf16.msra.mxu0 0
      %726 = vmatpush.bf16.msra.mxu0 0
      %727 = vmatpush.bf16.msra.mxu0 0
      %728 = vmatpush.bf16.msra.mxu0 0
      %729 = vmatpush.bf16.msra.mxu0 0
      %730 = vmatpush.bf16.msra.mxu0 0
      %731 = vmatpush.bf16.msra.mxu0 %v722
      %732 = vmatpush.bf16.msra.mxu0 %v721
      %733 = vmatmul.bf16.gmra.mxu0 %v501
      %v734 = vpop.f32.mrf.mxu0
      %v735 = vadd.f32 0.0, %v734
      %v736 = vpop.f32.mrf.mxu0
      %v737 = vadd.f32 0.0, %v736
      %738 = vmatmul.bf16.gmra.mxu0 %v504
      %v739 = vpop.f32.mrf.mxu0
      %v740 = vadd.f32 0.0, %v739
      %v741 = vpop.f32.mrf.mxu0
      %742 = vdwg.mxu0
      %s743 = scalar_lea.vmem %s3, 80
      %v744 = vld [vmem:[%s743] sm:$0xf]
      %v745 = vld [vmem:[%s743 + $0x4] sm:$0xf]
      %v746 = vld [vmem:[%s743 + $0x8] sm:$0xf]
      %v747 = vld [vmem:[%s743 + $0xc] sm:$0xf]
      %v752 = vunpack.c.l.b16 %v744
      %v753 = vunpack.c.l.b16 %v745
      %v754 = vunpack.c.l.b16 %v746
      %v755 = vunpack.c.l.b16 %v747
      %v756 = vpack.c.b16 %v753, %v752
      %v757 = vpack.c.b16 %v755, %v754
      %760 = vmatpush.bf16.msra.mxu0 0
      %761 = vmatpush.bf16.msra.mxu0 0
      %762 = vmatpush.bf16.msra.mxu0 0
      %763 = vmatpush.bf16.msra.mxu0 0
      %764 = vmatpush.bf16.msra.mxu0 0
      %765 = vmatpush.bf16.msra.mxu0 0
      %766 = vmatpush.bf16.msra.mxu0 %v757
      %767 = vmatpush.bf16.msra.mxu0 %v756
      %768 = vmatmul.bf16.gmra.mxu0 %v501
      %v769 = vpop.f32.mrf.mxu0
      %v770 = vadd.f32 0.0, %v769
      %v771 = vpop.f32.mrf.mxu0
      %v772 = vadd.f32 0.0, %v771
      %773 = vmatmul.bf16.gmra.mxu0 %v504
      %v774 = vpop.f32.mrf.mxu0
      %v775 = vadd.f32 0.0, %v774
      %v776 = vpop.f32.mrf.mxu0
      %777 = vdwg.mxu0
      %s778 = scalar_lea.vmem %s3, 144
      %v779 = vld [vmem:[%s778] sm:$0xf]
      %v780 = vld [vmem:[%s778 + $0x4] sm:$0xf]
      %v781 = vld [vmem:[%s778 + $0x8] sm:$0xf]
      %v782 = vld [vmem:[%s778 + $0xc] sm:$0xf]
      %v787 = vunpack.c.l.b16 %v779
      %v788 = vunpack.c.l.b16 %v780
      %v789 = vunpack.c.l.b16 %v781
      %v790 = vunpack.c.l.b16 %v782
      %v791 = vpack.c.b16 %v788, %v787
      %v792 = vpack.c.b16 %v790, %v789
      %795 = vmatpush.bf16.msra.mxu0 0
      %796 = vmatpush.bf16.msra.mxu0 0
      %797 = vmatpush.bf16.msra.mxu0 0
      %798 = vmatpush.bf16.msra.mxu0 0
      %799 = vmatpush.bf16.msra.mxu0 0
      %800 = vmatpush.bf16.msra.mxu0 0
      %801 = vmatpush.bf16.msra.mxu0 %v792
      %802 = vmatpush.bf16.msra.mxu0 %v791
      %803 = vmatmul.bf16.gmra.mxu0 %v501
      %v804 = vpop.f32.mrf.mxu0
      %v805 = vadd.f32 0.0, %v804
      %v806 = vpop.f32.mrf.mxu0
      %v807 = vadd.f32 0.0, %v806
      %808 = vmatmul.bf16.gmra.mxu0 %v504
      %v809 = vpop.f32.mrf.mxu0
      %v810 = vadd.f32 0.0, %v809
      %v811 = vpop.f32.mrf.mxu0
      %812 = vdwg.mxu0
      %v813 = vpack.c.bf16 %v737, %v735
      %v814 = vpack.c.bf16 %v740, %v740
      %v815 = vpack.c.bf16 %v772, %v770
      %v816 = vpack.c.bf16 %v775, %v775
      %v818 = vsel %vm598, %v813, 0
      %v821 = vsel %vm598, %v814, 0
      %v824 = vsel %vm598, %v815, 0
      %v827 = vsel %vm598, %v816, 0
      %829 = vmatpush.bf16.xpose.msra.mxu0 0
      %830 = vmatpush.bf16.xpose.msra.mxu0 0
      %831 = vmatpush.bf16.xpose.msra.mxu0 0
      %832 = vmatpush.bf16.xpose.msra.mxu0 0
      %833 = vmatpush.bf16.xpose.msra.mxu0 0
      %834 = vmatpush.bf16.xpose.msra.mxu0 0
      %835 = vmatpush.bf16.xpose.msra.mxu0 %v827
      %836 = vmatpush.bf16.xpose.msra.mxu0 %v824
      %837 = vmatmul.bf16.gmra.mxu0 %v818
      %v838 = vpop.f32.mrf.mxu0
      %v839 = vadd.f32 0.0, %v838
      %v840 = vpop.f32.mrf.mxu0
      %v841 = vadd.f32 0.0, %v840
      %842 = vmatmul.bf16.gmra.mxu0 %v821
      %v843 = vpop.f32.mrf.mxu0
      %v844 = vadd.f32 0.0, %v843
      %v845 = vpop.f32.mrf.mxu0
      %846 = vdwg.mxu0
      %v847 = vmul.f32 %v839, 0.35355338
      %v848 = vmul.f32 %v841, 0.35355338
      %v849 = vmul.f32 %v844, 0.35355338
      %v850 = vsel %vm399, %v847, -1e+30
      %v851 = vsel %vm400, %v848, -1e+30
      %v852 = vsel %vm401, %v849, -1e+30
      %v853 = vsel %vm635, %v850, -inf
      %854 = vmax.xlane.f32.xlu0 %v853
      %v855 = vpop.xlane.xlu0 %854
      %v856 = vsel %vm635, %v851, -inf
      %857 = vmax.xlane.f32.xlu0 %v856
      %v858 = vpop.xlane.xlu0 %857
      %v859 = vsel %vm642, %v852, -inf
      %860 = vmax.xlane.f32.xlu0 %v859
      %v861 = vpop.xlane.xlu0 %860
      %v862 = vsub.f32 %v850, %v855
      %v863 = vsub.f32 %v851, %v858
      %v864 = vsub.f32 %v852, %v861
      %v865 = vmul.f32 %v862, 1.442695
      %v866 = vpow.pop %v865
      %v867 = vmul.f32 %v863, 1.442695
      %v868 = vpow.pop %v867
      %v869 = vmul.f32 %v864, 1.442695
      %v870 = vpow.pop %v869
      %v871 = vsel %vm635, %v866, 0.0
      %872 = vadd.xlane.f32.xlu0 %v871
      %v873 = vpop.xlane.xlu0 %872
      %v874 = vsel %vm635, %v868, 0.0
      %875 = vadd.xlane.f32.xlu0 %v874
      %v876 = vpop.xlane.xlu0 %875
      %v877 = vsel %vm642, %v870, 0.0
      %878 = vadd.xlane.f32.xlu0 %v877
      %v879 = vpop.xlane.xlu0 %878
      %v880 = vrcp.pop %v873
      %v881 = vrcp.pop %v876
      %v882 = vrcp.pop %v879
      %v883 = vmul.f32 %v866, %v880
      %v884 = vmul.f32 %v868, %v881
      %v885 = vmul.f32 %v870, %v882
      %v886 = vpack.c.bf16 %v884, %v883
      %v887 = vpack.c.bf16 %v885, %v885
      %v888 = vpack.c.bf16 %v807, %v805
      %v889 = vpack.c.bf16 %v810, %v810
      %v891 = vsel %vm635, %v886, 0
      %v894 = vsel %vm635, %v887, 0
      %v897 = vand.u32 %v889, %v683
      %899 = vmatpush.bf16.msra.mxu0 0
      %900 = vmatpush.bf16.msra.mxu0 0
      %901 = vmatpush.bf16.msra.mxu0 0
      %902 = vmatpush.bf16.msra.mxu0 0
      %903 = vmatpush.bf16.msra.mxu0 0
      %904 = vmatpush.bf16.msra.mxu0 0
      %905 = vmatpush.bf16.msra.mxu0 %v897
      %906 = vmatpush.bf16.msra.mxu0 %v888
      %907 = vmatmul.bf16.gmra.mxu0 %v891
      %v908 = vpop.f32.mrf.mxu0
      %v909 = vadd.f32 0.0, %v908
      %v910 = vpop.f32.mrf.mxu0
      %v911 = vadd.f32 0.0, %v910
      %912 = vmatmul.bf16.gmra.mxu0 %v894
      %v913 = vpop.f32.mrf.mxu0
      %v914 = vadd.f32 0.0, %v913
      %v915 = vpop.f32.mrf.mxu0
      %916 = vdwg.mxu0
      %v917 = vpack.c.bf16 %v911, %v909
      %v918 = vpack.c.bf16 %v914, %v914
      %s919 = scalar_lea.vmem %s4, 4
      %v920 = vld [vmem:[%s919] sm:$0xf]
      %v922 = vsel %vm598, %v917, 0
      %v925 = vsel %vm598, %v918, 0
      %v928 = vsel %vm681, %v920, 0
      %930 = vmatpush.bf16.msra.mxu0 0
      %931 = vmatpush.bf16.msra.mxu0 0
      %932 = vmatpush.bf16.msra.mxu0 0
      %933 = vmatpush.bf16.msra.mxu0 0
      %934 = vmatpush.bf16.msra.mxu0 0
      %935 = vmatpush.bf16.msra.mxu0 0
      %936 = vmatpush.bf16.msra.mxu0 0
      %937 = vmatpush.bf16.msra.mxu0 %v928
      %938 = vmatmul.bf16.gmra.mxu0 %v922
      %v939 = vpop.f32.mrf.mxu0
      %v940 = vadd.f32 0.0, %v939
      %v941 = vpop.f32.mrf.mxu0
      %v942 = vadd.f32 0.0, %v941
      %943 = vmatmul.bf16.gmra.mxu0 %v925
      %v944 = vpop.f32.mrf.mxu0
      %v945 = vadd.f32 0.0, %v944
      %v946 = vpop.f32.mrf.mxu0
      %947 = vdwg.mxu0
      %v949 = vsel %vm598, %v705, 0
      %v952 = vsel %vm598, %v706, 0
      %v955 = vsel %vm681, %v707, 0
      %957 = vmatpush.bf16.msra.mxu0 0
      %958 = vmatpush.bf16.msra.mxu0 0
      %959 = vmatpush.bf16.msra.mxu0 0
      %960 = vmatpush.bf16.msra.mxu0 0
      %961 = vmatpush.bf16.msra.mxu0 0
      %962 = vmatpush.bf16.msra.mxu0 0
      %963 = vmatpush.bf16.msra.mxu0 0
      %964 = vmatpush.bf16.msra.mxu0 %v955
      %965 = vmatmul.bf16.gmra.mxu0 %v949
      %v966 = vpop.f32.mrf.mxu0
      %v967 = vadd.f32 %v940, %v966
      %v968 = vpop.f32.mrf.mxu0
      %v969 = vadd.f32 %v942, %v968
      %970 = vmatmul.bf16.gmra.mxu0 %v952
      %v971 = vpop.f32.mrf.mxu0
      %v972 = vadd.f32 %v945, %v971
      %v973 = vpop.f32.mrf.mxu0
      %974 = vdwg.mxu0
      %s975 = scalar_lea.vmem %s3, 32
      %v976 = vld [vmem:[%s975] sm:$0xf]
      %v977 = vld [vmem:[%s975 + $0x4] sm:$0xf]
      %v978 = vld [vmem:[%s975 + $0x8] sm:$0xf]
      %v979 = vld [vmem:[%s975 + $0xc] sm:$0xf]
      %v984 = vunpack.c.l.b16 %v976
      %v985 = vunpack.c.l.b16 %v977
      %v986 = vunpack.c.l.b16 %v978
      %v987 = vunpack.c.l.b16 %v979
      %v988 = vpack.c.b16 %v985, %v984
      %v989 = vpack.c.b16 %v987, %v986
      %992 = vmatpush.bf16.msra.mxu0 0
      %993 = vmatpush.bf16.msra.mxu0 0
      %994 = vmatpush.bf16.msra.mxu0 0
      %995 = vmatpush.bf16.msra.mxu0 0
      %996 = vmatpush.bf16.msra.mxu0 0
      %997 = vmatpush.bf16.msra.mxu0 0
      %998 = vmatpush.bf16.msra.mxu0 %v989
      %999 = vmatpush.bf16.msra.mxu0 %v988
      %1000 = vmatmul.bf16.gmra.mxu0 %v501
      %v1001 = vpop.f32.mrf.mxu0
      %v1002 = vadd.f32 0.0, %v1001
      %v1003 = vpop.f32.mrf.mxu0
      %v1004 = vadd.f32 0.0, %v1003
      %1005 = vmatmul.bf16.gmra.mxu0 %v504
      %v1006 = vpop.f32.mrf.mxu0
      %v1007 = vadd.f32 0.0, %v1006
      %v1008 = vpop.f32.mrf.mxu0
      %1009 = vdwg.mxu0
      %s1010 = scalar_lea.vmem %s3, 96
      %v1011 = vld [vmem:[%s1010] sm:$0xf]
      %v1012 = vld [vmem:[%s1010 + $0x4] sm:$0xf]
      %v1013 = vld [vmem:[%s1010 + $0x8] sm:$0xf]
      %v1014 = vld [vmem:[%s1010 + $0xc] sm:$0xf]
      %v1019 = vunpack.c.l.b16 %v1011
      %v1020 = vunpack.c.l.b16 %v1012
      %v1021 = vunpack.c.l.b16 %v1013
      %v1022 = vunpack.c.l.b16 %v1014
      %v1023 = vpack.c.b16 %v1020, %v1019
      %v1024 = vpack.c.b16 %v1022, %v1021
      %1027 = vmatpush.bf16.msra.mxu0 0
      %1028 = vmatpush.bf16.msra.mxu0 0
      %1029 = vmatpush.bf16.msra.mxu0 0
      %1030 = vmatpush.bf16.msra.mxu0 0
      %1031 = vmatpush.bf16.msra.mxu0 0
      %1032 = vmatpush.bf16.msra.mxu0 0
      %1033 = vmatpush.bf16.msra.mxu0 %v1024
      %1034 = vmatpush.bf16.msra.mxu0 %v1023
      %1035 = vmatmul.bf16.gmra.mxu0 %v501
      %v1036 = vpop.f32.mrf.mxu0
      %v1037 = vadd.f32 0.0, %v1036
      %v1038 = vpop.f32.mrf.mxu0
      %v1039 = vadd.f32 0.0, %v1038
      %1040 = vmatmul.bf16.gmra.mxu0 %v504
      %v1041 = vpop.f32.mrf.mxu0
      %v1042 = vadd.f32 0.0, %v1041
      %v1043 = vpop.f32.mrf.mxu0
      %1044 = vdwg.mxu0
      %s1045 = scalar_lea.vmem %s3, 160
      %v1046 = vld [vmem:[%s1045] sm:$0xf]
      %v1047 = vld [vmem:[%s1045 + $0x4] sm:$0xf]
      %v1048 = vld [vmem:[%s1045 + $0x8] sm:$0xf]
      %v1049 = vld [vmem:[%s1045 + $0xc] sm:$0xf]
      %v1054 = vunpack.c.l.b16 %v1046
      %v1055 = vunpack.c.l.b16 %v1047
      %v1056 = vunpack.c.l.b16 %v1048
      %v1057 = vunpack.c.l.b16 %v1049
      %v1058 = vpack.c.b16 %v1055, %v1054
      %v1059 = vpack.c.b16 %v1057, %v1056
      %1062 = vmatpush.bf16.msra.mxu0 0
      %1063 = vmatpush.bf16.msra.mxu0 0
      %1064 = vmatpush.bf16.msra.mxu0 0
      %1065 = vmatpush.bf16.msra.mxu0 0
      %1066 = vmatpush.bf16.msra.mxu0 0
      %1067 = vmatpush.bf16.msra.mxu0 0
      %1068 = vmatpush.bf16.msra.mxu0 %v1059
      %1069 = vmatpush.bf16.msra.mxu0 %v1058
      %1070 = vmatmul.bf16.gmra.mxu0 %v501
      %v1071 = vpop.f32.mrf.mxu0
      %v1072 = vadd.f32 0.0, %v1071
      %v1073 = vpop.f32.mrf.mxu0
      %v1074 = vadd.f32 0.0, %v1073
      %1075 = vmatmul.bf16.gmra.mxu0 %v504
      %v1076 = vpop.f32.mrf.mxu0
      %v1077 = vadd.f32 0.0, %v1076
      %v1078 = vpop.f32.mrf.mxu0
      %1079 = vdwg.mxu0
      %v1080 = vpack.c.bf16 %v1004, %v1002
      %v1081 = vpack.c.bf16 %v1007, %v1007
      %v1082 = vpack.c.bf16 %v1039, %v1037
      %v1083 = vpack.c.bf16 %v1042, %v1042
      %v1085 = vsel %vm598, %v1080, 0
      %v1088 = vsel %vm598, %v1081, 0
      %v1091 = vsel %vm598, %v1082, 0
      %v1094 = vsel %vm598, %v1083, 0
      %1096 = vmatpush.bf16.xpose.msra.mxu0 0
      %1097 = vmatpush.bf16.xpose.msra.mxu0 0
      %1098 = vmatpush.bf16.xpose.msra.mxu0 0
      %1099 = vmatpush.bf16.xpose.msra.mxu0 0
      %1100 = vmatpush.bf16.xpose.msra.mxu0 0
      %1101 = vmatpush.bf16.xpose.msra.mxu0 0
      %1102 = vmatpush.bf16.xpose.msra.mxu0 %v1094
      %1103 = vmatpush.bf16.xpose.msra.mxu0 %v1091
      %1104 = vmatmul.bf16.gmra.mxu0 %v1085
      %v1105 = vpop.f32.mrf.mxu0
      %v1106 = vadd.f32 0.0, %v1105
      %v1107 = vpop.f32.mrf.mxu0
      %v1108 = vadd.f32 0.0, %v1107
      %1109 = vmatmul.bf16.gmra.mxu0 %v1088
      %v1110 = vpop.f32.mrf.mxu0
      %v1111 = vadd.f32 0.0, %v1110
      %v1112 = vpop.f32.mrf.mxu0
      %1113 = vdwg.mxu0
      %v1114 = vmul.f32 %v1106, 0.35355338
      %v1115 = vmul.f32 %v1108, 0.35355338
      %v1116 = vmul.f32 %v1111, 0.35355338
      %v1117 = vsel %vm399, %v1114, -1e+30
      %v1118 = vsel %vm400, %v1115, -1e+30
      %v1119 = vsel %vm401, %v1116, -1e+30
      %v1120 = vsel %vm635, %v1117, -inf
      %1121 = vmax.xlane.f32.xlu0 %v1120
      %v1122 = vpop.xlane.xlu0 %1121
      %v1123 = vsel %vm635, %v1118, -inf
      %1124 = vmax.xlane.f32.xlu0 %v1123
      %v1125 = vpop.xlane.xlu0 %1124
      %v1126 = vsel %vm642, %v1119, -inf
      %1127 = vmax.xlane.f32.xlu0 %v1126
      %v1128 = vpop.xlane.xlu0 %1127
      %v1129 = vsub.f32 %v1117, %v1122
      %v1130 = vsub.f32 %v1118, %v1125
      %v1131 = vsub.f32 %v1119, %v1128
      %v1132 = vmul.f32 %v1129, 1.442695
      %v1133 = vpow.pop %v1132
      %v1134 = vmul.f32 %v1130, 1.442695
      %v1135 = vpow.pop %v1134
      %v1136 = vmul.f32 %v1131, 1.442695
      %v1137 = vpow.pop %v1136
      %v1138 = vsel %vm635, %v1133, 0.0
      %1139 = vadd.xlane.f32.xlu0 %v1138
      %v1140 = vpop.xlane.xlu0 %1139
      %v1141 = vsel %vm635, %v1135, 0.0
      %1142 = vadd.xlane.f32.xlu0 %v1141
      %v1143 = vpop.xlane.xlu0 %1142
      %v1144 = vsel %vm642, %v1137, 0.0
      %1145 = vadd.xlane.f32.xlu0 %v1144
      %v1146 = vpop.xlane.xlu0 %1145
      %v1147 = vrcp.pop %v1140
      %v1148 = vrcp.pop %v1143
      %v1149 = vrcp.pop %v1146
      %v1150 = vmul.f32 %v1133, %v1147
      %v1151 = vmul.f32 %v1135, %v1148
      %v1152 = vmul.f32 %v1137, %v1149
      %v1153 = vpack.c.bf16 %v1151, %v1150
      %v1154 = vpack.c.bf16 %v1152, %v1152
      %v1155 = vpack.c.bf16 %v1074, %v1072
      %v1156 = vpack.c.bf16 %v1077, %v1077
      %v1158 = vsel %vm635, %v1153, 0
      %v1161 = vsel %vm635, %v1154, 0
      %v1164 = vand.u32 %v1156, %v683
      %1166 = vmatpush.bf16.msra.mxu0 0
      %1167 = vmatpush.bf16.msra.mxu0 0
      %1168 = vmatpush.bf16.msra.mxu0 0
      %1169 = vmatpush.bf16.msra.mxu0 0
      %1170 = vmatpush.bf16.msra.mxu0 0
      %1171 = vmatpush.bf16.msra.mxu0 0
      %1172 = vmatpush.bf16.msra.mxu0 %v1164
      %1173 = vmatpush.bf16.msra.mxu0 %v1155
      %1174 = vmatmul.bf16.gmra.mxu0 %v1158
      %v1175 = vpop.f32.mrf.mxu0
      %v1176 = vadd.f32 0.0, %v1175
      %v1177 = vpop.f32.mrf.mxu0
      %v1178 = vadd.f32 0.0, %v1177
      %1179 = vmatmul.bf16.gmra.mxu0 %v1161
      %v1180 = vpop.f32.mrf.mxu0
      %v1181 = vadd.f32 0.0, %v1180
      %v1182 = vpop.f32.mrf.mxu0
      %1183 = vdwg.mxu0
      %v1184 = vpack.c.bf16 %v1178, %v1176
      %v1185 = vpack.c.bf16 %v1181, %v1181
      %s1186 = scalar_lea.vmem %s4, 8
      %v1187 = vld [vmem:[%s1186] sm:$0xf]
      %v1189 = vsel %vm598, %v1184, 0
      %v1192 = vsel %vm598, %v1185, 0
      %v1195 = vsel %vm681, %v1187, 0
      %1197 = vmatpush.bf16.msra.mxu0 0
      %1198 = vmatpush.bf16.msra.mxu0 0
      %1199 = vmatpush.bf16.msra.mxu0 0
      %1200 = vmatpush.bf16.msra.mxu0 0
      %1201 = vmatpush.bf16.msra.mxu0 0
      %1202 = vmatpush.bf16.msra.mxu0 0
      %1203 = vmatpush.bf16.msra.mxu0 0
      %1204 = vmatpush.bf16.msra.mxu0 %v1195
      %1205 = vmatmul.bf16.gmra.mxu0 %v1189
      %v1206 = vpop.f32.mrf.mxu0
      %v1207 = vadd.f32 0.0, %v1206
      %v1208 = vpop.f32.mrf.mxu0
      %v1209 = vadd.f32 0.0, %v1208
      %1210 = vmatmul.bf16.gmra.mxu0 %v1192
      %v1211 = vpop.f32.mrf.mxu0
      %v1212 = vadd.f32 0.0, %v1211
      %v1213 = vpop.f32.mrf.mxu0
      %1214 = vdwg.mxu0
      %v1215 = vadd.f32 %v967, %v1207
      %v1216 = vadd.f32 %v969, %v1209
      %v1217 = vadd.f32 %v972, %v1212
      %s1218 = scalar_lea.vmem %s3, 48
      %v1219 = vld [vmem:[%s1218] sm:$0xf]
      %v1220 = vld [vmem:[%s1218 + $0x4] sm:$0xf]
      %v1221 = vld [vmem:[%s1218 + $0x8] sm:$0xf]
      %v1222 = vld [vmem:[%s1218 + $0xc] sm:$0xf]
      %v1227 = vunpack.c.l.b16 %v1219
      %v1228 = vunpack.c.l.b16 %v1220
      %v1229 = vunpack.c.l.b16 %v1221
      %v1230 = vunpack.c.l.b16 %v1222
      %v1231 = vpack.c.b16 %v1228, %v1227
      %v1232 = vpack.c.b16 %v1230, %v1229
      %1235 = vmatpush.bf16.msra.mxu0 0
      %1236 = vmatpush.bf16.msra.mxu0 0
      %1237 = vmatpush.bf16.msra.mxu0 0
      %1238 = vmatpush.bf16.msra.mxu0 0
      %1239 = vmatpush.bf16.msra.mxu0 0
      %1240 = vmatpush.bf16.msra.mxu0 0
      %1241 = vmatpush.bf16.msra.mxu0 %v1232
      %1242 = vmatpush.bf16.msra.mxu0 %v1231
      %1243 = vmatmul.bf16.gmra.mxu0 %v501
      %v1244 = vpop.f32.mrf.mxu0
      %v1245 = vadd.f32 0.0, %v1244
      %v1246 = vpop.f32.mrf.mxu0
      %v1247 = vadd.f32 0.0, %v1246
      %1248 = vmatmul.bf16.gmra.mxu0 %v504
      %v1249 = vpop.f32.mrf.mxu0
      %v1250 = vadd.f32 0.0, %v1249
      %v1251 = vpop.f32.mrf.mxu0
      %1252 = vdwg.mxu0
      %s1253 = scalar_lea.vmem %s3, 112
      %v1254 = vld [vmem:[%s1253] sm:$0xf]
      %v1255 = vld [vmem:[%s1253 + $0x4] sm:$0xf]
      %v1256 = vld [vmem:[%s1253 + $0x8] sm:$0xf]
      %v1257 = vld [vmem:[%s1253 + $0xc] sm:$0xf]
      %v1262 = vunpack.c.l.b16 %v1254
      %v1263 = vunpack.c.l.b16 %v1255
      %v1264 = vunpack.c.l.b16 %v1256
      %v1265 = vunpack.c.l.b16 %v1257
      %v1266 = vpack.c.b16 %v1263, %v1262
      %v1267 = vpack.c.b16 %v1265, %v1264
      %1270 = vmatpush.bf16.msra.mxu0 0
      %1271 = vmatpush.bf16.msra.mxu0 0
      %1272 = vmatpush.bf16.msra.mxu0 0
      %1273 = vmatpush.bf16.msra.mxu0 0
      %1274 = vmatpush.bf16.msra.mxu0 0
      %1275 = vmatpush.bf16.msra.mxu0 0
      %1276 = vmatpush.bf16.msra.mxu0 %v1267
      %1277 = vmatpush.bf16.msra.mxu0 %v1266
      %1278 = vmatmul.bf16.gmra.mxu0 %v501
      %v1279 = vpop.f32.mrf.mxu0
      %v1280 = vadd.f32 0.0, %v1279
      %v1281 = vpop.f32.mrf.mxu0
      %v1282 = vadd.f32 0.0, %v1281
      %1283 = vmatmul.bf16.gmra.mxu0 %v504
      %v1284 = vpop.f32.mrf.mxu0
      %v1285 = vadd.f32 0.0, %v1284
      %v1286 = vpop.f32.mrf.mxu0
      %1287 = vdwg.mxu0
      %s1288 = scalar_lea.vmem %s3, 176
      %v1289 = vld [vmem:[%s1288] sm:$0xf]
      %v1290 = vld [vmem:[%s1288 + $0x4] sm:$0xf]
      %v1291 = vld [vmem:[%s1288 + $0x8] sm:$0xf]
      %v1292 = vld [vmem:[%s1288 + $0xc] sm:$0xf]
      %v1297 = vunpack.c.l.b16 %v1289
      %v1298 = vunpack.c.l.b16 %v1290
      %v1299 = vunpack.c.l.b16 %v1291
      %v1300 = vunpack.c.l.b16 %v1292
      %v1301 = vpack.c.b16 %v1298, %v1297
      %v1302 = vpack.c.b16 %v1300, %v1299
      %1305 = vmatpush.bf16.msra.mxu0 0
      %1306 = vmatpush.bf16.msra.mxu0 0
      %1307 = vmatpush.bf16.msra.mxu0 0
      %1308 = vmatpush.bf16.msra.mxu0 0
      %1309 = vmatpush.bf16.msra.mxu0 0
      %1310 = vmatpush.bf16.msra.mxu0 0
      %1311 = vmatpush.bf16.msra.mxu0 %v1302
      %1312 = vmatpush.bf16.msra.mxu0 %v1301
      %1313 = vmatmul.bf16.gmra.mxu0 %v501
      %v1314 = vpop.f32.mrf.mxu0
      %v1315 = vadd.f32 0.0, %v1314
      %v1316 = vpop.f32.mrf.mxu0
      %v1317 = vadd.f32 0.0, %v1316
      %1318 = vmatmul.bf16.gmra.mxu0 %v504
      %v1319 = vpop.f32.mrf.mxu0
      %v1320 = vadd.f32 0.0, %v1319
      %v1321 = vpop.f32.mrf.mxu0
      %1322 = vdwg.mxu0
      %v1323 = vpack.c.bf16 %v1247, %v1245
      %v1324 = vpack.c.bf16 %v1250, %v1250
      %v1325 = vpack.c.bf16 %v1282, %v1280
      %v1326 = vpack.c.bf16 %v1285, %v1285
      %v1328 = vsel %vm598, %v1323, 0
      %v1331 = vsel %vm598, %v1324, 0
      %v1334 = vsel %vm598, %v1325, 0
      %v1337 = vsel %vm598, %v1326, 0
      %1339 = vmatpush.bf16.xpose.msra.mxu0 0
      %1340 = vmatpush.bf16.xpose.msra.mxu0 0
      %1341 = vmatpush.bf16.xpose.msra.mxu0 0
      %1342 = vmatpush.bf16.xpose.msra.mxu0 0
      %1343 = vmatpush.bf16.xpose.msra.mxu0 0
      %1344 = vmatpush.bf16.xpose.msra.mxu0 0
      %1345 = vmatpush.bf16.xpose.msra.mxu0 %v1337
      %1346 = vmatpush.bf16.xpose.msra.mxu0 %v1334
      %1347 = vmatmul.bf16.gmra.mxu0 %v1328
      %v1348 = vpop.f32.mrf.mxu0
      %v1349 = vadd.f32 0.0, %v1348
      %v1350 = vpop.f32.mrf.mxu0
      %v1351 = vadd.f32 0.0, %v1350
      %1352 = vmatmul.bf16.gmra.mxu0 %v1331
      %v1353 = vpop.f32.mrf.mxu0
      %v1354 = vadd.f32 0.0, %v1353
      %v1355 = vpop.f32.mrf.mxu0
      %1356 = vdwg.mxu0
      %v1357 = vmul.f32 %v1349, 0.35355338
      %v1358 = vmul.f32 %v1351, 0.35355338
      %v1359 = vmul.f32 %v1354, 0.35355338
      %v1360 = vsel %vm399, %v1357, -1e+30
      %v1361 = vsel %vm400, %v1358, -1e+30
      %v1362 = vsel %vm401, %v1359, -1e+30
      %v1363 = vsel %vm635, %v1360, -inf
      %1364 = vmax.xlane.f32.xlu0 %v1363
      %v1365 = vpop.xlane.xlu0 %1364
      %v1366 = vsel %vm635, %v1361, -inf
      %1367 = vmax.xlane.f32.xlu0 %v1366
      %v1368 = vpop.xlane.xlu0 %1367
      %v1369 = vsel %vm642, %v1362, -inf
      %1370 = vmax.xlane.f32.xlu0 %v1369
      %v1371 = vpop.xlane.xlu0 %1370
      %v1372 = vsub.f32 %v1360, %v1365
      %v1373 = vsub.f32 %v1361, %v1368
      %v1374 = vsub.f32 %v1362, %v1371
      %v1375 = vmul.f32 %v1372, 1.442695
      %v1376 = vpow.pop %v1375
      %v1377 = vmul.f32 %v1373, 1.442695
      %v1378 = vpow.pop %v1377
      %v1379 = vmul.f32 %v1374, 1.442695
      %v1380 = vpow.pop %v1379
      %v1381 = vsel %vm635, %v1376, 0.0
      %1382 = vadd.xlane.f32.xlu0 %v1381
      %v1383 = vpop.xlane.xlu0 %1382
      %v1384 = vsel %vm635, %v1378, 0.0
      %1385 = vadd.xlane.f32.xlu0 %v1384
      %v1386 = vpop.xlane.xlu0 %1385
      %v1387 = vsel %vm642, %v1380, 0.0
      %1388 = vadd.xlane.f32.xlu0 %v1387
      %v1389 = vpop.xlane.xlu0 %1388
      %v1390 = vrcp.pop %v1383
      %v1391 = vrcp.pop %v1386
      %v1392 = vrcp.pop %v1389
      %v1393 = vmul.f32 %v1376, %v1390
      %v1394 = vmul.f32 %v1378, %v1391
      %v1395 = vmul.f32 %v1380, %v1392
      %v1396 = vpack.c.bf16 %v1394, %v1393
      %v1397 = vpack.c.bf16 %v1395, %v1395
      %v1398 = vpack.c.bf16 %v1317, %v1315
      %v1399 = vpack.c.bf16 %v1320, %v1320
      %v1401 = vsel %vm635, %v1396, 0
      %v1404 = vsel %vm635, %v1397, 0
      %v1407 = vand.u32 %v1399, %v683
      %1409 = vmatpush.bf16.msra.mxu0 0
      %1410 = vmatpush.bf16.msra.mxu0 0
      %1411 = vmatpush.bf16.msra.mxu0 0
      %1412 = vmatpush.bf16.msra.mxu0 0
      %1413 = vmatpush.bf16.msra.mxu0 0
      %1414 = vmatpush.bf16.msra.mxu0 0
      %1415 = vmatpush.bf16.msra.mxu0 %v1407
      %1416 = vmatpush.bf16.msra.mxu0 %v1398
      %1417 = vmatmul.bf16.gmra.mxu0 %v1401
      %v1418 = vpop.f32.mrf.mxu0
      %v1419 = vadd.f32 0.0, %v1418
      %v1420 = vpop.f32.mrf.mxu0
      %v1421 = vadd.f32 0.0, %v1420
      %1422 = vmatmul.bf16.gmra.mxu0 %v1404
      %v1423 = vpop.f32.mrf.mxu0
      %v1424 = vadd.f32 0.0, %v1423
      %v1425 = vpop.f32.mrf.mxu0
      %1426 = vdwg.mxu0
      %v1427 = vpack.c.bf16 %v1421, %v1419
      %v1428 = vpack.c.bf16 %v1424, %v1424
      %s1429 = scalar_lea.vmem %s4, 12
      %v1430 = vld [vmem:[%s1429] sm:$0xf]
      %v1432 = vsel %vm598, %v1427, 0
      %v1435 = vsel %vm598, %v1428, 0
      %v1438 = vsel %vm681, %v1430, 0
      %1440 = vmatpush.bf16.msra.mxu0 0
      %1441 = vmatpush.bf16.msra.mxu0 0
      %1442 = vmatpush.bf16.msra.mxu0 0
      %1443 = vmatpush.bf16.msra.mxu0 0
      %1444 = vmatpush.bf16.msra.mxu0 0
      %1445 = vmatpush.bf16.msra.mxu0 0
      %1446 = vmatpush.bf16.msra.mxu0 0
      %1447 = vmatpush.bf16.msra.mxu0 %v1438
      %1448 = vmatmul.bf16.gmra.mxu0 %v1432
      %v1449 = vpop.f32.mrf.mxu0
      %v1450 = vadd.f32 0.0, %v1449
      %v1451 = vpop.f32.mrf.mxu0
      %v1452 = vadd.f32 0.0, %v1451
      %1453 = vmatmul.bf16.gmra.mxu0 %v1435
      %v1454 = vpop.f32.mrf.mxu0
      %v1455 = vadd.f32 0.0, %v1454
      %v1456 = vpop.f32.mrf.mxu0
      %1457 = vdwg.mxu0
      %v1458 = vadd.f32 %v1215, %v1450
      %v1459 = vadd.f32 %v1216, %v1452
      %v1460 = vadd.f32 %v1217, %v1455
      %v1461 = vadd.f32 %v390, %v1458
      %v1462 = vadd.f32 %v391, %v1459
      %v1463 = vadd.f32 %v392, %v1460
      %v1464 = vld [vmem:[%s2 + $0x1] sm:$0x1]
      %v1465 = vsel %vm403, %v1461, 0.0
      %1466 = vadd.xlane.f32.xlu0 %v1465
      %v1467 = vpop.xlane.xlu0 %1466
      %v1468 = vsel %vm403, %v1462, 0.0
      %1469 = vadd.xlane.f32.xlu0 %v1468
      %v1470 = vpop.xlane.xlu0 %1469
      %v1471 = vsel %vm410, %v1463, 0.0
      %1472 = vadd.xlane.f32.xlu0 %v1471
      %v1473 = vpop.xlane.xlu0 %1472
      %v1474 = vmul.f32 %v1467, %v420
      %v1475 = vmul.f32 %v1470, %v420
      %v1476 = vmul.f32 %v1473, %v420
      %v1477 = vsub.f32 %v1461, %v1474
      %v1478 = vsub.f32 %v1462, %v1475
      %v1479 = vsub.f32 %v1463, %v1476
      %v1480 = vmul.f32 %v1477, %v1477
      %v1481 = vmul.f32 %v1478, %v1478
      %v1482 = vmul.f32 %v1479, %v1479
      %v1483 = vsel %vm403, %v1480, 0.0
      %1484 = vadd.xlane.f32.xlu0 %v1483
      %v1485 = vpop.xlane.xlu0 %1484
      %v1486 = vsel %vm403, %v1481, 0.0
      %1487 = vadd.xlane.f32.xlu0 %v1486
      %v1488 = vpop.xlane.xlu0 %1487
      %v1489 = vsel %vm410, %v1482, 0.0
      %1490 = vadd.xlane.f32.xlu0 %v1489
      %v1491 = vpop.xlane.xlu0 %1490
      %v1492 = vmul.f32 %v1485, %v420
      %v1493 = vmul.f32 %v1488, %v420
      %v1494 = vmul.f32 %v1491, %v420
      %v1495 = vadd.f32 %v1492, 1e-05
      %v1496 = vadd.f32 %v1493, 1e-05
      %v1497 = vadd.f32 %v1494, 1e-05
      %v1498 = vrsqrt.pop %v1495
      %v1499 = vmul.f32 %v1498, %v1495
      %v1500 = vmul.f32 %v1499, %v1498
      %v1501 = vmul.f32 0.5, %v1500
      %v1502 = vsub.f32 1.5, %v1501
      %v1503 = vmul.f32 %v1498, %v1502
      %vm1504 = vweird.f32 %v1495
      %vm1505 = vweird.f32 %v1498
      %vm1506 = vmor %vm1504, %vm1505
      %v1507 = vsel %vm1506, %v1498, %v1503
      %v1508 = vrsqrt.pop %v1496
      %v1509 = vmul.f32 %v1508, %v1496
      %v1510 = vmul.f32 %v1509, %v1508
      %v1511 = vmul.f32 0.5, %v1510
      %v1512 = vsub.f32 1.5, %v1511
      %v1513 = vmul.f32 %v1508, %v1512
      %vm1514 = vweird.f32 %v1496
      %vm1515 = vweird.f32 %v1508
      %vm1516 = vmor %vm1514, %vm1515
      %v1517 = vsel %vm1516, %v1508, %v1513
      %v1518 = vrsqrt.pop %v1497
      %v1519 = vmul.f32 %v1518, %v1497
      %v1520 = vmul.f32 %v1519, %v1518
      %v1521 = vmul.f32 0.5, %v1520
      %v1522 = vsub.f32 1.5, %v1521
      %v1523 = vmul.f32 %v1518, %v1522
      %vm1524 = vweird.f32 %v1497
      %vm1525 = vweird.f32 %v1518
      %vm1526 = vmor %vm1524, %vm1525
      %v1527 = vsel %vm1526, %v1518, %v1523
      %v1528 = vmul.f32 %v1477, %v1507
      %v1529 = vmul.f32 %v1478, %v1517
      %v1530 = vmul.f32 %v1479, %v1527
      %v1531 = vperm.slane %v1464, 0
      %v1532 = vmul.f32 %v1528, %v1531
      %v1533 = vmul.f32 %v1529, %v1531
      %v1534 = vmul.f32 %v1530, %v1531
      %v1535 = vpack.c.bf16 %v1533, %v1532
      %v1536 = vpack.c.bf16 %v1534, %v1534
      %v1537 = vld [vmem:[%s5] sm:$0xf]
      %v1538 = vld [vmem:[%s5 + $0x4] sm:$0xf]
      %v1539 = vld [vmem:[%s5 + $0x8] sm:$0xf]
      %v1540 = vld [vmem:[%s5 + $0xc] sm:$0xf]
      %v1545 = vunpack.c.l.b16 %v1537
      %v1546 = vunpack.c.l.b16 %v1538
      %v1547 = vunpack.c.l.b16 %v1539
      %v1548 = vunpack.c.l.b16 %v1540
      %v1549 = vpack.c.b16 %v1546, %v1545
      %v1550 = vpack.c.b16 %v1548, %v1547
      %v1554 = vsel %vm403, %v1535, 0
      %v1557 = vsel %vm403, %v1536, 0
      %1559 = vmatpush.bf16.msra.mxu0 0
      %1560 = vmatpush.bf16.msra.mxu0 0
      %1561 = vmatpush.bf16.msra.mxu0 0
      %1562 = vmatpush.bf16.msra.mxu0 0
      %1563 = vmatpush.bf16.msra.mxu0 0
      %1564 = vmatpush.bf16.msra.mxu0 0
      %1565 = vmatpush.bf16.msra.mxu0 %v1550
      %1566 = vmatpush.bf16.msra.mxu0 %v1549
      %1567 = vmatmul.bf16.gmra.mxu0 %v1554
      %v1568 = vpop.f32.mrf.mxu0
      %v1569 = vadd.f32 0.0, %v1568
      %v1570 = vpop.f32.mrf.mxu0
      %v1571 = vadd.f32 0.0, %v1570
      %1572 = vmatmul.bf16.gmra.mxu0 %v1557
      %v1573 = vpop.f32.mrf.mxu0
      %v1574 = vadd.f32 0.0, %v1573
      %v1575 = vpop.f32.mrf.mxu0
      %1576 = vdwg.mxu0
      %v1577 = vmul.f32 %v1569, 0.5
      %v1578 = vmul.f32 %v1571, 0.5
      %v1579 = vmul.f32 %v1574, 0.5
      %v1580 = vmul.f32 %v1569, 0.70710677
      %v1581 = vmul.f32 %v1571, 0.70710677
      %v1582 = vmul.f32 %v1574, 0.70710677
      %v1583 = vand.u32 2147483647, %v1580
      %v1584 = vand.u32 2147483647, %v1581
      %v1585 = vand.u32 2147483647, %v1582
      %v1586 = vmul.f32 %v1583, 0.3275911
      %v1587 = vmul.f32 %v1584, 0.3275911
      %v1588 = vmul.f32 %v1585, 0.3275911
      %v1589 = vadd.f32 %v1586, 1.0
      %v1590 = vadd.f32 %v1587, 1.0
      %v1591 = vadd.f32 %v1588, 1.0
      %v1592 = vrcp.pop %v1589
      %v1593 = vmul.f32 %v1589, %v1592
      %v1594 = vsub.f32 1.0, %v1593
      %v1595 = vmul.f32 %v1592, %v1594
      %v1596 = vadd.f32 %v1592, %v1595
      %vm1597 = vweird.f32 %v1589
      %vm1598 = vweird.f32 %v1592
      %vm1599 = vmor %vm1597, %vm1598
      %v1600 = vsel %vm1599, %v1592, %v1596
      %v1601 = vand.u32 2147483647, %v1589
      %vm1602 = vcmp.eq.f32.partialorder %v1601, 8.507059e+37
      %v1603 = vand.u32 %v1589, 2147483648
      %v1604 = vor.u32 1.1754944e-38, %v1603
      %v1605 = vsel %vm1602, %v1604, %v1600
      %v1606 = vmul.f32 1.0, %v1605
      %v1607 = vrcp.pop %v1590
      %v1608 = vmul.f32 %v1590, %v1607
      %v1609 = vsub.f32 1.0, %v1608
      %v1610 = vmul.f32 %v1607, %v1609
      %v1611 = vadd.f32 %v1607, %v1610
      %vm1612 = vweird.f32 %v1590
      %vm1613 = vweird.f32 %v1607
      %vm1614 = vmor %vm1612, %vm1613
      %v1615 = vsel %vm1614, %v1607, %v1611
      %v1616 = vand.u32 2147483647, %v1590
      %vm1617 = vcmp.eq.f32.partialorder %v1616, 8.507059e+37
      %v1618 = vand.u32 %v1590, 2147483648
      %v1619 = vor.u32 1.1754944e-38, %v1618
      %v1620 = vsel %vm1617, %v1619, %v1615
      %v1621 = vmul.f32 1.0, %v1620
      %v1622 = vrcp.pop %v1591
      %v1623 = vmul.f32 %v1591, %v1622
      %v1624 = vsub.f32 1.0, %v1623
      %v1625 = vmul.f32 %v1622, %v1624
      %v1626 = vadd.f32 %v1622, %v1625
      %vm1627 = vweird.f32 %v1591
      %vm1628 = vweird.f32 %v1622
      %vm1629 = vmor %vm1627, %vm1628
      %v1630 = vsel %vm1629, %v1622, %v1626
      %v1631 = vand.u32 2147483647, %v1591
      %vm1632 = vcmp.eq.f32.partialorder %v1631, 8.507059e+37
      %v1633 = vand.u32 %v1591, 2147483648
      %v1634 = vor.u32 1.1754944e-38, %v1633
      %v1635 = vsel %vm1632, %v1634, %v1630
      %v1636 = vmul.f32 1.0, %v1635
      %v1637 = vmul.f32 %v1606, 1.0614054
      %v1638 = vmul.f32 %v1621, 1.0614054
      %v1639 = vmul.f32 %v1636, 1.0614054
      %v1640 = vadd.f32 %v1637, -1.4531521
      %v1641 = vadd.f32 %v1638, -1.4531521
      %v1642 = vadd.f32 %v1639, -1.4531521
      %v1643 = vmul.f32 %v1640, %v1606
      %v1644 = vmul.f32 %v1641, %v1621
      %v1645 = vmul.f32 %v1642, %v1636
      %v1646 = vadd.f32 %v1643, 1.4214138
      %v1647 = vadd.f32 %v1644, 1.4214138
      %v1648 = vadd.f32 %v1645, 1.4214138
      %v1649 = vmul.f32 %v1646, %v1606
      %v1650 = vmul.f32 %v1647, %v1621
      %v1651 = vmul.f32 %v1648, %v1636
      %v1652 = vadd.f32 %v1649, -0.28449672
      %v1653 = vadd.f32 %v1650, -0.28449672
      %v1654 = vadd.f32 %v1651, -0.28449672
      %v1655 = vmul.f32 %v1652, %v1606
      %v1656 = vmul.f32 %v1653, %v1621
      %v1657 = vmul.f32 %v1654, %v1636
      %v1658 = vadd.f32 %v1655, 0.2548296
      %v1659 = vadd.f32 %v1656, 0.2548296
      %v1660 = vadd.f32 %v1657, 0.2548296
      %v1661 = vmul.f32 %v1658, %v1606
      %v1662 = vmul.f32 %v1659, %v1621
      %v1663 = vmul.f32 %v1660, %v1636
      %v1664 = vsub.f32 0.0, %v1583
      %v1665 = vsub.f32 0.0, %v1584
      %v1666 = vsub.f32 0.0, %v1585
      %v1667 = vmul.f32 %v1664, %v1583
      %v1668 = vmul.f32 %v1665, %v1584
      %v1669 = vmul.f32 %v1666, %v1585
      %v1670 = vmul.f32 %v1667, 1.442695
      %v1671 = vpow.pop %v1670
      %v1672 = vmul.f32 %v1668, 1.442695
      %v1673 = vpow.pop %v1672
      %v1674 = vmul.f32 %v1669, 1.442695
      %v1675 = vpow.pop %v1674
      %v1676 = vmul.f32 %v1661, %v1671
      %v1677 = vmul.f32 %v1662, %v1673
      %v1678 = vmul.f32 %v1663, %v1675
      %v1679 = vsub.f32 1.0, %v1676
      %v1680 = vsub.f32 1.0, %v1677
      %v1681 = vsub.f32 1.0, %v1678
      %vm1682 = vcmp.ge.f32.partialorder %v1580, 0.0
      %vm1683 = vcmp.ge.f32.partialorder %v1581, 0.0
      %vm1684 = vcmp.ge.f32.partialorder %v1582, 0.0
      %v1685 = vsub.f32 0.0, %v1679
      %v1686 = vsub.f32 0.0, %v1680
      %v1687 = vsub.f32 0.0, %v1681
      %v1688 = vsel %vm1682, %v1679, %v1685
      %v1689 = vsel %vm1683, %v1680, %v1686
      %v1690 = vsel %vm1684, %v1681, %v1687
      %v1691 = vadd.f32 %v1688, 1.0
      %v1692 = vadd.f32 %v1689, 1.0
      %v1693 = vadd.f32 %v1690, 1.0
      %v1694 = vmul.f32 %v1577, %v1691
      %v1695 = vmul.f32 %v1578, %v1692
      %v1696 = vmul.f32 %v1579, %v1693
      %v1697 = vpack.c.bf16 %v1695, %v1694
      %v1698 = vpack.c.bf16 %v1696, %v1696
      %v1699 = vld [vmem:[%s6] sm:$0xf]
      %v1700 = vld [vmem:[%s6 + $0x4] sm:$0xf]
      %v1701 = vld [vmem:[%s6 + $0x8] sm:$0xf]
      %v1702 = vld [vmem:[%s6 + $0xc] sm:$0xf]
      %v1703 = vld [vmem:[%s6 + $0x10] sm:$0xf]
      %v1704 = vld [vmem:[%s6 + $0x14] sm:$0xf]
      %v1705 = vld [vmem:[%s6 + $0x18] sm:$0xf]
      %v1706 = vld [vmem:[%s6 + $0x1c] sm:$0xf]
      %v1707 = vld [vmem:[%s6 + $0x20] sm:$0xf]
      %v1708 = vld [vmem:[%s6 + $0x24] sm:$0xf]
      %v1709 = vld [vmem:[%s6 + $0x28] sm:$0xf]
      %v1710 = vld [vmem:[%s6 + $0x2c] sm:$0xf]
      %v1711 = vld [vmem:[%s6 + $0x30] sm:$0xf]
      %v1712 = vld [vmem:[%s6 + $0x34] sm:$0xf]
      %v1713 = vld [vmem:[%s6 + $0x38] sm:$0xf]
      %v1714 = vld [vmem:[%s6 + $0x3c] sm:$0xf]
      %v1731 = vunpack.c.l.b16 %v1699
      %v1732 = vunpack.c.l.b16 %v1700
      %v1733 = vunpack.c.l.b16 %v1701
      %v1734 = vunpack.c.l.b16 %v1702
      %v1735 = vunpack.c.l.b16 %v1703
      %v1736 = vunpack.c.l.b16 %v1704
      %v1737 = vunpack.c.l.b16 %v1705
      %v1738 = vunpack.c.l.b16 %v1706
      %v1739 = vunpack.c.l.b16 %v1707
      %v1740 = vunpack.c.l.b16 %v1708
      %v1741 = vunpack.c.l.b16 %v1709
      %v1742 = vunpack.c.l.b16 %v1710
      %v1743 = vunpack.c.l.b16 %v1711
      %v1744 = vunpack.c.l.b16 %v1712
      %v1745 = vunpack.c.l.b16 %v1713
      %v1746 = vunpack.c.l.b16 %v1714
      %v1747 = vpack.c.b16 %v1732, %v1731
      %v1748 = vpack.c.b16 %v1734, %v1733
      %v1749 = vpack.c.b16 %v1736, %v1735
      %v1750 = vpack.c.b16 %v1738, %v1737
      %v1751 = vpack.c.b16 %v1740, %v1739
      %v1752 = vpack.c.b16 %v1742, %v1741
      %v1753 = vpack.c.b16 %v1744, %v1743
      %v1754 = vpack.c.b16 %v1746, %v1745
      %1763 = vmatpush.bf16.msra.mxu0 %v1754
      %1764 = vmatpush.bf16.msra.mxu0 %v1753
      %1765 = vmatpush.bf16.msra.mxu0 %v1752
      %1766 = vmatpush.bf16.msra.mxu0 %v1751
      %1767 = vmatpush.bf16.msra.mxu0 %v1750
      %1768 = vmatpush.bf16.msra.mxu0 %v1749
      %1769 = vmatpush.bf16.msra.mxu0 %v1748
      %1770 = vmatpush.bf16.msra.mxu0 %v1747
      %1771 = vmatmul.bf16.gmra.mxu0 %v1697
      %v1772 = vpop.f32.mrf.mxu0
      %v1773 = vadd.f32 0.0, %v1772
      %v1774 = vpop.f32.mrf.mxu0
      %v1775 = vadd.f32 0.0, %v1774
      %1776 = vmatmul.bf16.gmra.mxu0 %v1698
      %v1777 = vpop.f32.mrf.mxu0
      %v1778 = vadd.f32 0.0, %v1777
      %v1779 = vpop.f32.mrf.mxu0
      %1780 = vdwg.mxu0
      %v1781 = vadd.f32 %v1461, %v1773
      %v1782 = vadd.f32 %v1462, %v1775
      %v1783 = vadd.f32 %v1463, %v1778
      %v1784 = vld [vmem:[%s7] sm:$0x1]
      %v1785 = vsel %vm403, %v1781, 0.0
      %1786 = vadd.xlane.f32.xlu0 %v1785
      %v1787 = vpop.xlane.xlu0 %1786
      %v1788 = vsel %vm403, %v1782, 0.0
      %1789 = vadd.xlane.f32.xlu0 %v1788
      %v1790 = vpop.xlane.xlu0 %1789
      %v1791 = vsel %vm410, %v1783, 0.0
      %1792 = vadd.xlane.f32.xlu0 %v1791
      %v1793 = vpop.xlane.xlu0 %1792
      %v1794 = vmul.f32 %v1787, %v420
      %v1795 = vmul.f32 %v1790, %v420
      %v1796 = vmul.f32 %v1793, %v420
      %v1797 = vsub.f32 %v1781, %v1794
      %v1798 = vsub.f32 %v1782, %v1795
      %v1799 = vsub.f32 %v1783, %v1796
      %v1800 = vmul.f32 %v1797, %v1797
      %v1801 = vmul.f32 %v1798, %v1798
      %v1802 = vmul.f32 %v1799, %v1799
      %v1803 = vsel %vm403, %v1800, 0.0
      %1804 = vadd.xlane.f32.xlu0 %v1803
      %v1805 = vpop.xlane.xlu0 %1804
      %v1806 = vsel %vm403, %v1801, 0.0
      %1807 = vadd.xlane.f32.xlu0 %v1806
      %v1808 = vpop.xlane.xlu0 %1807
      %v1809 = vsel %vm410, %v1802, 0.0
      %1810 = vadd.xlane.f32.xlu0 %v1809
      %v1811 = vpop.xlane.xlu0 %1810
      %v1812 = vmul.f32 %v1805, %v420
      %v1813 = vmul.f32 %v1808, %v420
      %v1814 = vmul.f32 %v1811, %v420
      %v1815 = vadd.f32 %v1812, 1e-05
      %v1816 = vadd.f32 %v1813, 1e-05
      %v1817 = vadd.f32 %v1814, 1e-05
      %v1818 = vrsqrt.pop %v1815
      %v1819 = vmul.f32 %v1818, %v1815
      %v1820 = vmul.f32 %v1819, %v1818
      %v1821 = vmul.f32 0.5, %v1820
      %v1822 = vsub.f32 1.5, %v1821
      %v1823 = vmul.f32 %v1818, %v1822
      %vm1824 = vweird.f32 %v1815
      %vm1825 = vweird.f32 %v1818
      %vm1826 = vmor %vm1824, %vm1825
      %v1827 = vsel %vm1826, %v1818, %v1823
      %v1828 = vrsqrt.pop %v1816
      %v1829 = vmul.f32 %v1828, %v1816
      %v1830 = vmul.f32 %v1829, %v1828
      %v1831 = vmul.f32 0.5, %v1830
      %v1832 = vsub.f32 1.5, %v1831
      %v1833 = vmul.f32 %v1828, %v1832
      %vm1834 = vweird.f32 %v1816
      %vm1835 = vweird.f32 %v1828
      %vm1836 = vmor %vm1834, %vm1835
      %v1837 = vsel %vm1836, %v1828, %v1833
      %v1838 = vrsqrt.pop %v1817
      %v1839 = vmul.f32 %v1838, %v1817
      %v1840 = vmul.f32 %v1839, %v1838
      %v1841 = vmul.f32 0.5, %v1840
      %v1842 = vsub.f32 1.5, %v1841
      %v1843 = vmul.f32 %v1838, %v1842
      %vm1844 = vweird.f32 %v1817
      %vm1845 = vweird.f32 %v1838
      %vm1846 = vmor %vm1844, %vm1845
      %v1847 = vsel %vm1846, %v1838, %v1843
      %v1848 = vmul.f32 %v1797, %v1827
      %v1849 = vmul.f32 %v1798, %v1837
      %v1850 = vmul.f32 %v1799, %v1847
      %v1852 = vperm.slane %v1784, 0
      %v1854 = vmul.f32 %v1848, %v1852
      %v1855 = vmul.f32 %v1849, %v1852
      %v1856 = vmul.f32 %v1850, %v1852
      %v1857 = vpack.c.bf16 %v1855, %v1854
      %v1858 = vpack.c.bf16 %v1856, %v1856
      %v1859 = vld [vmem:[%s8] sm:$0xff]
      %v1860 = vld [vmem:[%s8 + $0x8] sm:$0xff]
      %v1861 = vld [vmem:[%s8 + $0x10] sm:$0xff]
      %v1862 = vld [vmem:[%s8 + $0x18] sm:$0xff]
      %v1863 = vld [vmem:[%s8 + $0x20] sm:$0xff]
      %v1864 = vld [vmem:[%s8 + $0x28] sm:$0xff]
      %v1865 = vld [vmem:[%s8 + $0x30] sm:$0xff]
      %v1866 = vld [vmem:[%s8 + $0x38] sm:$0xff]
      %v1867 = vpack.c.bf16 %v1860, %v1859
      %v1868 = vpack.c.bf16 %v1862, %v1861
      %v1869 = vpack.c.bf16 %v1864, %v1863
      %v1870 = vpack.c.bf16 %v1866, %v1865
      %v1872 = vsel %vm403, %v1857, 0
      %v1875 = vsel %vm403, %v1858, 0
      %v1878 = vsel %vm403, %v1867, 0
      %v1881 = vsel %vm403, %v1868, 0
      %v1884 = vsel %vm403, %v1869, 0
      %v1887 = vsel %vm403, %v1870, 0
      %1889 = vmatpush.bf16.xpose.msra.mxu0 0
      %1890 = vmatpush.bf16.xpose.msra.mxu0 0
      %1891 = vmatpush.bf16.xpose.msra.mxu0 0
      %1892 = vmatpush.bf16.xpose.msra.mxu0 0
      %1893 = vmatpush.bf16.xpose.msra.mxu0 %v1887
      %1894 = vmatpush.bf16.xpose.msra.mxu0 %v1884
      %1895 = vmatpush.bf16.xpose.msra.mxu0 %v1881
      %1896 = vmatpush.bf16.xpose.msra.mxu0 %v1878
      %1897 = vmatmul.bf16.gmra.mxu0 %v1872
      %v1898 = vpop.f32.mrf.mxu0
      %v1899 = vadd.f32 0.0, %v1898
      %v1900 = vpop.f32.mrf.mxu0
      %v1901 = vadd.f32 0.0, %v1900
      %1902 = vmatmul.bf16.gmra.mxu0 %v1875
      %v1903 = vpop.f32.mrf.mxu0
      %v1904 = vadd.f32 0.0, %v1903
      %v1905 = vpop.f32.mrf.mxu0
      %1906 = vdwg.mxu0
      %vm1907 = vcmask 523264
      %1908 = vst.msk [vmem:[%s385] sm:$0xff] %vm1907, %v1899
      %1909 = vst.msk [vmem:[%s385 + $0x8] sm:$0xff] %vm1907, %v1901
      %vm1910 = vcmask 522240
      %1911 = vst.msk [vmem:[%s385 + $0x10] sm:$0x7f] %vm1910, %v1904
      %v1912 = vld [vmem:[%s380] sm:$0xff]
      %v1913 = vld [vmem:[%s380 + $0x8] sm:$0xff]
      %v1914 = vld [vmem:[%s380 + $0x10] sm:$0x7f]
      %v1915 = vsel %vm1907, %v1899, -inf
      %1916 = vmax.xlane.f32.xlu0 %v1915
      %v1917 = vpop.xlane.xlu0 %1916
      %v1918 = vsel %vm1907, %v1901, -inf
      %1919 = vmax.xlane.f32.xlu0 %v1918
      %v1920 = vpop.xlane.xlu0 %1919
      %v1921 = vsel %vm1910, %v1904, -inf
      %1922 = vmax.xlane.f32.xlu0 %v1921
      %v1923 = vpop.xlane.xlu0 %1922
      %v1924 = vsub.f32 %v1899, %v1917
      %v1925 = vsub.f32 %v1901, %v1920
      %v1926 = vsub.f32 %v1904, %v1923
      %v1927 = vmul.f32 %v1924, 1.442695
      %v1928 = vpow.pop %v1927
      %v1929 = vmul.f32 %v1925, 1.442695
      %v1930 = vpow.pop %v1929
      %v1931 = vmul.f32 %v1926, 1.442695
      %v1932 = vpow.pop %v1931
      %v1933 = vsel %vm1907, %v1928, 0.0
      %1934 = vadd.xlane.f32.xlu0 %v1933
      %v1935 = vpop.xlane.xlu0 %1934
      %v1936 = vsel %vm1907, %v1930, 0.0
      %1937 = vadd.xlane.f32.xlu0 %v1936
      %v1938 = vpop.xlane.xlu0 %1937
      %v1939 = vsel %vm1910, %v1932, 0.0
      %1940 = vadd.xlane.f32.xlu0 %v1939
      %v1941 = vpop.xlane.xlu0 %1940
      %v1942 = vlog2.pop %v1935
      %v1943 = vmul.f32 %v1942, 0.6931472
      %v1944 = vlog2.pop %v1938
      %v1945 = vmul.f32 %v1944, 0.6931472
      %v1946 = vlog2.pop %v1941
      %v1947 = vmul.f32 %v1946, 0.6931472
      %v1948 = vadd.f32 %v1917, %v1943
      %v1949 = vadd.f32 %v1920, %v1945
      %v1950 = vadd.f32 %v1923, %v1947
      %1951 = vset.pattern.permute.xlu0 0
      %1952 = vperm.xlu0 %1951, %v1912
      %v1953 = vpop.permute.xlu0 %1952
      %1954 = vset.pattern.permute.xlu0 0
      %1955 = vperm.xlu0 %1954, %v1913
      %v1956 = vpop.permute.xlu0 %1955
      %1957 = vset.pattern.permute.xlu0 0
      %1958 = vperm.xlu0 %1957, %v1914
      %v1959 = vpop.permute.xlu0 %1958
      %vm1960 = vcmp.eq.s32.totalorder %v398, %v1953
      %vm1961 = vcmp.eq.s32.totalorder %v398, %v1956
      %vm1962 = vcmp.eq.s32.totalorder %v398, %v1959
      %v1963 = vsel %vm1960, %v1899, 0.0
      %v1964 = vsel %vm1961, %v1901, 0.0
      %v1965 = vsel %vm1962, %v1904, 0.0
      %v1966 = vsel %vm1907, %v1963, 0.0
      %1967 = vadd.xlane.f32.xlu0 %v1966
      %v1968 = vpop.xlane.xlu0 %1967
      %v1969 = vsel %vm1907, %v1964, 0.0
      %1970 = vadd.xlane.f32.xlu0 %v1969
      %v1971 = vpop.xlane.xlu0 %1970
      %v1972 = vsel %vm1910, %v1965, 0.0
      %1973 = vadd.xlane.f32.xlu0 %v1972
      %v1974 = vpop.xlane.xlu0 %1973
      %v1975 = vsub.f32 %v1948, %v1968
      %v1976 = vsub.f32 %v1949, %v1971
      %v1977 = vsub.f32 %v1950, %v1974
      %v1978 = vadd.f32 %v1975, %v1976
      %vm1979 = vcmask 1046528
      %v1980 = vsel %vm1979, %v1977, 0.0
      %v1981 = vadd.f32 %v1978, %v1980
      %v1982 = vrot.slane %v1981, 4
      %v1983 = vadd.f32 %v1981, %v1982
      %v1984 = vrot.slane %v1983, 2
      %v1985 = vadd.f32 %v1983, %v1984
      %v1986 = vrot.slane %v1985, 1
      %v1987 = vadd.f32 %v1985, %v1986
      %vm1988 = vcmask 0
      %1989 = vst.msk [vmem:[%s388] sm:$0x1] %vm1988, %v1987
      %p1990 = scmp.lt.s32.totalorder %s22, 1
      %s1991 = scalar_select %p1990, %s22, 1
      %s1992 = smul.addr %s1991, 3
      %s1993 = smul.addr %s1992, 8
      %s1994 = scalar_lea.vmem %s9, %s1993
      %p1995 = scmp.lt.s32.totalorder %s22, 1
      %s1996 = scalar_select %p1995, %s22, 1
      %s1997 = scalar_lea.vmem %s10, %s1996
      // Predicated region
      $region57: #{_lambda_.3} parent=55 // pred_check
        %p1998 = pneg %p239
      $region58: #{_lambda_.3} parent=55 // pred_check_branch
        %2000 = sbr.rel (%p1998) target = $region60
      $region59: #{_lambda_.3} parent=55 // pred_region
        _
      $region60: #{_lambda_.3} parent=55 // pred_fallthru
        _
      // Predicated region
      $region61: #{_lambda_.3} parent=55 // pred_check
        %p2001 = pneg %p265
      $region62: #{_lambda_.3} parent=55 // pred_check_branch
        %2003 = sbr.rel (%p2001) target = $region64
      $region63: #{_lambda_.3} parent=55 // pred_region
        _
      $region64: #{_lambda_.3} parent=55 // pred_fallthru
        _
    $region56: #{_lambda_.3} parent=5 // pred_fallthru
      _
    %p2004 = scmp.le.s32.totalorder 2, %s17
    // Predicated region
    $region65: #{_lambda_.3} parent=5 // pred_check
      %p2005 = pneg %p2004
    $region66: #{_lambda_.3} parent=5 // pred_check_branch
      %2007 = sbr.rel (%p2005) target = $region68
    $region67: #{_lambda_.3} parent=5 // pred_region
      %s2008 = ssub.s32 %s17, 2
      // Predicated region
      $region69: #{_lambda_.3} parent=67 // pred_check
        %p2009 = pneg %p245
      $region70: #{_lambda_.3} parent=67 // pred_check_branch
        %2011 = sbr.rel (%p2009) target = $region72
      $region71: #{_lambda_.3} parent=67 // pred_region
        %p2012 = scmp.lt.s32.totalorder %s23, 1
        %s2013 = scalar_select %p2012, %s23, 1
        %s2014 = smul.addr %s2013, 3
        %s2015 = smul.addr %s2014, 8
        %s2016 = scalar_lea.vmem %s9, %s2015
      $region72: #{_lambda_.3} parent=67 // pred_fallthru
        _
      // Predicated region
      $region73: #{_lambda_.3} parent=67 // pred_check
        %p2017 = pneg %p271
      $region74: #{_lambda_.3} parent=67 // pred_check_branch
        %2019 = sbr.rel (%p2017) target = $region76
      $region75: #{_lambda_.3} parent=67 // pred_region
        %p2020 = scmp.lt.s32.totalorder %s23, 1
        %s2021 = scalar_select %p2020, %s23, 1
        %s2022 = scalar_lea.vmem %s10, %s2021
      $region76: #{_lambda_.3} parent=67 // pred_fallthru
        _
    $region68: #{_lambda_.3} parent=5 // pred_fallthru
      _
  $region6: #{_lambda_.3} parent=0 // loop_footer
    %s21 = sadd.s32 1, %s17
  $region7: #{_lambda_.3} parent=0 // loop_footer_branch
    %16 = sbr.rel target = $region3
  $region8: #{_lambda_.3} parent=0 // loop_exit
    _

// kernel: _lambda_.2
$region0: #{_lambda_.2}
  #allocation0 [shape = 'u32[]', space=smem, size = 0x4, offset = 0x4, fixed_abs, tag = 'smem constant byte address 0x4 - core index']
  #allocation1 [shape = 'u32[72,128]{1,0:T(1,128)}', space=vmem, size = 0x9000, scoped, tag = 'internal scratch']
  %s0 = inlined_call_operand.vmem [shape: f32[2,16,32], index: 0, kind: input, shape index: {}]
  %s1 = inlined_call_operand.vmem [shape: f32[2,8,32], index: 1, kind: input, shape index: {}]
  %s2 = inlined_call_operand.vmem [shape: f32[2,32], index: 2, kind: input, shape index: {}]
  %s3 = inlined_call_operand.vmem [shape: bf16[12,32,8], index: 3, kind: input, shape index: {}]
  %s4 = inlined_call_operand.vmem [shape: bf16[4,8,32], index: 4, kind: input, shape index: {}]
  %s5 = inlined_call_operand.vmem [shape: bf16[1,32,128], index: 5, kind: input, shape index: {}]
  %s6 = inlined_call_operand.vmem [shape: bf16[1,128,32], index: 6, kind: input, shape index: {}]
  %s7 = inlined_call_operand.vmem [shape: f32[8,32], index: 7, kind: input, shape index: {}]
  %s8 = inlined_call_operand.vmem [shape: bf16[12,32,8], index: 8, kind: input, shape index: {}]
  %s9 = inlined_call_operand.vmem [shape: f32[12,8], index: 9, kind: input, shape index: {}]
  %s10 = inlined_call_operand.vmem [shape: bf16[4,8,32], index: 10, kind: input, shape index: {}]
  %s11 = inlined_call_operand.vmem [shape: bf16[32,128], index: 11, kind: input, shape index: {}]
  %s12 = inlined_call_operand.vmem [shape: f32[1,128], index: 12, kind: input, shape index: {}]
  %s13 = inlined_call_operand.vmem [shape: bf16[128,32], index: 13, kind: input, shape index: {}]
  %s14 = inlined_call_operand.vmem [shape: f32[2,32], index: 14, kind: input, shape index: {}]
  %s15 = inlined_call_operand.vmem [shape: bf16[12,32,8], index: 15, kind: input, shape index: {}]
  %s16 = inlined_call_operand.vmem [shape: bf16[4,8,32], index: 16, kind: input, shape index: {}]
  %s17 = inlined_call_operand.vmem [shape: bf16[1,32,128], index: 17, kind: input, shape index: {}]
  %s18 = inlined_call_operand.vmem [shape: bf16[1,128,32], index: 18, kind: input, shape index: {}]
  %s19 = inlined_call_operand.vmem [shape: f32[32,16], index: 19, kind: input, shape index: {}]
  %s20 = inlined_call_operand.vmem [shape: f32[1,16], index: 20, kind: input, shape index: {}]
  %s21 = inlined_call_operand.vmem [shape: f32[16,32], index: 21, kind: input, shape index: {}]
  %s22 = inlined_call_operand.hbm [shape: f32[2,8,16], index: 22, kind: output, shape index: {0}]
  %s23 = inlined_call_operand.vmem [shape: s32[2,8,1], index: 23, kind: output, shape index: {1}]
  %s24 = inlined_call_operand.vmem [shape: f32[2,1,1], index: 24, kind: output, shape index: {2}]
  %25 = xla_tuple %s22, %s23, %s24
  %s26 = sld [smem:[#allocation0]]
  $region137: #{_lambda_.2} parent=0
    _
  %s28 = ssub.s32 1, %s26
  %s29 = scalar_select 0, %s28, %s26
  $region1: #{_lambda_.2} parent=0
    #allocation2 [shape = 'u8[8192]{0}', space=vmem, size = 0x2000, scoped, tag = 'output window, operand 0']
    #allocation3 [shape = 's32[2]{0}', space=sflag, size = 0x8, scoped, tag = 'scoped memory for _lambda_.2']
    %30 = vsyncpa [#allocation3], 0
    %s31 = scalar_lea.sflag [#allocation3], 1
    %32 = vsyncpa %s31, 0
    loop: start=0, step=1, limit=4
    $region2: #{_lambda_.2} parent=1 // loop_pre_header
      _
    $region3: #{_lambda_.2} parent=1 // loop_header
      %s34 = sphi 0, %s38
      %p35 = scmp.ge.s32.totalorder %s34, 4
      %s44 = sphi 0, %s46
      %s47 = sphi 0, %s44
      %s48 = sphi 0, %s47
      %s64 = sphi 0, %s48
      %s68 = sphi 0, %s68
      %s70 = sphi 0, %s68
      %s71 = sphi 0, %s70
      %s85 = sphi 0, %s71
      %s89 = sphi 0, %s89
      %s91 = sphi 0, %s89
      %s92 = sphi 0, %s91
      %s106 = sphi 0, %s92
      %s110 = sphi 0, %s110
      %s112 = sphi 0, %s110
      %s113 = sphi 0, %s112
      %s127 = sphi 0, %s113
      %s131 = sphi 0, %s131
      %s133 = sphi 0, %s131
      %s134 = sphi 0, %s133
      %s148 = sphi 0, %s134
      %s152 = sphi 0, %s152
      %s154 = sphi 0, %s152
      %s155 = sphi 0, %s154
      %s169 = sphi 0, %s155
      %s173 = sphi 0, %s173
      %s175 = sphi 0, %s173
      %s176 = sphi 0, %s175
      %s190 = sphi 0, %s176
      %s194 = sphi 0, %s194
      %s196 = sphi 0, %s194
      %s197 = sphi 0, %s196
      %s211 = sphi 0, %s197
      %s215 = sphi 0, %s215
      %s217 = sphi 0, %s215
      %s218 = sphi 0, %s217
      %s232 = sphi 0, %s218
      %s236 = sphi 0, %s236
      %s238 = sphi 0, %s236
      %s239 = sphi 0, %s238
      %s253 = sphi 0, %s239
      %s257 = sphi 0, %s257
      %s259 = sphi 0, %s257
      %s260 = sphi 0, %s259
      %s274 = sphi 0, %s260
      %s278 = sphi 0, %s278
      %s280 = sphi 0, %s278
      %s281 = sphi 0, %s280
      %s295 = sphi 0, %s281
      %s299 = sphi 0, %s299
      %s301 = sphi 0, %s299
      %s302 = sphi 0, %s301
      %s316 = sphi 0, %s302
      %s320 = sphi 0, %s320
      %s322 = sphi 0, %s320
      %s323 = sphi 0, %s322
      %s337 = sphi 0, %s323
      %s341 = sphi 0, %s341
      %s343 = sphi 0, %s341
      %s344 = sphi 0, %s343
      %s358 = sphi 0, %s344
      %s362 = sphi 0, %s362
      %s364 = sphi 0, %s362
      %s365 = sphi 0, %s364
      %s379 = sphi 0, %s365
      %s383 = sphi 0, %s383
      %s385 = sphi 0, %s383
      %s386 = sphi 0, %s385
      %s400 = sphi 0, %s386
      %s404 = sphi 0, %s404
      %s406 = sphi 0, %s404
      %s407 = sphi 0, %s406
      %s421 = sphi 0, %s407
      %s425 = sphi 0, %s425
      %s427 = sphi 0, %s425
      %s428 = sphi 0, %s427
      %s442 = sphi 0, %s428
      %s446 = sphi 0, %s446
      %s448 = sphi 0, %s446
      %s449 = sphi 0, %s448
      %s463 = sphi 0, %s449
      %s467 = sphi 0, %s467
      %s469 = sphi 0, %s467
      %s470 = sphi 0, %s469
      %s484 = sphi 0, %s470
      %s488 = sphi 0, %s488
      %s490 = sphi 0, %s488
      %s491 = sphi 0, %s490
      %s505 = sphi 0, %s491
      %s511 = sphi 0, %s513
      %s514 = sphi 0, %s511
      %s515 = sphi 0, %s514
      %s531 = sphi 0, %s515
      %s537 = sphi 0, %s539
      %s540 = sphi 0, %s537
      %s541 = sphi 0, %s540
      %s557 = sphi 0, %s541
      %s563 = sphi 0, %s565
      %s566 = sphi 0, %s563
      %s567 = sphi 0, %s566
      %s583 = sphi 0, %s567
    $region4: #{_lambda_.2} parent=1 // loop_header_branch
      %37 = sbr.rel (%p35) target = $region8
    $region5: #{_lambda_.2} parent=1 // loop_body
      %s39 = ssub.s32 %s34, 1
      %s40 = ssub.s32 %s34, 2
      %s41 = sadd.s32 %s34, 1
      %s42 = ssub.s32 %s34, %s41
      %p43 = scmp.eq.s32.totalorder %s42, 0
      %s45 = sadd.s32 %s44, 1
      %s46 = scalar_select %p43, %s44, %s45
      %p49 = pneg %p43
      %p50 = scmp.eq.s32.totalorder %s34, 1
      %p51 = por %p49, %p50
      %p52 = scmp.ne.s32.totalorder %s44, %s47
      %p53 = scmp.eq.s32.totalorder %s34, 0
      %p54 = por %p52, %p53
      %p55 = scmp.ne.s32.totalorder %s44, %s47
      %p56 = scmp.eq.s32.totalorder %s39, 1
      %p57 = por %p55, %p56
      %p58 = scmp.ne.s32.totalorder %s47, %s48
      %p59 = scmp.eq.s32.totalorder %s39, 0
      %p60 = por %p58, %p59
      %p61 = scmp.ne.s32.totalorder %s47, %s48
      %p62 = scmp.eq.s32.totalorder %s40, 1
      %p63 = por %p61, %p62
      %p65 = scmp.ne.s32.totalorder %s48, %s64
      %p66 = scmp.eq.s32.totalorder %s40, 0
      %p67 = por %p65, %p66
      %s69 = sadd.s32 %s68, 1
      %p72 = scmp.eq.s32.totalorder %s34, 1
      %p73 = scmp.ne.s32.totalorder %s68, %s70
      %p74 = scmp.eq.s32.totalorder %s34, 0
      %p75 = por %p73, %p74
      %p76 = scmp.ne.s32.totalorder %s68, %s70
      %p77 = scmp.eq.s32.totalorder %s39, 1
      %p78 = por %p76, %p77
      %p79 = scmp.ne.s32.totalorder %s70, %s71
      %p80 = scmp.eq.s32.totalorder %s39, 0
      %p81 = por %p79, %p80
      %p82 = scmp.ne.s32.totalorder %s70, %s71
      %p83 = scmp.eq.s32.totalorder %s40, 1
      %p84 = por %p82, %p83
      %p86 = scmp.ne.s32.totalorder %s71, %s85
      %p87 = scmp.eq.s32.totalorder %s40, 0
      %p88 = por %p86, %p87
      %s90 = sadd.s32 %s89, 1
      %p93 = scmp.eq.s32.totalorder %s34, 1
      %p94 = scmp.ne.s32.totalorder %s89, %s91
      %p95 = scmp.eq.s32.totalorder %s34, 0
      %p96 = por %p94, %p95
      %p97 = scmp.ne.s32.totalorder %s89, %s91
      %p98 = scmp.eq.s32.totalorder %s39, 1
      %p99 = por %p97, %p98
      %p100 = scmp.ne.s32.totalorder %s91, %s92
      %p101 = scmp.eq.s32.totalorder %s39, 0
      %p102 = por %p100, %p101
      %p103 = scmp.ne.s32.totalorder %s91, %s92
      %p104 = scmp.eq.s32.totalorder %s40, 1
      %p105 = por %p103, %p104
      %p107 = scmp.ne.s32.totalorder %s92, %s106
      %p108 = scmp.eq.s32.totalorder %s40, 0
      %p109 = por %p107, %p108
      %s111 = sadd.s32 %s110, 1
      %p114 = scmp.eq.s32.totalorder %s34, 1
      %p115 = scmp.ne.s32.totalorder %s110, %s112
      %p116 = scmp.eq.s32.totalorder %s34, 0
      %p117 = por %p115, %p116
      %p118 = scmp.ne.s32.totalorder %s110, %s112
      %p119 = scmp.eq.s32.totalorder %s39, 1
      %p120 = por %p118, %p119
      %p121 = scmp.ne.s32.totalorder %s112, %s113
      %p122 = scmp.eq.s32.totalorder %s39, 0
      %p123 = por %p121, %p122
      %p124 = scmp.ne.s32.totalorder %s112, %s113
      %p125 = scmp.eq.s32.totalorder %s40, 1
      %p126 = por %p124, %p125
      %p128 = scmp.ne.s32.totalorder %s113, %s127
      %p129 = scmp.eq.s32.totalorder %s40, 0
      %p130 = por %p128, %p129
      %s132 = sadd.s32 %s131, 1
      %p135 = scmp.eq.s32.totalorder %s34, 1
      %p136 = scmp.ne.s32.totalorder %s131, %s133
      %p137 = scmp.eq.s32.totalorder %s34, 0
      %p138 = por %p136, %p137
      %p139 = scmp.ne.s32.totalorder %s131, %s133
      %p140 = scmp.eq.s32.totalorder %s39, 1
      %p141 = por %p139, %p140
      %p142 = scmp.ne.s32.totalorder %s133, %s134
      %p143 = scmp.eq.s32.totalorder %s39, 0
      %p144 = por %p142, %p143
      %p145 = scmp.ne.s32.totalorder %s133, %s134
      %p146 = scmp.eq.s32.totalorder %s40, 1
      %p147 = por %p145, %p146
      %p149 = scmp.ne.s32.totalorder %s134, %s148
      %p150 = scmp.eq.s32.totalorder %s40, 0
      %p151 = por %p149, %p150
      %s153 = sadd.s32 %s152, 1
      %p156 = scmp.eq.s32.totalorder %s34, 1
      %p157 = scmp.ne.s32.totalorder %s152, %s154
      %p158 = scmp.eq.s32.totalorder %s34, 0
      %p159 = por %p157, %p158
      %p160 = scmp.ne.s32.totalorder %s152, %s154
      %p161 = scmp.eq.s32.totalorder %s39, 1
      %p162 = por %p160, %p161
      %p163 = scmp.ne.s32.totalorder %s154, %s155
      %p164 = scmp.eq.s32.totalorder %s39, 0
      %p165 = por %p163, %p164
      %p166 = scmp.ne.s32.totalorder %s154, %s155
      %p167 = scmp.eq.s32.totalorder %s40, 1
      %p168 = por %p166, %p167
      %p170 = scmp.ne.s32.totalorder %s155, %s169
      %p171 = scmp.eq.s32.totalorder %s40, 0
      %p172 = por %p170, %p171
      %s174 = sadd.s32 %s173, 1
      %p177 = scmp.eq.s32.totalorder %s34, 1
      %p178 = scmp.ne.s32.totalorder %s173, %s175
      %p179 = scmp.eq.s32.totalorder %s34, 0
      %p180 = por %p178, %p179
      %p181 = scmp.ne.s32.totalorder %s173, %s175
      %p182 = scmp.eq.s32.totalorder %s39, 1
      %p183 = por %p181, %p182
      %p184 = scmp.ne.s32.totalorder %s175, %s176
      %p185 = scmp.eq.s32.totalorder %s39, 0
      %p186 = por %p184, %p185
      %p187 = scmp.ne.s32.totalorder %s175, %s176
      %p188 = scmp.eq.s32.totalorder %s40, 1
      %p189 = por %p187, %p188
      %p191 = scmp.ne.s32.totalorder %s176, %s190
      %p192 = scmp.eq.s32.totalorder %s40, 0
      %p193 = por %p191, %p192
      %s195 = sadd.s32 %s194, 1
      %p198 = scmp.eq.s32.totalorder %s34, 1
      %p199 = scmp.ne.s32.totalorder %s194, %s196
      %p200 = scmp.eq.s32.totalorder %s34, 0
      %p201 = por %p199, %p200
      %p202 = scmp.ne.s32.totalorder %s194, %s196
      %p203 = scmp.eq.s32.totalorder %s39, 1
      %p204 = por %p202, %p203
      %p205 = scmp.ne.s32.totalorder %s196, %s197
      %p206 = scmp.eq.s32.totalorder %s39, 0
      %p207 = por %p205, %p206
      %p208 = scmp.ne.s32.totalorder %s196, %s197
      %p209 = scmp.eq.s32.totalorder %s40, 1
      %p210 = por %p208, %p209
      %p212 = scmp.ne.s32.totalorder %s197, %s211
      %p213 = scmp.eq.s32.totalorder %s40, 0
      %p214 = por %p212, %p213
      %s216 = sadd.s32 %s215, 1
      %p219 = scmp.eq.s32.totalorder %s34, 1
      %p220 = scmp.ne.s32.totalorder %s215, %s217
      %p221 = scmp.eq.s32.totalorder %s34, 0
      %p222 = por %p220, %p221
      %p223 = scmp.ne.s32.totalorder %s215, %s217
      %p224 = scmp.eq.s32.totalorder %s39, 1
      %p225 = por %p223, %p224
      %p226 = scmp.ne.s32.totalorder %s217, %s218
      %p227 = scmp.eq.s32.totalorder %s39, 0
      %p228 = por %p226, %p227
      %p229 = scmp.ne.s32.totalorder %s217, %s218
      %p230 = scmp.eq.s32.totalorder %s40, 1
      %p231 = por %p229, %p230
      %p233 = scmp.ne.s32.totalorder %s218, %s232
      %p234 = scmp.eq.s32.totalorder %s40, 0
      %p235 = por %p233, %p234
      %s237 = sadd.s32 %s236, 1
      %p240 = scmp.eq.s32.totalorder %s34, 1
      %p241 = scmp.ne.s32.totalorder %s236, %s238
      %p242 = scmp.eq.s32.totalorder %s34, 0
      %p243 = por %p241, %p242
      %p244 = scmp.ne.s32.totalorder %s236, %s238
      %p245 = scmp.eq.s32.totalorder %s39, 1
      %p246 = por %p244, %p245
      %p247 = scmp.ne.s32.totalorder %s238, %s239
      %p248 = scmp.eq.s32.totalorder %s39, 0
      %p249 = por %p247, %p248
      %p250 = scmp.ne.s32.totalorder %s238, %s239
      %p251 = scmp.eq.s32.totalorder %s40, 1
      %p252 = por %p250, %p251
      %p254 = scmp.ne.s32.totalorder %s239, %s253
      %p255 = scmp.eq.s32.totalorder %s40, 0
      %p256 = por %p254, %p255
      %s258 = sadd.s32 %s257, 1
      %p261 = scmp.eq.s32.totalorder %s34, 1
      %p262 = scmp.ne.s32.totalorder %s257, %s259
      %p263 = scmp.eq.s32.totalorder %s34, 0
      %p264 = por %p262, %p263
      %p265 = scmp.ne.s32.totalorder %s257, %s259
      %p266 = scmp.eq.s32.totalorder %s39, 1
      %p267 = por %p265, %p266
      %p268 = scmp.ne.s32.totalorder %s259, %s260
      %p269 = scmp.eq.s32.totalorder %s39, 0
      %p270 = por %p268, %p269
      %p271 = scmp.ne.s32.totalorder %s259, %s260
      %p272 = scmp.eq.s32.totalorder %s40, 1
      %p273 = por %p271, %p272
      %p275 = scmp.ne.s32.totalorder %s260, %s274
      %p276 = scmp.eq.s32.totalorder %s40, 0
      %p277 = por %p275, %p276
      %s279 = sadd.s32 %s278, 1
      %p282 = scmp.eq.s32.totalorder %s34, 1
      %p283 = scmp.ne.s32.totalorder %s278, %s280
      %p284 = scmp.eq.s32.totalorder %s34, 0
      %p285 = por %p283, %p284
      %p286 = scmp.ne.s32.totalorder %s278, %s280
      %p287 = scmp.eq.s32.totalorder %s39, 1
      %p288 = por %p286, %p287
      %p289 = scmp.ne.s32.totalorder %s280, %s281
      %p290 = scmp.eq.s32.totalorder %s39, 0
      %p291 = por %p289, %p290
      %p292 = scmp.ne.s32.totalorder %s280, %s281
      %p293 = scmp.eq.s32.totalorder %s40, 1
      %p294 = por %p292, %p293
      %p296 = scmp.ne.s32.totalorder %s281, %s295
      %p297 = scmp.eq.s32.totalorder %s40, 0
      %p298 = por %p296, %p297
      %s300 = sadd.s32 %s299, 1
      %p303 = scmp.eq.s32.totalorder %s34, 1
      %p304 = scmp.ne.s32.totalorder %s299, %s301
      %p305 = scmp.eq.s32.totalorder %s34, 0
      %p306 = por %p304, %p305
      %p307 = scmp.ne.s32.totalorder %s299, %s301
      %p308 = scmp.eq.s32.totalorder %s39, 1
      %p309 = por %p307, %p308
      %p310 = scmp.ne.s32.totalorder %s301, %s302
      %p311 = scmp.eq.s32.totalorder %s39, 0
      %p312 = por %p310, %p311
      %p313 = scmp.ne.s32.totalorder %s301, %s302
      %p314 = scmp.eq.s32.totalorder %s40, 1
      %p315 = por %p313, %p314
      %p317 = scmp.ne.s32.totalorder %s302, %s316
      %p318 = scmp.eq.s32.totalorder %s40, 0
      %p319 = por %p317, %p318
      %s321 = sadd.s32 %s320, 1
      %p324 = scmp.eq.s32.totalorder %s34, 1
      %p325 = scmp.ne.s32.totalorder %s320, %s322
      %p326 = scmp.eq.s32.totalorder %s34, 0
      %p327 = por %p325, %p326
      %p328 = scmp.ne.s32.totalorder %s320, %s322
      %p329 = scmp.eq.s32.totalorder %s39, 1
      %p330 = por %p328, %p329
      %p331 = scmp.ne.s32.totalorder %s322, %s323
      %p332 = scmp.eq.s32.totalorder %s39, 0
      %p333 = por %p331, %p332
      %p334 = scmp.ne.s32.totalorder %s322, %s323
      %p335 = scmp.eq.s32.totalorder %s40, 1
      %p336 = por %p334, %p335
      %p338 = scmp.ne.s32.totalorder %s323, %s337
      %p339 = scmp.eq.s32.totalorder %s40, 0
      %p340 = por %p338, %p339
      %s342 = sadd.s32 %s341, 1
      %p345 = scmp.eq.s32.totalorder %s34, 1
      %p346 = scmp.ne.s32.totalorder %s341, %s343
      %p347 = scmp.eq.s32.totalorder %s34, 0
      %p348 = por %p346, %p347
      %p349 = scmp.ne.s32.totalorder %s341, %s343
      %p350 = scmp.eq.s32.totalorder %s39, 1
      %p351 = por %p349, %p350
      %p352 = scmp.ne.s32.totalorder %s343, %s344
      %p353 = scmp.eq.s32.totalorder %s39, 0
      %p354 = por %p352, %p353
      %p355 = scmp.ne.s32.totalorder %s343, %s344
      %p356 = scmp.eq.s32.totalorder %s40, 1
      %p357 = por %p355, %p356
      %p359 = scmp.ne.s32.totalorder %s344, %s358
      %p360 = scmp.eq.s32.totalorder %s40, 0
      %p361 = por %p359, %p360
      %s363 = sadd.s32 %s362, 1
      %p366 = scmp.eq.s32.totalorder %s34, 1
      %p367 = scmp.ne.s32.totalorder %s362, %s364
      %p368 = scmp.eq.s32.totalorder %s34, 0
      %p369 = por %p367, %p368
      %p370 = scmp.ne.s32.totalorder %s362, %s364
      %p371 = scmp.eq.s32.totalorder %s39, 1
      %p372 = por %p370, %p371
      %p373 = scmp.ne.s32.totalorder %s364, %s365
      %p374 = scmp.eq.s32.totalorder %s39, 0
      %p375 = por %p373, %p374
      %p376 = scmp.ne.s32.totalorder %s364, %s365
      %p377 = scmp.eq.s32.totalorder %s40, 1
      %p378 = por %p376, %p377
      %p380 = scmp.ne.s32.totalorder %s365, %s379
      %p381 = scmp.eq.s32.totalorder %s40, 0
      %p382 = por %p380, %p381
      %s384 = sadd.s32 %s383, 1
      %p387 = scmp.eq.s32.totalorder %s34, 1
      %p388 = scmp.ne.s32.totalorder %s383, %s385
      %p389 = scmp.eq.s32.totalorder %s34, 0
      %p390 = por %p388, %p389
      %p391 = scmp.ne.s32.totalorder %s383, %s385
      %p392 = scmp.eq.s32.totalorder %s39, 1
      %p393 = por %p391, %p392
      %p394 = scmp.ne.s32.totalorder %s385, %s386
      %p395 = scmp.eq.s32.totalorder %s39, 0
      %p396 = por %p394, %p395
      %p397 = scmp.ne.s32.totalorder %s385, %s386
      %p398 = scmp.eq.s32.totalorder %s40, 1
      %p399 = por %p397, %p398
      %p401 = scmp.ne.s32.totalorder %s386, %s400
      %p402 = scmp.eq.s32.totalorder %s40, 0
      %p403 = por %p401, %p402
      %s405 = sadd.s32 %s404, 1
      %p408 = scmp.eq.s32.totalorder %s34, 1
      %p409 = scmp.ne.s32.totalorder %s404, %s406
      %p410 = scmp.eq.s32.totalorder %s34, 0
      %p411 = por %p409, %p410
      %p412 = scmp.ne.s32.totalorder %s404, %s406
      %p413 = scmp.eq.s32.totalorder %s39, 1
      %p414 = por %p412, %p413
      %p415 = scmp.ne.s32.totalorder %s406, %s407
      %p416 = scmp.eq.s32.totalorder %s39, 0
      %p417 = por %p415, %p416
      %p418 = scmp.ne.s32.totalorder %s406, %s407
      %p419 = scmp.eq.s32.totalorder %s40, 1
      %p420 = por %p418, %p419
      %p422 = scmp.ne.s32.totalorder %s407, %s421
      %p423 = scmp.eq.s32.totalorder %s40, 0
      %p424 = por %p422, %p423
      %s426 = sadd.s32 %s425, 1
      %p429 = scmp.eq.s32.totalorder %s34, 1
      %p430 = scmp.ne.s32.totalorder %s425, %s427
      %p431 = scmp.eq.s32.totalorder %s34, 0
      %p432 = por %p430, %p431
      %p433 = scmp.ne.s32.totalorder %s425, %s427
      %p434 = scmp.eq.s32.totalorder %s39, 1
      %p435 = por %p433, %p434
      %p436 = scmp.ne.s32.totalorder %s427, %s428
      %p437 = scmp.eq.s32.totalorder %s39, 0
      %p438 = por %p436, %p437
      %p439 = scmp.ne.s32.totalorder %s427, %s428
      %p440 = scmp.eq.s32.totalorder %s40, 1
      %p441 = por %p439, %p440
      %p443 = scmp.ne.s32.totalorder %s428, %s442
      %p444 = scmp.eq.s32.totalorder %s40, 0
      %p445 = por %p443, %p444
      %s447 = sadd.s32 %s446, 1
      %p450 = scmp.eq.s32.totalorder %s34, 1
      %p451 = scmp.ne.s32.totalorder %s446, %s448
      %p452 = scmp.eq.s32.totalorder %s34, 0
      %p453 = por %p451, %p452
      %p454 = scmp.ne.s32.totalorder %s446, %s448
      %p455 = scmp.eq.s32.totalorder %s39, 1
      %p456 = por %p454, %p455
      %p457 = scmp.ne.s32.totalorder %s448, %s449
      %p458 = scmp.eq.s32.totalorder %s39, 0
      %p459 = por %p457, %p458
      %p460 = scmp.ne.s32.totalorder %s448, %s449
      %p461 = scmp.eq.s32.totalorder %s40, 1
      %p462 = por %p460, %p461
      %p464 = scmp.ne.s32.totalorder %s449, %s463
      %p465 = scmp.eq.s32.totalorder %s40, 0
      %p466 = por %p464, %p465
      %s468 = sadd.s32 %s467, 1
      %p471 = scmp.eq.s32.totalorder %s34, 1
      %p472 = scmp.ne.s32.totalorder %s467, %s469
      %p473 = scmp.eq.s32.totalorder %s34, 0
      %p474 = por %p472, %p473
      %p475 = scmp.ne.s32.totalorder %s467, %s469
      %p476 = scmp.eq.s32.totalorder %s39, 1
      %p477 = por %p475, %p476
      %p478 = scmp.ne.s32.totalorder %s469, %s470
      %p479 = scmp.eq.s32.totalorder %s39, 0
      %p480 = por %p478, %p479
      %p481 = scmp.ne.s32.totalorder %s469, %s470
      %p482 = scmp.eq.s32.totalorder %s40, 1
      %p483 = por %p481, %p482
      %p485 = scmp.ne.s32.totalorder %s470, %s484
      %p486 = scmp.eq.s32.totalorder %s40, 0
      %p487 = por %p485, %p486
      %s489 = sadd.s32 %s488, 1
      %p492 = scmp.eq.s32.totalorder %s34, 1
      %p493 = scmp.ne.s32.totalorder %s488, %s490
      %p494 = scmp.eq.s32.totalorder %s34, 0
      %p495 = por %p493, %p494
      %p496 = scmp.ne.s32.totalorder %s488, %s490
      %p497 = scmp.eq.s32.totalorder %s39, 1
      %p498 = por %p496, %p497
      %p499 = scmp.ne.s32.totalorder %s490, %s491
      %p500 = scmp.eq.s32.totalorder %s39, 0
      %p501 = por %p499, %p500
      %p502 = scmp.ne.s32.totalorder %s490, %s491
      %p503 = scmp.eq.s32.totalorder %s40, 1
      %p504 = por %p502, %p503
      %p506 = scmp.ne.s32.totalorder %s491, %s505
      %p507 = scmp.eq.s32.totalorder %s40, 0
      %p508 = por %p506, %p507
      %s509 = ssub.s32 %s34, %s41
      %p510 = scmp.eq.s32.totalorder %s509, 0
      %s512 = sadd.s32 %s511, 1
      %s513 = scalar_select %p510, %s511, %s512
      %p516 = pneg %p510
      %p517 = scmp.eq.s32.totalorder %s34, 1
      %p518 = por %p516, %p517
      %p519 = scmp.ne.s32.totalorder %s511, %s514
      %p520 = scmp.eq.s32.totalorder %s34, 0
      %p521 = por %p519, %p520
      %p522 = scmp.ne.s32.totalorder %s511, %s514
      %p523 = scmp.eq.s32.totalorder %s39, 1
      %p524 = por %p522, %p523
      %p525 = scmp.ne.s32.totalorder %s514, %s515
      %p526 = scmp.eq.s32.totalorder %s39, 0
      %p527 = por %p525, %p526
      %p528 = scmp.ne.s32.totalorder %s514, %s515
      %p529 = scmp.eq.s32.totalorder %s40, 1
      %p530 = por %p528, %p529
      %p532 = scmp.ne.s32.totalorder %s515, %s531
      %p533 = scmp.eq.s32.totalorder %s40, 0
      %p534 = por %p532, %p533
      %s535 = ssub.s32 %s34, %s41
      %p536 = scmp.eq.s32.totalorder %s535, 0
      %s538 = sadd.s32 %s537, 1
      %s539 = scalar_select %p536, %s537, %s538
      %p542 = pneg %p536
      %p543 = scmp.eq.s32.totalorder %s34, 1
      %p544 = por %p542, %p543
      %p545 = scmp.ne.s32.totalorder %s537, %s540
      %p546 = scmp.eq.s32.totalorder %s34, 0
      %p547 = por %p545, %p546
      %p548 = scmp.ne.s32.totalorder %s537, %s540
      %p549 = scmp.eq.s32.totalorder %s39, 1
      %p550 = por %p548, %p549
      %p551 = scmp.ne.s32.totalorder %s540, %s541
      %p552 = scmp.eq.s32.totalorder %s39, 0
      %p553 = por %p551, %p552
      %p554 = scmp.ne.s32.totalorder %s540, %s541
      %p555 = scmp.eq.s32.totalorder %s40, 1
      %p556 = por %p554, %p555
      %p558 = scmp.ne.s32.totalorder %s541, %s557
      %p559 = scmp.eq.s32.totalorder %s40, 0
      %p560 = por %p558, %p559
      %s561 = ssub.s32 %s34, %s41
      %p562 = scmp.eq.s32.totalorder %s561, 0
      %s564 = sadd.s32 %s563, 1
      %s565 = scalar_select %p562, %s563, %s564
      %p568 = pneg %p562
      %p569 = scmp.eq.s32.totalorder %s34, 1
      %p570 = por %p568, %p569
      %p571 = scmp.ne.s32.totalorder %s563, %s566
      %p572 = scmp.eq.s32.totalorder %s34, 0
      %p573 = por %p571, %p572
      %p574 = scmp.ne.s32.totalorder %s563, %s566
      %p575 = scmp.eq.s32.totalorder %s39, 1
      %p576 = por %p574, %p575
      %p577 = scmp.ne.s32.totalorder %s566, %s567
      %p578 = scmp.eq.s32.totalorder %s39, 0
      %p579 = por %p577, %p578
      %p580 = scmp.ne.s32.totalorder %s566, %s567
      %p581 = scmp.eq.s32.totalorder %s40, 1
      %p582 = por %p580, %p581
      %p584 = scmp.ne.s32.totalorder %s567, %s583
      %p585 = scmp.eq.s32.totalorder %s40, 0
      %p586 = por %p584, %p585
      %p587 = scmp.le.s32.totalorder 1, %s34
      %p588 = scmp.lt.s32.totalorder %s34, 3
      %p589 = pnand %p587, %p588
      %p590 = pneg %p589
      // Predicated region
      $region9: #{_lambda_.2} parent=5 // pred_check
        _
      $region10: #{_lambda_.2} parent=5 // pred_check_branch
        %592 = sbr.rel (%p589) target = $region12
      $region11: #{_lambda_.2} parent=5 // pred_region
        %s593 = ssub.s32 %s34, 1
        // Predicated region
        $region13: #{_lambda_.2} parent=11 // pred_check
          %p594 = pneg %p81
        $region14: #{_lambda_.2} parent=11 // pred_check_branch
          %596 = sbr.rel (%p594) target = $region16
        $region15: #{_lambda_.2} parent=11 // pred_region
          _
        $region16: #{_lambda_.2} parent=11 // pred_fallthru
          _
        // Predicated region
        $region17: #{_lambda_.2} parent=11 // pred_check
          %p597 = pneg %p102
        $region18: #{_lambda_.2} parent=11 // pred_check_branch
          %599 = sbr.rel (%p597) target = $region20
        $region19: #{_lambda_.2} parent=11 // pred_region
          _
        $region20: #{_lambda_.2} parent=11 // pred_fallthru
          _
        // Predicated region
        $region21: #{_lambda_.2} parent=11 // pred_check
          %p600 = pneg %p123
        $region22: #{_lambda_.2} parent=11 // pred_check_branch
          %602 = sbr.rel (%p600) target = $region24
        $region23: #{_lambda_.2} parent=11 // pred_region
          _
        $region24: #{_lambda_.2} parent=11 // pred_fallthru
          _
        // Predicated region
        $region25: #{_lambda_.2} parent=11 // pred_check
          %p603 = pneg %p144
        $region26: #{_lambda_.2} parent=11 // pred_check_branch
          %605 = sbr.rel (%p603) target = $region28
        $region27: #{_lambda_.2} parent=11 // pred_region
          _
        $region28: #{_lambda_.2} parent=11 // pred_fallthru
          _
        // Predicated region
        $region29: #{_lambda_.2} parent=11 // pred_check
          %p606 = pneg %p165
        $region30: #{_lambda_.2} parent=11 // pred_check_branch
          %608 = sbr.rel (%p606) target = $region32
        $region31: #{_lambda_.2} parent=11 // pred_region
          _
        $region32: #{_lambda_.2} parent=11 // pred_fallthru
          _
        // Predicated region
        $region33: #{_lambda_.2} parent=11 // pred_check
          %p609 = pneg %p186
        $region34: #{_lambda_.2} parent=11 // pred_check_branch
          %611 = sbr.rel (%p609) target = $region36
        $region35: #{_lambda_.2} parent=11 // pred_region
          _
        $region36: #{_lambda_.2} parent=11 // pred_fallthru
          _
        // Predicated region
        $region37: #{_lambda_.2} parent=11 // pred_check
          %p612 = pneg %p207
        $region38: #{_lambda_.2} parent=11 // pred_check_branch
          %614 = sbr.rel (%p612) target = $region40
        $region39: #{_lambda_.2} parent=11 // pred_region
          _
        $region40: #{_lambda_.2} parent=11 // pred_fallthru
          _
        // Predicated region
        $region41: #{_lambda_.2} parent=11 // pred_check
          %p615 = pneg %p228
        $region42: #{_lambda_.2} parent=11 // pred_check_branch
          %617 = sbr.rel (%p615) target = $region44
        $region43: #{_lambda_.2} parent=11 // pred_region
          _
        $region44: #{_lambda_.2} parent=11 // pred_fallthru
          _
        // Predicated region
        $region45: #{_lambda_.2} parent=11 // pred_check
          %p618 = pneg %p249
        $region46: #{_lambda_.2} parent=11 // pred_check_branch
          %620 = sbr.rel (%p618) target = $region48
        $region47: #{_lambda_.2} parent=11 // pred_region
          _
        $region48: #{_lambda_.2} parent=11 // pred_fallthru
          _
        // Predicated region
        $region49: #{_lambda_.2} parent=11 // pred_check
          %p621 = pneg %p270
        $region50: #{_lambda_.2} parent=11 // pred_check_branch
          %623 = sbr.rel (%p621) target = $region52
        $region51: #{_lambda_.2} parent=11 // pred_region
          _
        $region52: #{_lambda_.2} parent=11 // pred_fallthru
          _
        // Predicated region
        $region53: #{_lambda_.2} parent=11 // pred_check
          %p624 = pneg %p291
        $region54: #{_lambda_.2} parent=11 // pred_check_branch
          %626 = sbr.rel (%p624) target = $region56
        $region55: #{_lambda_.2} parent=11 // pred_region
          _
        $region56: #{_lambda_.2} parent=11 // pred_fallthru
          _
        // Predicated region
        $region57: #{_lambda_.2} parent=11 // pred_check
          %p627 = pneg %p312
        $region58: #{_lambda_.2} parent=11 // pred_check_branch
          %629 = sbr.rel (%p627) target = $region60
        $region59: #{_lambda_.2} parent=11 // pred_region
          _
        $region60: #{_lambda_.2} parent=11 // pred_fallthru
          _
        // Predicated region
        $region61: #{_lambda_.2} parent=11 // pred_check
          %p630 = pneg %p333
        $region62: #{_lambda_.2} parent=11 // pred_check_branch
          %632 = sbr.rel (%p630) target = $region64
        $region63: #{_lambda_.2} parent=11 // pred_region
          _
        $region64: #{_lambda_.2} parent=11 // pred_fallthru
          _
        // Predicated region
        $region65: #{_lambda_.2} parent=11 // pred_check
          %p633 = pneg %p354
        $region66: #{_lambda_.2} parent=11 // pred_check_branch
          %635 = sbr.rel (%p633) target = $region68
        $region67: #{_lambda_.2} parent=11 // pred_region
          _
        $region68: #{_lambda_.2} parent=11 // pred_fallthru
          _
        // Predicated region
        $region69: #{_lambda_.2} parent=11 // pred_check
          %p636 = pneg %p375
        $region70: #{_lambda_.2} parent=11 // pred_check_branch
          %638 = sbr.rel (%p636) target = $region72
        $region71: #{_lambda_.2} parent=11 // pred_region
          _
        $region72: #{_lambda_.2} parent=11 // pred_fallthru
          _
        // Predicated region
        $region73: #{_lambda_.2} parent=11 // pred_check
          %p639 = pneg %p396
        $region74: #{_lambda_.2} parent=11 // pred_check_branch
          %641 = sbr.rel (%p639) target = $region76
        $region75: #{_lambda_.2} parent=11 // pred_region
          _
        $region76: #{_lambda_.2} parent=11 // pred_fallthru
          _
        // Predicated region
        $region77: #{_lambda_.2} parent=11 // pred_check
          %p642 = pneg %p417
        $region78: #{_lambda_.2} parent=11 // pred_check_branch
          %644 = sbr.rel (%p642) target = $region80
        $region79: #{_lambda_.2} parent=11 // pred_region
          _
        $region80: #{_lambda_.2} parent=11 // pred_fallthru
          _
        // Predicated region
        $region81: #{_lambda_.2} parent=11 // pred_check
          %p645 = pneg %p438
        $region82: #{_lambda_.2} parent=11 // pred_check_branch
          %647 = sbr.rel (%p645) target = $region84
        $region83: #{_lambda_.2} parent=11 // pred_region
          _
        $region84: #{_lambda_.2} parent=11 // pred_fallthru
          _
        // Predicated region
        $region85: #{_lambda_.2} parent=11 // pred_check
          %p648 = pneg %p459
        $region86: #{_lambda_.2} parent=11 // pred_check_branch
          %650 = sbr.rel (%p648) target = $region88
        $region87: #{_lambda_.2} parent=11 // pred_region
          _
        $region88: #{_lambda_.2} parent=11 // pred_fallthru
          _
        // Predicated region
        $region89: #{_lambda_.2} parent=11 // pred_check
          %p651 = pneg %p480
        $region90: #{_lambda_.2} parent=11 // pred_check_branch
          %653 = sbr.rel (%p651) target = $region92
        $region91: #{_lambda_.2} parent=11 // pred_region
          _
        $region92: #{_lambda_.2} parent=11 // pred_fallthru
          _
        // Predicated region
        $region93: #{_lambda_.2} parent=11 // pred_check
          %p654 = pneg %p501
        $region94: #{_lambda_.2} parent=11 // pred_check_branch
          %656 = sbr.rel (%p654) target = $region96
        $region95: #{_lambda_.2} parent=11 // pred_region
          _
        $region96: #{_lambda_.2} parent=11 // pred_fallthru
          _
      $region12: #{_lambda_.2} parent=5 // pred_fallthru
        _
      %p657 = scmp.lt.s32.totalorder %s34, 2
      // Predicated region
      $region97: #{_lambda_.2} parent=5 // pred_check
        %p658 = pneg %p657
      $region98: #{_lambda_.2} parent=5 // pred_check_branch
        %660 = sbr.rel (%p658) target = $region100
      $region99: #{_lambda_.2} parent=5 // pred_region
        // Predicated region
        $region101: #{_lambda_.2} parent=99 // pred_check
          %p661 = pneg %p54
        $region102: #{_lambda_.2} parent=99 // pred_check_branch
          %663 = sbr.rel (%p661) target = $region104
        $region103: #{_lambda_.2} parent=99 // pred_region
          %p664 = scmp.lt.s32.totalorder %s34, 1
          %s665 = scalar_select %p664, %s34, 1
          %s666 = smul.addr %s665, 2
          %s667 = smul.addr %s666, 8
          %s668 = scalar_lea.vmem %s0, %s667
        $region104: #{_lambda_.2} parent=99 // pred_fallthru
          _
      $region100: #{_lambda_.2} parent=5 // pred_fallthru
        _
      %p669 = scmp.le.s32.totalorder 1, %s34
      %p670 = scmp.lt.s32.totalorder %s34, 3
      %p671 = pnand %p669, %p670
      %p672 = pneg %p671
      // Predicated region
      $region105: #{_lambda_.2} parent=5 // pred_check
        _
      $region106: #{_lambda_.2} parent=5 // pred_check_branch
        %674 = sbr.rel (%p671) target = $region108
      $region107: #{_lambda_.2} parent=5 // pred_region
        %s675 = ssub.s32 %s34, 1
        %p676 = scmp.lt.s32.totalorder %s39, 1
        %s677 = scalar_select %p676, %s39, 1
        %s678 = smul.addr %s677, 2
        %s679 = smul.addr %s678, 8
        %s680 = scalar_lea.vmem %s0, %s679
        %p681 = pneg %p60
        %p682 = pneg %p57
        %p683 = pneg %p81
        %p684 = pneg %p78
        %p685 = pneg %p102
        %p686 = pneg %p99
        %p687 = pneg %p123
        %p688 = pneg %p120
        %p689 = pneg %p144
        %p690 = pneg %p141
        %p691 = pneg %p165
        %p692 = pneg %p162
        %p693 = pneg %p186
        %p694 = pneg %p183
        %p695 = pneg %p207
        %p696 = pneg %p204
        %p697 = pneg %p228
        %p698 = pneg %p225
        %p699 = pneg %p249
        %p700 = pneg %p246
        %p701 = pneg %p270
        %p702 = pneg %p267
        %p703 = pneg %p291
        %p704 = pneg %p288
        %p705 = pneg %p312
        %p706 = pneg %p309
        %p707 = pneg %p333
        %p708 = pneg %p330
        %p709 = pneg %p354
        %p710 = pneg %p351
        %p711 = pneg %p375
        %p712 = pneg %p372
        %p713 = pneg %p396
        %p714 = pneg %p393
        %p715 = pneg %p417
        %p716 = pneg %p414
        %p717 = pneg %p438
        %p718 = pneg %p435
        %p719 = pneg %p459
        %p720 = pneg %p456
        %p721 = pneg %p480
        %p722 = pneg %p477
        %p723 = pneg %p501
        %p724 = pneg %p498
        %p725 = pneg %p527
        %p726 = pneg %p524
        %s727 = sand.u32 %s514, 1
        %s728 = scalar_lea.sflag [#allocation3], %s727
        %s729 = sand.u32 %s514, 1
        %s730 = smul.addr %s729, 8
        %s731 = scalar_lea.vmem [#allocation2], %s730
        %p732 = pneg %p553
        %p733 = pneg %p550
        %p734 = scmp.lt.s32.totalorder %s39, 1
        %s735 = scalar_select %p734, %s39, 1
        %s736 = smul.addr %s735, 8
        %s737 = scalar_lea.vmem %s23, %s736
        %p738 = pneg %p579
        %p739 = pneg %p576
        %p740 = scmp.lt.s32.totalorder %s39, 1
        %s741 = scalar_select %p740, %s39, 1
        %s742 = scalar_lea.vmem %s24, %s741
        %p743 = scmp.lt.s32.totalorder %s39, 1
        %s744 = scalar_select %p743, %s39, 1
        %s745 = smul.addr %s744, 2
        %s746 = smul.addr %s745, 8
        %s747 = scalar_lea.vmem %s0, %s746
        %p748 = scmp.lt.s32.totalorder %s39, 1
        %s749 = scalar_select %p748, %s39, 1
        %s750 = smul.addr %s749, 8
        %s751 = scalar_lea.vmem %s23, %s750
        %p752 = scmp.lt.s32.totalorder %s39, 1
        %s753 = scalar_select %p752, %s39, 1
        %s754 = scalar_lea.vmem %s24, %s753
        %v756 = vld [vmem:[%s747] sm:$0xff]
        %v757 = vld [vmem:[%s747 + $0x8] sm:$0xff]
        %v758 = vlaneseq
        %v759 = vshrl.u32 %v758, 7
        %v760 = vadd.s32 %v759, 8
        %v761 = vlaneseq
        %v762 = vand.u32 %v761, 127
        %vm763 = vcmp.le.s32.totalorder %v762, %v759
        %vm764 = vcmp.le.s32.totalorder %v762, %v760
        %v765 = vld [vmem:[%s2] sm:$0x1]
        %vm766 = vcmask 261120
        %v767 = vsel %vm766, %v756, 0.0
        %768 = vadd.xlane.f32.xlu0 %v767
        %v769 = vpop.xlane.xlu0 %768
        %v770 = vsel %vm766, %v757, 0.0
        %771 = vadd.xlane.f32.xlu0 %v770
        %v772 = vpop.xlane.xlu0 %771
        %v773 = vrcp.pop 32.0
        %v774 = vmul.f32 32.0, %v773
        %v775 = vsub.f32 1.0, %v774
        %v776 = vmul.f32 %v773, %v775
        %v777 = vadd.f32 %v773, %v776
        %vm778 = vweird.f32 %v773
        %v779 = vsel %vm778, %v773, %v777
        %v780 = vmul.f32 %v769, %v779
        %v781 = vmul.f32 %v772, %v779
        %v782 = vsub.f32 %v756, %v780
        %v783 = vsub.f32 %v757, %v781
        %v784 = vmul.f32 %v782, %v782
        %v785 = vmul.f32 %v783, %v783
        %v786 = vsel %vm766, %v784, 0.0
        %787 = vadd.xlane.f32.xlu0 %v786
        %v788 = vpop.xlane.xlu0 %787
        %v789 = vsel %vm766, %v785, 0.0
        %790 = vadd.xlane.f32.xlu0 %v789
        %v791 = vpop.xlane.xlu0 %790
        %v792 = vmul.f32 %v788, %v779
        %v793 = vmul.f32 %v791, %v779
        %v794 = vadd.f32 %v792, 1e-05
        %v795 = vadd.f32 %v793, 1e-05
        %v796 = vrsqrt.pop %v794
        %v797 = vmul.f32 %v796, %v794
        %v798 = vmul.f32 %v797, %v796
        %v799 = vmul.f32 0.5, %v798
        %v800 = vsub.f32 1.5, %v799
        %v801 = vmul.f32 %v796, %v800
        %vm802 = vweird.f32 %v794
        %vm803 = vweird.f32 %v796
        %vm804 = vmor %vm802, %vm803
        %v805 = vsel %vm804, %v796, %v801
        %v806 = vrsqrt.pop %v795
        %v807 = vmul.f32 %v806, %v795
        %v808 = vmul.f32 %v807, %v806
        %v809 = vmul.f32 0.5, %v808
        %v810 = vsub.f32 1.5, %v809
        %v811 = vmul.f32 %v806, %v810
        %vm812 = vweird.f32 %v795
        %vm813 = vweird.f32 %v806
        %vm814 = vmor %vm812, %vm813
        %v815 = vsel %vm814, %v806, %v811
        %v816 = vmul.f32 %v782, %v805
        %v817 = vmul.f32 %v783, %v815
        %v818 = vperm.slane %v765, 0
        %v819 = vmul.f32 %v816, %v818
        %v820 = vmul.f32 %v817, %v818
        %v821 = vpack.c.bf16 %v820, %v819
        %v822 = vld [vmem:[%s3] sm:$0xf]
        %v823 = vld [vmem:[%s3 + $0x4] sm:$0xf]
        %v824 = vld [vmem:[%s3 + $0x8] sm:$0xf]
        %v825 = vld [vmem:[%s3 + $0xc] sm:$0xf]
        %v830 = vunpack.c.l.b16 %v822
        %v831 = vunpack.c.l.b16 %v823
        %v832 = vunpack.c.l.b16 %v824
        %v833 = vunpack.c.l.b16 %v825
        %v834 = vpack.c.b16 %v831, %v830
        %v835 = vpack.c.b16 %v833, %v832
        %v839 = vsel %vm766, %v821, 0
        %841 = vmatpush.bf16.msra.mxu0 0
        %842 = vmatpush.bf16.msra.mxu0 0
        %843 = vmatpush.bf16.msra.mxu0 0
        %844 = vmatpush.bf16.msra.mxu0 0
        %845 = vmatpush.bf16.msra.mxu0 0
        %846 = vmatpush.bf16.msra.mxu0 0
        %847 = vmatpush.bf16.msra.mxu0 %v835
        %848 = vmatpush.bf16.msra.mxu0 %v834
        %849 = vmatmul.bf16.gmra.mxu0 %v839
        %v850 = vpop.f32.mrf.mxu0
        %v851 = vadd.f32 0.0, %v850
        %v852 = vpop.f32.mrf.mxu0
        %v853 = vadd.f32 0.0, %v852
        %854 = vdwg.mxu0
        %s855 = scalar_lea.vmem %s3, 64
        %v856 = vld [vmem:[%s855] sm:$0xf]
        %v857 = vld [vmem:[%s855 + $0x4] sm:$0xf]
        %v858 = vld [vmem:[%s855 + $0x8] sm:$0xf]
        %v859 = vld [vmem:[%s855 + $0xc] sm:$0xf]
        %v864 = vunpack.c.l.b16 %v856
        %v865 = vunpack.c.l.b16 %v857
        %v866 = vunpack.c.l.b16 %v858
        %v867 = vunpack.c.l.b16 %v859
        %v868 = vpack.c.b16 %v865, %v864
        %v869 = vpack.c.b16 %v867, %v866
        %872 = vmatpush.bf16.msra.mxu0 0
        %873 = vmatpush.bf16.msra.mxu0 0
        %874 = vmatpush.bf16.msra.mxu0 0
        %875 = vmatpush.bf16.msra.mxu0 0
        %876 = vmatpush.bf16.msra.mxu0 0
        %877 = vmatpush.bf16.msra.mxu0 0
        %878 = vmatpush.bf16.msra.mxu0 %v869
        %879 = vmatpush.bf16.msra.mxu0 %v868
        %880 = vmatmul.bf16.gmra.mxu0 %v839
        %v881 = vpop.f32.mrf.mxu0
        %v882 = vadd.f32 0.0, %v881
        %v883 = vpop.f32.mrf.mxu0
        %v884 = vadd.f32 0.0, %v883
        %885 = vdwg.mxu0
        %s886 = scalar_lea.vmem %s3, 128
        %v887 = vld [vmem:[%s886] sm:$0xf]
        %v888 = vld [vmem:[%s886 + $0x4] sm:$0xf]
        %v889 = vld [vmem:[%s886 + $0x8] sm:$0xf]
        %v890 = vld [vmem:[%s886 + $0xc] sm:$0xf]
        %v895 = vunpack.c.l.b16 %v887
        %v896 = vunpack.c.l.b16 %v888
        %v897 = vunpack.c.l.b16 %v889
        %v898 = vunpack.c.l.b16 %v890
        %v899 = vpack.c.b16 %v896, %v895
        %v900 = vpack.c.b16 %v898, %v897
        %903 = vmatpush.bf16.msra.mxu0 0
        %904 = vmatpush.bf16.msra.mxu0 0
        %905 = vmatpush.bf16.msra.mxu0 0
        %906 = vmatpush.bf16.msra.mxu0 0
        %907 = vmatpush.bf16.msra.mxu0 0
        %908 = vmatpush.bf16.msra.mxu0 0
        %909 = vmatpush.bf16.msra.mxu0 %v900
        %910 = vmatpush.bf16.msra.mxu0 %v899
        %911 = vmatmul.bf16.gmra.mxu0 %v839
        %v912 = vpop.f32.mrf.mxu0
        %v913 = vadd.f32 0.0, %v912
        %v914 = vpop.f32.mrf.mxu0
        %v915 = vadd.f32 0.0, %v914
        %916 = vdwg.mxu0
        %v917 = vpack.c.bf16 %v853, %v851
        %v918 = vpack.c.bf16 %v884, %v882
        %vm919 = vcmask 64512
        %v921 = vsel %vm919, %v917, 0
        %v924 = vsel %vm919, %v918, 0
        %926 = vmatpush.bf16.xpose.msra.mxu0 0
        %927 = vmatpush.bf16.xpose.msra.mxu0 0
        %928 = vmatpush.bf16.xpose.msra.mxu0 0
        %929 = vmatpush.bf16.xpose.msra.mxu0 0
        %930 = vmatpush.bf16.xpose.msra.mxu0 0
        %931 = vmatpush.bf16.xpose.msra.mxu0 0
        %932 = vmatpush.bf16.xpose.msra.mxu0 0
        %933 = vmatpush.bf16.xpose.msra.mxu0 %v924
        %934 = vmatmul.bf16.gmra.mxu0 %v921
        %v935 = vpop.f32.mrf.mxu0
        %v936 = vadd.f32 0.0, %v935
        %v937 = vpop.f32.mrf.mxu0
        %v938 = vadd.f32 0.0, %v937
        %939 = vdwg.mxu0
        %v940 = vmul.f32 %v936, 0.35355338
        %v941 = vmul.f32 %v938, 0.35355338
        %v942 = vsel %vm763, %v940, -1e+30
        %v943 = vsel %vm764, %v941, -1e+30
        %vm944 = vcmask 130048
        %v945 = vsel %vm944, %v942, -inf
        %946 = vmax.xlane.f32.xlu0 %v945
        %v947 = vpop.xlane.xlu0 %946
        %v948 = vsel %vm944, %v943, -inf
        %949 = vmax.xlane.f32.xlu0 %v948
        %v950 = vpop.xlane.xlu0 %949
        %v951 = vsub.f32 %v942, %v947
        %v952 = vsub.f32 %v943, %v950
        %v953 = vmul.f32 %v951, 1.442695
        %v954 = vpow.pop %v953
        %v955 = vmul.f32 %v952, 1.442695
        %v956 = vpow.pop %v955
        %v957 = vsel %vm944, %v954, 0.0
        %958 = vadd.xlane.f32.xlu0 %v957
        %v959 = vpop.xlane.xlu0 %958
        %v960 = vsel %vm944, %v956, 0.0
        %961 = vadd.xlane.f32.xlu0 %v960
        %v962 = vpop.xlane.xlu0 %961
        %v963 = vrcp.pop %v959
        %v964 = vrcp.pop %v962
        %v965 = vmul.f32 %v954, %v963
        %v966 = vmul.f32 %v956, %v964
        %v967 = vpack.c.bf16 %v966, %v965
        %v968 = vpack.c.bf16 %v915, %v913
        %v970 = vsel %vm944, %v967, 0
        %972 = vmatpush.bf16.msra.mxu0 0
        %973 = vmatpush.bf16.msra.mxu0 0
        %974 = vmatpush.bf16.msra.mxu0 0
        %975 = vmatpush.bf16.msra.mxu0 0
        %976 = vmatpush.bf16.msra.mxu0 0
        %977 = vmatpush.bf16.msra.mxu0 0
        %978 = vmatpush.bf16.msra.mxu0 0
        %979 = vmatpush.bf16.msra.mxu0 %v968
        %980 = vmatmul.bf16.gmra.mxu0 %v970
        %v981 = vpop.f32.mrf.mxu0
        %v982 = vadd.f32 0.0, %v981
        %v983 = vpop.f32.mrf.mxu0
        %v984 = vadd.f32 0.0, %v983
        %985 = vdwg.mxu0
        %v986 = vpack.c.bf16 %v984, %v982
        %v987 = vld [vmem:[%s4] sm:$0xf]
        %s988 = scalar_lea.vmem %s3, 16
        %v989 = vld [vmem:[%s988] sm:$0xf]
        %v990 = vld [vmem:[%s988 + $0x4] sm:$0xf]
        %v991 = vld [vmem:[%s988 + $0x8] sm:$0xf]
        %v992 = vld [vmem:[%s988 + $0xc] sm:$0xf]
        %v997 = vunpack.c.l.b16 %v989
        %v998 = vunpack.c.l.b16 %v990
        %v999 = vunpack.c.l.b16 %v991
        %v1000 = vunpack.c.l.b16 %v992
        %v1001 = vpack.c.b16 %v998, %v997
        %v1002 = vpack.c.b16 %v1000, %v999
        %1005 = vmatpush.bf16.msra.mxu0 0
        %1006 = vmatpush.bf16.msra.mxu0 0
        %1007 = vmatpush.bf16.msra.mxu0 0
        %1008 = vmatpush.bf16.msra.mxu0 0
        %1009 = vmatpush.bf16.msra.mxu0 0
        %1010 = vmatpush.bf16.msra.mxu0 0
        %1011 = vmatpush.bf16.msra.mxu0 %v1002
        %1012 = vmatpush.bf16.msra.mxu0 %v1001
        %1013 = vmatmul.bf16.gmra.mxu0 %v839
        %v1014 = vpop.f32.mrf.mxu0
        %v1015 = vadd.f32 0.0, %v1014
        %v1016 = vpop.f32.mrf.mxu0
        %v1017 = vadd.f32 0.0, %v1016
        %1018 = vdwg.mxu0
        %s1019 = scalar_lea.vmem %s3, 80
        %v1020 = vld [vmem:[%s1019] sm:$0xf]
        %v1021 = vld [vmem:[%s1019 + $0x4] sm:$0xf]
        %v1022 = vld [vmem:[%s1019 + $0x8] sm:$0xf]
        %v1023 = vld [vmem:[%s1019 + $0xc] sm:$0xf]
        %v1028 = vunpack.c.l.b16 %v1020
        %v1029 = vunpack.c.l.b16 %v1021
        %v1030 = vunpack.c.l.b16 %v1022
        %v1031 = vunpack.c.l.b16 %v1023
        %v1032 = vpack.c.b16 %v1029, %v1028
        %v1033 = vpack.c.b16 %v1031, %v1030
        %1036 = vmatpush.bf16.msra.mxu0 0
        %1037 = vmatpush.bf16.msra.mxu0 0
        %1038 = vmatpush.bf16.msra.mxu0 0
        %1039 = vmatpush.bf16.msra.mxu0 0
        %1040 = vmatpush.bf16.msra.mxu0 0
        %1041 = vmatpush.bf16.msra.mxu0 0
        %1042 = vmatpush.bf16.msra.mxu0 %v1033
        %1043 = vmatpush.bf16.msra.mxu0 %v1032
        %1044 = vmatmul.bf16.gmra.mxu0 %v839
        %v1045 = vpop.f32.mrf.mxu0
        %v1046 = vadd.f32 0.0, %v1045
        %v1047 = vpop.f32.mrf.mxu0
        %v1048 = vadd.f32 0.0, %v1047
        %1049 = vdwg.mxu0
        %s1050 = scalar_lea.vmem %s3, 144
        %v1051 = vld [vmem:[%s1050] sm:$0xf]
        %v1052 = vld [vmem:[%s1050 + $0x4] sm:$0xf]
        %v1053 = vld [vmem:[%s1050 + $0x8] sm:$0xf]
        %v1054 = vld [vmem:[%s1050 + $0xc] sm:$0xf]
        %v1059 = vunpack.c.l.b16 %v1051
        %v1060 = vunpack.c.l.b16 %v1052
        %v1061 = vunpack.c.l.b16 %v1053
        %v1062 = vunpack.c.l.b16 %v1054
        %v1063 = vpack.c.b16 %v1060, %v1059
        %v1064 = vpack.c.b16 %v1062, %v1061
        %1067 = vmatpush.bf16.msra.mxu0 0
        %1068 = vmatpush.bf16.msra.mxu0 0
        %1069 = vmatpush.bf16.msra.mxu0 0
        %1070 = vmatpush.bf16.msra.mxu0 0
        %1071 = vmatpush.bf16.msra.mxu0 0
        %1072 = vmatpush.bf16.msra.mxu0 0
        %1073 = vmatpush.bf16.msra.mxu0 %v1064
        %1074 = vmatpush.bf16.msra.mxu0 %v1063
        %1075 = vmatmul.bf16.gmra.mxu0 %v839
        %v1076 = vpop.f32.mrf.mxu0
        %v1077 = vadd.f32 0.0, %v1076
        %v1078 = vpop.f32.mrf.mxu0
        %v1079 = vadd.f32 0.0, %v1078
        %1080 = vdwg.mxu0
        %v1081 = vpack.c.bf16 %v1017, %v1015
        %v1082 = vpack.c.bf16 %v1048, %v1046
        %v1084 = vsel %vm919, %v1081, 0
        %v1087 = vsel %vm919, %v1082, 0
        %1089 = vmatpush.bf16.xpose.msra.mxu0 0
        %1090 = vmatpush.bf16.xpose.msra.mxu0 0
        %1091 = vmatpush.bf16.xpose.msra.mxu0 0
        %1092 = vmatpush.bf16.xpose.msra.mxu0 0
        %1093 = vmatpush.bf16.xpose.msra.mxu0 0
        %1094 = vmatpush.bf16.xpose.msra.mxu0 0
        %1095 = vmatpush.bf16.xpose.msra.mxu0 0
        %1096 = vmatpush.bf16.xpose.msra.mxu0 %v1087
        %1097 = vmatmul.bf16.gmra.mxu0 %v1084
        %v1098 = vpop.f32.mrf.mxu0
        %v1099 = vadd.f32 0.0, %v1098
        %v1100 = vpop.f32.mrf.mxu0
        %v1101 = vadd.f32 0.0, %v1100
        %1102 = vdwg.mxu0
        %v1103 = vmul.f32 %v1099, 0.35355338
        %v1104 = vmul.f32 %v1101, 0.35355338
        %v1105 = vsel %vm763, %v1103, -1e+30
        %v1106 = vsel %vm764, %v1104, -1e+30
        %v1107 = vsel %vm944, %v1105, -inf
        %1108 = vmax.xlane.f32.xlu0 %v1107
        %v1109 = vpop.xlane.xlu0 %1108
        %v1110 = vsel %vm944, %v1106, -inf
        %1111 = vmax.xlane.f32.xlu0 %v1110
        %v1112 = vpop.xlane.xlu0 %1111
        %v1113 = vsub.f32 %v1105, %v1109
        %v1114 = vsub.f32 %v1106, %v1112
        %v1115 = vmul.f32 %v1113, 1.442695
        %v1116 = vpow.pop %v1115
        %v1117 = vmul.f32 %v1114, 1.442695
        %v1118 = vpow.pop %v1117
        %v1119 = vsel %vm944, %v1116, 0.0
        %1120 = vadd.xlane.f32.xlu0 %v1119
        %v1121 = vpop.xlane.xlu0 %1120
        %v1122 = vsel %vm944, %v1118, 0.0
        %1123 = vadd.xlane.f32.xlu0 %v1122
        %v1124 = vpop.xlane.xlu0 %1123
        %v1125 = vrcp.pop %v1121
        %v1126 = vrcp.pop %v1124
        %v1127 = vmul.f32 %v1116, %v1125
        %v1128 = vmul.f32 %v1118, %v1126
        %v1129 = vpack.c.bf16 %v1128, %v1127
        %v1130 = vpack.c.bf16 %v1079, %v1077
        %v1132 = vsel %vm944, %v1129, 0
        %1134 = vmatpush.bf16.msra.mxu0 0
        %1135 = vmatpush.bf16.msra.mxu0 0
        %1136 = vmatpush.bf16.msra.mxu0 0
        %1137 = vmatpush.bf16.msra.mxu0 0
        %1138 = vmatpush.bf16.msra.mxu0 0
        %1139 = vmatpush.bf16.msra.mxu0 0
        %1140 = vmatpush.bf16.msra.mxu0 0
        %1141 = vmatpush.bf16.msra.mxu0 %v1130
        %1142 = vmatmul.bf16.gmra.mxu0 %v1132
        %v1143 = vpop.f32.mrf.mxu0
        %v1144 = vadd.f32 0.0, %v1143
        %v1145 = vpop.f32.mrf.mxu0
        %v1146 = vadd.f32 0.0, %v1145
        %1147 = vdwg.mxu0
        %v1148 = vpack.c.bf16 %v1146, %v1144
        %s1149 = scalar_lea.vmem %s4, 4
        %v1150 = vld [vmem:[%s1149] sm:$0xf]
        %v1152 = vsel %vm919, %v1148, 0
        %vm1154 = vcmask 1043456
        %v1156 = vsel %vm1154, %v1150, 0
        %1158 = vmatpush.bf16.msra.mxu0 0
        %1159 = vmatpush.bf16.msra.mxu0 0
        %1160 = vmatpush.bf16.msra.mxu0 0
        %1161 = vmatpush.bf16.msra.mxu0 0
        %1162 = vmatpush.bf16.msra.mxu0 0
        %1163 = vmatpush.bf16.msra.mxu0 0
        %1164 = vmatpush.bf16.msra.mxu0 0
        %1165 = vmatpush.bf16.msra.mxu0 %v1156
        %1166 = vmatmul.bf16.gmra.mxu0 %v1152
        %v1167 = vpop.f32.mrf.mxu0
        %v1168 = vadd.f32 0.0, %v1167
        %v1169 = vpop.f32.mrf.mxu0
        %v1170 = vadd.f32 0.0, %v1169
        %1171 = vdwg.mxu0
        %v1173 = vsel %vm919, %v986, 0
        %v1176 = vsel %vm1154, %v987, 0
        %1178 = vmatpush.bf16.msra.mxu0 0
        %1179 = vmatpush.bf16.msra.mxu0 0
        %1180 = vmatpush.bf16.msra.mxu0 0
        %1181 = vmatpush.bf16.msra.mxu0 0
        %1182 = vmatpush.bf16.msra.mxu0 0
        %1183 = vmatpush.bf16.msra.mxu0 0
        %1184 = vmatpush.bf16.msra.mxu0 0
        %1185 = vmatpush.bf16.msra.mxu0 %v1176
        %1186 = vmatmul.bf16.gmra.mxu0 %v1173
        %v1187 = vpop.f32.mrf.mxu0
        %v1188 = vadd.f32 %v1168, %v1187
        %v1189 = vpop.f32.mrf.mxu0
        %v1190 = vadd.f32 %v1170, %v1189
        %1191 = vdwg.mxu0
        %s1192 = scalar_lea.vmem %s3, 32
        %v1193 = vld [vmem:[%s1192] sm:$0xf]
        %v1194 = vld [vmem:[%s1192 + $0x4] sm:$0xf]
        %v1195 = vld [vmem:[%s1192 + $0x8] sm:$0xf]
        %v1196 = vld [vmem:[%s1192 + $0xc] sm:$0xf]
        %v1201 = vunpack.c.l.b16 %v1193
        %v1202 = vunpack.c.l.b16 %v1194
        %v1203 = vunpack.c.l.b16 %v1195
        %v1204 = vunpack.c.l.b16 %v1196
        %v1205 = vpack.c.b16 %v1202, %v1201
        %v1206 = vpack.c.b16 %v1204, %v1203
        %1209 = vmatpush.bf16.msra.mxu0 0
        %1210 = vmatpush.bf16.msra.mxu0 0
        %1211 = vmatpush.bf16.msra.mxu0 0
        %1212 = vmatpush.bf16.msra.mxu0 0
        %1213 = vmatpush.bf16.msra.mxu0 0
        %1214 = vmatpush.bf16.msra.mxu0 0
        %1215 = vmatpush.bf16.msra.mxu0 %v1206
        %1216 = vmatpush.bf16.msra.mxu0 %v1205
        %1217 = vmatmul.bf16.gmra.mxu0 %v839
        %v1218 = vpop.f32.mrf.mxu0
        %v1219 = vadd.f32 0.0, %v1218
        %v1220 = vpop.f32.mrf.mxu0
        %v1221 = vadd.f32 0.0, %v1220
        %1222 = vdwg.mxu0
        %s1223 = scalar_lea.vmem %s3, 96
        %v1224 = vld [vmem:[%s1223] sm:$0xf]
        %v1225 = vld [vmem:[%s1223 + $0x4] sm:$0xf]
        %v1226 = vld [vmem:[%s1223 + $0x8] sm:$0xf]
        %v1227 = vld [vmem:[%s1223 + $0xc] sm:$0xf]
        %v1232 = vunpack.c.l.b16 %v1224
        %v1233 = vunpack.c.l.b16 %v1225
        %v1234 = vunpack.c.l.b16 %v1226
        %v1235 = vunpack.c.l.b16 %v1227
        %v1236 = vpack.c.b16 %v1233, %v1232
        %v1237 = vpack.c.b16 %v1235, %v1234
        %1240 = vmatpush.bf16.msra.mxu0 0
        %1241 = vmatpush.bf16.msra.mxu0 0
        %1242 = vmatpush.bf16.msra.mxu0 0
        %1243 = vmatpush.bf16.msra.mxu0 0
        %1244 = vmatpush.bf16.msra.mxu0 0
        %1245 = vmatpush.bf16.msra.mxu0 0
        %1246 = vmatpush.bf16.msra.mxu0 %v1237
        %1247 = vmatpush.bf16.msra.mxu0 %v1236
        %1248 = vmatmul.bf16.gmra.mxu0 %v839
        %v1249 = vpop.f32.mrf.mxu0
        %v1250 = vadd.f32 0.0, %v1249
        %v1251 = vpop.f32.mrf.mxu0
        %v1252 = vadd.f32 0.0, %v1251
        %1253 = vdwg.mxu0
        %s1254 = scalar_lea.vmem %s3, 160
        %v1255 = vld [vmem:[%s1254] sm:$0xf]
        %v1256 = vld [vmem:[%s1254 + $0x4] sm:$0xf]
        %v1257 = vld [vmem:[%s1254 + $0x8] sm:$0xf]
        %v1258 = vld [vmem:[%s1254 + $0xc] sm:$0xf]
        %v1263 = vunpack.c.l.b16 %v1255
        %v1264 = vunpack.c.l.b16 %v1256
        %v1265 = vunpack.c.l.b16 %v1257
        %v1266 = vunpack.c.l.b16 %v1258
        %v1267 = vpack.c.b16 %v1264, %v1263
        %v1268 = vpack.c.b16 %v1266, %v1265
        %1271 = vmatpush.bf16.msra.mxu0 0
        %1272 = vmatpush.bf16.msra.mxu0 0
        %1273 = vmatpush.bf16.msra.mxu0 0
        %1274 = vmatpush.bf16.msra.mxu0 0
        %1275 = vmatpush.bf16.msra.mxu0 0
        %1276 = vmatpush.bf16.msra.mxu0 0
        %1277 = vmatpush.bf16.msra.mxu0 %v1268
        %1278 = vmatpush.bf16.msra.mxu0 %v1267
        %1279 = vmatmul.bf16.gmra.mxu0 %v839
        %v1280 = vpop.f32.mrf.mxu0
        %v1281 = vadd.f32 0.0, %v1280
        %v1282 = vpop.f32.mrf.mxu0
        %v1283 = vadd.f32 0.0, %v1282
        %1284 = vdwg.mxu0
        %v1285 = vpack.c.bf16 %v1221, %v1219
        %v1286 = vpack.c.bf16 %v1252, %v1250
        %v1288 = vsel %vm919, %v1285, 0
        %v1291 = vsel %vm919, %v1286, 0
        %1293 = vmatpush.bf16.xpose.msra.mxu0 0
        %1294 = vmatpush.bf16.xpose.msra.mxu0 0
        %1295 = vmatpush.bf16.xpose.msra.mxu0 0
        %1296 = vmatpush.bf16.xpose.msra.mxu0 0
        %1297 = vmatpush.bf16.xpose.msra.mxu0 0
        %1298 = vmatpush.bf16.xpose.msra.mxu0 0
        %1299 = vmatpush.bf16.xpose.msra.mxu0 0
        %1300 = vmatpush.bf16.xpose.msra.mxu0 %v1291
        %1301 = vmatmul.bf16.gmra.mxu0 %v1288
        %v1302 = vpop.f32.mrf.mxu0
        %v1303 = vadd.f32 0.0, %v1302
        %v1304 = vpop.f32.mrf.mxu0
        %v1305 = vadd.f32 0.0, %v1304
        %1306 = vdwg.mxu0
        %v1307 = vmul.f32 %v1303, 0.35355338
        %v1308 = vmul.f32 %v1305, 0.35355338
        %v1309 = vsel %vm763, %v1307, -1e+30
        %v1310 = vsel %vm764, %v1308, -1e+30
        %v1311 = vsel %vm944, %v1309, -inf
        %1312 = vmax.xlane.f32.xlu0 %v1311
        %v1313 = vpop.xlane.xlu0 %1312
        %v1314 = vsel %vm944, %v1310, -inf
        %1315 = vmax.xlane.f32.xlu0 %v1314
        %v1316 = vpop.xlane.xlu0 %1315
        %v1317 = vsub.f32 %v1309, %v1313
        %v1318 = vsub.f32 %v1310, %v1316
        %v1319 = vmul.f32 %v1317, 1.442695
        %v1320 = vpow.pop %v1319
        %v1321 = vmul.f32 %v1318, 1.442695
        %v1322 = vpow.pop %v1321
        %v1323 = vsel %vm944, %v1320, 0.0
        %1324 = vadd.xlane.f32.xlu0 %v1323
        %v1325 = vpop.xlane.xlu0 %1324
        %v1326 = vsel %vm944, %v1322, 0.0
        %1327 = vadd.xlane.f32.xlu0 %v1326
        %v1328 = vpop.xlane.xlu0 %1327
        %v1329 = vrcp.pop %v1325
        %v1330 = vrcp.pop %v1328
        %v1331 = vmul.f32 %v1320, %v1329
        %v1332 = vmul.f32 %v1322, %v1330
        %v1333 = vpack.c.bf16 %v1332, %v1331
        %v1334 = vpack.c.bf16 %v1283, %v1281
        %v1336 = vsel %vm944, %v1333, 0
        %1338 = vmatpush.bf16.msra.mxu0 0
        %1339 = vmatpush.bf16.msra.mxu0 0
        %1340 = vmatpush.bf16.msra.mxu0 0
        %1341 = vmatpush.bf16.msra.mxu0 0
        %1342 = vmatpush.bf16.msra.mxu0 0
        %1343 = vmatpush.bf16.msra.mxu0 0
        %1344 = vmatpush.bf16.msra.mxu0 0
        %1345 = vmatpush.bf16.msra.mxu0 %v1334
        %1346 = vmatmul.bf16.gmra.mxu0 %v1336
        %v1347 = vpop.f32.mrf.mxu0
        %v1348 = vadd.f32 0.0, %v1347
        %v1349 = vpop.f32.mrf.mxu0
        %v1350 = vadd.f32 0.0, %v1349
        %1351 = vdwg.mxu0
        %v1352 = vpack.c.bf16 %v1350, %v1348
        %s1353 = scalar_lea.vmem %s4, 8
        %v1354 = vld [vmem:[%s1353] sm:$0xf]
        %v1356 = vsel %vm919, %v1352, 0
        %v1359 = vsel %vm1154, %v1354, 0
        %1361 = vmatpush.bf16.msra.mxu0 0
        %1362 = vmatpush.bf16.msra.mxu0 0
        %1363 = vmatpush.bf16.msra.mxu0 0
        %1364 = vmatpush.bf16.msra.mxu0 0
        %1365 = vmatpush.bf16.msra.mxu0 0
        %1366 = vmatpush.bf16.msra.mxu0 0
        %1367 = vmatpush.bf16.msra.mxu0 0
        %1368 = vmatpush.bf16.msra.mxu0 %v1359
        %1369 = vmatmul.bf16.gmra.mxu0 %v1356
        %v1370 = vpop.f32.mrf.mxu0
        %v1371 = vadd.f32 0.0, %v1370
        %v1372 = vpop.f32.mrf.mxu0
        %v1373 = vadd.f32 0.0, %v1372
        %1374 = vdwg.mxu0
        %v1375 = vadd.f32 %v1188, %v1371
        %v1376 = vadd.f32 %v1190, %v1373
        %s1377 = scalar_lea.vmem %s3, 48
        %v1378 = vld [vmem:[%s1377] sm:$0xf]
        %v1379 = vld [vmem:[%s1377 + $0x4] sm:$0xf]
        %v1380 = vld [vmem:[%s1377 + $0x8] sm:$0xf]
        %v1381 = vld [vmem:[%s1377 + $0xc] sm:$0xf]
        %v1386 = vunpack.c.l.b16 %v1378
        %v1387 = vunpack.c.l.b16 %v1379
        %v1388 = vunpack.c.l.b16 %v1380
        %v1389 = vunpack.c.l.b16 %v1381
        %v1390 = vpack.c.b16 %v1387, %v1386
        %v1391 = vpack.c.b16 %v1389, %v1388
        %1394 = vmatpush.bf16.msra.mxu0 0
        %1395 = vmatpush.bf16.msra.mxu0 0
        %1396 = vmatpush.bf16.msra.mxu0 0
        %1397 = vmatpush.bf16.msra.mxu0 0
        %1398 = vmatpush.bf16.msra.mxu0 0
        %1399 = vmatpush.bf16.msra.mxu0 0
        %1400 = vmatpush.bf16.msra.mxu0 %v1391
        %1401 = vmatpush.bf16.msra.mxu0 %v1390
        %1402 = vmatmul.bf16.gmra.mxu0 %v839
        %v1403 = vpop.f32.mrf.mxu0
        %v1404 = vadd.f32 0.0, %v1403
        %v1405 = vpop.f32.mrf.mxu0
        %v1406 = vadd.f32 0.0, %v1405
        %1407 = vdwg.mxu0
        %s1408 = scalar_lea.vmem %s3, 112
        %v1409 = vld [vmem:[%s1408] sm:$0xf]
        %v1410 = vld [vmem:[%s1408 + $0x4] sm:$0xf]
        %v1411 = vld [vmem:[%s1408 + $0x8] sm:$0xf]
        %v1412 = vld [vmem:[%s1408 + $0xc] sm:$0xf]
        %v1417 = vunpack.c.l.b16 %v1409
        %v1418 = vunpack.c.l.b16 %v1410
        %v1419 = vunpack.c.l.b16 %v1411
        %v1420 = vunpack.c.l.b16 %v1412
        %v1421 = vpack.c.b16 %v1418, %v1417
        %v1422 = vpack.c.b16 %v1420, %v1419
        %1425 = vmatpush.bf16.msra.mxu0 0
        %1426 = vmatpush.bf16.msra.mxu0 0
        %1427 = vmatpush.bf16.msra.mxu0 0
        %1428 = vmatpush.bf16.msra.mxu0 0
        %1429 = vmatpush.bf16.msra.mxu0 0
        %1430 = vmatpush.bf16.msra.mxu0 0
        %1431 = vmatpush.bf16.msra.mxu0 %v1422
        %1432 = vmatpush.bf16.msra.mxu0 %v1421
        %1433 = vmatmul.bf16.gmra.mxu0 %v839
        %v1434 = vpop.f32.mrf.mxu0
        %v1435 = vadd.f32 0.0, %v1434
        %v1436 = vpop.f32.mrf.mxu0
        %v1437 = vadd.f32 0.0, %v1436
        %1438 = vdwg.mxu0
        %s1439 = scalar_lea.vmem %s3, 176
        %v1440 = vld [vmem:[%s1439] sm:$0xf]
        %v1441 = vld [vmem:[%s1439 + $0x4] sm:$0xf]
        %v1442 = vld [vmem:[%s1439 + $0x8] sm:$0xf]
        %v1443 = vld [vmem:[%s1439 + $0xc] sm:$0xf]
        %v1448 = vunpack.c.l.b16 %v1440
        %v1449 = vunpack.c.l.b16 %v1441
        %v1450 = vunpack.c.l.b16 %v1442
        %v1451 = vunpack.c.l.b16 %v1443
        %v1452 = vpack.c.b16 %v1449, %v1448
        %v1453 = vpack.c.b16 %v1451, %v1450
        %1456 = vmatpush.bf16.msra.mxu0 0
        %1457 = vmatpush.bf16.msra.mxu0 0
        %1458 = vmatpush.bf16.msra.mxu0 0
        %1459 = vmatpush.bf16.msra.mxu0 0
        %1460 = vmatpush.bf16.msra.mxu0 0
        %1461 = vmatpush.bf16.msra.mxu0 0
        %1462 = vmatpush.bf16.msra.mxu0 %v1453
        %1463 = vmatpush.bf16.msra.mxu0 %v1452
        %1464 = vmatmul.bf16.gmra.mxu0 %v839
        %v1465 = vpop.f32.mrf.mxu0
        %v1466 = vadd.f32 0.0, %v1465
        %v1467 = vpop.f32.mrf.mxu0
        %v1468 = vadd.f32 0.0, %v1467
        %1469 = vdwg.mxu0
        %v1470 = vpack.c.bf16 %v1406, %v1404
        %v1471 = vpack.c.bf16 %v1437, %v1435
        %v1473 = vsel %vm919, %v1470, 0
        %v1476 = vsel %vm919, %v1471, 0
        %1478 = vmatpush.bf16.xpose.msra.mxu0 0
        %1479 = vmatpush.bf16.xpose.msra.mxu0 0
        %1480 = vmatpush.bf16.xpose.msra.mxu0 0
        %1481 = vmatpush.bf16.xpose.msra.mxu0 0
        %1482 = vmatpush.bf16.xpose.msra.mxu0 0
        %1483 = vmatpush.bf16.xpose.msra.mxu0 0
        %1484 = vmatpush.bf16.xpose.msra.mxu0 0
        %1485 = vmatpush.bf16.xpose.msra.mxu0 %v1476
        %1486 = vmatmul.bf16.gmra.mxu0 %v1473
        %v1487 = vpop.f32.mrf.mxu0
        %v1488 = vadd.f32 0.0, %v1487
        %v1489 = vpop.f32.mrf.mxu0
        %v1490 = vadd.f32 0.0, %v1489
        %1491 = vdwg.mxu0
        %v1492 = vmul.f32 %v1488, 0.35355338
        %v1493 = vmul.f32 %v1490, 0.35355338
        %v1494 = vsel %vm763, %v1492, -1e+30
        %v1495 = vsel %vm764, %v1493, -1e+30
        %v1496 = vsel %vm944, %v1494, -inf
        %1497 = vmax.xlane.f32.xlu0 %v1496
        %v1498 = vpop.xlane.xlu0 %1497
        %v1499 = vsel %vm944, %v1495, -inf
        %1500 = vmax.xlane.f32.xlu0 %v1499
        %v1501 = vpop.xlane.xlu0 %1500
        %v1502 = vsub.f32 %v1494, %v1498
        %v1503 = vsub.f32 %v1495, %v1501
        %v1504 = vmul.f32 %v1502, 1.442695
        %v1505 = vpow.pop %v1504
        %v1506 = vmul.f32 %v1503, 1.442695
        %v1507 = vpow.pop %v1506
        %v1508 = vsel %vm944, %v1505, 0.0
        %1509 = vadd.xlane.f32.xlu0 %v1508
        %v1510 = vpop.xlane.xlu0 %1509
        %v1511 = vsel %vm944, %v1507, 0.0
        %1512 = vadd.xlane.f32.xlu0 %v1511
        %v1513 = vpop.xlane.xlu0 %1512
        %v1514 = vrcp.pop %v1510
        %v1515 = vrcp.pop %v1513
        %v1516 = vmul.f32 %v1505, %v1514
        %v1517 = vmul.f32 %v1507, %v1515
        %v1518 = vpack.c.bf16 %v1517, %v1516
        %v1519 = vpack.c.bf16 %v1468, %v1466
        %v1521 = vsel %vm944, %v1518, 0
        %1523 = vmatpush.bf16.msra.mxu0 0
        %1524 = vmatpush.bf16.msra.mxu0 0
        %1525 = vmatpush.bf16.msra.mxu0 0
        %1526 = vmatpush.bf16.msra.mxu0 0
        %1527 = vmatpush.bf16.msra.mxu0 0
        %1528 = vmatpush.bf16.msra.mxu0 0
        %1529 = vmatpush.bf16.msra.mxu0 0
        %1530 = vmatpush.bf16.msra.mxu0 %v1519
        %1531 = vmatmul.bf16.gmra.mxu0 %v1521
        %v1532 = vpop.f32.mrf.mxu0
        %v1533 = vadd.f32 0.0, %v1532
        %v1534 = vpop.f32.mrf.mxu0
        %v1535 = vadd.f32 0.0, %v1534
        %1536 = vdwg.mxu0
        %v1537 = vpack.c.bf16 %v1535, %v1533
        %s1538 = scalar_lea.vmem %s4, 12
        %v1539 = vld [vmem:[%s1538] sm:$0xf]
        %v1541 = vsel %vm919, %v1537, 0
        %v1544 = vsel %vm1154, %v1539, 0
        %1546 = vmatpush.bf16.msra.mxu0 0
        %1547 = vmatpush.bf16.msra.mxu0 0
        %1548 = vmatpush.bf16.msra.mxu0 0
        %1549 = vmatpush.bf16.msra.mxu0 0
        %1550 = vmatpush.bf16.msra.mxu0 0
        %1551 = vmatpush.bf16.msra.mxu0 0
        %1552 = vmatpush.bf16.msra.mxu0 0
        %1553 = vmatpush.bf16.msra.mxu0 %v1544
        %1554 = vmatmul.bf16.gmra.mxu0 %v1541
        %v1555 = vpop.f32.mrf.mxu0
        %v1556 = vadd.f32 0.0, %v1555
        %v1557 = vpop.f32.mrf.mxu0
        %v1558 = vadd.f32 0.0, %v1557
        %1559 = vdwg.mxu0
        %v1560 = vadd.f32 %v1375, %v1556
        %v1561 = vadd.f32 %v1376, %v1558
        %v1562 = vadd.f32 %v756, %v1560
        %v1563 = vadd.f32 %v757, %v1561
        %v1564 = vld [vmem:[%s2 + $0x1] sm:$0x1]
        %v1565 = vsel %vm766, %v1562, 0.0
        %1566 = vadd.xlane.f32.xlu0 %v1565
        %v1567 = vpop.xlane.xlu0 %1566
        %v1568 = vsel %vm766, %v1563, 0.0
        %1569 = vadd.xlane.f32.xlu0 %v1568
        %v1570 = vpop.xlane.xlu0 %1569
        %v1571 = vmul.f32 %v1567, %v779
        %v1572 = vmul.f32 %v1570, %v779
        %v1573 = vsub.f32 %v1562, %v1571
        %v1574 = vsub.f32 %v1563, %v1572
        %v1575 = vmul.f32 %v1573, %v1573
        %v1576 = vmul.f32 %v1574, %v1574
        %v1577 = vsel %vm766, %v1575, 0.0
        %1578 = vadd.xlane.f32.xlu0 %v1577
        %v1579 = vpop.xlane.xlu0 %1578
        %v1580 = vsel %vm766, %v1576, 0.0
        %1581 = vadd.xlane.f32.xlu0 %v1580
        %v1582 = vpop.xlane.xlu0 %1581
        %v1583 = vmul.f32 %v1579, %v779
        %v1584 = vmul.f32 %v1582, %v779
        %v1585 = vadd.f32 %v1583, 1e-05
        %v1586 = vadd.f32 %v1584, 1e-05
        %v1587 = vrsqrt.pop %v1585
        %v1588 = vmul.f32 %v1587, %v1585
        %v1589 = vmul.f32 %v1588, %v1587
        %v1590 = vmul.f32 0.5, %v1589
        %v1591 = vsub.f32 1.5, %v1590
        %v1592 = vmul.f32 %v1587, %v1591
        %vm1593 = vweird.f32 %v1585
        %vm1594 = vweird.f32 %v1587
        %vm1595 = vmor %vm1593, %vm1594
        %v1596 = vsel %vm1595, %v1587, %v1592
        %v1597 = vrsqrt.pop %v1586
        %v1598 = vmul.f32 %v1597, %v1586
        %v1599 = vmul.f32 %v1598, %v1597
        %v1600 = vmul.f32 0.5, %v1599
        %v1601 = vsub.f32 1.5, %v1600
        %v1602 = vmul.f32 %v1597, %v1601
        %vm1603 = vweird.f32 %v1586
        %vm1604 = vweird.f32 %v1597
        %vm1605 = vmor %vm1603, %vm1604
        %v1606 = vsel %vm1605, %v1597, %v1602
        %v1607 = vmul.f32 %v1573, %v1596
        %v1608 = vmul.f32 %v1574, %v1606
        %v1609 = vperm.slane %v1564, 0
        %v1610 = vmul.f32 %v1607, %v1609
        %v1611 = vmul.f32 %v1608, %v1609
        %v1612 = vpack.c.bf16 %v1611, %v1610
        %v1613 = vld [vmem:[%s5] sm:$0xf]
        %v1614 = vld [vmem:[%s5 + $0x4] sm:$0xf]
        %v1615 = vld [vmem:[%s5 + $0x8] sm:$0xf]
        %v1616 = vld [vmem:[%s5 + $0xc] sm:$0xf]
        %v1621 = vunpack.c.l.b16 %v1613
        %v1622 = vunpack.c.l.b16 %v1614
        %v1623 = vunpack.c.l.b16 %v1615
        %v1624 = vunpack.c.l.b16 %v1616
        %v1625 = vpack.c.b16 %v1622, %v1621
        %v1626 = vpack.c.b16 %v1624, %v1623
        %v1630 = vsel %vm766, %v1612, 0
        %1632 = vmatpush.bf16.msra.mxu0 0
        %1633 = vmatpush.bf16.msra.mxu0 0
        %1634 = vmatpush.bf16.msra.mxu0 0
        %1635 = vmatpush.bf16.msra.mxu0 0
        %1636 = vmatpush.bf16.msra.mxu0 0
        %1637 = vmatpush.bf16.msra.mxu0 0
        %1638 = vmatpush.bf16.msra.mxu0 %v1626
        %1639 = vmatpush.bf16.msra.mxu0 %v1625
        %1640 = vmatmul.bf16.gmra.mxu0 %v1630
        %v1641 = vpop.f32.mrf.mxu0
        %v1642 = vadd.f32 0.0, %v1641
        %v1643 = vpop.f32.mrf.mxu0
        %v1644 = vadd.f32 0.0, %v1643
        %1645 = vdwg.mxu0
        %v1646 = vmul.f32 %v1642, 0.5
        %v1647 = vmul.f32 %v1644, 0.5
        %v1648 = vmul.f32 %v1642, 0.70710677
        %v1649 = vmul.f32 %v1644, 0.70710677
        %v1650 = vand.u32 2147483647, %v1648
        %v1651 = vand.u32 2147483647, %v1649
        %v1652 = vmul.f32 %v1650, 0.3275911
        %v1653 = vmul.f32 %v1651, 0.3275911
        %v1654 = vadd.f32 %v1652, 1.0
        %v1655 = vadd.f32 %v1653, 1.0
        %v1656 = vrcp.pop %v1654
        %v1657 = vmul.f32 %v1654, %v1656
        %v1658 = vsub.f32 1.0, %v1657
        %v1659 = vmul.f32 %v1656, %v1658
        %v1660 = vadd.f32 %v1656, %v1659
        %vm1661 = vweird.f32 %v1654
        %vm1662 = vweird.f32 %v1656
        %vm1663 = vmor %vm1661, %vm1662
        %v1664 = vsel %vm1663, %v1656, %v1660
        %v1665 = vand.u32 2147483647, %v1654
        %vm1666 = vcmp.eq.f32.partialorder %v1665, 8.507059e+37
        %v1667 = vand.u32 %v1654, 2147483648
        %v1668 = vor.u32 1.1754944e-38, %v1667
        %v1669 = vsel %vm1666, %v1668, %v1664
        %v1670 = vmul.f32 1.0, %v1669
        %v1671 = vrcp.pop %v1655
        %v1672 = vmul.f32 %v1655, %v1671
        %v1673 = vsub.f32 1.0, %v1672
        %v1674 = vmul.f32 %v1671, %v1673
        %v1675 = vadd.f32 %v1671, %v1674
        %vm1676 = vweird.f32 %v1655
        %vm1677 = vweird.f32 %v1671
        %vm1678 = vmor %vm1676, %vm1677
        %v1679 = vsel %vm1678, %v1671, %v1675
        %v1680 = vand.u32 2147483647, %v1655
        %vm1681 = vcmp.eq.f32.partialorder %v1680, 8.507059e+37
        %v1682 = vand.u32 %v1655, 2147483648
        %v1683 = vor.u32 1.1754944e-38, %v1682
        %v1684 = vsel %vm1681, %v1683, %v1679
        %v1685 = vmul.f32 1.0, %v1684
        %v1686 = vmul.f32 %v1670, 1.0614054
        %v1687 = vmul.f32 %v1685, 1.0614054
        %v1688 = vadd.f32 %v1686, -1.4531521
        %v1689 = vadd.f32 %v1687, -1.4531521
        %v1690 = vmul.f32 %v1688, %v1670
        %v1691 = vmul.f32 %v1689, %v1685
        %v1692 = vadd.f32 %v1690, 1.4214138
        %v1693 = vadd.f32 %v1691, 1.4214138
        %v1694 = vmul.f32 %v1692, %v1670
        %v1695 = vmul.f32 %v1693, %v1685
        %v1696 = vadd.f32 %v1694, -0.28449672
        %v1697 = vadd.f32 %v1695, -0.28449672
        %v1698 = vmul.f32 %v1696, %v1670
        %v1699 = vmul.f32 %v1697, %v1685
        %v1700 = vadd.f32 %v1698, 0.2548296
        %v1701 = vadd.f32 %v1699, 0.2548296
        %v1702 = vmul.f32 %v1700, %v1670
        %v1703 = vmul.f32 %v1701, %v1685
        %v1704 = vsub.f32 0.0, %v1650
        %v1705 = vsub.f32 0.0, %v1651
        %v1706 = vmul.f32 %v1704, %v1650
        %v1707 = vmul.f32 %v1705, %v1651
        %v1708 = vmul.f32 %v1706, 1.442695
        %v1709 = vpow.pop %v1708
        %v1710 = vmul.f32 %v1707, 1.442695
        %v1711 = vpow.pop %v1710
        %v1712 = vmul.f32 %v1702, %v1709
        %v1713 = vmul.f32 %v1703, %v1711
        %v1714 = vsub.f32 1.0, %v1712
        %v1715 = vsub.f32 1.0, %v1713
        %vm1716 = vcmp.ge.f32.partialorder %v1648, 0.0
        %vm1717 = vcmp.ge.f32.partialorder %v1649, 0.0
        %v1718 = vsub.f32 0.0, %v1714
        %v1719 = vsub.f32 0.0, %v1715
        %v1720 = vsel %vm1716, %v1714, %v1718
        %v1721 = vsel %vm1717, %v1715, %v1719
        %v1722 = vadd.f32 %v1720, 1.0
        %v1723 = vadd.f32 %v1721, 1.0
        %v1724 = vmul.f32 %v1646, %v1722
        %v1725 = vmul.f32 %v1647, %v1723
        %v1726 = vpack.c.bf16 %v1725, %v1724
        %v1727 = vld [vmem:[%s6] sm:$0xf]
        %v1728 = vld [vmem:[%s6 + $0x4] sm:$0xf]
        %v1729 = vld [vmem:[%s6 + $0x8] sm:$0xf]
        %v1730 = vld [vmem:[%s6 + $0xc] sm:$0xf]
        %v1731 = vld [vmem:[%s6 + $0x10] sm:$0xf]
        %v1732 = vld [vmem:[%s6 + $0x14] sm:$0xf]
        %v1733 = vld [vmem:[%s6 + $0x18] sm:$0xf]
        %v1734 = vld [vmem:[%s6 + $0x1c] sm:$0xf]
        %v1735 = vld [vmem:[%s6 + $0x20] sm:$0xf]
        %v1736 = vld [vmem:[%s6 + $0x24] sm:$0xf]
        %v1737 = vld [vmem:[%s6 + $0x28] sm:$0xf]
        %v1738 = vld [vmem:[%s6 + $0x2c] sm:$0xf]
        %v1739 = vld [vmem:[%s6 + $0x30] sm:$0xf]
        %v1740 = vld [vmem:[%s6 + $0x34] sm:$0xf]
        %v1741 = vld [vmem:[%s6 + $0x38] sm:$0xf]
        %v1742 = vld [vmem:[%s6 + $0x3c] sm:$0xf]
        %v1759 = vunpack.c.l.b16 %v1727
        %v1760 = vunpack.c.l.b16 %v1728
        %v1761 = vunpack.c.l.b16 %v1729
        %v1762 = vunpack.c.l.b16 %v1730
        %v1763 = vunpack.c.l.b16 %v1731
        %v1764 = vunpack.c.l.b16 %v1732
        %v1765 = vunpack.c.l.b16 %v1733
        %v1766 = vunpack.c.l.b16 %v1734
        %v1767 = vunpack.c.l.b16 %v1735
        %v1768 = vunpack.c.l.b16 %v1736
        %v1769 = vunpack.c.l.b16 %v1737
        %v1770 = vunpack.c.l.b16 %v1738
        %v1771 = vunpack.c.l.b16 %v1739
        %v1772 = vunpack.c.l.b16 %v1740
        %v1773 = vunpack.c.l.b16 %v1741
        %v1774 = vunpack.c.l.b16 %v1742
        %v1775 = vpack.c.b16 %v1760, %v1759
        %v1776 = vpack.c.b16 %v1762, %v1761
        %v1777 = vpack.c.b16 %v1764, %v1763
        %v1778 = vpack.c.b16 %v1766, %v1765
        %v1779 = vpack.c.b16 %v1768, %v1767
        %v1780 = vpack.c.b16 %v1770, %v1769
        %v1781 = vpack.c.b16 %v1772, %v1771
        %v1782 = vpack.c.b16 %v1774, %v1773
        %1791 = vmatpush.bf16.msra.mxu0 %v1782
        %1792 = vmatpush.bf16.msra.mxu0 %v1781
        %1793 = vmatpush.bf16.msra.mxu0 %v1780
        %1794 = vmatpush.bf16.msra.mxu0 %v1779
        %1795 = vmatpush.bf16.msra.mxu0 %v1778
        %1796 = vmatpush.bf16.msra.mxu0 %v1777
        %1797 = vmatpush.bf16.msra.mxu0 %v1776
        %1798 = vmatpush.bf16.msra.mxu0 %v1775
        %1799 = vmatmul.bf16.gmra.mxu0 %v1726
        %v1800 = vpop.f32.mrf.mxu0
        %v1801 = vadd.f32 0.0, %v1800
        %v1802 = vpop.f32.mrf.mxu0
        %v1803 = vadd.f32 0.0, %v1802
        %1804 = vdwg.mxu0
        %v1805 = vadd.f32 %v1562, %v1801
        %v1806 = vadd.f32 %v1563, %v1803
        %v1807 = vld [vmem:[%s1] sm:$0xff]
        %v1808 = vld [vmem:[%s7] sm:$0x1]
        %v1809 = vld [vmem:[%s7 + $0x1] sm:$0x1]
        %v1810 = vsel %vm766, %v1807, 0.0
        %1811 = vadd.xlane.f32.xlu0 %v1810
        %v1812 = vpop.xlane.xlu0 %1811
        %v1813 = vmul.f32 %v1812, %v779
        %v1814 = vsub.f32 %v1807, %v1813
        %v1815 = vmul.f32 %v1814, %v1814
        %v1816 = vsel %vm766, %v1815, 0.0
        %1817 = vadd.xlane.f32.xlu0 %v1816
        %v1818 = vpop.xlane.xlu0 %1817
        %v1819 = vmul.f32 %v1818, %v779
        %v1820 = vadd.f32 %v1819, 1e-05
        %v1821 = vrsqrt.pop %v1820
        %v1822 = vmul.f32 %v1821, %v1820
        %v1823 = vmul.f32 %v1822, %v1821
        %v1824 = vmul.f32 0.5, %v1823
        %v1825 = vsub.f32 1.5, %v1824
        %v1826 = vmul.f32 %v1821, %v1825
        %vm1827 = vweird.f32 %v1820
        %vm1828 = vweird.f32 %v1821
        %vm1829 = vmor %vm1827, %vm1828
        %v1830 = vsel %vm1829, %v1821, %v1826
        %v1831 = vmul.f32 %v1814, %v1830
        %v1832 = vperm.slane %v1808, 0
        %v1833 = vmul.f32 %v1831, %v1832
        %v1834 = vperm.slane %v1809, 0
        %v1835 = vadd.f32 %v1833, %v1834
        %v1836 = vpack.c.bf16 %v1835, %v1835
        %v1837 = vld [vmem:[%s7 + $0x2] sm:$0x1]
        %v1838 = vld [vmem:[%s7 + $0x3] sm:$0x1]
        %v1839 = vsel %vm766, %v1805, 0.0
        %1840 = vadd.xlane.f32.xlu0 %v1839
        %v1841 = vpop.xlane.xlu0 %1840
        %v1842 = vsel %vm766, %v1806, 0.0
        %1843 = vadd.xlane.f32.xlu0 %v1842
        %v1844 = vpop.xlane.xlu0 %1843
        %v1845 = vmul.f32 %v1841, %v779
        %v1846 = vmul.f32 %v1844, %v779
        %v1847 = vsub.f32 %v1805, %v1845
        %v1848 = vsub.f32 %v1806, %v1846
        %v1849 = vmul.f32 %v1847, %v1847
        %v1850 = vmul.f32 %v1848, %v1848
        %v1851 = vsel %vm766, %v1849, 0.0
        %1852 = vadd.xlane.f32.xlu0 %v1851
        %v1853 = vpop.xlane.xlu0 %1852
        %v1854 = vsel %vm766, %v1850, 0.0
        %1855 = vadd.xlane.f32.xlu0 %v1854
        %v1856 = vpop.xlane.xlu0 %1855
        %v1857 = vmul.f32 %v1853, %v779
        %v1858 = vmul.f32 %v1856, %v779
        %v1859 = vadd.f32 %v1857, 1e-05
        %v1860 = vadd.f32 %v1858, 1e-05
        %v1861 = vrsqrt.pop %v1859
        %v1862 = vmul.f32 %v1861, %v1859
        %v1863 = vmul.f32 %v1862, %v1861
        %v1864 = vmul.f32 0.5, %v1863
        %v1865 = vsub.f32 1.5, %v1864
        %v1866 = vmul.f32 %v1861, %v1865
        %vm1867 = vweird.f32 %v1859
        %vm1868 = vweird.f32 %v1861
        %vm1869 = vmor %vm1867, %vm1868
        %v1870 = vsel %vm1869, %v1861, %v1866
        %v1871 = vrsqrt.pop %v1860
        %v1872 = vmul.f32 %v1871, %v1860
        %v1873 = vmul.f32 %v1872, %v1871
        %v1874 = vmul.f32 0.5, %v1873
        %v1875 = vsub.f32 1.5, %v1874
        %v1876 = vmul.f32 %v1871, %v1875
        %vm1877 = vweird.f32 %v1860
        %vm1878 = vweird.f32 %v1871
        %vm1879 = vmor %vm1877, %vm1878
        %v1880 = vsel %vm1879, %v1871, %v1876
        %v1881 = vmul.f32 %v1847, %v1870
        %v1882 = vmul.f32 %v1848, %v1880
        %v1883 = vperm.slane %v1837, 0
        %v1884 = vmul.f32 %v1881, %v1883
        %v1885 = vmul.f32 %v1882, %v1883
        %v1886 = vperm.slane %v1838, 0
        %v1887 = vadd.f32 %v1884, %v1886
        %v1888 = vadd.f32 %v1885, %v1886
        %v1889 = vpack.c.bf16 %v1888, %v1887
        %v1890 = vld [vmem:[%s8] sm:$0xf]
        %v1891 = vld [vmem:[%s8 + $0x4] sm:$0xf]
        %v1892 = vld [vmem:[%s8 + $0x8] sm:$0xf]
        %v1893 = vld [vmem:[%s8 + $0xc] sm:$0xf]
        %v1894 = vld [vmem:[%s9] sm:$0x1]
        %v1895 = vperm.slane %v1894, 0
        %v1900 = vunpack.c.l.b16 %v1890
        %v1901 = vunpack.c.l.b16 %v1891
        %v1902 = vunpack.c.l.b16 %v1892
        %v1903 = vunpack.c.l.b16 %v1893
        %v1904 = vpack.c.b16 %v1901, %v1900
        %v1905 = vpack.c.b16 %v1903, %v1902
        %v1909 = vsel %vm766, %v1836, 0
        %1911 = vmatpush.bf16.msra.mxu0 0
        %1912 = vmatpush.bf16.msra.mxu0 0
        %1913 = vmatpush.bf16.msra.mxu0 0
        %1914 = vmatpush.bf16.msra.mxu0 0
        %1915 = vmatpush.bf16.msra.mxu0 0
        %1916 = vmatpush.bf16.msra.mxu0 0
        %1917 = vmatpush.bf16.msra.mxu0 %v1905
        %1918 = vmatpush.bf16.msra.mxu0 %v1904
        %1919 = vmatmul.bf16.gmra.mxu0 %v1909
        %v1920 = vpop.f32.mrf.mxu0
        %v1921 = vadd.f32 %v1895, %v1920
        %v1922 = vpop.f32.mrf.mxu0
        %1923 = vdwg.mxu0
        %s1924 = scalar_lea.vmem %s8, 64
        %v1925 = vld [vmem:[%s1924] sm:$0xf]
        %v1926 = vld [vmem:[%s1924 + $0x4] sm:$0xf]
        %v1927 = vld [vmem:[%s1924 + $0x8] sm:$0xf]
        %v1928 = vld [vmem:[%s1924 + $0xc] sm:$0xf]
        %v1929 = vld [vmem:[%s9 + $0x4] sm:$0x1]
        %v1930 = vperm.slane %v1929, 0
        %v1935 = vunpack.c.l.b16 %v1925
        %v1936 = vunpack.c.l.b16 %v1926
        %v1937 = vunpack.c.l.b16 %v1927
        %v1938 = vunpack.c.l.b16 %v1928
        %v1939 = vpack.c.b16 %v1936, %v1935
        %v1940 = vpack.c.b16 %v1938, %v1937
        %v1944 = vsel %vm766, %v1889, 0
        %1946 = vmatpush.bf16.msra.mxu0 0
        %1947 = vmatpush.bf16.msra.mxu0 0
        %1948 = vmatpush.bf16.msra.mxu0 0
        %1949 = vmatpush.bf16.msra.mxu0 0
        %1950 = vmatpush.bf16.msra.mxu0 0
        %1951 = vmatpush.bf16.msra.mxu0 0
        %1952 = vmatpush.bf16.msra.mxu0 %v1940
        %1953 = vmatpush.bf16.msra.mxu0 %v1939
        %1954 = vmatmul.bf16.gmra.mxu0 %v1944
        %v1955 = vpop.f32.mrf.mxu0
        %v1956 = vadd.f32 %v1930, %v1955
        %v1957 = vpop.f32.mrf.mxu0
        %v1958 = vadd.f32 %v1930, %v1957
        %1959 = vdwg.mxu0
        %s1960 = scalar_lea.vmem %s8, 128
        %v1961 = vld [vmem:[%s1960] sm:$0xf]
        %v1962 = vld [vmem:[%s1960 + $0x4] sm:$0xf]
        %v1963 = vld [vmem:[%s1960 + $0x8] sm:$0xf]
        %v1964 = vld [vmem:[%s1960 + $0xc] sm:$0xf]
        %v1965 = vld [vmem:[%s9 + $0x8] sm:$0x1]
        %v1966 = vperm.slane %v1965, 0
        %v1971 = vunpack.c.l.b16 %v1961
        %v1972 = vunpack.c.l.b16 %v1962
        %v1973 = vunpack.c.l.b16 %v1963
        %v1974 = vunpack.c.l.b16 %v1964
        %v1975 = vpack.c.b16 %v1972, %v1971
        %v1976 = vpack.c.b16 %v1974, %v1973
        %1979 = vmatpush.bf16.msra.mxu0 0
        %1980 = vmatpush.bf16.msra.mxu0 0
        %1981 = vmatpush.bf16.msra.mxu0 0
        %1982 = vmatpush.bf16.msra.mxu0 0
        %1983 = vmatpush.bf16.msra.mxu0 0
        %1984 = vmatpush.bf16.msra.mxu0 0
        %1985 = vmatpush.bf16.msra.mxu0 %v1976
        %1986 = vmatpush.bf16.msra.mxu0 %v1975
        %1987 = vmatmul.bf16.gmra.mxu0 %v1944
        %v1988 = vpop.f32.mrf.mxu0
        %v1989 = vadd.f32 %v1966, %v1988
        %v1990 = vpop.f32.mrf.mxu0
        %v1991 = vadd.f32 %v1966, %v1990
        %1992 = vdwg.mxu0
        %v1993 = vpack.c.bf16 %v1921, %v1921
        %v1994 = vpack.c.bf16 %v1958, %v1956
        %v1996 = vsel %vm919, %v1993, 0
        %v1999 = vsel %vm919, %v1994, 0
        %2001 = vmatpush.bf16.xpose.msra.mxu0 0
        %2002 = vmatpush.bf16.xpose.msra.mxu0 0
        %2003 = vmatpush.bf16.xpose.msra.mxu0 0
        %2004 = vmatpush.bf16.xpose.msra.mxu0 0
        %2005 = vmatpush.bf16.xpose.msra.mxu0 0
        %2006 = vmatpush.bf16.xpose.msra.mxu0 0
        %2007 = vmatpush.bf16.xpose.msra.mxu0 0
        %2008 = vmatpush.bf16.xpose.msra.mxu0 %v1999
        %2009 = vmatmul.bf16.gmra.mxu0 %v1996
        %v2010 = vpop.f32.mrf.mxu0
        %v2011 = vadd.f32 0.0, %v2010
        %v2012 = vpop.f32.mrf.mxu0
        %2013 = vdwg.mxu0
        %v2014 = vmul.f32 %v2011, 0.35355338
        %v2015 = vsel %vm944, %v2014, -inf
        %2016 = vmax.xlane.f32.xlu0 %v2015
        %v2017 = vpop.xlane.xlu0 %2016
        %v2018 = vsub.f32 %v2014, %v2017
        %v2019 = vmul.f32 %v2018, 1.442695
        %v2020 = vpow.pop %v2019
        %v2021 = vsel %vm944, %v2020, 0.0
        %2022 = vadd.xlane.f32.xlu0 %v2021
        %v2023 = vpop.xlane.xlu0 %2022
        %v2024 = vrcp.pop %v2023
        %v2025 = vmul.f32 %v2020, %v2024
        %v2026 = vpack.c.bf16 %v2025, %v2025
        %v2027 = vpack.c.bf16 %v1991, %v1989
        %v2029 = vsel %vm944, %v2026, 0
        %2031 = vmatpush.bf16.msra.mxu0 0
        %2032 = vmatpush.bf16.msra.mxu0 0
        %2033 = vmatpush.bf16.msra.mxu0 0
        %2034 = vmatpush.bf16.msra.mxu0 0
        %2035 = vmatpush.bf16.msra.mxu0 0
        %2036 = vmatpush.bf16.msra.mxu0 0
        %2037 = vmatpush.bf16.msra.mxu0 0
        %2038 = vmatpush.bf16.msra.mxu0 %v2027
        %2039 = vmatmul.bf16.gmra.mxu0 %v2029
        %v2040 = vpop.f32.mrf.mxu0
        %v2041 = vadd.f32 0.0, %v2040
        %v2042 = vpop.f32.mrf.mxu0
        %2043 = vdwg.mxu0
        %v2044 = vpack.c.bf16 %v2041, %v2041
        %v2045 = vld [vmem:[%s10] sm:$0xf]
        %s2046 = scalar_lea.vmem %s8, 16
        %v2047 = vld [vmem:[%s2046] sm:$0xf]
        %v2048 = vld [vmem:[%s2046 + $0x4] sm:$0xf]
        %v2049 = vld [vmem:[%s2046 + $0x8] sm:$0xf]
        %v2050 = vld [vmem:[%s2046 + $0xc] sm:$0xf]
        %v2051 = vld [vmem:[%s9 + $0x1] sm:$0x1]
        %v2052 = vperm.slane %v2051, 0
        %v2057 = vunpack.c.l.b16 %v2047
        %v2058 = vunpack.c.l.b16 %v2048
        %v2059 = vunpack.c.l.b16 %v2049
        %v2060 = vunpack.c.l.b16 %v2050
        %v2061 = vpack.c.b16 %v2058, %v2057
        %v2062 = vpack.c.b16 %v2060, %v2059
        %2065 = vmatpush.bf16.msra.mxu0 0
        %2066 = vmatpush.bf16.msra.mxu0 0
        %2067 = vmatpush.bf16.msra.mxu0 0
        %2068 = vmatpush.bf16.msra.mxu0 0
        %2069 = vmatpush.bf16.msra.mxu0 0
        %2070 = vmatpush.bf16.msra.mxu0 0
        %2071 = vmatpush.bf16.msra.mxu0 %v2062
        %2072 = vmatpush.bf16.msra.mxu0 %v2061
        %2073 = vmatmul.bf16.gmra.mxu0 %v1909
        %v2074 = vpop.f32.mrf.mxu0
        %v2075 = vadd.f32 %v2052, %v2074
        %v2076 = vpop.f32.mrf.mxu0
        %2077 = vdwg.mxu0
        %s2078 = scalar_lea.vmem %s8, 80
        %v2079 = vld [vmem:[%s2078] sm:$0xf]
        %v2080 = vld [vmem:[%s2078 + $0x4] sm:$0xf]
        %v2081 = vld [vmem:[%s2078 + $0x8] sm:$0xf]
        %v2082 = vld [vmem:[%s2078 + $0xc] sm:$0xf]
        %v2083 = vld [vmem:[%s9 + $0x5] sm:$0x1]
        %v2084 = vperm.slane %v2083, 0
        %v2089 = vunpack.c.l.b16 %v2079
        %v2090 = vunpack.c.l.b16 %v2080
        %v2091 = vunpack.c.l.b16 %v2081
        %v2092 = vunpack.c.l.b16 %v2082
        %v2093 = vpack.c.b16 %v2090, %v2089
        %v2094 = vpack.c.b16 %v2092, %v2091
        %2097 = vmatpush.bf16.msra.mxu0 0
        %2098 = vmatpush.bf16.msra.mxu0 0
        %2099 = vmatpush.bf16.msra.mxu0 0
        %2100 = vmatpush.bf16.msra.mxu0 0
        %2101 = vmatpush.bf16.msra.mxu0 0
        %2102 = vmatpush.bf16.msra.mxu0 0
        %2103 = vmatpush.bf16.msra.mxu0 %v2094
        %2104 = vmatpush.bf16.msra.mxu0 %v2093
        %2105 = vmatmul.bf16.gmra.mxu0 %v1944
        %v2106 = vpop.f32.mrf.mxu0
        %v2107 = vadd.f32 %v2084, %v2106
        %v2108 = vpop.f32.mrf.mxu0
        %v2109 = vadd.f32 %v2084, %v2108
        %2110 = vdwg.mxu0
        %s2111 = scalar_lea.vmem %s8, 144
        %v2112 = vld [vmem:[%s2111] sm:$0xf]
        %v2113 = vld [vmem:[%s2111 + $0x4] sm:$0xf]
        %v2114 = vld [vmem:[%s2111 + $0x8] sm:$0xf]
        %v2115 = vld [vmem:[%s2111 + $0xc] sm:$0xf]
        %v2116 = vld [vmem:[%s9 + $0x9] sm:$0x1]
        %v2117 = vperm.slane %v2116, 0
        %v2122 = vunpack.c.l.b16 %v2112
        %v2123 = vunpack.c.l.b16 %v2113
        %v2124 = vunpack.c.l.b16 %v2114
        %v2125 = vunpack.c.l.b16 %v2115
        %v2126 = vpack.c.b16 %v2123, %v2122
        %v2127 = vpack.c.b16 %v2125, %v2124
        %2130 = vmatpush.bf16.msra.mxu0 0
        %2131 = vmatpush.bf16.msra.mxu0 0
        %2132 = vmatpush.bf16.msra.mxu0 0
        %2133 = vmatpush.bf16.msra.mxu0 0
        %2134 = vmatpush.bf16.msra.mxu0 0
        %2135 = vmatpush.bf16.msra.mxu0 0
        %2136 = vmatpush.bf16.msra.mxu0 %v2127
        %2137 = vmatpush.bf16.msra.mxu0 %v2126
        %2138 = vmatmul.bf16.gmra.mxu0 %v1944
        %v2139 = vpop.f32.mrf.mxu0
        %v2140 = vadd.f32 %v2117, %v2139
        %v2141 = vpop.f32.mrf.mxu0
        %v2142 = vadd.f32 %v2117, %v2141
        %2143 = vdwg.mxu0
        %v2144 = vpack.c.bf16 %v2075, %v2075
        %v2145 = vpack.c.bf16 %v2109, %v2107
        %v2147 = vsel %vm919, %v2144, 0
        %v2150 = vsel %vm919, %v2145, 0
        %2152 = vmatpush.bf16.xpose.msra.mxu0 0
        %2153 = vmatpush.bf16.xpose.msra.mxu0 0
        %2154 = vmatpush.bf16.xpose.msra.mxu0 0
        %2155 = vmatpush.bf16.xpose.msra.mxu0 0
        %2156 = vmatpush.bf16.xpose.msra.mxu0 0
        %2157 = vmatpush.bf16.xpose.msra.mxu0 0
        %2158 = vmatpush.bf16.xpose.msra.mxu0 0
        %2159 = vmatpush.bf16.xpose.msra.mxu0 %v2150
        %2160 = vmatmul.bf16.gmra.mxu0 %v2147
        %v2161 = vpop.f32.mrf.mxu0
        %v2162 = vadd.f32 0.0, %v2161
        %v2163 = vpop.f32.mrf.mxu0
        %2164 = vdwg.mxu0
        %v2165 = vmul.f32 %v2162, 0.35355338
        %v2166 = vsel %vm944, %v2165, -inf
        %2167 = vmax.xlane.f32.xlu0 %v2166
        %v2168 = vpop.xlane.xlu0 %2167
        %v2169 = vsub.f32 %v2165, %v2168
        %v2170 = vmul.f32 %v2169, 1.442695
        %v2171 = vpow.pop %v2170
        %v2172 = vsel %vm944, %v2171, 0.0
        %2173 = vadd.xlane.f32.xlu0 %v2172
        %v2174 = vpop.xlane.xlu0 %2173
        %v2175 = vrcp.pop %v2174
        %v2176 = vmul.f32 %v2171, %v2175
        %v2177 = vpack.c.bf16 %v2176, %v2176
        %v2178 = vpack.c.bf16 %v2142, %v2140
        %v2180 = vsel %vm944, %v2177, 0
        %2182 = vmatpush.bf16.msra.mxu0 0
        %2183 = vmatpush.bf16.msra.mxu0 0
        %2184 = vmatpush.bf16.msra.mxu0 0
        %2185 = vmatpush.bf16.msra.mxu0 0
        %2186 = vmatpush.bf16.msra.mxu0 0
        %2187 = vmatpush.bf16.msra.mxu0 0
        %2188 = vmatpush.bf16.msra.mxu0 0
        %2189 = vmatpush.bf16.msra.mxu0 %v2178
        %2190 = vmatmul.bf16.gmra.mxu0 %v2180
        %v2191 = vpop.f32.mrf.mxu0
        %v2192 = vadd.f32 0.0, %v2191
        %v2193 = vpop.f32.mrf.mxu0
        %2194 = vdwg.mxu0
        %v2195 = vpack.c.bf16 %v2192, %v2192
        %s2196 = scalar_lea.vmem %s10, 4
        %v2197 = vld [vmem:[%s2196] sm:$0xf]
        %v2199 = vsel %vm919, %v2195, 0
        %v2202 = vsel %vm1154, %v2197, 0
        %2204 = vmatpush.bf16.msra.mxu0 0
        %2205 = vmatpush.bf16.msra.mxu0 0
        %2206 = vmatpush.bf16.msra.mxu0 0
        %2207 = vmatpush.bf16.msra.mxu0 0
        %2208 = vmatpush.bf16.msra.mxu0 0
        %2209 = vmatpush.bf16.msra.mxu0 0
        %2210 = vmatpush.bf16.msra.mxu0 0
        %2211 = vmatpush.bf16.msra.mxu0 %v2202
        %2212 = vmatmul.bf16.gmra.mxu0 %v2199
        %v2213 = vpop.f32.mrf.mxu0
        %v2214 = vadd.f32 0.0, %v2213
        %v2215 = vpop.f32.mrf.mxu0
        %2216 = vdwg.mxu0
        %v2218 = vsel %vm919, %v2044, 0
        %v2221 = vsel %vm1154, %v2045, 0
        %2223 = vmatpush.bf16.msra.mxu0 0
        %2224 = vmatpush.bf16.msra.mxu0 0
        %2225 = vmatpush.bf16.msra.mxu0 0
        %2226 = vmatpush.bf16.msra.mxu0 0
        %2227 = vmatpush.bf16.msra.mxu0 0
        %2228 = vmatpush.bf16.msra.mxu0 0
        %2229 = vmatpush.bf16.msra.mxu0 0
        %2230 = vmatpush.bf16.msra.mxu0 %v2221
        %2231 = vmatmul.bf16.gmra.mxu0 %v2218
        %v2232 = vpop.f32.mrf.mxu0
        %v2233 = vadd.f32 %v2214, %v2232
        %v2234 = vpop.f32.mrf.mxu0
        %2235 = vdwg.mxu0
        %s2236 = scalar_lea.vmem %s8, 32
        %v2237 = vld [vmem:[%s2236] sm:$0xf]
        %v2238 = vld [vmem:[%s2236 + $0x4] sm:$0xf]
        %v2239 = vld [vmem:[%s2236 + $0x8] sm:$0xf]
        %v2240 = vld [vmem:[%s2236 + $0xc] sm:$0xf]
        %v2241 = vld [vmem:[%s9 + $0x2] sm:$0x1]
        %v2242 = vperm.slane %v2241, 0
        %v2247 = vunpack.c.l.b16 %v2237
        %v2248 = vunpack.c.l.b16 %v2238
        %v2249 = vunpack.c.l.b16 %v2239
        %v2250 = vunpack.c.l.b16 %v2240
        %v2251 = vpack.c.b16 %v2248, %v2247
        %v2252 = vpack.c.b16 %v2250, %v2249
        %2255 = vmatpush.bf16.msra.mxu0 0
        %2256 = vmatpush.bf16.msra.mxu0 0
        %2257 = vmatpush.bf16.msra.mxu0 0
        %2258 = vmatpush.bf16.msra.mxu0 0
        %2259 = vmatpush.bf16.msra.mxu0 0
        %2260 = vmatpush.bf16.msra.mxu0 0
        %2261 = vmatpush.bf16.msra.mxu0 %v2252
        %2262 = vmatpush.bf16.msra.mxu0 %v2251
        %2263 = vmatmul.bf16.gmra.mxu0 %v1909
        %v2264 = vpop.f32.mrf.mxu0
        %v2265 = vadd.f32 %v2242, %v2264
        %v2266 = vpop.f32.mrf.mxu0
        %2267 = vdwg.mxu0
        %s2268 = scalar_lea.vmem %s8, 96
        %v2269 = vld [vmem:[%s2268] sm:$0xf]
        %v2270 = vld [vmem:[%s2268 + $0x4] sm:$0xf]
        %v2271 = vld [vmem:[%s2268 + $0x8] sm:$0xf]
        %v2272 = vld [vmem:[%s2268 + $0xc] sm:$0xf]
        %v2273 = vld [vmem:[%s9 + $0x6] sm:$0x1]
        %v2274 = vperm.slane %v2273, 0
        %v2279 = vunpack.c.l.b16 %v2269
        %v2280 = vunpack.c.l.b16 %v2270
        %v2281 = vunpack.c.l.b16 %v2271
        %v2282 = vunpack.c.l.b16 %v2272
        %v2283 = vpack.c.b16 %v2280, %v2279
        %v2284 = vpack.c.b16 %v2282, %v2281
        %2287 = vmatpush.bf16.msra.mxu0 0
        %2288 = vmatpush.bf16.msra.mxu0 0
        %2289 = vmatpush.bf16.msra.mxu0 0
        %2290 = vmatpush.bf16.msra.mxu0 0
        %2291 = vmatpush.bf16.msra.mxu0 0
        %2292 = vmatpush.bf16.msra.mxu0 0
        %2293 = vmatpush.bf16.msra.mxu0 %v2284
        %2294 = vmatpush.bf16.msra.mxu0 %v2283
        %2295 = vmatmul.bf16.gmra.mxu0 %v1944
        %v2296 = vpop.f32.mrf.mxu0
        %v2297 = vadd.f32 %v2274, %v2296
        %v2298 = vpop.f32.mrf.mxu0
        %v2299 = vadd.f32 %v2274, %v2298
        %2300 = vdwg.mxu0
        %s2301 = scalar_lea.vmem %s8, 160
        %v2302 = vld [vmem:[%s2301] sm:$0xf]
        %v2303 = vld [vmem:[%s2301 + $0x4] sm:$0xf]
        %v2304 = vld [vmem:[%s2301 + $0x8] sm:$0xf]
        %v2305 = vld [vmem:[%s2301 + $0xc] sm:$0xf]
        %v2306 = vld [vmem:[%s9 + $0xa] sm:$0x1]
        %v2307 = vperm.slane %v2306, 0
        %v2312 = vunpack.c.l.b16 %v2302
        %v2313 = vunpack.c.l.b16 %v2303
        %v2314 = vunpack.c.l.b16 %v2304
        %v2315 = vunpack.c.l.b16 %v2305
        %v2316 = vpack.c.b16 %v2313, %v2312
        %v2317 = vpack.c.b16 %v2315, %v2314
        %2320 = vmatpush.bf16.msra.mxu0 0
        %2321 = vmatpush.bf16.msra.mxu0 0
        %2322 = vmatpush.bf16.msra.mxu0 0
        %2323 = vmatpush.bf16.msra.mxu0 0
        %2324 = vmatpush.bf16.msra.mxu0 0
        %2325 = vmatpush.bf16.msra.mxu0 0
        %2326 = vmatpush.bf16.msra.mxu0 %v2317
        %2327 = vmatpush.bf16.msra.mxu0 %v2316
        %2328 = vmatmul.bf16.gmra.mxu0 %v1944
        %v2329 = vpop.f32.mrf.mxu0
        %v2330 = vadd.f32 %v2307, %v2329
        %v2331 = vpop.f32.mrf.mxu0
        %v2332 = vadd.f32 %v2307, %v2331
        %2333 = vdwg.mxu0
        %v2334 = vpack.c.bf16 %v2265, %v2265
        %v2335 = vpack.c.bf16 %v2299, %v2297
        %v2337 = vsel %vm919, %v2334, 0
        %v2340 = vsel %vm919, %v2335, 0
        %2342 = vmatpush.bf16.xpose.msra.mxu0 0
        %2343 = vmatpush.bf16.xpose.msra.mxu0 0
        %2344 = vmatpush.bf16.xpose.msra.mxu0 0
        %2345 = vmatpush.bf16.xpose.msra.mxu0 0
        %2346 = vmatpush.bf16.xpose.msra.mxu0 0
        %2347 = vmatpush.bf16.xpose.msra.mxu0 0
        %2348 = vmatpush.bf16.xpose.msra.mxu0 0
        %2349 = vmatpush.bf16.xpose.msra.mxu0 %v2340
        %2350 = vmatmul.bf16.gmra.mxu0 %v2337
        %v2351 = vpop.f32.mrf.mxu0
        %v2352 = vadd.f32 0.0, %v2351
        %v2353 = vpop.f32.mrf.mxu0
        %2354 = vdwg.mxu0
        %v2355 = vmul.f32 %v2352, 0.35355338
        %v2356 = vsel %vm944, %v2355, -inf
        %2357 = vmax.xlane.f32.xlu0 %v2356
        %v2358 = vpop.xlane.xlu0 %2357
        %v2359 = vsub.f32 %v2355, %v2358
        %v2360 = vmul.f32 %v2359, 1.442695
        %v2361 = vpow.pop %v2360
        %v2362 = vsel %vm944, %v2361, 0.0
        %2363 = vadd.xlane.f32.xlu0 %v2362
        %v2364 = vpop.xlane.xlu0 %2363
        %v2365 = vrcp.pop %v2364
        %v2366 = vmul.f32 %v2361, %v2365
        %v2367 = vpack.c.bf16 %v2366, %v2366
        %v2368 = vpack.c.bf16 %v2332, %v2330
        %v2370 = vsel %vm944, %v2367, 0
        %2372 = vmatpush.bf16.msra.mxu0 0
        %2373 = vmatpush.bf16.msra.mxu0 0
        %2374 = vmatpush.bf16.msra.mxu0 0
        %2375 = vmatpush.bf16.msra.mxu0 0
        %2376 = vmatpush.bf16.msra.mxu0 0
        %2377 = vmatpush.bf16.msra.mxu0 0
        %2378 = vmatpush.bf16.msra.mxu0 0
        %2379 = vmatpush.bf16.msra.mxu0 %v2368
        %2380 = vmatmul.bf16.gmra.mxu0 %v2370
        %v2381 = vpop.f32.mrf.mxu0
        %v2382 = vadd.f32 0.0, %v2381
        %v2383 = vpop.f32.mrf.mxu0
        %2384 = vdwg.mxu0
        %v2385 = vpack.c.bf16 %v2382, %v2382
        %s2386 = scalar_lea.vmem %s10, 8
        %v2387 = vld [vmem:[%s2386] sm:$0xf]
        %v2389 = vsel %vm919, %v2385, 0
        %v2392 = vsel %vm1154, %v2387, 0
        %2394 = vmatpush.bf16.msra.mxu0 0
        %2395 = vmatpush.bf16.msra.mxu0 0
        %2396 = vmatpush.bf16.msra.mxu0 0
        %2397 = vmatpush.bf16.msra.mxu0 0
        %2398 = vmatpush.bf16.msra.mxu0 0
        %2399 = vmatpush.bf16.msra.mxu0 0
        %2400 = vmatpush.bf16.msra.mxu0 0
        %2401 = vmatpush.bf16.msra.mxu0 %v2392
        %2402 = vmatmul.bf16.gmra.mxu0 %v2389
        %v2403 = vpop.f32.mrf.mxu0
        %v2404 = vadd.f32 0.0, %v2403
        %v2405 = vpop.f32.mrf.mxu0
        %2406 = vdwg.mxu0
        %v2407 = vadd.f32 %v2233, %v2404
        %s2408 = scalar_lea.vmem %s8, 48
        %v2409 = vld [vmem:[%s2408] sm:$0xf]
        %v2410 = vld [vmem:[%s2408 + $0x4] sm:$0xf]
        %v2411 = vld [vmem:[%s2408 + $0x8] sm:$0xf]
        %v2412 = vld [vmem:[%s2408 + $0xc] sm:$0xf]
        %v2413 = vld [vmem:[%s9 + $0x3] sm:$0x1]
        %v2414 = vperm.slane %v2413, 0
        %v2419 = vunpack.c.l.b16 %v2409
        %v2420 = vunpack.c.l.b16 %v2410
        %v2421 = vunpack.c.l.b16 %v2411
        %v2422 = vunpack.c.l.b16 %v2412
        %v2423 = vpack.c.b16 %v2420, %v2419
        %v2424 = vpack.c.b16 %v2422, %v2421
        %2427 = vmatpush.bf16.msra.mxu0 0
        %2428 = vmatpush.bf16.msra.mxu0 0
        %2429 = vmatpush.bf16.msra.mxu0 0
        %2430 = vmatpush.bf16.msra.mxu0 0
        %2431 = vmatpush.bf16.msra.mxu0 0
        %2432 = vmatpush.bf16.msra.mxu0 0
        %2433 = vmatpush.bf16.msra.mxu0 %v2424
        %2434 = vmatpush.bf16.msra.mxu0 %v2423
        %2435 = vmatmul.bf16.gmra.mxu0 %v1909
        %v2436 = vpop.f32.mrf.mxu0
        %v2437 = vadd.f32 %v2414, %v2436
        %v2438 = vpop.f32.mrf.mxu0
        %2439 = vdwg.mxu0
        %s2440 = scalar_lea.vmem %s8, 112
        %v2441 = vld [vmem:[%s2440] sm:$0xf]
        %v2442 = vld [vmem:[%s2440 + $0x4] sm:$0xf]
        %v2443 = vld [vmem:[%s2440 + $0x8] sm:$0xf]
        %v2444 = vld [vmem:[%s2440 + $0xc] sm:$0xf]
        %v2445 = vld [vmem:[%s9 + $0x7] sm:$0x1]
        %v2446 = vperm.slane %v2445, 0
        %v2451 = vunpack.c.l.b16 %v2441
        %v2452 = vunpack.c.l.b16 %v2442
        %v2453 = vunpack.c.l.b16 %v2443
        %v2454 = vunpack.c.l.b16 %v2444
        %v2455 = vpack.c.b16 %v2452, %v2451
        %v2456 = vpack.c.b16 %v2454, %v2453
        %2459 = vmatpush.bf16.msra.mxu0 0
        %2460 = vmatpush.bf16.msra.mxu0 0
        %2461 = vmatpush.bf16.msra.mxu0 0
        %2462 = vmatpush.bf16.msra.mxu0 0
        %2463 = vmatpush.bf16.msra.mxu0 0
        %2464 = vmatpush.bf16.msra.mxu0 0
        %2465 = vmatpush.bf16.msra.mxu0 %v2456
        %2466 = vmatpush.bf16.msra.mxu0 %v2455
        %2467 = vmatmul.bf16.gmra.mxu0 %v1944
        %v2468 = vpop.f32.mrf.mxu0
        %v2469 = vadd.f32 %v2446, %v2468
        %v2470 = vpop.f32.mrf.mxu0
        %v2471 = vadd.f32 %v2446, %v2470
        %2472 = vdwg.mxu0
        %s2473 = scalar_lea.vmem %s8, 176
        %v2474 = vld [vmem:[%s2473] sm:$0xf]
        %v2475 = vld [vmem:[%s2473 + $0x4] sm:$0xf]
        %v2476 = vld [vmem:[%s2473 + $0x8] sm:$0xf]
        %v2477 = vld [vmem:[%s2473 + $0xc] sm:$0xf]
        %v2478 = vld [vmem:[%s9 + $0xb] sm:$0x1]
        %v2479 = vperm.slane %v2478, 0
        %v2484 = vunpack.c.l.b16 %v2474
        %v2485 = vunpack.c.l.b16 %v2475
        %v2486 = vunpack.c.l.b16 %v2476
        %v2487 = vunpack.c.l.b16 %v2477
        %v2488 = vpack.c.b16 %v2485, %v2484
        %v2489 = vpack.c.b16 %v2487, %v2486
        %2492 = vmatpush.bf16.msra.mxu0 0
        %2493 = vmatpush.bf16.msra.mxu0 0
        %2494 = vmatpush.bf16.msra.mxu0 0
        %2495 = vmatpush.bf16.msra.mxu0 0
        %2496 = vmatpush.bf16.msra.mxu0 0
        %2497 = vmatpush.bf16.msra.mxu0 0
        %2498 = vmatpush.bf16.msra.mxu0 %v2489
        %2499 = vmatpush.bf16.msra.mxu0 %v2488
        %2500 = vmatmul.bf16.gmra.mxu0 %v1944
        %v2501 = vpop.f32.mrf.mxu0
        %v2502 = vadd.f32 %v2479, %v2501
        %v2503 = vpop.f32.mrf.mxu0
        %v2504 = vadd.f32 %v2479, %v2503
        %2505 = vdwg.mxu0
        %v2506 = vpack.c.bf16 %v2437, %v2437
        %v2507 = vpack.c.bf16 %v2471, %v2469
        %v2509 = vsel %vm919, %v2506, 0
        %v2512 = vsel %vm919, %v2507, 0
        %2514 = vmatpush.bf16.xpose.msra.mxu0 0
        %2515 = vmatpush.bf16.xpose.msra.mxu0 0
        %2516 = vmatpush.bf16.xpose.msra.mxu0 0
        %2517 = vmatpush.bf16.xpose.msra.mxu0 0
        %2518 = vmatpush.bf16.xpose.msra.mxu0 0
        %2519 = vmatpush.bf16.xpose.msra.mxu0 0
        %2520 = vmatpush.bf16.xpose.msra.mxu0 0
        %2521 = vmatpush.bf16.xpose.msra.mxu0 %v2512
        %2522 = vmatmul.bf16.gmra.mxu0 %v2509
        %v2523 = vpop.f32.mrf.mxu0
        %v2524 = vadd.f32 0.0, %v2523
        %v2525 = vpop.f32.mrf.mxu0
        %2526 = vdwg.mxu0
        %v2527 = vmul.f32 %v2524, 0.35355338
        %v2528 = vsel %vm944, %v2527, -inf
        %2529 = vmax.xlane.f32.xlu0 %v2528
        %v2530 = vpop.xlane.xlu0 %2529
        %v2531 = vsub.f32 %v2527, %v2530
        %v2532 = vmul.f32 %v2531, 1.442695
        %v2533 = vpow.pop %v2532
        %v2534 = vsel %vm944, %v2533, 0.0
        %2535 = vadd.xlane.f32.xlu0 %v2534
        %v2536 = vpop.xlane.xlu0 %2535
        %v2537 = vrcp.pop %v2536
        %v2538 = vmul.f32 %v2533, %v2537
        %v2539 = vpack.c.bf16 %v2538, %v2538
        %v2540 = vpack.c.bf16 %v2504, %v2502
        %v2542 = vsel %vm944, %v2539, 0
        %2544 = vmatpush.bf16.msra.mxu0 0
        %2545 = vmatpush.bf16.msra.mxu0 0
        %2546 = vmatpush.bf16.msra.mxu0 0
        %2547 = vmatpush.bf16.msra.mxu0 0
        %2548 = vmatpush.bf16.msra.mxu0 0
        %2549 = vmatpush.bf16.msra.mxu0 0
        %2550 = vmatpush.bf16.msra.mxu0 0
        %2551 = vmatpush.bf16.msra.mxu0 %v2540
        %2552 = vmatmul.bf16.gmra.mxu0 %v2542
        %v2553 = vpop.f32.mrf.mxu0
        %v2554 = vadd.f32 0.0, %v2553
        %v2555 = vpop.f32.mrf.mxu0
        %2556 = vdwg.mxu0
        %v2557 = vpack.c.bf16 %v2554, %v2554
        %s2558 = scalar_lea.vmem %s10, 12
        %v2559 = vld [vmem:[%s2558] sm:$0xf]
        %v2561 = vsel %vm919, %v2557, 0
        %v2564 = vsel %vm1154, %v2559, 0
        %2566 = vmatpush.bf16.msra.mxu0 0
        %2567 = vmatpush.bf16.msra.mxu0 0
        %2568 = vmatpush.bf16.msra.mxu0 0
        %2569 = vmatpush.bf16.msra.mxu0 0
        %2570 = vmatpush.bf16.msra.mxu0 0
        %2571 = vmatpush.bf16.msra.mxu0 0
        %2572 = vmatpush.bf16.msra.mxu0 0
        %2573 = vmatpush.bf16.msra.mxu0 %v2564
        %2574 = vmatmul.bf16.gmra.mxu0 %v2561
        %v2575 = vpop.f32.mrf.mxu0
        %v2576 = vadd.f32 0.0, %v2575
        %v2577 = vpop.f32.mrf.mxu0
        %2578 = vdwg.mxu0
        %v2579 = vadd.f32 %v2407, %v2576
        %v2580 = vadd.f32 %v1807, %v2579
        %v2581 = vld [vmem:[%s7 + $0x6] sm:$0x1]
        %v2582 = vperm.slane %v2581, 0
        %v2583 = vadd.f32 %v2580, %v2582
        %v2584 = vld [vmem:[%s7 + $0x4] sm:$0x1]
        %v2585 = vld [vmem:[%s7 + $0x5] sm:$0x1]
        %v2586 = vsel %vm766, %v2583, 0.0
        %2587 = vadd.xlane.f32.xlu0 %v2586
        %v2588 = vpop.xlane.xlu0 %2587
        %v2589 = vmul.f32 %v2588, %v779
        %v2590 = vsub.f32 %v2583, %v2589
        %v2591 = vmul.f32 %v2590, %v2590
        %v2592 = vsel %vm766, %v2591, 0.0
        %2593 = vadd.xlane.f32.xlu0 %v2592
        %v2594 = vpop.xlane.xlu0 %2593
        %v2595 = vmul.f32 %v2594, %v779
        %v2596 = vadd.f32 %v2595, 1e-05
        %v2597 = vrsqrt.pop %v2596
        %v2598 = vmul.f32 %v2597, %v2596
        %v2599 = vmul.f32 %v2598, %v2597
        %v2600 = vmul.f32 0.5, %v2599
        %v2601 = vsub.f32 1.5, %v2600
        %v2602 = vmul.f32 %v2597, %v2601
        %vm2603 = vweird.f32 %v2596
        %vm2604 = vweird.f32 %v2597
        %vm2605 = vmor %vm2603, %vm2604
        %v2606 = vsel %vm2605, %v2597, %v2602
        %v2607 = vmul.f32 %v2590, %v2606
        %v2608 = vperm.slane %v2584, 0
        %v2609 = vmul.f32 %v2607, %v2608
        %v2610 = vperm.slane %v2585, 0
        %v2611 = vadd.f32 %v2609, %v2610
        %v2612 = vpack.c.bf16 %v2611, %v2611
        %v2613 = vld [vmem:[%s11] sm:$0xf]
        %v2614 = vld [vmem:[%s11 + $0x4] sm:$0xf]
        %v2615 = vld [vmem:[%s11 + $0x8] sm:$0xf]
        %v2616 = vld [vmem:[%s11 + $0xc] sm:$0xf]
        %v2617 = vld [vmem:[%s12] sm:$0x1]
        %v2619 = vperm.slane %v2617, 0
        %v2625 = vunpack.c.l.b16 %v2613
        %v2626 = vunpack.c.l.b16 %v2614
        %v2627 = vunpack.c.l.b16 %v2615
        %v2628 = vunpack.c.l.b16 %v2616
        %v2629 = vpack.c.b16 %v2626, %v2625
        %v2630 = vpack.c.b16 %v2628, %v2627
        %v2634 = vsel %vm766, %v2612, 0
        %2636 = vmatpush.bf16.msra.mxu0 0
        %2637 = vmatpush.bf16.msra.mxu0 0
        %2638 = vmatpush.bf16.msra.mxu0 0
        %2639 = vmatpush.bf16.msra.mxu0 0
        %2640 = vmatpush.bf16.msra.mxu0 0
        %2641 = vmatpush.bf16.msra.mxu0 0
        %2642 = vmatpush.bf16.msra.mxu0 %v2630
        %2643 = vmatpush.bf16.msra.mxu0 %v2629
        %2644 = vmatmul.bf16.gmra.mxu0 %v2634
        %v2645 = vpop.f32.mrf.mxu0
        %v2646 = vadd.f32 %v2619, %v2645
        %v2647 = vpop.f32.mrf.mxu0
        %2648 = vdwg.mxu0
        %v2649 = vmul.f32 %v2646, 0.5
        %v2650 = vmul.f32 %v2646, 0.70710677
        %v2651 = vand.u32 2147483647, %v2650
        %v2652 = vmul.f32 %v2651, 0.3275911
        %v2653 = vadd.f32 %v2652, 1.0
        %v2654 = vrcp.pop %v2653
        %v2655 = vmul.f32 %v2653, %v2654
        %v2656 = vsub.f32 1.0, %v2655
        %v2657 = vmul.f32 %v2654, %v2656
        %v2658 = vadd.f32 %v2654, %v2657
        %vm2659 = vweird.f32 %v2653
        %vm2660 = vweird.f32 %v2654
        %vm2661 = vmor %vm2659, %vm2660
        %v2662 = vsel %vm2661, %v2654, %v2658
        %v2663 = vand.u32 2147483647, %v2653
        %vm2664 = vcmp.eq.f32.partialorder %v2663, 8.507059e+37
        %v2665 = vand.u32 %v2653, 2147483648
        %v2666 = vor.u32 1.1754944e-38, %v2665
        %v2667 = vsel %vm2664, %v2666, %v2662
        %v2668 = vmul.f32 1.0, %v2667
        %v2669 = vmul.f32 %v2668, 1.0614054
        %v2670 = vadd.f32 %v2669, -1.4531521
        %v2671 = vmul.f32 %v2670, %v2668
        %v2672 = vadd.f32 %v2671, 1.4214138
        %v2673 = vmul.f32 %v2672, %v2668
        %v2674 = vadd.f32 %v2673, -0.28449672
        %v2675 = vmul.f32 %v2674, %v2668
        %v2676 = vadd.f32 %v2675, 0.2548296
        %v2677 = vmul.f32 %v2676, %v2668
        %v2678 = vsub.f32 0.0, %v2651
        %v2679 = vmul.f32 %v2678, %v2651
        %v2680 = vmul.f32 %v2679, 1.442695
        %v2681 = vpow.pop %v2680
        %v2682 = vmul.f32 %v2677, %v2681
        %v2683 = vsub.f32 1.0, %v2682
        %vm2684 = vcmp.ge.f32.partialorder %v2650, 0.0
        %v2685 = vsub.f32 0.0, %v2683
        %v2686 = vsel %vm2684, %v2683, %v2685
        %v2687 = vadd.f32 %v2686, 1.0
        %v2688 = vmul.f32 %v2649, %v2687
        %v2689 = vpack.c.bf16 %v2688, %v2688
        %v2690 = vld [vmem:[%s13] sm:$0xf]
        %v2691 = vld [vmem:[%s13 + $0x4] sm:$0xf]
        %v2692 = vld [vmem:[%s13 + $0x8] sm:$0xf]
        %v2693 = vld [vmem:[%s13 + $0xc] sm:$0xf]
        %v2694 = vld [vmem:[%s13 + $0x10] sm:$0xf]
        %v2695 = vld [vmem:[%s13 + $0x14] sm:$0xf]
        %v2696 = vld [vmem:[%s13 + $0x18] sm:$0xf]
        %v2697 = vld [vmem:[%s13 + $0x1c] sm:$0xf]
        %v2698 = vld [vmem:[%s13 + $0x20] sm:$0xf]
        %v2699 = vld [vmem:[%s13 + $0x24] sm:$0xf]
        %v2700 = vld [vmem:[%s13 + $0x28] sm:$0xf]
        %v2701 = vld [vmem:[%s13 + $0x2c] sm:$0xf]
        %v2702 = vld [vmem:[%s13 + $0x30] sm:$0xf]
        %v2703 = vld [vmem:[%s13 + $0x34] sm:$0xf]
        %v2704 = vld [vmem:[%s13 + $0x38] sm:$0xf]
        %v2705 = vld [vmem:[%s13 + $0x3c] sm:$0xf]
        %v2722 = vunpack.c.l.b16 %v2690
        %v2723 = vunpack.c.l.b16 %v2691
        %v2724 = vunpack.c.l.b16 %v2692
        %v2725 = vunpack.c.l.b16 %v2693
        %v2726 = vunpack.c.l.b16 %v2694
        %v2727 = vunpack.c.l.b16 %v2695
        %v2728 = vunpack.c.l.b16 %v2696
        %v2729 = vunpack.c.l.b16 %v2697
        %v2730 = vunpack.c.l.b16 %v2698
        %v2731 = vunpack.c.l.b16 %v2699
        %v2732 = vunpack.c.l.b16 %v2700
        %v2733 = vunpack.c.l.b16 %v2701
        %v2734 = vunpack.c.l.b16 %v2702
        %v2735 = vunpack.c.l.b16 %v2703
        %v2736 = vunpack.c.l.b16 %v2704
        %v2737 = vunpack.c.l.b16 %v2705
        %v2738 = vpack.c.b16 %v2723, %v2722
        %v2739 = vpack.c.b16 %v2725, %v2724
        %v2740 = vpack.c.b16 %v2727, %v2726
        %v2741 = vpack.c.b16 %v2729, %v2728
        %v2742 = vpack.c.b16 %v2731, %v2730
        %v2743 = vpack.c.b16 %v2733, %v2732
        %v2744 = vpack.c.b16 %v2735, %v2734
        %v2745 = vpack.c.b16 %v2737, %v2736
        %2754 = vmatpush.bf16.msra.mxu0 %v2745
        %2755 = vmatpush.bf16.msra.mxu0 %v2744
        %2756 = vmatpush.bf16.msra.mxu0 %v2743
        %2757 = vmatpush.bf16.msra.mxu0 %v2742
        %2758 = vmatpush.bf16.msra.mxu0 %v2741
        %2759 = vmatpush.bf16.msra.mxu0 %v2740
        %2760 = vmatpush.bf16.msra.mxu0 %v2739
        %2761 = vmatpush.bf16.msra.mxu0 %v2738
        %2762 = vmatmul.bf16.gmra.mxu0 %v2689
        %v2763 = vpop.f32.mrf.mxu0
        %v2764 = vadd.f32 0.0, %v2763
        %v2765 = vpop.f32.mrf.mxu0
        %2766 = vdwg.mxu0
        %v2767 = vadd.f32 %v2583, %v2764
        %v2768 = vld [vmem:[%s7 + $0x7] sm:$0x1]
        %v2769 = vperm.slane %v2768, 0
        %v2770 = vadd.f32 %v2767, %v2769
        %s2771 = scalar_lea.vmem %s1, 8
        %v2772 = vld [vmem:[%s2771] sm:$0xff]
        %v2773 = vadd.f32 %v2770, %v2772
        %v2774 = vld [vmem:[%s14] sm:$0x1]
        %v2775 = vsel %vm766, %v2773, 0.0
        %2776 = vadd.xlane.f32.xlu0 %v2775
        %v2777 = vpop.xlane.xlu0 %2776
        %v2778 = vmul.f32 %v2777, %v779
        %v2779 = vsub.f32 %v2773, %v2778
        %v2780 = vmul.f32 %v2779, %v2779
        %v2781 = vsel %vm766, %v2780, 0.0
        %2782 = vadd.xlane.f32.xlu0 %v2781
        %v2783 = vpop.xlane.xlu0 %2782
        %v2784 = vmul.f32 %v2783, %v779
        %v2785 = vadd.f32 %v2784, 1e-05
        %v2786 = vrsqrt.pop %v2785
        %v2787 = vmul.f32 %v2786, %v2785
        %v2788 = vmul.f32 %v2787, %v2786
        %v2789 = vmul.f32 0.5, %v2788
        %v2790 = vsub.f32 1.5, %v2789
        %v2791 = vmul.f32 %v2786, %v2790
        %vm2792 = vweird.f32 %v2785
        %vm2793 = vweird.f32 %v2786
        %vm2794 = vmor %vm2792, %vm2793
        %v2795 = vsel %vm2794, %v2786, %v2791
        %v2796 = vmul.f32 %v2779, %v2795
        %v2797 = vperm.slane %v2774, 0
        %v2798 = vmul.f32 %v2796, %v2797
        %v2799 = vpack.c.bf16 %v2798, %v2798
        %v2800 = vld [vmem:[%s15] sm:$0xf]
        %v2801 = vld [vmem:[%s15 + $0x4] sm:$0xf]
        %v2802 = vld [vmem:[%s15 + $0x8] sm:$0xf]
        %v2803 = vld [vmem:[%s15 + $0xc] sm:$0xf]
        %v2808 = vunpack.c.l.b16 %v2800
        %v2809 = vunpack.c.l.b16 %v2801
        %v2810 = vunpack.c.l.b16 %v2802
        %v2811 = vunpack.c.l.b16 %v2803
        %v2812 = vpack.c.b16 %v2809, %v2808
        %v2813 = vpack.c.b16 %v2811, %v2810
        %v2817 = vsel %vm766, %v2799, 0
        %2819 = vmatpush.bf16.msra.mxu0 0
        %2820 = vmatpush.bf16.msra.mxu0 0
        %2821 = vmatpush.bf16.msra.mxu0 0
        %2822 = vmatpush.bf16.msra.mxu0 0
        %2823 = vmatpush.bf16.msra.mxu0 0
        %2824 = vmatpush.bf16.msra.mxu0 0
        %2825 = vmatpush.bf16.msra.mxu0 %v2813
        %2826 = vmatpush.bf16.msra.mxu0 %v2812
        %2827 = vmatmul.bf16.gmra.mxu0 %v2817
        %v2828 = vpop.f32.mrf.mxu0
        %v2829 = vadd.f32 0.0, %v2828
        %v2830 = vpop.f32.mrf.mxu0
        %2831 = vdwg.mxu0
        %s2832 = scalar_lea.vmem %s15, 64
        %v2833 = vld [vmem:[%s2832] sm:$0xf]
        %v2834 = vld [vmem:[%s2832 + $0x4] sm:$0xf]
        %v2835 = vld [vmem:[%s2832 + $0x8] sm:$0xf]
        %v2836 = vld [vmem:[%s2832 + $0xc] sm:$0xf]
        %v2841 = vunpack.c.l.b16 %v2833
        %v2842 = vunpack.c.l.b16 %v2834
        %v2843 = vunpack.c.l.b16 %v2835
        %v2844 = vunpack.c.l.b16 %v2836
        %v2845 = vpack.c.b16 %v2842, %v2841
        %v2846 = vpack.c.b16 %v2844, %v2843
        %2849 = vmatpush.bf16.msra.mxu0 0
        %2850 = vmatpush.bf16.msra.mxu0 0
        %2851 = vmatpush.bf16.msra.mxu0 0
        %2852 = vmatpush.bf16.msra.mxu0 0
        %2853 = vmatpush.bf16.msra.mxu0 0
        %2854 = vmatpush.bf16.msra.mxu0 0
        %2855 = vmatpush.bf16.msra.mxu0 %v2846
        %2856 = vmatpush.bf16.msra.mxu0 %v2845
        %2857 = vmatmul.bf16.gmra.mxu0 %v2817
        %v2858 = vpop.f32.mrf.mxu0
        %v2859 = vadd.f32 0.0, %v2858
        %v2860 = vpop.f32.mrf.mxu0
        %2861 = vdwg.mxu0
        %s2862 = scalar_lea.vmem %s15, 128
        %v2863 = vld [vmem:[%s2862] sm:$0xf]
        %v2864 = vld [vmem:[%s2862 + $0x4] sm:$0xf]
        %v2865 = vld [vmem:[%s2862 + $0x8] sm:$0xf]
        %v2866 = vld [vmem:[%s2862 + $0xc] sm:$0xf]
        %v2871 = vunpack.c.l.b16 %v2863
        %v2872 = vunpack.c.l.b16 %v2864
        %v2873 = vunpack.c.l.b16 %v2865
        %v2874 = vunpack.c.l.b16 %v2866
        %v2875 = vpack.c.b16 %v2872, %v2871
        %v2876 = vpack.c.b16 %v2874, %v2873
        %2879 = vmatpush.bf16.msra.mxu0 0
        %2880 = vmatpush.bf16.msra.mxu0 0
        %2881 = vmatpush.bf16.msra.mxu0 0
        %2882 = vmatpush.bf16.msra.mxu0 0
        %2883 = vmatpush.bf16.msra.mxu0 0
        %2884 = vmatpush.bf16.msra.mxu0 0
        %2885 = vmatpush.bf16.msra.mxu0 %v2876
        %2886 = vmatpush.bf16.msra.mxu0 %v2875
        %2887 = vmatmul.bf16.gmra.mxu0 %v2817
        %v2888 = vpop.f32.mrf.mxu0
        %v2889 = vadd.f32 0.0, %v2888
        %v2890 = vpop.f32.mrf.mxu0
        %2891 = vdwg.mxu0
        %v2892 = vpack.c.bf16 %v2829, %v2829
        %v2893 = vpack.c.bf16 %v2859, %v2859
        %v2895 = vsel %vm919, %v2892, 0
        %v2898 = vsel %vm919, %v2893, 0
        %2900 = vmatpush.bf16.xpose.msra.mxu0 0
        %2901 = vmatpush.bf16.xpose.msra.mxu0 0
        %2902 = vmatpush.bf16.xpose.msra.mxu0 0
        %2903 = vmatpush.bf16.xpose.msra.mxu0 0
        %2904 = vmatpush.bf16.xpose.msra.mxu0 0
        %2905 = vmatpush.bf16.xpose.msra.mxu0 0
        %2906 = vmatpush.bf16.xpose.msra.mxu0 0
        %2907 = vmatpush.bf16.xpose.msra.mxu0 %v2898
        %2908 = vmatmul.bf16.gmra.mxu0 %v2895
        %v2909 = vpop.f32.mrf.mxu0
        %v2910 = vadd.f32 0.0, %v2909
        %v2911 = vpop.f32.mrf.mxu0
        %2912 = vdwg.mxu0
        %v2913 = vmul.f32 %v2910, 0.35355338
        %v2914 = vsel %vm763, %v2913, -1e+30
        %v2915 = vsel %vm919, %v2914, -inf
        %2916 = vmax.xlane.f32.xlu0 %v2915
        %v2917 = vpop.xlane.xlu0 %2916
        %v2918 = vsub.f32 %v2914, %v2917
        %v2919 = vmul.f32 %v2918, 1.442695
        %v2920 = vpow.pop %v2919
        %v2921 = vsel %vm919, %v2920, 0.0
        %2922 = vadd.xlane.f32.xlu0 %v2921
        %v2923 = vpop.xlane.xlu0 %2922
        %v2924 = vrcp.pop %v2923
        %v2925 = vmul.f32 %v2920, %v2924
        %v2926 = vpack.c.bf16 %v2925, %v2925
        %v2927 = vpack.c.bf16 %v2889, %v2889
        %v2929 = vsel %vm919, %v2926, 0
        %v2932 = vsel %vm1154, %v2927, 0
        %2934 = vmatpush.bf16.msra.mxu0 0
        %2935 = vmatpush.bf16.msra.mxu0 0
        %2936 = vmatpush.bf16.msra.mxu0 0
        %2937 = vmatpush.bf16.msra.mxu0 0
        %2938 = vmatpush.bf16.msra.mxu0 0
        %2939 = vmatpush.bf16.msra.mxu0 0
        %2940 = vmatpush.bf16.msra.mxu0 0
        %2941 = vmatpush.bf16.msra.mxu0 %v2932
        %2942 = vmatmul.bf16.gmra.mxu0 %v2929
        %v2943 = vpop.f32.mrf.mxu0
        %v2944 = vadd.f32 0.0, %v2943
        %v2945 = vpop.f32.mrf.mxu0
        %2946 = vdwg.mxu0
        %v2947 = vpack.c.bf16 %v2944, %v2944
        %v2948 = vld [vmem:[%s16] sm:$0xf]
        %s2949 = scalar_lea.vmem %s15, 16
        %v2950 = vld [vmem:[%s2949] sm:$0xf]
        %v2951 = vld [vmem:[%s2949 + $0x4] sm:$0xf]
        %v2952 = vld [vmem:[%s2949 + $0x8] sm:$0xf]
        %v2953 = vld [vmem:[%s2949 + $0xc] sm:$0xf]
        %v2958 = vunpack.c.l.b16 %v2950
        %v2959 = vunpack.c.l.b16 %v2951
        %v2960 = vunpack.c.l.b16 %v2952
        %v2961 = vunpack.c.l.b16 %v2953
        %v2962 = vpack.c.b16 %v2959, %v2958
        %v2963 = vpack.c.b16 %v2961, %v2960
        %2966 = vmatpush.bf16.msra.mxu0 0
        %2967 = vmatpush.bf16.msra.mxu0 0
        %2968 = vmatpush.bf16.msra.mxu0 0
        %2969 = vmatpush.bf16.msra.mxu0 0
        %2970 = vmatpush.bf16.msra.mxu0 0
        %2971 = vmatpush.bf16.msra.mxu0 0
        %2972 = vmatpush.bf16.msra.mxu0 %v2963
        %2973 = vmatpush.bf16.msra.mxu0 %v2962
        %2974 = vmatmul.bf16.gmra.mxu0 %v2817
        %v2975 = vpop.f32.mrf.mxu0
        %v2976 = vadd.f32 0.0, %v2975
        %v2977 = vpop.f32.mrf.mxu0
        %2978 = vdwg.mxu0
        %s2979 = scalar_lea.vmem %s15, 80
        %v2980 = vld [vmem:[%s2979] sm:$0xf]
        %v2981 = vld [vmem:[%s2979 + $0x4] sm:$0xf]
        %v2982 = vld [vmem:[%s2979 + $0x8] sm:$0xf]
        %v2983 = vld [vmem:[%s2979 + $0xc] sm:$0xf]
        %v2988 = vunpack.c.l.b16 %v2980
        %v2989 = vunpack.c.l.b16 %v2981
        %v2990 = vunpack.c.l.b16 %v2982
        %v2991 = vunpack.c.l.b16 %v2983
        %v2992 = vpack.c.b16 %v2989, %v2988
        %v2993 = vpack.c.b16 %v2991, %v2990
        %2996 = vmatpush.bf16.msra.mxu0 0
        %2997 = vmatpush.bf16.msra.mxu0 0
        %2998 = vmatpush.bf16.msra.mxu0 0
        %2999 = vmatpush.bf16.msra.mxu0 0
        %3000 = vmatpush.bf16.msra.mxu0 0
        %3001 = vmatpush.bf16.msra.mxu0 0
        %3002 = vmatpush.bf16.msra.mxu0 %v2993
        %3003 = vmatpush.bf16.msra.mxu0 %v2992
        %3004 = vmatmul.bf16.gmra.mxu0 %v2817
        %v3005 = vpop.f32.mrf.mxu0
        %v3006 = vadd.f32 0.0, %v3005
        %v3007 = vpop.f32.mrf.mxu0
        %3008 = vdwg.mxu0
        %s3009 = scalar_lea.vmem %s15, 144
        %v3010 = vld [vmem:[%s3009] sm:$0xf]
        %v3011 = vld [vmem:[%s3009 + $0x4] sm:$0xf]
        %v3012 = vld [vmem:[%s3009 + $0x8] sm:$0xf]
        %v3013 = vld [vmem:[%s3009 + $0xc] sm:$0xf]
        %v3018 = vunpack.c.l.b16 %v3010
        %v3019 = vunpack.c.l.b16 %v3011
        %v3020 = vunpack.c.l.b16 %v3012
        %v3021 = vunpack.c.l.b16 %v3013
        %v3022 = vpack.c.b16 %v3019, %v3018
        %v3023 = vpack.c.b16 %v3021, %v3020
        %3026 = vmatpush.bf16.msra.mxu0 0
        %3027 = vmatpush.bf16.msra.mxu0 0
        %3028 = vmatpush.bf16.msra.mxu0 0
        %3029 = vmatpush.bf16.msra.mxu0 0
        %3030 = vmatpush.bf16.msra.mxu0 0
        %3031 = vmatpush.bf16.msra.mxu0 0
        %3032 = vmatpush.bf16.msra.mxu0 %v3023
        %3033 = vmatpush.bf16.msra.mxu0 %v3022
        %3034 = vmatmul.bf16.gmra.mxu0 %v2817
        %v3035 = vpop.f32.mrf.mxu0
        %v3036 = vadd.f32 0.0, %v3035
        %v3037 = vpop.f32.mrf.mxu0
        %3038 = vdwg.mxu0
        %v3039 = vpack.c.bf16 %v2976, %v2976
        %v3040 = vpack.c.bf16 %v3006, %v3006
        %v3042 = vsel %vm919, %v3039, 0
        %v3045 = vsel %vm919, %v3040, 0
        %3047 = vmatpush.bf16.xpose.msra.mxu0 0
        %3048 = vmatpush.bf16.xpose.msra.mxu0 0
        %3049 = vmatpush.bf16.xpose.msra.mxu0 0
        %3050 = vmatpush.bf16.xpose.msra.mxu0 0
        %3051 = vmatpush.bf16.xpose.msra.mxu0 0
        %3052 = vmatpush.bf16.xpose.msra.mxu0 0
        %3053 = vmatpush.bf16.xpose.msra.mxu0 0
        %3054 = vmatpush.bf16.xpose.msra.mxu0 %v3045
        %3055 = vmatmul.bf16.gmra.mxu0 %v3042
        %v3056 = vpop.f32.mrf.mxu0
        %v3057 = vadd.f32 0.0, %v3056
        %v3058 = vpop.f32.mrf.mxu0
        %3059 = vdwg.mxu0
        %v3060 = vmul.f32 %v3057, 0.35355338
        %v3061 = vsel %vm763, %v3060, -1e+30
        %v3062 = vsel %vm919, %v3061, -inf
        %3063 = vmax.xlane.f32.xlu0 %v3062
        %v3064 = vpop.xlane.xlu0 %3063
        %v3065 = vsub.f32 %v3061, %v3064
        %v3066 = vmul.f32 %v3065, 1.442695
        %v3067 = vpow.pop %v3066
        %v3068 = vsel %vm919, %v3067, 0.0
        %3069 = vadd.xlane.f32.xlu0 %v3068
        %v3070 = vpop.xlane.xlu0 %3069
        %v3071 = vrcp.pop %v3070
        %v3072 = vmul.f32 %v3067, %v3071
        %v3073 = vpack.c.bf16 %v3072, %v3072
        %v3074 = vpack.c.bf16 %v3036, %v3036
        %v3076 = vsel %vm919, %v3073, 0
        %v3079 = vsel %vm1154, %v3074, 0
        %3081 = vmatpush.bf16.msra.mxu0 0
        %3082 = vmatpush.bf16.msra.mxu0 0
        %3083 = vmatpush.bf16.msra.mxu0 0
        %3084 = vmatpush.bf16.msra.mxu0 0
        %3085 = vmatpush.bf16.msra.mxu0 0
        %3086 = vmatpush.bf16.msra.mxu0 0
        %3087 = vmatpush.bf16.msra.mxu0 0
        %3088 = vmatpush.bf16.msra.mxu0 %v3079
        %3089 = vmatmul.bf16.gmra.mxu0 %v3076
        %v3090 = vpop.f32.mrf.mxu0
        %v3091 = vadd.f32 0.0, %v3090
        %v3092 = vpop.f32.mrf.mxu0
        %3093 = vdwg.mxu0
        %v3094 = vpack.c.bf16 %v3091, %v3091
        %s3095 = scalar_lea.vmem %s16, 4
        %v3096 = vld [vmem:[%s3095] sm:$0xf]
        %v3098 = vsel %vm919, %v3094, 0
        %v3101 = vsel %vm1154, %v3096, 0
        %3103 = vmatpush.bf16.msra.mxu0 0
        %3104 = vmatpush.bf16.msra.mxu0 0
        %3105 = vmatpush.bf16.msra.mxu0 0
        %3106 = vmatpush.bf16.msra.mxu0 0
        %3107 = vmatpush.bf16.msra.mxu0 0
        %3108 = vmatpush.bf16.msra.mxu0 0
        %3109 = vmatpush.bf16.msra.mxu0 0
        %3110 = vmatpush.bf16.msra.mxu0 %v3101
        %3111 = vmatmul.bf16.gmra.mxu0 %v3098
        %v3112 = vpop.f32.mrf.mxu0
        %v3113 = vadd.f32 0.0, %v3112
        %v3114 = vpop.f32.mrf.mxu0
        %3115 = vdwg.mxu0
        %v3117 = vsel %vm919, %v2947, 0
        %v3120 = vsel %vm1154, %v2948, 0
        %3122 = vmatpush.bf16.msra.mxu0 0
        %3123 = vmatpush.bf16.msra.mxu0 0
        %3124 = vmatpush.bf16.msra.mxu0 0
        %3125 = vmatpush.bf16.msra.mxu0 0
        %3126 = vmatpush.bf16.msra.mxu0 0
        %3127 = vmatpush.bf16.msra.mxu0 0
        %3128 = vmatpush.bf16.msra.mxu0 0
        %3129 = vmatpush.bf16.msra.mxu0 %v3120
        %3130 = vmatmul.bf16.gmra.mxu0 %v3117
        %v3131 = vpop.f32.mrf.mxu0
        %v3132 = vadd.f32 %v3113, %v3131
        %v3133 = vpop.f32.mrf.mxu0
        %3134 = vdwg.mxu0
        %s3135 = scalar_lea.vmem %s15, 32
        %v3136 = vld [vmem:[%s3135] sm:$0xf]
        %v3137 = vld [vmem:[%s3135 + $0x4] sm:$0xf]
        %v3138 = vld [vmem:[%s3135 + $0x8] sm:$0xf]
        %v3139 = vld [vmem:[%s3135 + $0xc] sm:$0xf]
        %v3144 = vunpack.c.l.b16 %v3136
        %v3145 = vunpack.c.l.b16 %v3137
        %v3146 = vunpack.c.l.b16 %v3138
        %v3147 = vunpack.c.l.b16 %v3139
        %v3148 = vpack.c.b16 %v3145, %v3144
        %v3149 = vpack.c.b16 %v3147, %v3146
        %3152 = vmatpush.bf16.msra.mxu0 0
        %3153 = vmatpush.bf16.msra.mxu0 0
        %3154 = vmatpush.bf16.msra.mxu0 0
        %3155 = vmatpush.bf16.msra.mxu0 0
        %3156 = vmatpush.bf16.msra.mxu0 0
        %3157 = vmatpush.bf16.msra.mxu0 0
        %3158 = vmatpush.bf16.msra.mxu0 %v3149
        %3159 = vmatpush.bf16.msra.mxu0 %v3148
        %3160 = vmatmul.bf16.gmra.mxu0 %v2817
        %v3161 = vpop.f32.mrf.mxu0
        %v3162 = vadd.f32 0.0, %v3161
        %v3163 = vpop.f32.mrf.mxu0
        %3164 = vdwg.mxu0
        %s3165 = scalar_lea.vmem %s15, 96
        %v3166 = vld [vmem:[%s3165] sm:$0xf]
        %v3167 = vld [vmem:[%s3165 + $0x4] sm:$0xf]
        %v3168 = vld [vmem:[%s3165 + $0x8] sm:$0xf]
        %v3169 = vld [vmem:[%s3165 + $0xc] sm:$0xf]
        %v3174 = vunpack.c.l.b16 %v3166
        %v3175 = vunpack.c.l.b16 %v3167
        %v3176 = vunpack.c.l.b16 %v3168
        %v3177 = vunpack.c.l.b16 %v3169
        %v3178 = vpack.c.b16 %v3175, %v3174
        %v3179 = vpack.c.b16 %v3177, %v3176
        %3182 = vmatpush.bf16.msra.mxu0 0
        %3183 = vmatpush.bf16.msra.mxu0 0
        %3184 = vmatpush.bf16.msra.mxu0 0
        %3185 = vmatpush.bf16.msra.mxu0 0
        %3186 = vmatpush.bf16.msra.mxu0 0
        %3187 = vmatpush.bf16.msra.mxu0 0
        %3188 = vmatpush.bf16.msra.mxu0 %v3179
        %3189 = vmatpush.bf16.msra.mxu0 %v3178
        %3190 = vmatmul.bf16.gmra.mxu0 %v2817
        %v3191 = vpop.f32.mrf.mxu0
        %v3192 = vadd.f32 0.0, %v3191
        %v3193 = vpop.f32.mrf.mxu0
        %3194 = vdwg.mxu0
        %s3195 = scalar_lea.vmem %s15, 160
        %v3196 = vld [vmem:[%s3195] sm:$0xf]
        %v3197 = vld [vmem:[%s3195 + $0x4] sm:$0xf]
        %v3198 = vld [vmem:[%s3195 + $0x8] sm:$0xf]
        %v3199 = vld [vmem:[%s3195 + $0xc] sm:$0xf]
        %v3204 = vunpack.c.l.b16 %v3196
        %v3205 = vunpack.c.l.b16 %v3197
        %v3206 = vunpack.c.l.b16 %v3198
        %v3207 = vunpack.c.l.b16 %v3199
        %v3208 = vpack.c.b16 %v3205, %v3204
        %v3209 = vpack.c.b16 %v3207, %v3206
        %3212 = vmatpush.bf16.msra.mxu0 0
        %3213 = vmatpush.bf16.msra.mxu0 0
        %3214 = vmatpush.bf16.msra.mxu0 0
        %3215 = vmatpush.bf16.msra.mxu0 0
        %3216 = vmatpush.bf16.msra.mxu0 0
        %3217 = vmatpush.bf16.msra.mxu0 0
        %3218 = vmatpush.bf16.msra.mxu0 %v3209
        %3219 = vmatpush.bf16.msra.mxu0 %v3208
        %3220 = vmatmul.bf16.gmra.mxu0 %v2817
        %v3221 = vpop.f32.mrf.mxu0
        %v3222 = vadd.f32 0.0, %v3221
        %v3223 = vpop.f32.mrf.mxu0
        %3224 = vdwg.mxu0
        %v3225 = vpack.c.bf16 %v3162, %v3162
        %v3226 = vpack.c.bf16 %v3192, %v3192
        %v3228 = vsel %vm919, %v3225, 0
        %v3231 = vsel %vm919, %v3226, 0
        %3233 = vmatpush.bf16.xpose.msra.mxu0 0
        %3234 = vmatpush.bf16.xpose.msra.mxu0 0
        %3235 = vmatpush.bf16.xpose.msra.mxu0 0
        %3236 = vmatpush.bf16.xpose.msra.mxu0 0
        %3237 = vmatpush.bf16.xpose.msra.mxu0 0
        %3238 = vmatpush.bf16.xpose.msra.mxu0 0
        %3239 = vmatpush.bf16.xpose.msra.mxu0 0
        %3240 = vmatpush.bf16.xpose.msra.mxu0 %v3231
        %3241 = vmatmul.bf16.gmra.mxu0 %v3228
        %v3242 = vpop.f32.mrf.mxu0
        %v3243 = vadd.f32 0.0, %v3242
        %v3244 = vpop.f32.mrf.mxu0
        %3245 = vdwg.mxu0
        %v3246 = vmul.f32 %v3243, 0.35355338
        %v3247 = vsel %vm763, %v3246, -1e+30
        %v3248 = vsel %vm919, %v3247, -inf
        %3249 = vmax.xlane.f32.xlu0 %v3248
        %v3250 = vpop.xlane.xlu0 %3249
        %v3251 = vsub.f32 %v3247, %v3250
        %v3252 = vmul.f32 %v3251, 1.442695
        %v3253 = vpow.pop %v3252
        %v3254 = vsel %vm919, %v3253, 0.0
        %3255 = vadd.xlane.f32.xlu0 %v3254
        %v3256 = vpop.xlane.xlu0 %3255
        %v3257 = vrcp.pop %v3256
        %v3258 = vmul.f32 %v3253, %v3257
        %v3259 = vpack.c.bf16 %v3258, %v3258
        %v3260 = vpack.c.bf16 %v3222, %v3222
        %v3262 = vsel %vm919, %v3259, 0
        %v3265 = vsel %vm1154, %v3260, 0
        %3267 = vmatpush.bf16.msra.mxu0 0
        %3268 = vmatpush.bf16.msra.mxu0 0
        %3269 = vmatpush.bf16.msra.mxu0 0
        %3270 = vmatpush.bf16.msra.mxu0 0
        %3271 = vmatpush.bf16.msra.mxu0 0
        %3272 = vmatpush.bf16.msra.mxu0 0
        %3273 = vmatpush.bf16.msra.mxu0 0
        %3274 = vmatpush.bf16.msra.mxu0 %v3265
        %3275 = vmatmul.bf16.gmra.mxu0 %v3262
        %v3276 = vpop.f32.mrf.mxu0
        %v3277 = vadd.f32 0.0, %v3276
        %v3278 = vpop.f32.mrf.mxu0
        %3279 = vdwg.mxu0
        %v3280 = vpack.c.bf16 %v3277, %v3277
        %s3281 = scalar_lea.vmem %s16, 8
        %v3282 = vld [vmem:[%s3281] sm:$0xf]
        %v3284 = vsel %vm919, %v3280, 0
        %v3287 = vsel %vm1154, %v3282, 0
        %3289 = vmatpush.bf16.msra.mxu0 0
        %3290 = vmatpush.bf16.msra.mxu0 0
        %3291 = vmatpush.bf16.msra.mxu0 0
        %3292 = vmatpush.bf16.msra.mxu0 0
        %3293 = vmatpush.bf16.msra.mxu0 0
        %3294 = vmatpush.bf16.msra.mxu0 0
        %3295 = vmatpush.bf16.msra.mxu0 0
        %3296 = vmatpush.bf16.msra.mxu0 %v3287
        %3297 = vmatmul.bf16.gmra.mxu0 %v3284
        %v3298 = vpop.f32.mrf.mxu0
        %v3299 = vadd.f32 0.0, %v3298
        %v3300 = vpop.f32.mrf.mxu0
        %3301 = vdwg.mxu0
        %v3302 = vadd.f32 %v3132, %v3299
        %s3303 = scalar_lea.vmem %s15, 48
        %v3304 = vld [vmem:[%s3303] sm:$0xf]
        %v3305 = vld [vmem:[%s3303 + $0x4] sm:$0xf]
        %v3306 = vld [vmem:[%s3303 + $0x8] sm:$0xf]
        %v3307 = vld [vmem:[%s3303 + $0xc] sm:$0xf]
        %v3312 = vunpack.c.l.b16 %v3304
        %v3313 = vunpack.c.l.b16 %v3305
        %v3314 = vunpack.c.l.b16 %v3306
        %v3315 = vunpack.c.l.b16 %v3307
        %v3316 = vpack.c.b16 %v3313, %v3312
        %v3317 = vpack.c.b16 %v3315, %v3314
        %3320 = vmatpush.bf16.msra.mxu0 0
        %3321 = vmatpush.bf16.msra.mxu0 0
        %3322 = vmatpush.bf16.msra.mxu0 0
        %3323 = vmatpush.bf16.msra.mxu0 0
        %3324 = vmatpush.bf16.msra.mxu0 0
        %3325 = vmatpush.bf16.msra.mxu0 0
        %3326 = vmatpush.bf16.msra.mxu0 %v3317
        %3327 = vmatpush.bf16.msra.mxu0 %v3316
        %3328 = vmatmul.bf16.gmra.mxu0 %v2817
        %v3329 = vpop.f32.mrf.mxu0
        %v3330 = vadd.f32 0.0, %v3329
        %v3331 = vpop.f32.mrf.mxu0
        %3332 = vdwg.mxu0
        %s3333 = scalar_lea.vmem %s15, 112
        %v3334 = vld [vmem:[%s3333] sm:$0xf]
        %v3335 = vld [vmem:[%s3333 + $0x4] sm:$0xf]
        %v3336 = vld [vmem:[%s3333 + $0x8] sm:$0xf]
        %v3337 = vld [vmem:[%s3333 + $0xc] sm:$0xf]
        %v3342 = vunpack.c.l.b16 %v3334
        %v3343 = vunpack.c.l.b16 %v3335
        %v3344 = vunpack.c.l.b16 %v3336
        %v3345 = vunpack.c.l.b16 %v3337
        %v3346 = vpack.c.b16 %v3343, %v3342
        %v3347 = vpack.c.b16 %v3345, %v3344
        %3350 = vmatpush.bf16.msra.mxu0 0
        %3351 = vmatpush.bf16.msra.mxu0 0
        %3352 = vmatpush.bf16.msra.mxu0 0
        %3353 = vmatpush.bf16.msra.mxu0 0
        %3354 = vmatpush.bf16.msra.mxu0 0
        %3355 = vmatpush.bf16.msra.mxu0 0
        %3356 = vmatpush.bf16.msra.mxu0 %v3347
        %3357 = vmatpush.bf16.msra.mxu0 %v3346
        %3358 = vmatmul.bf16.gmra.mxu0 %v2817
        %v3359 = vpop.f32.mrf.mxu0
        %v3360 = vadd.f32 0.0, %v3359
        %v3361 = vpop.f32.mrf.mxu0
        %3362 = vdwg.mxu0
        %s3363 = scalar_lea.vmem %s15, 176
        %v3364 = vld [vmem:[%s3363] sm:$0xf]
        %v3365 = vld [vmem:[%s3363 + $0x4] sm:$0xf]
        %v3366 = vld [vmem:[%s3363 + $0x8] sm:$0xf]
        %v3367 = vld [vmem:[%s3363 + $0xc] sm:$0xf]
        %v3372 = vunpack.c.l.b16 %v3364
        %v3373 = vunpack.c.l.b16 %v3365
        %v3374 = vunpack.c.l.b16 %v3366
        %v3375 = vunpack.c.l.b16 %v3367
        %v3376 = vpack.c.b16 %v3373, %v3372
        %v3377 = vpack.c.b16 %v3375, %v3374
        %3380 = vmatpush.bf16.msra.mxu0 0
        %3381 = vmatpush.bf16.msra.mxu0 0
        %3382 = vmatpush.bf16.msra.mxu0 0
        %3383 = vmatpush.bf16.msra.mxu0 0
        %3384 = vmatpush.bf16.msra.mxu0 0
        %3385 = vmatpush.bf16.msra.mxu0 0
        %3386 = vmatpush.bf16.msra.mxu0 %v3377
        %3387 = vmatpush.bf16.msra.mxu0 %v3376
        %3388 = vmatmul.bf16.gmra.mxu0 %v2817
        %v3389 = vpop.f32.mrf.mxu0
        %v3390 = vadd.f32 0.0, %v3389
        %v3391 = vpop.f32.mrf.mxu0
        %3392 = vdwg.mxu0
        %v3393 = vpack.c.bf16 %v3330, %v3330
        %v3394 = vpack.c.bf16 %v3360, %v3360
        %v3396 = vsel %vm919, %v3393, 0
        %v3399 = vsel %vm919, %v3394, 0
        %3401 = vmatpush.bf16.xpose.msra.mxu0 0
        %3402 = vmatpush.bf16.xpose.msra.mxu0 0
        %3403 = vmatpush.bf16.xpose.msra.mxu0 0
        %3404 = vmatpush.bf16.xpose.msra.mxu0 0
        %3405 = vmatpush.bf16.xpose.msra.mxu0 0
        %3406 = vmatpush.bf16.xpose.msra.mxu0 0
        %3407 = vmatpush.bf16.xpose.msra.mxu0 0
        %3408 = vmatpush.bf16.xpose.msra.mxu0 %v3399
        %3409 = vmatmul.bf16.gmra.mxu0 %v3396
        %v3410 = vpop.f32.mrf.mxu0
        %v3411 = vadd.f32 0.0, %v3410
        %v3412 = vpop.f32.mrf.mxu0
        %3413 = vdwg.mxu0
        %v3414 = vmul.f32 %v3411, 0.35355338
        %v3415 = vsel %vm763, %v3414, -1e+30
        %v3416 = vsel %vm919, %v3415, -inf
        %3417 = vmax.xlane.f32.xlu0 %v3416
        %v3418 = vpop.xlane.xlu0 %3417
        %v3419 = vsub.f32 %v3415, %v3418
        %v3420 = vmul.f32 %v3419, 1.442695
        %v3421 = vpow.pop %v3420
        %v3422 = vsel %vm919, %v3421, 0.0
        %3423 = vadd.xlane.f32.xlu0 %v3422
        %v3424 = vpop.xlane.xlu0 %3423
        %v3425 = vrcp.pop %v3424
        %v3426 = vmul.f32 %v3421, %v3425
        %v3427 = vpack.c.bf16 %v3426, %v3426
        %v3428 = vpack.c.bf16 %v3390, %v3390
        %v3430 = vsel %vm919, %v3427, 0
        %v3433 = vsel %vm1154, %v3428, 0
        %3435 = vmatpush.bf16.msra.mxu0 0
        %3436 = vmatpush.bf16.msra.mxu0 0
        %3437 = vmatpush.bf16.msra.mxu0 0
        %3438 = vmatpush.bf16.msra.mxu0 0
        %3439 = vmatpush.bf16.msra.mxu0 0
        %3440 = vmatpush.bf16.msra.mxu0 0
        %3441 = vmatpush.bf16.msra.mxu0 0
        %3442 = vmatpush.bf16.msra.mxu0 %v3433
        %3443 = vmatmul.bf16.gmra.mxu0 %v3430
        %v3444 = vpop.f32.mrf.mxu0
        %v3445 = vadd.f32 0.0, %v3444
        %v3446 = vpop.f32.mrf.mxu0
        %3447 = vdwg.mxu0
        %v3448 = vpack.c.bf16 %v3445, %v3445
        %s3449 = scalar_lea.vmem %s16, 12
        %v3450 = vld [vmem:[%s3449] sm:$0xf]
        %v3452 = vsel %vm919, %v3448, 0
        %v3455 = vsel %vm1154, %v3450, 0
        %3457 = vmatpush.bf16.msra.mxu0 0
        %3458 = vmatpush.bf16.msra.mxu0 0
        %3459 = vmatpush.bf16.msra.mxu0 0
        %3460 = vmatpush.bf16.msra.mxu0 0
        %3461 = vmatpush.bf16.msra.mxu0 0
        %3462 = vmatpush.bf16.msra.mxu0 0
        %3463 = vmatpush.bf16.msra.mxu0 0
        %3464 = vmatpush.bf16.msra.mxu0 %v3455
        %3465 = vmatmul.bf16.gmra.mxu0 %v3452
        %v3466 = vpop.f32.mrf.mxu0
        %v3467 = vadd.f32 0.0, %v3466
        %v3468 = vpop.f32.mrf.mxu0
        %3469 = vdwg.mxu0
        %v3470 = vadd.f32 %v3302, %v3467
        %v3471 = vadd.f32 %v2773, %v3470
        %v3472 = vld [vmem:[%s14 + $0x1] sm:$0x1]
        %v3473 = vsel %vm766, %v3471, 0.0
        %3474 = vadd.xlane.f32.xlu0 %v3473
        %v3475 = vpop.xlane.xlu0 %3474
        %v3476 = vmul.f32 %v3475, %v779
        %v3477 = vsub.f32 %v3471, %v3476
        %v3478 = vmul.f32 %v3477, %v3477
        %v3479 = vsel %vm766, %v3478, 0.0
        %3480 = vadd.xlane.f32.xlu0 %v3479
        %v3481 = vpop.xlane.xlu0 %3480
        %v3482 = vmul.f32 %v3481, %v779
        %v3483 = vadd.f32 %v3482, 1e-05
        %v3484 = vrsqrt.pop %v3483
        %v3485 = vmul.f32 %v3484, %v3483
        %v3486 = vmul.f32 %v3485, %v3484
        %v3487 = vmul.f32 0.5, %v3486
        %v3488 = vsub.f32 1.5, %v3487
        %v3489 = vmul.f32 %v3484, %v3488
        %vm3490 = vweird.f32 %v3483
        %vm3491 = vweird.f32 %v3484
        %vm3492 = vmor %vm3490, %vm3491
        %v3493 = vsel %vm3492, %v3484, %v3489
        %v3494 = vmul.f32 %v3477, %v3493
        %v3495 = vperm.slane %v3472, 0
        %v3496 = vmul.f32 %v3494, %v3495
        %v3497 = vpack.c.bf16 %v3496, %v3496
        %v3498 = vld [vmem:[%s17] sm:$0xf]
        %v3499 = vld [vmem:[%s17 + $0x4] sm:$0xf]
        %v3500 = vld [vmem:[%s17 + $0x8] sm:$0xf]
        %v3501 = vld [vmem:[%s17 + $0xc] sm:$0xf]
        %v3506 = vunpack.c.l.b16 %v3498
        %v3507 = vunpack.c.l.b16 %v3499
        %v3508 = vunpack.c.l.b16 %v3500
        %v3509 = vunpack.c.l.b16 %v3501
        %v3510 = vpack.c.b16 %v3507, %v3506
        %v3511 = vpack.c.b16 %v3509, %v3508
        %v3515 = vsel %vm766, %v3497, 0
        %3517 = vmatpush.bf16.msra.mxu0 0
        %3518 = vmatpush.bf16.msra.mxu0 0
        %3519 = vmatpush.bf16.msra.mxu0 0
        %3520 = vmatpush.bf16.msra.mxu0 0
        %3521 = vmatpush.bf16.msra.mxu0 0
        %3522 = vmatpush.bf16.msra.mxu0 0
        %3523 = vmatpush.bf16.msra.mxu0 %v3511
        %3524 = vmatpush.bf16.msra.mxu0 %v3510
        %3525 = vmatmul.bf16.gmra.mxu0 %v3515
        %v3526 = vpop.f32.mrf.mxu0
        %v3527 = vadd.f32 0.0, %v3526
        %v3528 = vpop.f32.mrf.mxu0
        %3529 = vdwg.mxu0
        %v3530 = vmul.f32 %v3527, 0.5
        %v3531 = vmul.f32 %v3527, 0.70710677
        %v3532 = vand.u32 2147483647, %v3531
        %v3533 = vmul.f32 %v3532, 0.3275911
        %v3534 = vadd.f32 %v3533, 1.0
        %v3535 = vrcp.pop %v3534
        %v3536 = vmul.f32 %v3534, %v3535
        %v3537 = vsub.f32 1.0, %v3536
        %v3538 = vmul.f32 %v3535, %v3537
        %v3539 = vadd.f32 %v3535, %v3538
        %vm3540 = vweird.f32 %v3534
        %vm3541 = vweird.f32 %v3535
        %vm3542 = vmor %vm3540, %vm3541
        %v3543 = vsel %vm3542, %v3535, %v3539
        %v3544 = vand.u32 2147483647, %v3534
        %vm3545 = vcmp.eq.f32.partialorder %v3544, 8.507059e+37
        %v3546 = vand.u32 %v3534, 2147483648
        %v3547 = vor.u32 1.1754944e-38, %v3546
        %v3548 = vsel %vm3545, %v3547, %v3543
        %v3549 = vmul.f32 1.0, %v3548
        %v3550 = vmul.f32 %v3549, 1.0614054
        %v3551 = vadd.f32 %v3550, -1.4531521
        %v3552 = vmul.f32 %v3551, %v3549
        %v3553 = vadd.f32 %v3552, 1.4214138
        %v3554 = vmul.f32 %v3553, %v3549
        %v3555 = vadd.f32 %v3554, -0.28449672
        %v3556 = vmul.f32 %v3555, %v3549
        %v3557 = vadd.f32 %v3556, 0.2548296
        %v3558 = vmul.f32 %v3557, %v3549
        %v3559 = vsub.f32 0.0, %v3532
        %v3560 = vmul.f32 %v3559, %v3532
        %v3561 = vmul.f32 %v3560, 1.442695
        %v3562 = vpow.pop %v3561
        %v3563 = vmul.f32 %v3558, %v3562
        %v3564 = vsub.f32 1.0, %v3563
        %vm3565 = vcmp.ge.f32.partialorder %v3531, 0.0
        %v3566 = vsub.f32 0.0, %v3564
        %v3567 = vsel %vm3565, %v3564, %v3566
        %v3568 = vadd.f32 %v3567, 1.0
        %v3569 = vmul.f32 %v3530, %v3568
        %v3570 = vpack.c.bf16 %v3569, %v3569
        %v3571 = vld [vmem:[%s18] sm:$0xf]
        %v3572 = vld [vmem:[%s18 + $0x4] sm:$0xf]
        %v3573 = vld [vmem:[%s18 + $0x8] sm:$0xf]
        %v3574 = vld [vmem:[%s18 + $0xc] sm:$0xf]
        %v3575 = vld [vmem:[%s18 + $0x10] sm:$0xf]
        %v3576 = vld [vmem:[%s18 + $0x14] sm:$0xf]
        %v3577 = vld [vmem:[%s18 + $0x18] sm:$0xf]
        %v3578 = vld [vmem:[%s18 + $0x1c] sm:$0xf]
        %v3579 = vld [vmem:[%s18 + $0x20] sm:$0xf]
        %v3580 = vld [vmem:[%s18 + $0x24] sm:$0xf]
        %v3581 = vld [vmem:[%s18 + $0x28] sm:$0xf]
        %v3582 = vld [vmem:[%s18 + $0x2c] sm:$0xf]
        %v3583 = vld [vmem:[%s18 + $0x30] sm:$0xf]
        %v3584 = vld [vmem:[%s18 + $0x34] sm:$0xf]
        %v3585 = vld [vmem:[%s18 + $0x38] sm:$0xf]
        %v3586 = vld [vmem:[%s18 + $0x3c] sm:$0xf]
        %v3603 = vunpack.c.l.b16 %v3571
        %v3604 = vunpack.c.l.b16 %v3572
        %v3605 = vunpack.c.l.b16 %v3573
        %v3606 = vunpack.c.l.b16 %v3574
        %v3607 = vunpack.c.l.b16 %v3575
        %v3608 = vunpack.c.l.b16 %v3576
        %v3609 = vunpack.c.l.b16 %v3577
        %v3610 = vunpack.c.l.b16 %v3578
        %v3611 = vunpack.c.l.b16 %v3579
        %v3612 = vunpack.c.l.b16 %v3580
        %v3613 = vunpack.c.l.b16 %v3581
        %v3614 = vunpack.c.l.b16 %v3582
        %v3615 = vunpack.c.l.b16 %v3583
        %v3616 = vunpack.c.l.b16 %v3584
        %v3617 = vunpack.c.l.b16 %v3585
        %v3618 = vunpack.c.l.b16 %v3586
        %v3619 = vpack.c.b16 %v3604, %v3603
        %v3620 = vpack.c.b16 %v3606, %v3605
        %v3621 = vpack.c.b16 %v3608, %v3607
        %v3622 = vpack.c.b16 %v3610, %v3609
        %v3623 = vpack.c.b16 %v3612, %v3611
        %v3624 = vpack.c.b16 %v3614, %v3613
        %v3625 = vpack.c.b16 %v3616, %v3615
        %v3626 = vpack.c.b16 %v3618, %v3617
        %3635 = vmatpush.bf16.msra.mxu0 %v3626
        %3636 = vmatpush.bf16.msra.mxu0 %v3625
        %3637 = vmatpush.bf16.msra.mxu0 %v3624
        %3638 = vmatpush.bf16.msra.mxu0 %v3623
        %3639 = vmatpush.bf16.msra.mxu0 %v3622
        %3640 = vmatpush.bf16.msra.mxu0 %v3621
        %3641 = vmatpush.bf16.msra.mxu0 %v3620
        %3642 = vmatpush.bf16.msra.mxu0 %v3619
        %3643 = vmatmul.bf16.gmra.mxu0 %v3570
        %v3644 = vpop.f32.mrf.mxu0
        %v3645 = vadd.f32 0.0, %v3644
        %v3646 = vpop.f32.mrf.mxu0
        %3647 = vdwg.mxu0
        %v3648 = vadd.f32 %v3471, %v3645
        %v3649 = vld [vmem:[%s19] sm:$0xff]
        %v3650 = vld [vmem:[%s19 + $0x8] sm:$0xff]
        %v3651 = vld [vmem:[%s19 + $0x10] sm:$0xff]
        %v3652 = vld [vmem:[%s19 + $0x18] sm:$0xff]
        %v3653 = vld [vmem:[%s20] sm:$0x1]
        %v3655 = vperm.slane %v3653, 0
        %v3658 = vsel %vm766, %v3648, 0
        %3660 = vmatpush.msra.mxu0 0.0
        %3661 = vmatpush.msra.mxu0 0.0
        %3662 = vmatpush.msra.mxu0 0.0
        %3663 = vmatpush.msra.mxu0 0.0
        %3664 = vmatpush.msra.mxu0 0.0
        %3665 = vmatpush.msra.mxu0 0.0
        %3666 = vmatpush.msra.mxu0 0.0
        %3667 = vmatpush.msra.mxu0 0.0
        %3668 = vmatpush.msra.mxu0 0.0
        %3669 = vmatpush.msra.mxu0 0.0
        %3670 = vmatpush.msra.mxu0 0.0
        %3671 = vmatpush.msra.mxu0 0.0
        %3672 = vmatpush.msra.mxu0 %v3652
        %3673 = vmatpush.msra.mxu0 %v3651
        %3674 = vmatpush.msra.mxu0 %v3650
        %3675 = vmatpush.msra.mxu0 %v3649
        %3676 = vmatmul.f32.gmra.mxu0 %v3658
        %v3677 = vpop.f32.mrf.mxu0
        %v3678 = vadd.f32 %v3655, %v3677
        %3679 = vdwg.mxu0
        %v3680 = vld [vmem:[%s21] sm:$0xff]
        %v3681 = vld [vmem:[%s21 + $0x8] sm:$0xff]
        %v3682 = vmul.f32 %v3678, %v3678
        %v3683 = vsel %vm944, %v3682, 0.0
        %3684 = vadd.xlane.f32.xlu0 %v3683
        %v3685 = vpop.xlane.xlu0 %3684
        %v3687 = vsel %vm944, %v3678, 0
        %3689 = vmatpush.msra.mxu0 0.0
        %3690 = vmatpush.msra.mxu0 0.0
        %3691 = vmatpush.msra.mxu0 0.0
        %3692 = vmatpush.msra.mxu0 0.0
        %3693 = vmatpush.msra.mxu0 0.0
        %3694 = vmatpush.msra.mxu0 0.0
        %3695 = vmatpush.msra.mxu0 0.0
        %3696 = vmatpush.msra.mxu0 0.0
        %3697 = vmatpush.msra.mxu0 0.0
        %3698 = vmatpush.msra.mxu0 0.0
        %3699 = vmatpush.msra.mxu0 0.0
        %3700 = vmatpush.msra.mxu0 0.0
        %3701 = vmatpush.msra.mxu0 0.0
        %3702 = vmatpush.msra.mxu0 0.0
        %3703 = vmatpush.msra.mxu0 %v3681
        %3704 = vmatpush.msra.mxu0 %v3680
        %3705 = vmatmul.f32.gmra.mxu0 %v3687
        %v3706 = vpop.f32.mrf.mxu0
        %v3707 = vadd.f32 0.0, %v3706
        %3708 = vdwg.mxu0
        %v3709 = vmul.f32 %v3707, 2.0
        %v3710 = vsub.f32 %v3685, %v3709
        %v3711 = vmul.f32 %v3680, %v3680
        %v3712 = vmul.f32 %v3681, %v3681
        %v3713 = vsel %vm766, %v3711, 0.0
        %v3714 = vsel %vm766, %v3712, 0.0
        %v3715 = vadd.f32 %v3713, %v3714
        %v3716 = vrot.slane %v3715, 4
        %v3717 = vadd.f32 %v3715, %v3716
        %v3718 = vrot.slane %v3717, 2
        %v3719 = vadd.f32 %v3717, %v3718
        %v3720 = vrot.slane %v3719, 1
        %v3721 = vadd.f32 %v3719, %v3720
        %v3722 = vadd.f32 %v3710, %v3721
        %v3723 = vsel %vm766, %v3722, inf
        %3724 = vmin.xlane.f32.xlu0 %v3723
        %v3725 = vpop.xlane.xlu0 %3724
        %vm3726 = vcmp.eq.f32.partialorder %v3722, %v3725
        %v3727 = vsel %vm3726, %v762, 32
        %v3728 = vsel %vm766, %v3727, 2147483647
        %v3729 = vand.u32 %v3728, 65535
        %v3730 = vshra.s32 %v3728, 16
        %v3731 = vcvt.s32.f32 %v3729
        %v3732 = vcvt.s32.f32 %v3730
        %3733 = vmin.xlane.f32.xlu0 %v3732
        %v3734 = vpop.xlane.xlu0 %3733
        %vm3735 = vcmp.eq.f32.partialorder %v3732, %v3734
        %v3736 = vsel %vm3735, %v3731, inf
        %3737 = vmin.xlane.f32.xlu0 %v3736
        %v3738 = vpop.xlane.xlu0 %3737
        %v3739 = vcvt.f32.s32 %v3738
        %v3740 = vcvt.f32.s32 %v3734
        %v3741 = vshll.u32 %v3740, 16
        %v3742 = vadd.s32 %v3741, %v3739
        %vm3743 = vcmp.eq.s32.totalorder %v762, %v3742
        %v3744 = vsel %vm3743, 1, 0
        %v3745 = vcvt.s32.f32 %v3744
        %v3747 = vsel %vm766, %v3745, 0
        %v3750 = vsel %vm766, %v3680, 0
        %v3753 = vsel %vm766, %v3681, 0
        %3755 = vmatpush.xpose.msra.mxu0 0.0
        %3756 = vmatpush.xpose.msra.mxu0 0.0
        %3757 = vmatpush.xpose.msra.mxu0 0.0
        %3758 = vmatpush.xpose.msra.mxu0 0.0
        %3759 = vmatpush.xpose.msra.mxu0 0.0
        %3760 = vmatpush.xpose.msra.mxu0 0.0
        %3761 = vmatpush.xpose.msra.mxu0 0.0
        %3762 = vmatpush.xpose.msra.mxu0 0.0
        %3763 = vmatpush.xpose.msra.mxu0 0.0
        %3764 = vmatpush.xpose.msra.mxu0 0.0
        %3765 = vmatpush.xpose.msra.mxu0 0.0
        %3766 = vmatpush.xpose.msra.mxu0 0.0
        %3767 = vmatpush.xpose.msra.mxu0 0.0
        %3768 = vmatpush.xpose.msra.mxu0 0.0
        %3769 = vmatpush.xpose.msra.mxu0 %v3753
        %3770 = vmatpush.xpose.msra.mxu0 %v3750
        %3771 = vmatmul.f32.gmra.mxu0 %v3747
        %v3772 = vpop.f32.mrf.mxu0
        %v3773 = vadd.f32 0.0, %v3772
        %3774 = vdwg.mxu0
        %v3775 = vsub.f32 %v3678, %v3773
        %v3776 = vmul.f32 %v3775, %v3775
        %v3777 = vsel %vm944, %v3776, 0.0
        %3778 = vadd.xlane.f32.xlu0 %v3777
        %v3779 = vpop.xlane.xlu0 %3778
        %v3780 = vrot.slane %v3779, 4
        %v3781 = vadd.f32 %v3779, %v3780
        %v3782 = vrot.slane %v3781, 2
        %v3783 = vadd.f32 %v3781, %v3782
        %v3784 = vrot.slane %v3783, 1
        %v3785 = vadd.f32 %v3783, %v3784
        %vm3786 = vcmask 0
        %3787 = vst.msk [vmem:[%s754] sm:$0x1] %vm3786, %v3785
        %3788 = vst.msk [vmem:[%s731] sm:$0xff] %vm944, %v3773
        %vm3789 = vcmask 7168
        %3790 = vst.msk [vmem:[%s751] sm:$0xff] %vm3789, %v3742
        %s3791 = sand.u32 %s514, 1
        %s3792 = scalar_lea.sflag [#allocation3], %s3791
        %s3793 = sand.u32 %s514, 1
        %s3794 = smul.addr %s3793, 8
        %s3795 = scalar_lea.vmem [#allocation2], %s3794
        %p3796 = scmp.lt.s32.totalorder %s39, 1
        %s3797 = scalar_select %p3796, %s39, 1
        %s3798 = smul.addr %s3797, 8
        %s3799 = scalar_lea.vmem %s23, %s3798
        %p3800 = scmp.lt.s32.totalorder %s39, 1
        %s3801 = scalar_select %p3800, %s39, 1
        %s3802 = scalar_lea.vmem %s24, %s3801
        // Predicated region
        $region109: #{_lambda_.2} parent=107 // pred_check
          %p3803 = pneg %p524
        $region110: #{_lambda_.2} parent=107 // pred_check_branch
          %3805 = sbr.rel (%p3803) target = $region112
        $region111: #{_lambda_.2} parent=107 // pred_region
          %3807 = vsyncadd %s3792, 0
          %s3808 = smul.addr %s39, 8
          %s3809 = scalar_lea.hbm %s22, %s3808
          %s3811 = sshll.u32 %s3795, 4
          %s3812 = int_to_ptr.vmem [resolvable:$true] %s3811
          %s3813 = sshll.u32 %s3809, 4
          %s3814 = int_to_ptr.hbm [resolvable:$true] %s3813
          %3816 = dma.vmem_to_hbm [thread:$0]  %s3812, 128, %s3814, %s3792
        $region112: #{_lambda_.2} parent=107 // pred_fallthru
          _
        // Predicated region
        $region113: #{_lambda_.2} parent=107 // pred_check
          %p3817 = pneg %p550
        $region114: #{_lambda_.2} parent=107 // pred_check_branch
          %3819 = sbr.rel (%p3817) target = $region116
        $region115: #{_lambda_.2} parent=107 // pred_region
          _
        $region116: #{_lambda_.2} parent=107 // pred_fallthru
          _
        // Predicated region
        $region117: #{_lambda_.2} parent=107 // pred_check
          %p3820 = pneg %p576
        $region118: #{_lambda_.2} parent=107 // pred_check_branch
          %3822 = sbr.rel (%p3820) target = $region120
        $region119: #{_lambda_.2} parent=107 // pred_region
          _
        $region120: #{_lambda_.2} parent=107 // pred_fallthru
          _
      $region108: #{_lambda_.2} parent=5 // pred_fallthru
        _
      %p3823 = scmp.le.s32.totalorder 2, %s34
      // Predicated region
      $region121: #{_lambda_.2} parent=5 // pred_check
        %p3824 = pneg %p3823
      $region122: #{_lambda_.2} parent=5 // pred_check_branch
        %3826 = sbr.rel (%p3824) target = $region124
      $region123: #{_lambda_.2} parent=5 // pred_region
        %s3827 = ssub.s32 %s34, 2
        // Predicated region
        $region125: #{_lambda_.2} parent=123 // pred_check
          %p3828 = pneg %p530
        $region126: #{_lambda_.2} parent=123 // pred_check_branch
          %3830 = sbr.rel (%p3828) target = $region128
        $region127: #{_lambda_.2} parent=123 // pred_region
          %s3831 = sand.u32 %s515, 1
          %s3832 = scalar_lea.sflag [#allocation3], %s3831
          %s3833 = sand.u32 %s515, 1
          %s3834 = smul.addr %s3833, 8
          %s3835 = scalar_lea.vmem [#allocation2], %s3834
          %3837 = dma.done %s3832, 128
        $region128: #{_lambda_.2} parent=123 // pred_fallthru
          _
        // Predicated region
        $region129: #{_lambda_.2} parent=123 // pred_check
          %p3838 = pneg %p556
        $region130: #{_lambda_.2} parent=123 // pred_check_branch
          %3840 = sbr.rel (%p3838) target = $region132
        $region131: #{_lambda_.2} parent=123 // pred_region
          %p3841 = scmp.lt.s32.totalorder %s40, 1
          %s3842 = scalar_select %p3841, %s40, 1
          %s3843 = smul.addr %s3842, 8
          %s3844 = scalar_lea.vmem %s23, %s3843
        $region132: #{_lambda_.2} parent=123 // pred_fallthru
          _
        // Predicated region
        $region133: #{_lambda_.2} parent=123 // pred_check
          %p3845 = pneg %p582
        $region134: #{_lambda_.2} parent=123 // pred_check_branch
          %3847 = sbr.rel (%p3845) target = $region136
        $region135: #{_lambda_.2} parent=123 // pred_region
          %p3848 = scmp.lt.s32.totalorder %s40, 1
          %s3849 = scalar_select %p3848, %s40, 1
          %s3850 = scalar_lea.vmem %s24, %s3849
        $region136: #{_lambda_.2} parent=123 // pred_fallthru
          _
      $region124: #{_lambda_.2} parent=5 // pred_fallthru
        _
    $region6: #{_lambda_.2} parent=1 // loop_footer
      %s38 = sadd.s32 1, %s34
    $region7: #{_lambda_.2} parent=1 // loop_footer_branch
      %33 = sbr.rel target = $region3
    $region8: #{_lambda_.2} parent=1 // loop_exit
      _
    %3851 = vsyncpa [#allocation3], 1
    %s3852 = scalar_lea.sflag [#allocation3], 1
    %3853 = vsyncpa %s3852, 1

</llo_original>
